<compile_context>
chip_gen: v5e
topology: v5e:2x2
jax: 0.10.0
libtpu: 0.0.40
codegen_flags: <defaults>
</compile_context>

<pallas_src>
import jax
import jax.numpy as jnp
from jax import lax
from jax.experimental import pallas as pl
from jax.experimental.pallas import tpu as pltpu

EPS = 1e-5
_TAPS = tuple((dy, dx) for dy in (-1, 0, 1) for dx in (-1, 0, 1))


def _mixing_matrices(w_hwio, n_batch):
    """(3,3,cin,cout) HWIO weights -> (9, N*cout, N*cin) block-diagonal per-tap
    channel-mix matrices (one small MXU matmul per tap, batch on the diagonal)."""
    cin, cout = int(w_hwio.shape[2]), int(w_hwio.shape[3])
    wt = jnp.transpose(w_hwio.astype(jnp.float32).reshape(9, cin, cout), (0, 2, 1))
    eye = jnp.eye(n_batch, dtype=jnp.float32)
    p = jnp.einsum("nm,tcd->tncmd", eye, wt)       # [t, n, co, m, ci]
    return p.reshape(9, n_batch * cout, n_batch * cin)


def _bn_cols(gamma, beta, n_batch):
    """Per-channel affine params -> (2, N*C, 1) sublane columns (row n*C+c -> c)."""
    c = int(gamma.shape[0])
    gcol = jnp.tile(gamma.astype(jnp.float32), n_batch).reshape(n_batch * c, 1)
    bcol = jnp.tile(beta.astype(jnp.float32), n_batch).reshape(n_batch * c, 1)
    return jnp.stack([gcol, bcol], axis=0)


def _make_kernel(N, C, H, W):
    NC, HW = N * C, H * W
    inv_cnt = 1.0 / float(N * HW)

    def border_masks():
        # (1, HW) f32 validity mask per 3x3 tap, built from a lane iota in-kernel.
        idx = lax.broadcasted_iota(jnp.int32, (1, HW), 1)
        if W & (W - 1) == 0:                       # power-of-two width: bit ops only
            ys = idx >> (W.bit_length() - 1)
            xs = idx & (W - 1)
        else:
            ys = idx // W
            xs = idx - ys * W
        out = []
        for dy, dx in _TAPS:
            ok = (ys + dy >= 0) & (ys + dy < H) & (xs + dx >= 0) & (xs + dx < W)
            out.append(jnp.where(ok, 1.0, 0.0).astype(jnp.float32))
        return out

    def conv3x3(blk, p_ref, mvals):
        """3x3 / stride-1 / SAME conv on the lane-dense (N*C, HW) block:
        per tap an XLU lane rotate + mask, then one (NC,NC)x(NC,HW) MXU matmul."""
        acc = jnp.zeros((NC, HW), jnp.float32)
        for t, (dy, dx) in enumerate(_TAPS):
            d = dy * W + dx
            if d == 0:
                sh = blk
            else:
                sh = pltpu.roll(blk, (-d) % HW, 1) * mvals[t]
            acc = acc + jnp.dot(p_ref[0, t], sh,
                                preferred_element_type=jnp.float32,
                                precision=lax.Precision.HIGHEST)
        return acc

    def batchnorm(blk, g_col, b_col):
        """Training-mode BN, block-vectorized: lane reduces -> (NC,1) columns,
        batch folded with sublane-slice adds, var clamped >= 0."""
        s = jnp.sum(blk, axis=1, keepdims=True)            # (NC, 1)
        ss = jnp.sum(blk * blk, axis=1, keepdims=True)     # (NC, 1)
        cs, css = s[0:C, :], ss[0:C, :]
        for n in range(1, N):
            cs = cs + s[n * C:(n + 1) * C, :]
            css = css + ss[n * C:(n + 1) * C, :]
        mean_c = cs * inv_cnt                              # (C, 1)
        var_c = jnp.maximum(css * inv_cnt - mean_c * mean_c, 0.0)
        mean = jnp.concatenate([mean_c] * N, axis=0)       # (NC, 1)
        var = jnp.concatenate([var_c] * N, axis=0)
        scale = g_col * lax.rsqrt(var + EPS)               # EUP rsqrt
        shift = b_col - mean * scale
        return blk * scale + shift                         # one vmul + one vadd

    def kernel(x_ref, p1_ref, gb1_ref, p2_ref, gb2_ref, o_ref, act_ref):
        blk_idx = pl.program_id(0)

        @pl.when(blk_idx == 0)
        def _():
            act_ref[...] = x_ref[...]          # stage input -> resident activation

        cur = act_ref[...]                     # this block's input (also the shortcut)
        mvals = border_masks()

        h = conv3x3(cur, p1_ref, mvals)
        h = jnp.maximum(batchnorm(h, gb1_ref[0, 0], gb1_ref[0, 1]), 0.0)

        h = conv3x3(h, p2_ref, mvals)
        h = batchnorm(h, gb2_ref[0, 0], gb2_ref[0, 1])

        new = jnp.maximum(h + cur, 0.0)        # identity shortcut + relu (block op)
        act_ref[...] = new                     # carry to the next block (stays in VMEM)

        @pl.when(blk_idx == pl.num_programs(0) - 1)
        def _():
            o_ref[...] = new                   # single lane-dense store at stage end

    return kernel


def fused_stage_forward(x_nchw, block_params):
    """x_nchw: (N, C, H, W) f32.  block_params: list of (w1, g1, b1, w2, g2, b2)
    with w* in HWIO (3, 3, C, C) and g*/b* of shape (C,).  Returns (N, C, H, W)."""
    N, C, H, W = map(int, x_nchw.shape)
    HW, NC = H * W, N * C
    num_blocks = len(block_params)
    for (w1, _, _, w2, _, _) in block_params:
        assert tuple(w1.shape) == (3, 3, C, C) and tuple(w2.shape) == (3, 3, C, C), \
            "identity ('A') shortcut stage requires in_planes == planes, stride == 1"

    # Pure reshape: sublanes = N*C, lanes = H*W (multiple of 128 -> unmasked vst).
    x2 = x_nchw.astype(jnp.float32).reshape(NC, HW)

    # Per-block weights pre-arranged in VMEM-friendly layouts (no SMEM scalar reads).
    P1 = jnp.stack([_mixing_matrices(p[0], N) for p in block_params])   # (B, 9, NC, NC)
    GB1 = jnp.stack([_bn_cols(p[1], p[2], N) for p in block_params])    # (B, 2, NC, 1)
    P2 = jnp.stack([_mixing_matrices(p[3], N) for p in block_params])   # (B, 9, NC, NC)
    GB2 = jnp.stack([_bn_cols(p[4], p[5], N) for p in block_params])    # (B, 2, NC, 1)

    kernel = _make_kernel(N, C, H, W)

    flops = num_blocks * (2 * (2 * NC * NC * HW * 9) + 12 * NC * HW)
    bytes_accessed = 4 * (2 * NC * HW + int(P1.size) + int(P2.size)
                          + int(GB1.size) + int(GB2.size))

    out2 = pl.pallas_call(
        kernel,
        out_shape=jax.ShapeDtypeStruct((NC, HW), jnp.float32),
        grid=(num_blocks,),
        in_specs=[
            pl.BlockSpec((NC, HW), lambda b: (0, 0)),             # fetched once
            pl.BlockSpec((1, 9, NC, NC), lambda b: (b, 0, 0, 0)), # conv1 mix, per block
            pl.BlockSpec((1, 2, NC, 1), lambda b: (b, 0, 0, 0)),  # bn1 gamma/beta cols
            pl.BlockSpec((1, 9, NC, NC), lambda b: (b, 0, 0, 0)), # conv2 mix, per block
            pl.BlockSpec((1, 2, NC, 1), lambda b: (b, 0, 0, 0)),  # bn2 gamma/beta cols
        ],
        out_specs=pl.BlockSpec((NC, HW), lambda b: (0, 0)),       # written back once
        scratch_shapes=[pltpu.VMEM((NC, HW), jnp.float32)],       # activation carry
        compiler_params=pltpu.CompilerParams(
            dimension_semantics=("arbitrary",)),                  # sequential chain
        cost_estimate=pl.CostEstimate(
            flops=flops, transcendentals=num_blocks * 2 * C,
            bytes_accessed=bytes_accessed),
    )(x2, P1, GB1, P2, GB2)

    return out2.reshape(N, C, H, W)


def reference_stage(x_nchw, block_params):
    """Pure-JAX reference: chained BasicBlocks (NHWC convs, training-mode BN)."""
    x = jnp.transpose(x_nchw, (0, 2, 3, 1)).astype(jnp.float32)

    def conv(a, w):
        return lax.conv_general_dilated(
            a, w, window_strides=(1, 1), padding="SAME",
            dimension_numbers=("NHWC", "HWIO", "NHWC"),
            precision=lax.Precision.HIGHEST)

    def bn(a, g, b):
        m = jnp.mean(a, axis=(0, 1, 2), keepdims=True)
        v = jnp.mean((a - m) ** 2, axis=(0, 1, 2), keepdims=True)
        return (a - m) * lax.rsqrt(v + EPS) * g.reshape(1, 1, 1, -1) + \
            b.reshape(1, 1, 1, -1)

    for (w1, g1, b1, w2, g2, b2) in block_params:
        h = jnp.maximum(bn(conv(x, w1), g1, b1), 0.0)
        h = bn(conv(h, w2), g2, b2)
        x = jnp.maximum(h + x, 0.0)
    return jnp.transpose(x, (0, 3, 1, 2))


if __name__ == "__main__":
    key = jax.random.PRNGKey(0)
    N, C, H, W = 2, 4, 16, 16         # in_planes = planes = 4, stride = 1
    num_blocks = 6                    # one ResNet stage's worth of BasicBlocks, fused

    keys = jax.random.split(key, 1 + 6 * num_blocks)
    x = jax.random.normal(keys[0], (N, C, H, W), dtype=jnp.float32)

    params = []
    ki = 1
    for _ in range(num_blocks):
        w1 = 0.1 * jax.random.normal(keys[ki + 0], (3, 3, C, C), jnp.float32)
        g1 = 1.0 + 0.05 * jax.random.normal(keys[ki + 1], (C,), jnp.float32)
        b1 = 0.05 * jax.random.normal(keys[ki + 2], (C,), jnp.float32)
        w2 = 0.1 * jax.random.normal(keys[ki + 3], (3, 3, C, C), jnp.float32)
        g2 = 1.0 + 0.05 * jax.random.normal(keys[ki + 4], (C,), jnp.float32)
        b2 = 0.05 * jax.random.normal(keys[ki + 5], (C,), jnp.float32)
        params.append((w1, g1, b1, w2, g2, b2))
        ki += 6

    out = jax.block_until_ready(fused_stage_forward(x, params))
    ref = jax.block_until_ready(reference_stage(x, params))

    assert out.shape == (N, C, H, W)
    err = float(jnp.max(jnp.abs(out - ref)))
    assert err < 2e-3, f"max abs error {err}"

    print("KERNEL_OK")
</pallas_src>

<mosaic_0001>
module attributes {stable_mosaic.version = 11 : i64} {
  func.func @kernel(%arg0: i32, %arg1: memref<8x256xf32, #tpu.memory_space<vmem>>, %arg2: memref<1x9x8x8xf32, #tpu.memory_space<vmem>>, %arg3: memref<1x2x8x1xf32, #tpu.memory_space<vmem>>, %arg4: memref<1x9x8x8xf32, #tpu.memory_space<vmem>>, %arg5: memref<1x2x8x1xf32, #tpu.memory_space<vmem>>, %arg6: memref<8x256xf32, #tpu.memory_space<vmem>>, %arg7: memref<8x256xf32, #tpu.memory_space<vmem>>) attributes {dimension_semantics = [#tpu.dimension_semantics<arbitrary>], iteration_bounds = array<i64: 6>, scalar_prefetch = 0 : i64, scratch_operands = 1 : i64, tpu.core_type = #tpu.core_type<tc>, window_params = [{pipeline_mode = #tpu.pipeline_mode<synchronous>, transform_indices = @transform_0, window_bounds = array<i64: 8, 256>}, {transform_indices = @transform_1, window_bounds = array<i64: 1, 9, 8, 8>}, {transform_indices = @transform_2, window_bounds = array<i64: 1, 2, 8, 1>}, {transform_indices = @transform_3, window_bounds = array<i64: 1, 9, 8, 8>}, {transform_indices = @transform_4, window_bounds = array<i64: 1, 2, 8, 1>}, {pipeline_mode = #tpu.pipeline_mode<synchronous>, transform_indices = @transform_5, window_bounds = array<i64: 8, 256>}]} {
    %c0_i32 = arith.constant 0 : i32
    %0 = arith.cmpi eq, %arg0, %c0_i32 : i32
    %1 = arith.extui %0 : i1 to i32
    %c0_i32_0 = arith.constant 0 : i32
    %2 = arith.cmpi ne, %1, %c0_i32_0 : i32
    scf.if %2 {
      %c0_206 = arith.constant 0 : index
      %c0_207 = arith.constant 0 : index
      %386 = vector.load %arg1[%c0_206, %c0_207] : memref<8x256xf32, #tpu.memory_space<vmem>>, vector<8x256xf32>
      %c0_208 = arith.constant 0 : index
      %c0_209 = arith.constant 0 : index
      %387 = vector.load %arg7[%c0_208, %c0_209] : memref<8x256xf32, #tpu.memory_space<vmem>>, vector<8x256xf32>
      tpu.vector_store %arg7[%c0_208, %c0_209], %386 {strides = array<i32>} : memref<8x256xf32, #tpu.memory_space<vmem>>, vector<8x256xf32>,
    } else {
    }
    %c0 = arith.constant 0 : index
    %c0_1 = arith.constant 0 : index
    %3 = vector.load %arg7[%c0, %c0_1] : memref<8x256xf32, #tpu.memory_space<vmem>>, vector<8x256xf32>
    %4 = tpu.iota {dimensions = array<i32: 1>} : vector<1x256xi32>
    %c4_i32 = arith.constant 4 : i32
    %5 = vector.broadcast %c4_i32 : i32 to vector<1x256xi32>
    %6 = arith.shrsi %4, %5 : vector<1x256xi32>
    %c15_i32 = arith.constant 15 : i32
    %7 = vector.broadcast %c15_i32 : i32 to vector<1x256xi32>
    %8 = arith.andi %4, %7 : vector<1x256xi32>
    %c-1_i32 = arith.constant -1 : i32
    %9 = vector.broadcast %c-1_i32 : i32 to vector<1x256xi32>
    %10 = arith.addi %6, %9 : vector<1x256xi32>
    %c0_i32_2 = arith.constant 0 : i32
    %11 = vector.broadcast %c0_i32_2 : i32 to vector<1x256xi32>
    %12 = arith.cmpi sge, %10, %11 : vector<1x256xi32>
    %c-1_i32_3 = arith.constant -1 : i32
    %13 = vector.broadcast %c-1_i32_3 : i32 to vector<1x256xi32>
    %14 = arith.addi %6, %13 : vector<1x256xi32>
    %c16_i32 = arith.constant 16 : i32
    %15 = vector.broadcast %c16_i32 : i32 to vector<1x256xi32>
    %16 = arith.cmpi slt, %14, %15 : vector<1x256xi32>
    %17 = arith.andi %12, %16 : vector<1x256xi1>
    %c-1_i32_4 = arith.constant -1 : i32
    %18 = vector.broadcast %c-1_i32_4 : i32 to vector<1x256xi32>
    %19 = arith.addi %8, %18 : vector<1x256xi32>
    %c0_i32_5 = arith.constant 0 : i32
    %20 = vector.broadcast %c0_i32_5 : i32 to vector<1x256xi32>
    %21 = arith.cmpi sge, %19, %20 : vector<1x256xi32>
    %22 = arith.andi %17, %21 : vector<1x256xi1>
    %c-1_i32_6 = arith.constant -1 : i32
    %23 = vector.broadcast %c-1_i32_6 : i32 to vector<1x256xi32>
    %24 = arith.addi %8, %23 : vector<1x256xi32>
    %c16_i32_7 = arith.constant 16 : i32
    %25 = vector.broadcast %c16_i32_7 : i32 to vector<1x256xi32>
    %26 = arith.cmpi slt, %24, %25 : vector<1x256xi32>
    %27 = arith.andi %22, %26 : vector<1x256xi1>
    %cst = arith.constant 1.000000e+00 : f32
    %cst_8 = arith.constant 0.000000e+00 : f32
    %28 = vector.broadcast %cst : f32 to vector<1x256xf32>
    %29 = vector.broadcast %cst_8 : f32 to vector<1x256xf32>
    %30 = arith.select %27, %28, %29 : vector<1x256xi1>, vector<1x256xf32>
    %c-1_i32_9 = arith.constant -1 : i32
    %31 = vector.broadcast %c-1_i32_9 : i32 to vector<1x256xi32>
    %32 = arith.addi %6, %31 : vector<1x256xi32>
    %c0_i32_10 = arith.constant 0 : i32
    %33 = vector.broadcast %c0_i32_10 : i32 to vector<1x256xi32>
    %34 = arith.cmpi sge, %32, %33 : vector<1x256xi32>
    %c-1_i32_11 = arith.constant -1 : i32
    %35 = vector.broadcast %c-1_i32_11 : i32 to vector<1x256xi32>
    %36 = arith.addi %6, %35 : vector<1x256xi32>
    %c16_i32_12 = arith.constant 16 : i32
    %37 = vector.broadcast %c16_i32_12 : i32 to vector<1x256xi32>
    %38 = arith.cmpi slt, %36, %37 : vector<1x256xi32>
    %39 = arith.andi %34, %38 : vector<1x256xi1>
    %c0_i32_13 = arith.constant 0 : i32
    %40 = vector.broadcast %c0_i32_13 : i32 to vector<1x256xi32>
    %41 = arith.addi %8, %40 : vector<1x256xi32>
    %c0_i32_14 = arith.constant 0 : i32
    %42 = vector.broadcast %c0_i32_14 : i32 to vector<1x256xi32>
    %43 = arith.cmpi sge, %41, %42 : vector<1x256xi32>
    %44 = arith.andi %39, %43 : vector<1x256xi1>
    %c0_i32_15 = arith.constant 0 : i32
    %45 = vector.broadcast %c0_i32_15 : i32 to vector<1x256xi32>
    %46 = arith.addi %8, %45 : vector<1x256xi32>
    %c16_i32_16 = arith.constant 16 : i32
    %47 = vector.broadcast %c16_i32_16 : i32 to vector<1x256xi32>
    %48 = arith.cmpi slt, %46, %47 : vector<1x256xi32>
    %49 = arith.andi %44, %48 : vector<1x256xi1>
    %cst_17 = arith.constant 1.000000e+00 : f32
    %cst_18 = arith.constant 0.000000e+00 : f32
    %50 = vector.broadcast %cst_17 : f32 to vector<1x256xf32>
    %51 = vector.broadcast %cst_18 : f32 to vector<1x256xf32>
    %52 = arith.select %49, %50, %51 : vector<1x256xi1>, vector<1x256xf32>
    %c-1_i32_19 = arith.constant -1 : i32
    %53 = vector.broadcast %c-1_i32_19 : i32 to vector<1x256xi32>
    %54 = arith.addi %6, %53 : vector<1x256xi32>
    %c0_i32_20 = arith.constant 0 : i32
    %55 = vector.broadcast %c0_i32_20 : i32 to vector<1x256xi32>
    %56 = arith.cmpi sge, %54, %55 : vector<1x256xi32>
    %c-1_i32_21 = arith.constant -1 : i32
    %57 = vector.broadcast %c-1_i32_21 : i32 to vector<1x256xi32>
    %58 = arith.addi %6, %57 : vector<1x256xi32>
    %c16_i32_22 = arith.constant 16 : i32
    %59 = vector.broadcast %c16_i32_22 : i32 to vector<1x256xi32>
    %60 = arith.cmpi slt, %58, %59 : vector<1x256xi32>
    %61 = arith.andi %56, %60 : vector<1x256xi1>
    %c1_i32 = arith.constant 1 : i32
    %62 = vector.broadcast %c1_i32 : i32 to vector<1x256xi32>
    %63 = arith.addi %8, %62 : vector<1x256xi32>
    %c0_i32_23 = arith.constant 0 : i32
    %64 = vector.broadcast %c0_i32_23 : i32 to vector<1x256xi32>
    %65 = arith.cmpi sge, %63, %64 : vector<1x256xi32>
    %66 = arith.andi %61, %65 : vector<1x256xi1>
    %c1_i32_24 = arith.constant 1 : i32
    %67 = vector.broadcast %c1_i32_24 : i32 to vector<1x256xi32>
    %68 = arith.addi %8, %67 : vector<1x256xi32>
    %c16_i32_25 = arith.constant 16 : i32
    %69 = vector.broadcast %c16_i32_25 : i32 to vector<1x256xi32>
    %70 = arith.cmpi slt, %68, %69 : vector<1x256xi32>
    %71 = arith.andi %66, %70 : vector<1x256xi1>
    %cst_26 = arith.constant 1.000000e+00 : f32
    %cst_27 = arith.constant 0.000000e+00 : f32
    %72 = vector.broadcast %cst_26 : f32 to vector<1x256xf32>
    %73 = vector.broadcast %cst_27 : f32 to vector<1x256xf32>
    %74 = arith.select %71, %72, %73 : vector<1x256xi1>, vector<1x256xf32>
    %c0_i32_28 = arith.constant 0 : i32
    %75 = vector.broadcast %c0_i32_28 : i32 to vector<1x256xi32>
    %76 = arith.addi %6, %75 : vector<1x256xi32>
    %c0_i32_29 = arith.constant 0 : i32
    %77 = vector.broadcast %c0_i32_29 : i32 to vector<1x256xi32>
    %78 = arith.cmpi sge, %76, %77 : vector<1x256xi32>
    %c0_i32_30 = arith.constant 0 : i32
    %79 = vector.broadcast %c0_i32_30 : i32 to vector<1x256xi32>
    %80 = arith.addi %6, %79 : vector<1x256xi32>
    %c16_i32_31 = arith.constant 16 : i32
    %81 = vector.broadcast %c16_i32_31 : i32 to vector<1x256xi32>
    %82 = arith.cmpi slt, %80, %81 : vector<1x256xi32>
    %83 = arith.andi %78, %82 : vector<1x256xi1>
    %c-1_i32_32 = arith.constant -1 : i32
    %84 = vector.broadcast %c-1_i32_32 : i32 to vector<1x256xi32>
    %85 = arith.addi %8, %84 : vector<1x256xi32>
    %c0_i32_33 = arith.constant 0 : i32
    %86 = vector.broadcast %c0_i32_33 : i32 to vector<1x256xi32>
    %87 = arith.cmpi sge, %85, %86 : vector<1x256xi32>
    %88 = arith.andi %83, %87 : vector<1x256xi1>
    %c-1_i32_34 = arith.constant -1 : i32
    %89 = vector.broadcast %c-1_i32_34 : i32 to vector<1x256xi32>
    %90 = arith.addi %8, %89 : vector<1x256xi32>
    %c16_i32_35 = arith.constant 16 : i32
    %91 = vector.broadcast %c16_i32_35 : i32 to vector<1x256xi32>
    %92 = arith.cmpi slt, %90, %91 : vector<1x256xi32>
    %93 = arith.andi %88, %92 : vector<1x256xi1>
    %cst_36 = arith.constant 1.000000e+00 : f32
    %cst_37 = arith.constant 0.000000e+00 : f32
    %94 = vector.broadcast %cst_36 : f32 to vector<1x256xf32>
    %95 = vector.broadcast %cst_37 : f32 to vector<1x256xf32>
    %96 = arith.select %93, %94, %95 : vector<1x256xi1>, vector<1x256xf32>
    %c0_i32_38 = arith.constant 0 : i32
    %97 = vector.broadcast %c0_i32_38 : i32 to vector<1x256xi32>
    %98 = arith.addi %6, %97 : vector<1x256xi32>
    %c0_i32_39 = arith.constant 0 : i32
    %99 = vector.broadcast %c0_i32_39 : i32 to vector<1x256xi32>
    %100 = arith.cmpi sge, %98, %99 : vector<1x256xi32>
    %c0_i32_40 = arith.constant 0 : i32
    %101 = vector.broadcast %c0_i32_40 : i32 to vector<1x256xi32>
    %102 = arith.addi %6, %101 : vector<1x256xi32>
    %c16_i32_41 = arith.constant 16 : i32
    %103 = vector.broadcast %c16_i32_41 : i32 to vector<1x256xi32>
    %104 = arith.cmpi slt, %102, %103 : vector<1x256xi32>
    %105 = arith.andi %100, %104 : vector<1x256xi1>
    %c1_i32_42 = arith.constant 1 : i32
    %106 = vector.broadcast %c1_i32_42 : i32 to vector<1x256xi32>
    %107 = arith.addi %8, %106 : vector<1x256xi32>
    %c0_i32_43 = arith.constant 0 : i32
    %108 = vector.broadcast %c0_i32_43 : i32 to vector<1x256xi32>
    %109 = arith.cmpi sge, %107, %108 : vector<1x256xi32>
    %110 = arith.andi %105, %109 : vector<1x256xi1>
    %c1_i32_44 = arith.constant 1 : i32
    %111 = vector.broadcast %c1_i32_44 : i32 to vector<1x256xi32>
    %112 = arith.addi %8, %111 : vector<1x256xi32>
    %c16_i32_45 = arith.constant 16 : i32
    %113 = vector.broadcast %c16_i32_45 : i32 to vector<1x256xi32>
    %114 = arith.cmpi slt, %112, %113 : vector<1x256xi32>
    %115 = arith.andi %110, %114 : vector<1x256xi1>
    %cst_46 = arith.constant 1.000000e+00 : f32
    %cst_47 = arith.constant 0.000000e+00 : f32
    %116 = vector.broadcast %cst_46 : f32 to vector<1x256xf32>
    %117 = vector.broadcast %cst_47 : f32 to vector<1x256xf32>
    %118 = arith.select %115, %116, %117 : vector<1x256xi1>, vector<1x256xf32>
    %c1_i32_48 = arith.constant 1 : i32
    %119 = vector.broadcast %c1_i32_48 : i32 to vector<1x256xi32>
    %120 = arith.addi %6, %119 : vector<1x256xi32>
    %c0_i32_49 = arith.constant 0 : i32
    %121 = vector.broadcast %c0_i32_49 : i32 to vector<1x256xi32>
    %122 = arith.cmpi sge, %120, %121 : vector<1x256xi32>
    %c1_i32_50 = arith.constant 1 : i32
    %123 = vector.broadcast %c1_i32_50 : i32 to vector<1x256xi32>
    %124 = arith.addi %6, %123 : vector<1x256xi32>
    %c16_i32_51 = arith.constant 16 : i32
    %125 = vector.broadcast %c16_i32_51 : i32 to vector<1x256xi32>
    %126 = arith.cmpi slt, %124, %125 : vector<1x256xi32>
    %127 = arith.andi %122, %126 : vector<1x256xi1>
    %c-1_i32_52 = arith.constant -1 : i32
    %128 = vector.broadcast %c-1_i32_52 : i32 to vector<1x256xi32>
    %129 = arith.addi %8, %128 : vector<1x256xi32>
    %c0_i32_53 = arith.constant 0 : i32
    %130 = vector.broadcast %c0_i32_53 : i32 to vector<1x256xi32>
    %131 = arith.cmpi sge, %129, %130 : vector<1x256xi32>
    %132 = arith.andi %127, %131 : vector<1x256xi1>
    %c-1_i32_54 = arith.constant -1 : i32
    %133 = vector.broadcast %c-1_i32_54 : i32 to vector<1x256xi32>
    %134 = arith.addi %8, %133 : vector<1x256xi32>
    %c16_i32_55 = arith.constant 16 : i32
    %135 = vector.broadcast %c16_i32_55 : i32 to vector<1x256xi32>
    %136 = arith.cmpi slt, %134, %135 : vector<1x256xi32>
    %137 = arith.andi %132, %136 : vector<1x256xi1>
    %cst_56 = arith.constant 1.000000e+00 : f32
    %cst_57 = arith.constant 0.000000e+00 : f32
    %138 = vector.broadcast %cst_56 : f32 to vector<1x256xf32>
    %139 = vector.broadcast %cst_57 : f32 to vector<1x256xf32>
    %140 = arith.select %137, %138, %139 : vector<1x256xi1>, vector<1x256xf32>
    %c1_i32_58 = arith.constant 1 : i32
    %141 = vector.broadcast %c1_i32_58 : i32 to vector<1x256xi32>
    %142 = arith.addi %6, %141 : vector<1x256xi32>
    %c0_i32_59 = arith.constant 0 : i32
    %143 = vector.broadcast %c0_i32_59 : i32 to vector<1x256xi32>
    %144 = arith.cmpi sge, %142, %143 : vector<1x256xi32>
    %c1_i32_60 = arith.constant 1 : i32
    %145 = vector.broadcast %c1_i32_60 : i32 to vector<1x256xi32>
    %146 = arith.addi %6, %145 : vector<1x256xi32>
    %c16_i32_61 = arith.constant 16 : i32
    %147 = vector.broadcast %c16_i32_61 : i32 to vector<1x256xi32>
    %148 = arith.cmpi slt, %146, %147 : vector<1x256xi32>
    %149 = arith.andi %144, %148 : vector<1x256xi1>
    %c0_i32_62 = arith.constant 0 : i32
    %150 = vector.broadcast %c0_i32_62 : i32 to vector<1x256xi32>
    %151 = arith.addi %8, %150 : vector<1x256xi32>
    %c0_i32_63 = arith.constant 0 : i32
    %152 = vector.broadcast %c0_i32_63 : i32 to vector<1x256xi32>
    %153 = arith.cmpi sge, %151, %152 : vector<1x256xi32>
    %154 = arith.andi %149, %153 : vector<1x256xi1>
    %c0_i32_64 = arith.constant 0 : i32
    %155 = vector.broadcast %c0_i32_64 : i32 to vector<1x256xi32>
    %156 = arith.addi %8, %155 : vector<1x256xi32>
    %c16_i32_65 = arith.constant 16 : i32
    %157 = vector.broadcast %c16_i32_65 : i32 to vector<1x256xi32>
    %158 = arith.cmpi slt, %156, %157 : vector<1x256xi32>
    %159 = arith.andi %154, %158 : vector<1x256xi1>
    %cst_66 = arith.constant 1.000000e+00 : f32
    %cst_67 = arith.constant 0.000000e+00 : f32
    %160 = vector.broadcast %cst_66 : f32 to vector<1x256xf32>
    %161 = vector.broadcast %cst_67 : f32 to vector<1x256xf32>
    %162 = arith.select %159, %160, %161 : vector<1x256xi1>, vector<1x256xf32>
    %c1_i32_68 = arith.constant 1 : i32
    %163 = vector.broadcast %c1_i32_68 : i32 to vector<1x256xi32>
    %164 = arith.addi %6, %163 : vector<1x256xi32>
    %c0_i32_69 = arith.constant 0 : i32
    %165 = vector.broadcast %c0_i32_69 : i32 to vector<1x256xi32>
    %166 = arith.cmpi sge, %164, %165 : vector<1x256xi32>
    %c1_i32_70 = arith.constant 1 : i32
    %167 = vector.broadcast %c1_i32_70 : i32 to vector<1x256xi32>
    %168 = arith.addi %6, %167 : vector<1x256xi32>
    %c16_i32_71 = arith.constant 16 : i32
    %169 = vector.broadcast %c16_i32_71 : i32 to vector<1x256xi32>
    %170 = arith.cmpi slt, %168, %169 : vector<1x256xi32>
    %171 = arith.andi %166, %170 : vector<1x256xi1>
    %c1_i32_72 = arith.constant 1 : i32
    %172 = vector.broadcast %c1_i32_72 : i32 to vector<1x256xi32>
    %173 = arith.addi %8, %172 : vector<1x256xi32>
    %c0_i32_73 = arith.constant 0 : i32
    %174 = vector.broadcast %c0_i32_73 : i32 to vector<1x256xi32>
    %175 = arith.cmpi sge, %173, %174 : vector<1x256xi32>
    %176 = arith.andi %171, %175 : vector<1x256xi1>
    %c1_i32_74 = arith.constant 1 : i32
    %177 = vector.broadcast %c1_i32_74 : i32 to vector<1x256xi32>
    %178 = arith.addi %8, %177 : vector<1x256xi32>
    %c16_i32_75 = arith.constant 16 : i32
    %179 = vector.broadcast %c16_i32_75 : i32 to vector<1x256xi32>
    %180 = arith.cmpi slt, %178, %179 : vector<1x256xi32>
    %181 = arith.andi %176, %180 : vector<1x256xi1>
    %cst_76 = arith.constant 1.000000e+00 : f32
    %cst_77 = arith.constant 0.000000e+00 : f32
    %182 = vector.broadcast %cst_76 : f32 to vector<1x256xf32>
    %183 = vector.broadcast %cst_77 : f32 to vector<1x256xf32>
    %184 = arith.select %181, %182, %183 : vector<1x256xi1>, vector<1x256xf32>
    %cst_78 = arith.constant 0.000000e+00 : f32
    %185 = vector.broadcast %cst_78 : f32 to vector<8x256xf32>
    %c17_i32 = arith.constant 17 : i32
    %186 = tpu.dynamic_rotate %3 by %c17_i32 dim 1 : vector<8x256xf32>, i32 -> vector<8x256xf32>
    %187 = vector.broadcast %30 : vector<1x256xf32> to vector<8x256xf32>
    %188 = arith.mulf %186, %187 : vector<8x256xf32>
    %c0_79 = arith.constant 0 : index
    %c0_80 = arith.constant 0 : index
    %c0_81 = arith.constant 0 : index
    %c0_82 = arith.constant 0 : index
    %189 = vector.load %arg2[%c0_79, %c0_80, %c0_81, %c0_82] : memref<1x9x8x8xf32, #tpu.memory_space<vmem>>, vector<1x1x8x8xf32>
    %190 = vector.shape_cast %189 : vector<1x1x8x8xf32> to vector<8x8xf32>
    %cst_83 = arith.constant dense<0.000000e+00> : vector<8x256xf32>
    %191 = tpu.matmul %190, %188, %cst_83 {dimension_numbers = #tpu.dot_dimension_numbers<[1], [0], [0], [1], [0, 0, 1, 1], [], []>, precision = #tpu.contract_precision<fp32>} : vector<8x8xf32>, vector<8x256xf32>, vector<8x256xf32> -> vector<8x256xf32>
    %192 = arith.addf %185, %191 : vector<8x256xf32>
    %c16_i32_84 = arith.constant 16 : i32
    %193 = tpu.dynamic_rotate %3 by %c16_i32_84 dim 1 : vector<8x256xf32>, i32 -> vector<8x256xf32>
    %194 = vector.broadcast %52 : vector<1x256xf32> to vector<8x256xf32>
    %195 = arith.mulf %193, %194 : vector<8x256xf32>
    %c0_85 = arith.constant 0 : index
    %c1 = arith.constant 1 : index
    %c0_86 = arith.constant 0 : index
    %c0_87 = arith.constant 0 : index
    %196 = vector.load %arg2[%c0_85, %c1, %c0_86, %c0_87] : memref<1x9x8x8xf32, #tpu.memory_space<vmem>>, vector<1x1x8x8xf32>
    %197 = vector.shape_cast %196 : vector<1x1x8x8xf32> to vector<8x8xf32>
    %cst_88 = arith.constant dense<0.000000e+00> : vector<8x256xf32>
    %198 = tpu.matmul %197, %195, %cst_88 {dimension_numbers = #tpu.dot_dimension_numbers<[1], [0], [0], [1], [0, 0, 1, 1], [], []>, precision = #tpu.contract_precision<fp32>} : vector<8x8xf32>, vector<8x256xf32>, vector<8x256xf32> -> vector<8x256xf32>
    %199 = arith.addf %192, %198 : vector<8x256xf32>
    %c15_i32_89 = arith.constant 15 : i32
    %200 = tpu.dynamic_rotate %3 by %c15_i32_89 dim 1 : vector<8x256xf32>, i32 -> vector<8x256xf32>
    %201 = vector.broadcast %74 : vector<1x256xf32> to vector<8x256xf32>
    %202 = arith.mulf %200, %201 : vector<8x256xf32>
    %c0_90 = arith.constant 0 : index
    %c2 = arith.constant 2 : index
    %c0_91 = arith.constant 0 : index
    %c0_92 = arith.constant 0 : index
    %203 = vector.load %arg2[%c0_90, %c2, %c0_91, %c0_92] : memref<1x9x8x8xf32, #tpu.memory_space<vmem>>, vector<1x1x8x8xf32>
    %204 = vector.shape_cast %203 : vector<1x1x8x8xf32> to vector<8x8xf32>
    %cst_93 = arith.constant dense<0.000000e+00> : vector<8x256xf32>
    %205 = tpu.matmul %204, %202, %cst_93 {dimension_numbers = #tpu.dot_dimension_numbers<[1], [0], [0], [1], [0, 0, 1, 1], [], []>, precision = #tpu.contract_precision<fp32>} : vector<8x8xf32>, vector<8x256xf32>, vector<8x256xf32> -> vector<8x256xf32>
    %206 = arith.addf %199, %205 : vector<8x256xf32>
    %c1_i32_94 = arith.constant 1 : i32
    %207 = tpu.dynamic_rotate %3 by %c1_i32_94 dim 1 : vector<8x256xf32>, i32 -> vector<8x256xf32>
    %208 = vector.broadcast %96 : vector<1x256xf32> to vector<8x256xf32>
    %209 = arith.mulf %207, %208 : vector<8x256xf32>
    %c0_95 = arith.constant 0 : index
    %c3 = arith.constant 3 : index
    %c0_96 = arith.constant 0 : index
    %c0_97 = arith.constant 0 : index
    %210 = vector.load %arg2[%c0_95, %c3, %c0_96, %c0_97] : memref<1x9x8x8xf32, #tpu.memory_space<vmem>>, vector<1x1x8x8xf32>
    %211 = vector.shape_cast %210 : vector<1x1x8x8xf32> to vector<8x8xf32>
    %cst_98 = arith.constant dense<0.000000e+00> : vector<8x256xf32>
    %212 = tpu.matmul %211, %209, %cst_98 {dimension_numbers = #tpu.dot_dimension_numbers<[1], [0], [0], [1], [0, 0, 1, 1], [], []>, precision = #tpu.contract_precision<fp32>} : vector<8x8xf32>, vector<8x256xf32>, vector<8x256xf32> -> vector<8x256xf32>
    %213 = arith.addf %206, %212 : vector<8x256xf32>
    %c0_99 = arith.constant 0 : index
    %c4 = arith.constant 4 : index
    %c0_100 = arith.constant 0 : index
    %c0_101 = arith.constant 0 : index
    %214 = vector.load %arg2[%c0_99, %c4, %c0_100, %c0_101] : memref<1x9x8x8xf32, #tpu.memory_space<vmem>>, vector<1x1x8x8xf32>
    %215 = vector.shape_cast %214 : vector<1x1x8x8xf32> to vector<8x8xf32>
    %cst_102 = arith.constant dense<0.000000e+00> : vector<8x256xf32>
    %216 = tpu.matmul %215, %3, %cst_102 {dimension_numbers = #tpu.dot_dimension_numbers<[1], [0], [0], [1], [0, 0, 1, 1], [], []>, precision = #tpu.contract_precision<fp32>} : vector<8x8xf32>, vector<8x256xf32>, vector<8x256xf32> -> vector<8x256xf32>
    %217 = arith.addf %213, %216 : vector<8x256xf32>
    %c255_i32 = arith.constant 255 : i32
    %218 = tpu.dynamic_rotate %3 by %c255_i32 dim 1 : vector<8x256xf32>, i32 -> vector<8x256xf32>
    %219 = vector.broadcast %118 : vector<1x256xf32> to vector<8x256xf32>
    %220 = arith.mulf %218, %219 : vector<8x256xf32>
    %c0_103 = arith.constant 0 : index
    %c5 = arith.constant 5 : index
    %c0_104 = arith.constant 0 : index
    %c0_105 = arith.constant 0 : index
    %221 = vector.load %arg2[%c0_103, %c5, %c0_104, %c0_105] : memref<1x9x8x8xf32, #tpu.memory_space<vmem>>, vector<1x1x8x8xf32>
    %222 = vector.shape_cast %221 : vector<1x1x8x8xf32> to vector<8x8xf32>
    %cst_106 = arith.constant dense<0.000000e+00> : vector<8x256xf32>
    %223 = tpu.matmul %222, %220, %cst_106 {dimension_numbers = #tpu.dot_dimension_numbers<[1], [0], [0], [1], [0, 0, 1, 1], [], []>, precision = #tpu.contract_precision<fp32>} : vector<8x8xf32>, vector<8x256xf32>, vector<8x256xf32> -> vector<8x256xf32>
    %224 = arith.addf %217, %223 : vector<8x256xf32>
    %c241_i32 = arith.constant 241 : i32
    %225 = tpu.dynamic_rotate %3 by %c241_i32 dim 1 : vector<8x256xf32>, i32 -> vector<8x256xf32>
    %226 = vector.broadcast %140 : vector<1x256xf32> to vector<8x256xf32>
    %227 = arith.mulf %225, %226 : vector<8x256xf32>
    %c0_107 = arith.constant 0 : index
    %c6 = arith.constant 6 : index
    %c0_108 = arith.constant 0 : index
    %c0_109 = arith.constant 0 : index
    %228 = vector.load %arg2[%c0_107, %c6, %c0_108, %c0_109] : memref<1x9x8x8xf32, #tpu.memory_space<vmem>>, vector<1x1x8x8xf32>
    %229 = vector.shape_cast %228 : vector<1x1x8x8xf32> to vector<8x8xf32>
    %cst_110 = arith.constant dense<0.000000e+00> : vector<8x256xf32>
    %230 = tpu.matmul %229, %227, %cst_110 {dimension_numbers = #tpu.dot_dimension_numbers<[1], [0], [0], [1], [0, 0, 1, 1], [], []>, precision = #tpu.contract_precision<fp32>} : vector<8x8xf32>, vector<8x256xf32>, vector<8x256xf32> -> vector<8x256xf32>
    %231 = arith.addf %224, %230 : vector<8x256xf32>
    %c240_i32 = arith.constant 240 : i32
    %232 = tpu.dynamic_rotate %3 by %c240_i32 dim 1 : vector<8x256xf32>, i32 -> vector<8x256xf32>
    %233 = vector.broadcast %162 : vector<1x256xf32> to vector<8x256xf32>
    %234 = arith.mulf %232, %233 : vector<8x256xf32>
    %c0_111 = arith.constant 0 : index
    %c7 = arith.constant 7 : index
    %c0_112 = arith.constant 0 : index
    %c0_113 = arith.constant 0 : index
    %235 = vector.load %arg2[%c0_111, %c7, %c0_112, %c0_113] : memref<1x9x8x8xf32, #tpu.memory_space<vmem>>, vector<1x1x8x8xf32>
    %236 = vector.shape_cast %235 : vector<1x1x8x8xf32> to vector<8x8xf32>
    %cst_114 = arith.constant dense<0.000000e+00> : vector<8x256xf32>
    %237 = tpu.matmul %236, %234, %cst_114 {dimension_numbers = #tpu.dot_dimension_numbers<[1], [0], [0], [1], [0, 0, 1, 1], [], []>, precision = #tpu.contract_precision<fp32>} : vector<8x8xf32>, vector<8x256xf32>, vector<8x256xf32> -> vector<8x256xf32>
    %238 = arith.addf %231, %237 : vector<8x256xf32>
    %c239_i32 = arith.constant 239 : i32
    %239 = tpu.dynamic_rotate %3 by %c239_i32 dim 1 : vector<8x256xf32>, i32 -> vector<8x256xf32>
    %240 = vector.broadcast %184 : vector<1x256xf32> to vector<8x256xf32>
    %241 = arith.mulf %239, %240 : vector<8x256xf32>
    %c0_115 = arith.constant 0 : index
    %c8 = arith.constant 8 : index
    %c0_116 = arith.constant 0 : index
    %c0_117 = arith.constant 0 : index
    %242 = vector.load %arg2[%c0_115, %c8, %c0_116, %c0_117] : memref<1x9x8x8xf32, #tpu.memory_space<vmem>>, vector<1x1x8x8xf32>
    %243 = vector.shape_cast %242 : vector<1x1x8x8xf32> to vector<8x8xf32>
    %cst_118 = arith.constant dense<0.000000e+00> : vector<8x256xf32>
    %244 = tpu.matmul %243, %241, %cst_118 {dimension_numbers = #tpu.dot_dimension_numbers<[1], [0], [0], [1], [0, 0, 1, 1], [], []>, precision = #tpu.contract_precision<fp32>} : vector<8x8xf32>, vector<8x256xf32>, vector<8x256xf32> -> vector<8x256xf32>
    %245 = arith.addf %238, %244 : vector<8x256xf32>
    %c0_119 = arith.constant 0 : index
    %c0_120 = arith.constant 0 : index
    %c0_121 = arith.constant 0 : index
    %c0_122 = arith.constant 0 : index
    %246 = vector.load %arg3[%c0_119, %c0_120, %c0_121, %c0_122] : memref<1x2x8x1xf32, #tpu.memory_space<vmem>>, vector<1x1x8x1xf32>
    %247 = vector.shape_cast %246 : vector<1x1x8x1xf32> to vector<8x1xf32>
    %c0_123 = arith.constant 0 : index
    %c1_124 = arith.constant 1 : index
    %c0_125 = arith.constant 0 : index
    %c0_126 = arith.constant 0 : index
    %248 = vector.load %arg3[%c0_123, %c1_124, %c0_125, %c0_126] : memref<1x2x8x1xf32, #tpu.memory_space<vmem>>, vector<1x1x8x1xf32>
    %249 = vector.shape_cast %248 : vector<1x1x8x1xf32> to vector<8x1xf32>
    %cst_127 = arith.constant dense<0.000000e+00> : vector<8xf32>
    %250 = vector.multi_reduction <add>, %245, %cst_127 [1] : vector<8x256xf32> to vector<8xf32>
    %251 = vector.shape_cast %250 : vector<8xf32> to vector<8x1xf32>
    %252 = arith.mulf %245, %245 : vector<8x256xf32>
    %cst_128 = arith.constant dense<0.000000e+00> : vector<8xf32>
    %253 = vector.multi_reduction <add>, %252, %cst_128 [1] : vector<8x256xf32> to vector<8xf32>
    %254 = vector.shape_cast %253 : vector<8xf32> to vector<8x1xf32>
    %255 = vector.extract_strided_slice %251 {offsets = [0, 0], sizes = [4, 1], strides = [1, 1]} : vector<8x1xf32> to vector<4x1xf32>
    %256 = vector.extract_strided_slice %254 {offsets = [0, 0], sizes = [4, 1], strides = [1, 1]} : vector<8x1xf32> to vector<4x1xf32>
    %257 = vector.extract_strided_slice %251 {offsets = [4, 0], sizes = [4, 1], strides = [1, 1]} : vector<8x1xf32> to vector<4x1xf32>
    %258 = arith.addf %255, %257 : vector<4x1xf32>
    %259 = vector.extract_strided_slice %254 {offsets = [4, 0], sizes = [4, 1], strides = [1, 1]} : vector<8x1xf32> to vector<4x1xf32>
    %260 = arith.addf %256, %259 : vector<4x1xf32>
    %cst_129 = arith.constant 0.001953125 : f32
    %261 = vector.broadcast %cst_129 : f32 to vector<4x1xf32>
    %262 = arith.mulf %258, %261 : vector<4x1xf32>
    %cst_130 = arith.constant 0.001953125 : f32
    %263 = vector.broadcast %cst_130 : f32 to vector<4x1xf32>
    %264 = arith.mulf %260, %263 : vector<4x1xf32>
    %265 = arith.mulf %262, %262 : vector<4x1xf32>
    %266 = arith.subf %264, %265 : vector<4x1xf32>
    %cst_131 = arith.constant 0.000000e+00 : f32
    %267 = vector.broadcast %cst_131 : f32 to vector<4x1xf32>
    %268 = arith.maximumf %266, %267 : vector<4x1xf32>
    %269 = tpu.concatenate %262, %262 in 0 : vector<4x1xf32>, vector<4x1xf32> -> vector<8x1xf32>
    %270 = tpu.concatenate %268, %268 in 0 : vector<4x1xf32>, vector<4x1xf32> -> vector<8x1xf32>
    %cst_132 = arith.constant 9.99999974E-6 : f32
    %271 = vector.broadcast %cst_132 : f32 to vector<8x1xf32>
    %272 = arith.addf %270, %271 : vector<8x1xf32>
    %273 = math.rsqrt %272 : vector<8x1xf32>
    %274 = arith.mulf %247, %273 : vector<8x1xf32>
    %275 = arith.mulf %269, %274 : vector<8x1xf32>
    %276 = arith.subf %249, %275 : vector<8x1xf32>
    %277 = vector.broadcast %274 : vector<8x1xf32> to vector<8x256xf32>
    %278 = arith.mulf %245, %277 : vector<8x256xf32>
    %279 = vector.broadcast %276 : vector<8x1xf32> to vector<8x256xf32>
    %280 = arith.addf %278, %279 : vector<8x256xf32>
    %cst_133 = arith.constant 0.000000e+00 : f32
    %281 = vector.broadcast %cst_133 : f32 to vector<8x256xf32>
    %282 = arith.maximumf %280, %281 : vector<8x256xf32>
    %cst_134 = arith.constant 0.000000e+00 : f32
    %283 = vector.broadcast %cst_134 : f32 to vector<8x256xf32>
    %c17_i32_135 = arith.constant 17 : i32
    %284 = tpu.dynamic_rotate %282 by %c17_i32_135 dim 1 : vector<8x256xf32>, i32 -> vector<8x256xf32>
    %285 = vector.broadcast %30 : vector<1x256xf32> to vector<8x256xf32>
    %286 = arith.mulf %284, %285 : vector<8x256xf32>
    %c0_136 = arith.constant 0 : index
    %c0_137 = arith.constant 0 : index
    %c0_138 = arith.constant 0 : index
    %c0_139 = arith.constant 0 : index
    %287 = vector.load %arg4[%c0_136, %c0_137, %c0_138, %c0_139] : memref<1x9x8x8xf32, #tpu.memory_space<vmem>>, vector<1x1x8x8xf32>
    %288 = vector.shape_cast %287 : vector<1x1x8x8xf32> to vector<8x8xf32>
    %cst_140 = arith.constant dense<0.000000e+00> : vector<8x256xf32>
    %289 = tpu.matmul %288, %286, %cst_140 {dimension_numbers = #tpu.dot_dimension_numbers<[1], [0], [0], [1], [0, 0, 1, 1], [], []>, precision = #tpu.contract_precision<fp32>} : vector<8x8xf32>, vector<8x256xf32>, vector<8x256xf32> -> vector<8x256xf32>
    %290 = arith.addf %283, %289 : vector<8x256xf32>
    %c16_i32_141 = arith.constant 16 : i32
    %291 = tpu.dynamic_rotate %282 by %c16_i32_141 dim 1 : vector<8x256xf32>, i32 -> vector<8x256xf32>
    %292 = vector.broadcast %52 : vector<1x256xf32> to vector<8x256xf32>
    %293 = arith.mulf %291, %292 : vector<8x256xf32>
    %c0_142 = arith.constant 0 : index
    %c1_143 = arith.constant 1 : index
    %c0_144 = arith.constant 0 : index
    %c0_145 = arith.constant 0 : index
    %294 = vector.load %arg4[%c0_142, %c1_143, %c0_144, %c0_145] : memref<1x9x8x8xf32, #tpu.memory_space<vmem>>, vector<1x1x8x8xf32>
    %295 = vector.shape_cast %294 : vector<1x1x8x8xf32> to vector<8x8xf32>
    %cst_146 = arith.constant dense<0.000000e+00> : vector<8x256xf32>
    %296 = tpu.matmul %295, %293, %cst_146 {dimension_numbers = #tpu.dot_dimension_numbers<[1], [0], [0], [1], [0, 0, 1, 1], [], []>, precision = #tpu.contract_precision<fp32>} : vector<8x8xf32>, vector<8x256xf32>, vector<8x256xf32> -> vector<8x256xf32>
    %297 = arith.addf %290, %296 : vector<8x256xf32>
    %c15_i32_147 = arith.constant 15 : i32
    %298 = tpu.dynamic_rotate %282 by %c15_i32_147 dim 1 : vector<8x256xf32>, i32 -> vector<8x256xf32>
    %299 = vector.broadcast %74 : vector<1x256xf32> to vector<8x256xf32>
    %300 = arith.mulf %298, %299 : vector<8x256xf32>
    %c0_148 = arith.constant 0 : index
    %c2_149 = arith.constant 2 : index
    %c0_150 = arith.constant 0 : index
    %c0_151 = arith.constant 0 : index
    %301 = vector.load %arg4[%c0_148, %c2_149, %c0_150, %c0_151] : memref<1x9x8x8xf32, #tpu.memory_space<vmem>>, vector<1x1x8x8xf32>
    %302 = vector.shape_cast %301 : vector<1x1x8x8xf32> to vector<8x8xf32>
    %cst_152 = arith.constant dense<0.000000e+00> : vector<8x256xf32>
    %303 = tpu.matmul %302, %300, %cst_152 {dimension_numbers = #tpu.dot_dimension_numbers<[1], [0], [0], [1], [0, 0, 1, 1], [], []>, precision = #tpu.contract_precision<fp32>} : vector<8x8xf32>, vector<8x256xf32>, vector<8x256xf32> -> vector<8x256xf32>
    %304 = arith.addf %297, %303 : vector<8x256xf32>
    %c1_i32_153 = arith.constant 1 : i32
    %305 = tpu.dynamic_rotate %282 by %c1_i32_153 dim 1 : vector<8x256xf32>, i32 -> vector<8x256xf32>
    %306 = vector.broadcast %96 : vector<1x256xf32> to vector<8x256xf32>
    %307 = arith.mulf %305, %306 : vector<8x256xf32>
    %c0_154 = arith.constant 0 : index
    %c3_155 = arith.constant 3 : index
    %c0_156 = arith.constant 0 : index
    %c0_157 = arith.constant 0 : index
    %308 = vector.load %arg4[%c0_154, %c3_155, %c0_156, %c0_157] : memref<1x9x8x8xf32, #tpu.memory_space<vmem>>, vector<1x1x8x8xf32>
    %309 = vector.shape_cast %308 : vector<1x1x8x8xf32> to vector<8x8xf32>
    %cst_158 = arith.constant dense<0.000000e+00> : vector<8x256xf32>
    %310 = tpu.matmul %309, %307, %cst_158 {dimension_numbers = #tpu.dot_dimension_numbers<[1], [0], [0], [1], [0, 0, 1, 1], [], []>, precision = #tpu.contract_precision<fp32>} : vector<8x8xf32>, vector<8x256xf32>, vector<8x256xf32> -> vector<8x256xf32>
    %311 = arith.addf %304, %310 : vector<8x256xf32>
    %c0_159 = arith.constant 0 : index
    %c4_160 = arith.constant 4 : index
    %c0_161 = arith.constant 0 : index
    %c0_162 = arith.constant 0 : index
    %312 = vector.load %arg4[%c0_159, %c4_160, %c0_161, %c0_162] : memref<1x9x8x8xf32, #tpu.memory_space<vmem>>, vector<1x1x8x8xf32>
    %313 = vector.shape_cast %312 : vector<1x1x8x8xf32> to vector<8x8xf32>
    %cst_163 = arith.constant dense<0.000000e+00> : vector<8x256xf32>
    %314 = tpu.matmul %313, %282, %cst_163 {dimension_numbers = #tpu.dot_dimension_numbers<[1], [0], [0], [1], [0, 0, 1, 1], [], []>, precision = #tpu.contract_precision<fp32>} : vector<8x8xf32>, vector<8x256xf32>, vector<8x256xf32> -> vector<8x256xf32>
    %315 = arith.addf %311, %314 : vector<8x256xf32>
    %c255_i32_164 = arith.constant 255 : i32
    %316 = tpu.dynamic_rotate %282 by %c255_i32_164 dim 1 : vector<8x256xf32>, i32 -> vector<8x256xf32>
    %317 = vector.broadcast %118 : vector<1x256xf32> to vector<8x256xf32>
    %318 = arith.mulf %316, %317 : vector<8x256xf32>
    %c0_165 = arith.constant 0 : index
    %c5_166 = arith.constant 5 : index
    %c0_167 = arith.constant 0 : index
    %c0_168 = arith.constant 0 : index
    %319 = vector.load %arg4[%c0_165, %c5_166, %c0_167, %c0_168] : memref<1x9x8x8xf32, #tpu.memory_space<vmem>>, vector<1x1x8x8xf32>
    %320 = vector.shape_cast %319 : vector<1x1x8x8xf32> to vector<8x8xf32>
    %cst_169 = arith.constant dense<0.000000e+00> : vector<8x256xf32>
    %321 = tpu.matmul %320, %318, %cst_169 {dimension_numbers = #tpu.dot_dimension_numbers<[1], [0], [0], [1], [0, 0, 1, 1], [], []>, precision = #tpu.contract_precision<fp32>} : vector<8x8xf32>, vector<8x256xf32>, vector<8x256xf32> -> vector<8x256xf32>
    %322 = arith.addf %315, %321 : vector<8x256xf32>
    %c241_i32_170 = arith.constant 241 : i32
    %323 = tpu.dynamic_rotate %282 by %c241_i32_170 dim 1 : vector<8x256xf32>, i32 -> vector<8x256xf32>
    %324 = vector.broadcast %140 : vector<1x256xf32> to vector<8x256xf32>
    %325 = arith.mulf %323, %324 : vector<8x256xf32>
    %c0_171 = arith.constant 0 : index
    %c6_172 = arith.constant 6 : index
    %c0_173 = arith.constant 0 : index
    %c0_174 = arith.constant 0 : index
    %326 = vector.load %arg4[%c0_171, %c6_172, %c0_173, %c0_174] : memref<1x9x8x8xf32, #tpu.memory_space<vmem>>, vector<1x1x8x8xf32>
    %327 = vector.shape_cast %326 : vector<1x1x8x8xf32> to vector<8x8xf32>
    %cst_175 = arith.constant dense<0.000000e+00> : vector<8x256xf32>
    %328 = tpu.matmul %327, %325, %cst_175 {dimension_numbers = #tpu.dot_dimension_numbers<[1], [0], [0], [1], [0, 0, 1, 1], [], []>, precision = #tpu.contract_precision<fp32>} : vector<8x8xf32>, vector<8x256xf32>, vector<8x256xf32> -> vector<8x256xf32>
    %329 = arith.addf %322, %328 : vector<8x256xf32>
    %c240_i32_176 = arith.constant 240 : i32
    %330 = tpu.dynamic_rotate %282 by %c240_i32_176 dim 1 : vector<8x256xf32>, i32 -> vector<8x256xf32>
    %331 = vector.broadcast %162 : vector<1x256xf32> to vector<8x256xf32>
    %332 = arith.mulf %330, %331 : vector<8x256xf32>
    %c0_177 = arith.constant 0 : index
    %c7_178 = arith.constant 7 : index
    %c0_179 = arith.constant 0 : index
    %c0_180 = arith.constant 0 : index
    %333 = vector.load %arg4[%c0_177, %c7_178, %c0_179, %c0_180] : memref<1x9x8x8xf32, #tpu.memory_space<vmem>>, vector<1x1x8x8xf32>
    %334 = vector.shape_cast %333 : vector<1x1x8x8xf32> to vector<8x8xf32>
    %cst_181 = arith.constant dense<0.000000e+00> : vector<8x256xf32>
    %335 = tpu.matmul %334, %332, %cst_181 {dimension_numbers = #tpu.dot_dimension_numbers<[1], [0], [0], [1], [0, 0, 1, 1], [], []>, precision = #tpu.contract_precision<fp32>} : vector<8x8xf32>, vector<8x256xf32>, vector<8x256xf32> -> vector<8x256xf32>
    %336 = arith.addf %329, %335 : vector<8x256xf32>
    %c239_i32_182 = arith.constant 239 : i32
    %337 = tpu.dynamic_rotate %282 by %c239_i32_182 dim 1 : vector<8x256xf32>, i32 -> vector<8x256xf32>
    %338 = vector.broadcast %184 : vector<1x256xf32> to vector<8x256xf32>
    %339 = arith.mulf %337, %338 : vector<8x256xf32>
    %c0_183 = arith.constant 0 : index
    %c8_184 = arith.constant 8 : index
    %c0_185 = arith.constant 0 : index
    %c0_186 = arith.constant 0 : index
    %340 = vector.load %arg4[%c0_183, %c8_184, %c0_185, %c0_186] : memref<1x9x8x8xf32, #tpu.memory_space<vmem>>, vector<1x1x8x8xf32>
    %341 = vector.shape_cast %340 : vector<1x1x8x8xf32> to vector<8x8xf32>
    %cst_187 = arith.constant dense<0.000000e+00> : vector<8x256xf32>
    %342 = tpu.matmul %341, %339, %cst_187 {dimension_numbers = #tpu.dot_dimension_numbers<[1], [0], [0], [1], [0, 0, 1, 1], [], []>, precision = #tpu.contract_precision<fp32>} : vector<8x8xf32>, vector<8x256xf32>, vector<8x256xf32> -> vector<8x256xf32>
    %343 = arith.addf %336, %342 : vector<8x256xf32>
    %c0_188 = arith.constant 0 : index
    %c0_189 = arith.constant 0 : index
    %c0_190 = arith.constant 0 : index
    %c0_191 = arith.constant 0 : index
    %344 = vector.load %arg5[%c0_188, %c0_189, %c0_190, %c0_191] : memref<1x2x8x1xf32, #tpu.memory_space<vmem>>, vector<1x1x8x1xf32>
    %345 = vector.shape_cast %344 : vector<1x1x8x1xf32> to vector<8x1xf32>
    %c0_192 = arith.constant 0 : index
    %c1_193 = arith.constant 1 : index
    %c0_194 = arith.constant 0 : index
    %c0_195 = arith.constant 0 : index
    %346 = vector.load %arg5[%c0_192, %c1_193, %c0_194, %c0_195] : memref<1x2x8x1xf32, #tpu.memory_space<vmem>>, vector<1x1x8x1xf32>
    %347 = vector.shape_cast %346 : vector<1x1x8x1xf32> to vector<8x1xf32>
    %cst_196 = arith.constant dense<0.000000e+00> : vector<8xf32>
    %348 = vector.multi_reduction <add>, %343, %cst_196 [1] : vector<8x256xf32> to vector<8xf32>
    %349 = vector.shape_cast %348 : vector<8xf32> to vector<8x1xf32>
    %350 = arith.mulf %343, %343 : vector<8x256xf32>
    %cst_197 = arith.constant dense<0.000000e+00> : vector<8xf32>
    %351 = vector.multi_reduction <add>, %350, %cst_197 [1] : vector<8x256xf32> to vector<8xf32>
    %352 = vector.shape_cast %351 : vector<8xf32> to vector<8x1xf32>
    %353 = vector.extract_strided_slice %349 {offsets = [0, 0], sizes = [4, 1], strides = [1, 1]} : vector<8x1xf32> to vector<4x1xf32>
    %354 = vector.extract_strided_slice %352 {offsets = [0, 0], sizes = [4, 1], strides = [1, 1]} : vector<8x1xf32> to vector<4x1xf32>
    %355 = vector.extract_strided_slice %349 {offsets = [4, 0], sizes = [4, 1], strides = [1, 1]} : vector<8x1xf32> to vector<4x1xf32>
    %356 = arith.addf %353, %355 : vector<4x1xf32>
    %357 = vector.extract_strided_slice %352 {offsets = [4, 0], sizes = [4, 1], strides = [1, 1]} : vector<8x1xf32> to vector<4x1xf32>
    %358 = arith.addf %354, %357 : vector<4x1xf32>
    %cst_198 = arith.constant 0.001953125 : f32
    %359 = vector.broadcast %cst_198 : f32 to vector<4x1xf32>
    %360 = arith.mulf %356, %359 : vector<4x1xf32>
    %cst_199 = arith.constant 0.001953125 : f32
    %361 = vector.broadcast %cst_199 : f32 to vector<4x1xf32>
    %362 = arith.mulf %358, %361 : vector<4x1xf32>
    %363 = arith.mulf %360, %360 : vector<4x1xf32>
    %364 = arith.subf %362, %363 : vector<4x1xf32>
    %cst_200 = arith.constant 0.000000e+00 : f32
    %365 = vector.broadcast %cst_200 : f32 to vector<4x1xf32>
    %366 = arith.maximumf %364, %365 : vector<4x1xf32>
    %367 = tpu.concatenate %360, %360 in 0 : vector<4x1xf32>, vector<4x1xf32> -> vector<8x1xf32>
    %368 = tpu.concatenate %366, %366 in 0 : vector<4x1xf32>, vector<4x1xf32> -> vector<8x1xf32>
    %cst_201 = arith.constant 9.99999974E-6 : f32
    %369 = vector.broadcast %cst_201 : f32 to vector<8x1xf32>
    %370 = arith.addf %368, %369 : vector<8x1xf32>
    %371 = math.rsqrt %370 : vector<8x1xf32>
    %372 = arith.mulf %345, %371 : vector<8x1xf32>
    %373 = arith.mulf %367, %372 : vector<8x1xf32>
    %374 = arith.subf %347, %373 : vector<8x1xf32>
    %375 = vector.broadcast %372 : vector<8x1xf32> to vector<8x256xf32>
    %376 = arith.mulf %343, %375 : vector<8x256xf32>
    %377 = vector.broadcast %374 : vector<8x1xf32> to vector<8x256xf32>
    %378 = arith.addf %376, %377 : vector<8x256xf32>
    %379 = arith.addf %378, %3 : vector<8x256xf32>
    %cst_202 = arith.constant 0.000000e+00 : f32
    %380 = vector.broadcast %cst_202 : f32 to vector<8x256xf32>
    %381 = arith.maximumf %379, %380 : vector<8x256xf32>
    %c0_203 = arith.constant 0 : index
    %c0_204 = arith.constant 0 : index
    %382 = vector.load %arg7[%c0_203, %c0_204] : memref<8x256xf32, #tpu.memory_space<vmem>>, vector<8x256xf32>
    tpu.vector_store %arg7[%c0_203, %c0_204], %381 {strides = array<i32>} : memref<8x256xf32, #tpu.memory_space<vmem>>, vector<8x256xf32>,
    %c5_i32 = arith.constant 5 : i32
    %383 = arith.cmpi eq, %arg0, %c5_i32 : i32
    %384 = arith.extui %383 : i1 to i32
    %c0_i32_205 = arith.constant 0 : i32
    %385 = arith.cmpi ne, %384, %c0_i32_205 : i32
    scf.if %385 {
      %c0_206 = arith.constant 0 : index
      %c0_207 = arith.constant 0 : index
      %386 = vector.load %arg6[%c0_206, %c0_207] : memref<8x256xf32, #tpu.memory_space<vmem>>, vector<8x256xf32>
      tpu.vector_store %arg6[%c0_206, %c0_207], %381 {strides = array<i32>} : memref<8x256xf32, #tpu.memory_space<vmem>>, vector<8x256xf32>,
    } else {
    }
    return
  }
  func.func @transform_0(%arg0: i32) -> (i32, i32) {
    %c0_i32 = arith.constant 0 : i32
    %c0_i32_0 = arith.constant 0 : i32
    %c0_i32_1 = arith.constant 0 : i32
    return %c0_i32, %c0_i32_0 : i32, i32
  }
  func.func @transform_1(%arg0: i32) -> (i32, i32, i32, i32) {
    %c0_i32 = arith.constant 0 : i32
    %c0_i32_0 = arith.constant 0 : i32
    %c0_i32_1 = arith.constant 0 : i32
    %c0_i32_2 = arith.constant 0 : i32
    return %arg0, %c0_i32, %c0_i32_0, %c0_i32_1 : i32, i32, i32, i32
  }
  func.func @transform_2(%arg0: i32) -> (i32, i32, i32, i32) {
    %c0_i32 = arith.constant 0 : i32
    %c0_i32_0 = arith.constant 0 : i32
    %c0_i32_1 = arith.constant 0 : i32
    %c0_i32_2 = arith.constant 0 : i32
    return %arg0, %c0_i32, %c0_i32_0, %c0_i32_1 : i32, i32, i32, i32
  }
  func.func @transform_3(%arg0: i32) -> (i32, i32, i32, i32) {
    %c0_i32 = arith.constant 0 : i32
    %c0_i32_0 = arith.constant 0 : i32
    %c0_i32_1 = arith.constant 0 : i32
    %c0_i32_2 = arith.constant 0 : i32
    return %arg0, %c0_i32, %c0_i32_0, %c0_i32_1 : i32, i32, i32, i32
  }
  func.func @transform_4(%arg0: i32) -> (i32, i32, i32, i32) {
    %c0_i32 = arith.constant 0 : i32
    %c0_i32_0 = arith.constant 0 : i32
    %c0_i32_1 = arith.constant 0 : i32
    %c0_i32_2 = arith.constant 0 : i32
    return %arg0, %c0_i32, %c0_i32_0, %c0_i32_1 : i32, i32, i32, i32
  }
  func.func @transform_5(%arg0: i32) -> (i32, i32) {
    %c0_i32 = arith.constant 0 : i32
    %c0_i32_0 = arith.constant 0 : i32
    %c0_i32_1 = arith.constant 0 : i32
    return %c0_i32, %c0_i32_0 : i32, i32
  }
}

</mosaic_0001>

<llo_original>
// kernel: tpu_custom_call.1
$region0: #{tpu_custom_call.1}
  #allocation0 [shape = 'u32[]', space=smem, size = 0x4, offset = 0x4, fixed_abs, tag = 'smem constant byte address 0x4 - core index']
  #allocation1 [shape = 'u32[72,128]{1,0:T(1,128)}', space=vmem, size = 0x9000, scoped, tag = 'internal scratch']
  #allocation2 [shape = 'f32[8,256]{1,0:T(8,128)}', space=vmem, size = 0x2000, scoped, tag = 'scratch operand']
  %s0 = inlined_call_operand.vmem [shape: f32[8,256], index: 0, kind: input, shape index: {}]
  %s1 = inlined_call_operand.vmem [shape: f32[6,9,8,8], index: 1, kind: input, shape index: {}]
  %s2 = inlined_call_operand.vmem [shape: f32[6,2,8,1], index: 2, kind: input, shape index: {}]
  %s3 = inlined_call_operand.vmem [shape: f32[6,9,8,8], index: 3, kind: input, shape index: {}]
  %s4 = inlined_call_operand.vmem [shape: f32[6,2,8,1], index: 4, kind: input, shape index: {}]
  %s5 = inlined_call_operand.hbm [shape: f32[8,256], index: 5, kind: output, shape index: {}]
  %s6 = sld [smem:[#allocation0]]
  $region61: #{tpu_custom_call.1} parent=0
    _
  %s8 = ssub.s32 1, %s6
  %s9 = scalar_select 0, %s8, %s6
  $region1: #{tpu_custom_call.1} parent=0
    #allocation3 [shape = 'u8[8192]{0}', space=vmem, size = 0x2000, scoped, tag = 'output window, operand 0, single buffered']
    #allocation4 [shape = 's32[2]{0}', space=sflag, size = 0x8, scoped, tag = 'scoped memory for tpu_custom_call.1']
    %10 = vsyncpa [#allocation4], 0
    loop: start=0, step=1, limit=8
    $region2: #{tpu_custom_call.1} parent=1 // loop_pre_header
      _
    $region3: #{tpu_custom_call.1} parent=1 // loop_header
      %s12 = sphi 0, %s16
      %p13 = scmp.ge.s32.totalorder %s12, 8
      %s20 = sphi 0, %s20
      %s22 = sphi 0, %s20
      %s23 = sphi 0, %s22
      %s37 = sphi 0, %s23
      %s43 = sphi 0, %s45
      %s46 = sphi 0, %s43
      %s47 = sphi 0, %s46
      %s63 = sphi 0, %s47
      %s69 = sphi 0, %s71
      %s72 = sphi 0, %s69
      %s73 = sphi 0, %s72
      %s89 = sphi 0, %s73
      %s95 = sphi 0, %s97
      %s98 = sphi 0, %s95
      %s99 = sphi 0, %s98
      %s115 = sphi 0, %s99
      %s121 = sphi 0, %s123
      %s124 = sphi 0, %s121
      %s125 = sphi 0, %s124
      %s141 = sphi 0, %s125
      %s145 = sphi 0, %s145
      %s147 = sphi 0, %s145
      %s148 = sphi 0, %s147
      %s162 = sphi 0, %s148
    $region4: #{tpu_custom_call.1} parent=1 // loop_header_branch
      %15 = sbr.rel (%p13) target = $region8
    $region5: #{tpu_custom_call.1} parent=1 // loop_body
      %s17 = ssub.s32 %s12, 1
      %s18 = ssub.s32 %s12, 2
      %s19 = sadd.s32 %s12, 1
      %s21 = sadd.s32 %s20, 1
      %p24 = scmp.eq.s32.totalorder %s12, 5
      %p25 = scmp.ne.s32.totalorder %s20, %s22
      %p26 = scmp.eq.s32.totalorder %s12, 0
      %p27 = por %p25, %p26
      %p28 = scmp.ne.s32.totalorder %s20, %s22
      %p29 = scmp.eq.s32.totalorder %s17, 5
      %p30 = por %p28, %p29
      %p31 = scmp.ne.s32.totalorder %s22, %s23
      %p32 = scmp.eq.s32.totalorder %s17, 0
      %p33 = por %p31, %p32
      %p34 = scmp.ne.s32.totalorder %s22, %s23
      %p35 = scmp.eq.s32.totalorder %s18, 5
      %p36 = por %p34, %p35
      %p38 = scmp.ne.s32.totalorder %s23, %s37
      %p39 = scmp.eq.s32.totalorder %s18, 0
      %p40 = por %p38, %p39
      %s41 = ssub.s32 %s12, %s19
      %p42 = scmp.eq.s32.totalorder %s41, 0
      %s44 = sadd.s32 %s43, 1
      %s45 = scalar_select %p42, %s43, %s44
      %p48 = pneg %p42
      %p49 = scmp.eq.s32.totalorder %s12, 5
      %p50 = por %p48, %p49
      %p51 = scmp.ne.s32.totalorder %s43, %s46
      %p52 = scmp.eq.s32.totalorder %s12, 0
      %p53 = por %p51, %p52
      %p54 = scmp.ne.s32.totalorder %s43, %s46
      %p55 = scmp.eq.s32.totalorder %s17, 5
      %p56 = por %p54, %p55
      %p57 = scmp.ne.s32.totalorder %s46, %s47
      %p58 = scmp.eq.s32.totalorder %s17, 0
      %p59 = por %p57, %p58
      %p60 = scmp.ne.s32.totalorder %s46, %s47
      %p61 = scmp.eq.s32.totalorder %s18, 5
      %p62 = por %p60, %p61
      %p64 = scmp.ne.s32.totalorder %s47, %s63
      %p65 = scmp.eq.s32.totalorder %s18, 0
      %p66 = por %p64, %p65
      %s67 = ssub.s32 %s12, %s19
      %p68 = scmp.eq.s32.totalorder %s67, 0
      %s70 = sadd.s32 %s69, 1
      %s71 = scalar_select %p68, %s69, %s70
      %p74 = pneg %p68
      %p75 = scmp.eq.s32.totalorder %s12, 5
      %p76 = por %p74, %p75
      %p77 = scmp.ne.s32.totalorder %s69, %s72
      %p78 = scmp.eq.s32.totalorder %s12, 0
      %p79 = por %p77, %p78
      %p80 = scmp.ne.s32.totalorder %s69, %s72
      %p81 = scmp.eq.s32.totalorder %s17, 5
      %p82 = por %p80, %p81
      %p83 = scmp.ne.s32.totalorder %s72, %s73
      %p84 = scmp.eq.s32.totalorder %s17, 0
      %p85 = por %p83, %p84
      %p86 = scmp.ne.s32.totalorder %s72, %s73
      %p87 = scmp.eq.s32.totalorder %s18, 5
      %p88 = por %p86, %p87
      %p90 = scmp.ne.s32.totalorder %s73, %s89
      %p91 = scmp.eq.s32.totalorder %s18, 0
      %p92 = por %p90, %p91
      %s93 = ssub.s32 %s12, %s19
      %p94 = scmp.eq.s32.totalorder %s93, 0
      %s96 = sadd.s32 %s95, 1
      %s97 = scalar_select %p94, %s95, %s96
      %p100 = pneg %p94
      %p101 = scmp.eq.s32.totalorder %s12, 5
      %p102 = por %p100, %p101
      %p103 = scmp.ne.s32.totalorder %s95, %s98
      %p104 = scmp.eq.s32.totalorder %s12, 0
      %p105 = por %p103, %p104
      %p106 = scmp.ne.s32.totalorder %s95, %s98
      %p107 = scmp.eq.s32.totalorder %s17, 5
      %p108 = por %p106, %p107
      %p109 = scmp.ne.s32.totalorder %s98, %s99
      %p110 = scmp.eq.s32.totalorder %s17, 0
      %p111 = por %p109, %p110
      %p112 = scmp.ne.s32.totalorder %s98, %s99
      %p113 = scmp.eq.s32.totalorder %s18, 5
      %p114 = por %p112, %p113
      %p116 = scmp.ne.s32.totalorder %s99, %s115
      %p117 = scmp.eq.s32.totalorder %s18, 0
      %p118 = por %p116, %p117
      %s119 = ssub.s32 %s12, %s19
      %p120 = scmp.eq.s32.totalorder %s119, 0
      %s122 = sadd.s32 %s121, 1
      %s123 = scalar_select %p120, %s121, %s122
      %p126 = pneg %p120
      %p127 = scmp.eq.s32.totalorder %s12, 5
      %p128 = por %p126, %p127
      %p129 = scmp.ne.s32.totalorder %s121, %s124
      %p130 = scmp.eq.s32.totalorder %s12, 0
      %p131 = por %p129, %p130
      %p132 = scmp.ne.s32.totalorder %s121, %s124
      %p133 = scmp.eq.s32.totalorder %s17, 5
      %p134 = por %p132, %p133
      %p135 = scmp.ne.s32.totalorder %s124, %s125
      %p136 = scmp.eq.s32.totalorder %s17, 0
      %p137 = por %p135, %p136
      %p138 = scmp.ne.s32.totalorder %s124, %s125
      %p139 = scmp.eq.s32.totalorder %s18, 5
      %p140 = por %p138, %p139
      %p142 = scmp.ne.s32.totalorder %s125, %s141
      %p143 = scmp.eq.s32.totalorder %s18, 0
      %p144 = por %p142, %p143
      %s146 = sadd.s32 %s145, 1
      %p149 = scmp.eq.s32.totalorder %s12, 5
      %p150 = scmp.ne.s32.totalorder %s145, %s147
      %p151 = scmp.eq.s32.totalorder %s12, 0
      %p152 = por %p150, %p151
      %p153 = scmp.ne.s32.totalorder %s145, %s147
      %p154 = scmp.eq.s32.totalorder %s17, 5
      %p155 = por %p153, %p154
      %p156 = scmp.ne.s32.totalorder %s147, %s148
      %p157 = scmp.eq.s32.totalorder %s17, 0
      %p158 = por %p156, %p157
      %p159 = scmp.ne.s32.totalorder %s147, %s148
      %p160 = scmp.eq.s32.totalorder %s18, 5
      %p161 = por %p159, %p160
      %p163 = scmp.ne.s32.totalorder %s148, %s162
      %p164 = scmp.eq.s32.totalorder %s18, 0
      %p165 = por %p163, %p164
      %p166 = scmp.le.s32.totalorder 1, %s12
      %p167 = scmp.lt.s32.totalorder %s12, 7
      %p168 = pnand %p166, %p167
      %p169 = pneg %p168
      // Predicated region
      $region9: #{tpu_custom_call.1} parent=5 // pred_check
        _
      $region10: #{tpu_custom_call.1} parent=5 // pred_check_branch
        %171 = sbr.rel (%p168) target = $region12
      $region11: #{tpu_custom_call.1} parent=5 // pred_region
        %s172 = ssub.s32 %s12, 1
        // Predicated region
        $region13: #{tpu_custom_call.1} parent=11 // pred_check
          %p173 = pneg %p33
        $region14: #{tpu_custom_call.1} parent=11 // pred_check_branch
          %175 = sbr.rel (%p173) target = $region16
        $region15: #{tpu_custom_call.1} parent=11 // pred_region
          _
        $region16: #{tpu_custom_call.1} parent=11 // pred_fallthru
          _
      $region12: #{tpu_custom_call.1} parent=5 // pred_fallthru
        _
      %p176 = scmp.lt.s32.totalorder %s12, 6
      // Predicated region
      $region17: #{tpu_custom_call.1} parent=5 // pred_check
        %p177 = pneg %p176
      $region18: #{tpu_custom_call.1} parent=5 // pred_check_branch
        %179 = sbr.rel (%p177) target = $region20
      $region19: #{tpu_custom_call.1} parent=5 // pred_region
        // Predicated region
        $region21: #{tpu_custom_call.1} parent=19 // pred_check
          %p180 = pneg %p53
        $region22: #{tpu_custom_call.1} parent=19 // pred_check_branch
          %182 = sbr.rel (%p180) target = $region24
        $region23: #{tpu_custom_call.1} parent=19 // pred_region
          %p183 = scmp.lt.s32.totalorder %s12, 5
          %s184 = scalar_select %p183, %s12, 5
          %s185 = smul.addr %s184, 9
          %s186 = smul.addr %s185, 8
          %s187 = scalar_lea.vmem %s1, %s186
        $region24: #{tpu_custom_call.1} parent=19 // pred_fallthru
          _
        // Predicated region
        $region25: #{tpu_custom_call.1} parent=19 // pred_check
          %p188 = pneg %p79
        $region26: #{tpu_custom_call.1} parent=19 // pred_check_branch
          %190 = sbr.rel (%p188) target = $region28
        $region27: #{tpu_custom_call.1} parent=19 // pred_region
          %p191 = scmp.lt.s32.totalorder %s12, 5
          %s192 = scalar_select %p191, %s12, 5
          %s193 = smul.addr %s192, 2
          %s194 = smul.addr %s193, 8
          %s195 = scalar_lea.vmem %s2, %s194
        $region28: #{tpu_custom_call.1} parent=19 // pred_fallthru
          _
        // Predicated region
        $region29: #{tpu_custom_call.1} parent=19 // pred_check
          %p196 = pneg %p105
        $region30: #{tpu_custom_call.1} parent=19 // pred_check_branch
          %198 = sbr.rel (%p196) target = $region32
        $region31: #{tpu_custom_call.1} parent=19 // pred_region
          %p199 = scmp.lt.s32.totalorder %s12, 5
          %s200 = scalar_select %p199, %s12, 5
          %s201 = smul.addr %s200, 9
          %s202 = smul.addr %s201, 8
          %s203 = scalar_lea.vmem %s3, %s202
        $region32: #{tpu_custom_call.1} parent=19 // pred_fallthru
          _
        // Predicated region
        $region33: #{tpu_custom_call.1} parent=19 // pred_check
          %p204 = pneg %p131
        $region34: #{tpu_custom_call.1} parent=19 // pred_check_branch
          %206 = sbr.rel (%p204) target = $region36
        $region35: #{tpu_custom_call.1} parent=19 // pred_region
          %p207 = scmp.lt.s32.totalorder %s12, 5
          %s208 = scalar_select %p207, %s12, 5
          %s209 = smul.addr %s208, 2
          %s210 = smul.addr %s209, 8
          %s211 = scalar_lea.vmem %s4, %s210
        $region36: #{tpu_custom_call.1} parent=19 // pred_fallthru
          _
      $region20: #{tpu_custom_call.1} parent=5 // pred_fallthru
        _
      %p212 = scmp.le.s32.totalorder 1, %s12
      %p213 = scmp.lt.s32.totalorder %s12, 7
      %p214 = pnand %p212, %p213
      %p215 = pneg %p214
      // Predicated region
      $region37: #{tpu_custom_call.1} parent=5 // pred_check
        _
      $region38: #{tpu_custom_call.1} parent=5 // pred_check_branch
        %217 = sbr.rel (%p214) target = $region40
      $region39: #{tpu_custom_call.1} parent=5 // pred_region
        %s218 = ssub.s32 %s12, 1
        %p219 = pneg %p33
        %p220 = pneg %p30
        %p221 = scmp.lt.s32.totalorder %s17, 5
        %s222 = scalar_select %p221, %s17, 5
        %s223 = smul.addr %s222, 9
        %s224 = smul.addr %s223, 8
        %s225 = scalar_lea.vmem %s1, %s224
        %p226 = pneg %p59
        %p227 = pneg %p56
        %p228 = scmp.lt.s32.totalorder %s17, 5
        %s229 = scalar_select %p228, %s17, 5
        %s230 = smul.addr %s229, 2
        %s231 = smul.addr %s230, 8
        %s232 = scalar_lea.vmem %s2, %s231
        %p233 = pneg %p85
        %p234 = pneg %p82
        %p235 = scmp.lt.s32.totalorder %s17, 5
        %s236 = scalar_select %p235, %s17, 5
        %s237 = smul.addr %s236, 9
        %s238 = smul.addr %s237, 8
        %s239 = scalar_lea.vmem %s3, %s238
        %p240 = pneg %p111
        %p241 = pneg %p108
        %p242 = scmp.lt.s32.totalorder %s17, 5
        %s243 = scalar_select %p242, %s17, 5
        %s244 = smul.addr %s243, 2
        %s245 = smul.addr %s244, 8
        %s246 = scalar_lea.vmem %s4, %s245
        %p247 = pneg %p137
        %p248 = pneg %p134
        %p249 = pneg %p158
        %p250 = pneg %p155
        %p251 = scmp.lt.s32.totalorder %s17, 5
        %s252 = scalar_select %p251, %s17, 5
        %s253 = smul.addr %s252, 9
        %s254 = smul.addr %s253, 8
        %s255 = scalar_lea.vmem %s1, %s254
        %p256 = scmp.lt.s32.totalorder %s17, 5
        %s257 = scalar_select %p256, %s17, 5
        %s258 = smul.addr %s257, 2
        %s259 = smul.addr %s258, 8
        %s260 = scalar_lea.vmem %s2, %s259
        %p261 = scmp.lt.s32.totalorder %s17, 5
        %s262 = scalar_select %p261, %s17, 5
        %s263 = smul.addr %s262, 9
        %s264 = smul.addr %s263, 8
        %s265 = scalar_lea.vmem %s3, %s264
        %p266 = scmp.lt.s32.totalorder %s17, 5
        %s267 = scalar_select %p266, %s17, 5
        %s268 = smul.addr %s267, 2
        %s269 = smul.addr %s268, 8
        %s270 = scalar_lea.vmem %s4, %s269
        %p271 = scmp.eq.s32.totalorder %s17, 0
        // Predicated region
        $region41: #{tpu_custom_call.1} parent=39 // pred_check
          %p272 = pneg %p271
        $region42: #{tpu_custom_call.1} parent=39 // pred_check_branch
          %274 = sbr.rel (%p272) target = $region44
        $region43: #{tpu_custom_call.1} parent=39 // pred_region
          %v275 = vld [vmem:[%s0] sm:$0xff]
          %v276 = vld [vmem:[%s0 + $0x8] sm:$0xff]
          %277 = vst [vmem:[#allocation2] sm:$0xff] %v275
          %278 = vst [vmem:[#allocation2 + $0x8] sm:$0xff] %v276
        $region44: #{tpu_custom_call.1} parent=39 // pred_fallthru
          _
        %v279 = vld [vmem:[#allocation2] sm:$0xff]
        %v280 = vld [vmem:[#allocation2 + $0x8] sm:$0xff]
        %v281 = vlaneseq
        %v282 = vand.u32 %v281, 127
        %v283 = vadd.s32 %v282, 128
        %v284 = vshra.s32 %v282, 4
        %v285 = vshra.s32 %v283, 4
        %v286 = vand.u32 %v282, 15
        %v287 = vand.u32 %v283, 15
        %v288 = vadd.s32 %v284, 4294967295
        %v289 = vadd.s32 %v285, 4294967295
        %vm290 = vcmp.ge.s32.totalorder %v288, 0
        %vm291 = vcmp.ge.s32.totalorder %v289, 0
        %vm292 = vcmp.lt.s32.totalorder %v288, 16
        %vm293 = vcmp.lt.s32.totalorder %v289, 16
        %vm294 = vmand %vm290, %vm292
        %vm295 = vmand %vm291, %vm293
        %v296 = vadd.s32 %v286, 4294967295
        %v297 = vadd.s32 %v287, 4294967295
        %vm298 = vcmp.ge.s32.totalorder %v296, 0
        %vm299 = vcmp.ge.s32.totalorder %v297, 0
        %vm300 = vmand %vm294, %vm298
        %vm301 = vmand %vm295, %vm299
        %vm302 = vcmp.lt.s32.totalorder %v296, 16
        %vm303 = vcmp.lt.s32.totalorder %v297, 16
        %vm304 = vmand %vm300, %vm302
        %vm305 = vmand %vm301, %vm303
        %v306 = vsel %vm304, 1.0, 0.0
        %v307 = vsel %vm305, 1.0, 0.0
        %vm308 = vcmp.ge.s32.totalorder %v286, 0
        %vm309 = vcmp.ge.s32.totalorder %v287, 0
        %vm310 = vmand %vm294, %vm308
        %vm311 = vmand %vm295, %vm309
        %vm312 = vcmp.lt.s32.totalorder %v286, 16
        %vm313 = vcmp.lt.s32.totalorder %v287, 16
        %vm314 = vmand %vm310, %vm312
        %vm315 = vmand %vm311, %vm313
        %v316 = vsel %vm314, 1.0, 0.0
        %v317 = vsel %vm315, 1.0, 0.0
        %v318 = vadd.s32 %v286, 1
        %v319 = vadd.s32 %v287, 1
        %vm320 = vcmp.ge.s32.totalorder %v318, 0
        %vm321 = vcmp.ge.s32.totalorder %v319, 0
        %vm322 = vmand %vm294, %vm320
        %vm323 = vmand %vm295, %vm321
        %vm324 = vcmp.lt.s32.totalorder %v318, 16
        %vm325 = vcmp.lt.s32.totalorder %v319, 16
        %vm326 = vmand %vm322, %vm324
        %vm327 = vmand %vm323, %vm325
        %v328 = vsel %vm326, 1.0, 0.0
        %v329 = vsel %vm327, 1.0, 0.0
        %vm330 = vcmp.ge.s32.totalorder %v284, 0
        %vm331 = vcmp.ge.s32.totalorder %v285, 0
        %vm332 = vcmp.lt.s32.totalorder %v284, 16
        %vm333 = vcmp.lt.s32.totalorder %v285, 16
        %vm334 = vmand %vm330, %vm332
        %vm335 = vmand %vm331, %vm333
        %vm336 = vmand %vm334, %vm298
        %vm337 = vmand %vm335, %vm299
        %vm338 = vmand %vm336, %vm302
        %vm339 = vmand %vm337, %vm303
        %v340 = vsel %vm338, 1.0, 0.0
        %v341 = vsel %vm339, 1.0, 0.0
        %vm342 = vmand %vm334, %vm320
        %vm343 = vmand %vm335, %vm321
        %vm344 = vmand %vm342, %vm324
        %vm345 = vmand %vm343, %vm325
        %v346 = vsel %vm344, 1.0, 0.0
        %v347 = vsel %vm345, 1.0, 0.0
        %v348 = vadd.s32 %v284, 1
        %v349 = vadd.s32 %v285, 1
        %vm350 = vcmp.ge.s32.totalorder %v348, 0
        %vm351 = vcmp.ge.s32.totalorder %v349, 0
        %vm352 = vcmp.lt.s32.totalorder %v348, 16
        %vm353 = vcmp.lt.s32.totalorder %v349, 16
        %vm354 = vmand %vm350, %vm352
        %vm355 = vmand %vm351, %vm353
        %vm356 = vmand %vm354, %vm298
        %vm357 = vmand %vm355, %vm299
        %vm358 = vmand %vm356, %vm302
        %vm359 = vmand %vm357, %vm303
        %v360 = vsel %vm358, 1.0, 0.0
        %v361 = vsel %vm359, 1.0, 0.0
        %vm362 = vmand %vm354, %vm308
        %vm363 = vmand %vm355, %vm309
        %vm364 = vmand %vm362, %vm312
        %vm365 = vmand %vm363, %vm313
        %v366 = vsel %vm364, 1.0, 0.0
        %v367 = vsel %vm365, 1.0, 0.0
        %vm368 = vmand %vm354, %vm320
        %vm369 = vmand %vm355, %vm321
        %vm370 = vmand %vm368, %vm324
        %vm371 = vmand %vm369, %vm325
        %v372 = vsel %vm370, 1.0, 0.0
        %v373 = vsel %vm371, 1.0, 0.0
        %374 = vrot.lane.b32.xlu0 %v279, 17
        %v375 = vpop.permute.xlu0 %374
        %376 = vrot.lane.b32.xlu0 %v280, 17
        %v377 = vpop.permute.xlu0 %376
        %vm378 = vcmp.lt.s32.totalorder %v282, 17
        %v379 = vsel %vm378, %v375, %v377
        %v380 = vsel %vm378, %v377, %v375
        %v381 = vmul.f32 %v380, %v306
        %v382 = vmul.f32 %v379, %v307
        %v383 = vld [vmem:[%s255] sm:$0xff]
        %384 = vrot.lane.b32.xlu0 %v279, 16
        %v385 = vpop.permute.xlu0 %384
        %386 = vrot.lane.b32.xlu0 %v280, 16
        %v387 = vpop.permute.xlu0 %386
        %vm388 = vcmp.lt.s32.totalorder %v282, 16
        %v389 = vsel %vm388, %v385, %v387
        %v390 = vsel %vm388, %v387, %v385
        %v391 = vmul.f32 %v390, %v316
        %v392 = vmul.f32 %v389, %v317
        %s393 = scalar_lea.vmem %s255, 8
        %v394 = vld [vmem:[%s393] sm:$0xff]
        %vm395 = vcmask 64512
        %v397 = vsel %vm395, %v394, 0
        %399 = vmatpush.msra.mxu0 0.0
        %400 = vmatpush.msra.mxu0 0.0
        %401 = vmatpush.msra.mxu0 0.0
        %402 = vmatpush.msra.mxu0 0.0
        %403 = vmatpush.msra.mxu0 0.0
        %404 = vmatpush.msra.mxu0 0.0
        %405 = vmatpush.msra.mxu0 0.0
        %406 = vmatpush.msra.mxu0 0.0
        %407 = vmatpush.msra.mxu0 0.0
        %408 = vmatpush.msra.mxu0 0.0
        %409 = vmatpush.msra.mxu0 0.0
        %410 = vmatpush.msra.mxu0 0.0
        %411 = vmatpush.msra.mxu0 0.0
        %412 = vmatpush.msra.mxu0 0.0
        %413 = vmatpush.msra.mxu0 0.0
        %v414 = vand.u32 %v391, 4294901760
        %415 = vmatpush.msra.mxu0 %v414
        %v416 = vand.u32 %v397, 4294901760
        %v417 = vsub.f32 %v397, %v416
        %v418 = vand.u32 %v417, 4294901760
        %v419 = vsub.f32 %v417, %v418
        %v420 = vand.u32 %v419, 4294901760
        %421 = vmatmul.f32.gmra.mxu0 %v420
        %v422 = vpop.f32.mrf.mxu0
        %v423 = vadd.f32 0.0, %v422
        %424 = vdwg.mxu0
        %425 = vmatpush.msra.mxu0 0.0
        %426 = vmatpush.msra.mxu0 0.0
        %427 = vmatpush.msra.mxu0 0.0
        %428 = vmatpush.msra.mxu0 0.0
        %429 = vmatpush.msra.mxu0 0.0
        %430 = vmatpush.msra.mxu0 0.0
        %431 = vmatpush.msra.mxu0 0.0
        %432 = vmatpush.msra.mxu0 0.0
        %433 = vmatpush.msra.mxu0 0.0
        %434 = vmatpush.msra.mxu0 0.0
        %435 = vmatpush.msra.mxu0 0.0
        %436 = vmatpush.msra.mxu0 0.0
        %437 = vmatpush.msra.mxu0 0.0
        %438 = vmatpush.msra.mxu0 0.0
        %439 = vmatpush.msra.mxu0 0.0
        %v440 = vand.u32 %v391, 4294901760
        %v441 = vsub.f32 %v391, %v440
        %v442 = vand.u32 %v441, 4294901760
        %v443 = vsub.f32 %v441, %v442
        %v444 = vand.u32 %v443, 4294901760
        %445 = vmatpush.msra.mxu0 %v444
        %v446 = vand.u32 %v397, 4294901760
        %447 = vmatmul.f32.gmra.mxu0 %v446
        %v448 = vpop.f32.mrf.mxu0
        %v449 = vadd.f32 %v423, %v448
        %450 = vdwg.mxu0
        %451 = vmatpush.msra.mxu0 0.0
        %452 = vmatpush.msra.mxu0 0.0
        %453 = vmatpush.msra.mxu0 0.0
        %454 = vmatpush.msra.mxu0 0.0
        %455 = vmatpush.msra.mxu0 0.0
        %456 = vmatpush.msra.mxu0 0.0
        %457 = vmatpush.msra.mxu0 0.0
        %458 = vmatpush.msra.mxu0 0.0
        %459 = vmatpush.msra.mxu0 0.0
        %460 = vmatpush.msra.mxu0 0.0
        %461 = vmatpush.msra.mxu0 0.0
        %462 = vmatpush.msra.mxu0 0.0
        %463 = vmatpush.msra.mxu0 0.0
        %464 = vmatpush.msra.mxu0 0.0
        %465 = vmatpush.msra.mxu0 0.0
        %v466 = vand.u32 %v391, 4294901760
        %v467 = vsub.f32 %v391, %v466
        %468 = vmatpush.msra.mxu0 %v467
        %v469 = vand.u32 %v397, 4294901760
        %v470 = vsub.f32 %v397, %v469
        %471 = vmatmul.f32.gmra.mxu0 %v470
        %v472 = vpop.f32.mrf.mxu0
        %v473 = vadd.f32 %v449, %v472
        %474 = vdwg.mxu0
        %475 = vmatpush.msra.mxu0 0.0
        %476 = vmatpush.msra.mxu0 0.0
        %477 = vmatpush.msra.mxu0 0.0
        %478 = vmatpush.msra.mxu0 0.0
        %479 = vmatpush.msra.mxu0 0.0
        %480 = vmatpush.msra.mxu0 0.0
        %481 = vmatpush.msra.mxu0 0.0
        %482 = vmatpush.msra.mxu0 0.0
        %483 = vmatpush.msra.mxu0 0.0
        %484 = vmatpush.msra.mxu0 0.0
        %485 = vmatpush.msra.mxu0 0.0
        %486 = vmatpush.msra.mxu0 0.0
        %487 = vmatpush.msra.mxu0 0.0
        %488 = vmatpush.msra.mxu0 0.0
        %489 = vmatpush.msra.mxu0 0.0
        %v490 = vand.u32 %v391, 4294901760
        %491 = vmatpush.msra.mxu0 %v490
        %v492 = vand.u32 %v397, 4294901760
        %v493 = vsub.f32 %v397, %v492
        %v494 = vand.u32 %v493, 4294901760
        %495 = vmatmul.f32.gmra.mxu0 %v494
        %v496 = vpop.f32.mrf.mxu0
        %v497 = vadd.f32 %v473, %v496
        %498 = vdwg.mxu0
        %499 = vmatpush.msra.mxu0 0.0
        %500 = vmatpush.msra.mxu0 0.0
        %501 = vmatpush.msra.mxu0 0.0
        %502 = vmatpush.msra.mxu0 0.0
        %503 = vmatpush.msra.mxu0 0.0
        %504 = vmatpush.msra.mxu0 0.0
        %505 = vmatpush.msra.mxu0 0.0
        %506 = vmatpush.msra.mxu0 0.0
        %507 = vmatpush.msra.mxu0 0.0
        %508 = vmatpush.msra.mxu0 0.0
        %509 = vmatpush.msra.mxu0 0.0
        %510 = vmatpush.msra.mxu0 0.0
        %511 = vmatpush.msra.mxu0 0.0
        %512 = vmatpush.msra.mxu0 0.0
        %513 = vmatpush.msra.mxu0 0.0
        %v514 = vand.u32 %v391, 4294901760
        %v515 = vsub.f32 %v391, %v514
        %v516 = vand.u32 %v515, 4294901760
        %517 = vmatpush.msra.mxu0 %v516
        %v518 = vand.u32 %v397, 4294901760
        %519 = vmatmul.f32.gmra.mxu0 %v518
        %v520 = vpop.f32.mrf.mxu0
        %v521 = vadd.f32 %v497, %v520
        %522 = vdwg.mxu0
        %523 = vmatpush.msra.mxu0 0.0
        %524 = vmatpush.msra.mxu0 0.0
        %525 = vmatpush.msra.mxu0 0.0
        %526 = vmatpush.msra.mxu0 0.0
        %527 = vmatpush.msra.mxu0 0.0
        %528 = vmatpush.msra.mxu0 0.0
        %529 = vmatpush.msra.mxu0 0.0
        %530 = vmatpush.msra.mxu0 0.0
        %531 = vmatpush.msra.mxu0 0.0
        %532 = vmatpush.msra.mxu0 0.0
        %533 = vmatpush.msra.mxu0 0.0
        %534 = vmatpush.msra.mxu0 0.0
        %535 = vmatpush.msra.mxu0 0.0
        %536 = vmatpush.msra.mxu0 0.0
        %537 = vmatpush.msra.mxu0 0.0
        %v538 = vand.u32 %v391, 4294901760
        %539 = vmatpush.msra.mxu0 %v538
        %v540 = vand.u32 %v397, 4294901760
        %541 = vmatmul.f32.gmra.mxu0 %v540
        %v542 = vpop.f32.mrf.mxu0
        %v543 = vadd.f32 %v521, %v542
        %544 = vdwg.mxu0
        %545 = vmatpush.msra.mxu0 0.0
        %546 = vmatpush.msra.mxu0 0.0
        %547 = vmatpush.msra.mxu0 0.0
        %548 = vmatpush.msra.mxu0 0.0
        %549 = vmatpush.msra.mxu0 0.0
        %550 = vmatpush.msra.mxu0 0.0
        %551 = vmatpush.msra.mxu0 0.0
        %552 = vmatpush.msra.mxu0 0.0
        %553 = vmatpush.msra.mxu0 0.0
        %554 = vmatpush.msra.mxu0 0.0
        %555 = vmatpush.msra.mxu0 0.0
        %556 = vmatpush.msra.mxu0 0.0
        %557 = vmatpush.msra.mxu0 0.0
        %558 = vmatpush.msra.mxu0 0.0
        %559 = vmatpush.msra.mxu0 0.0
        %v560 = vand.u32 %v392, 4294901760
        %561 = vmatpush.msra.mxu0 %v560
        %v562 = vand.u32 %v397, 4294901760
        %v563 = vsub.f32 %v397, %v562
        %v564 = vand.u32 %v563, 4294901760
        %v565 = vsub.f32 %v563, %v564
        %v566 = vand.u32 %v565, 4294901760
        %567 = vmatmul.f32.gmra.mxu0 %v566
        %v568 = vpop.f32.mrf.mxu0
        %v569 = vadd.f32 0.0, %v568
        %570 = vdwg.mxu0
        %571 = vmatpush.msra.mxu0 0.0
        %572 = vmatpush.msra.mxu0 0.0
        %573 = vmatpush.msra.mxu0 0.0
        %574 = vmatpush.msra.mxu0 0.0
        %575 = vmatpush.msra.mxu0 0.0
        %576 = vmatpush.msra.mxu0 0.0
        %577 = vmatpush.msra.mxu0 0.0
        %578 = vmatpush.msra.mxu0 0.0
        %579 = vmatpush.msra.mxu0 0.0
        %580 = vmatpush.msra.mxu0 0.0
        %581 = vmatpush.msra.mxu0 0.0
        %582 = vmatpush.msra.mxu0 0.0
        %583 = vmatpush.msra.mxu0 0.0
        %584 = vmatpush.msra.mxu0 0.0
        %585 = vmatpush.msra.mxu0 0.0
        %v586 = vand.u32 %v392, 4294901760
        %v587 = vsub.f32 %v392, %v586
        %v588 = vand.u32 %v587, 4294901760
        %v589 = vsub.f32 %v587, %v588
        %v590 = vand.u32 %v589, 4294901760
        %591 = vmatpush.msra.mxu0 %v590
        %v592 = vand.u32 %v397, 4294901760
        %593 = vmatmul.f32.gmra.mxu0 %v592
        %v594 = vpop.f32.mrf.mxu0
        %v595 = vadd.f32 %v569, %v594
        %596 = vdwg.mxu0
        %597 = vmatpush.msra.mxu0 0.0
        %598 = vmatpush.msra.mxu0 0.0
        %599 = vmatpush.msra.mxu0 0.0
        %600 = vmatpush.msra.mxu0 0.0
        %601 = vmatpush.msra.mxu0 0.0
        %602 = vmatpush.msra.mxu0 0.0
        %603 = vmatpush.msra.mxu0 0.0
        %604 = vmatpush.msra.mxu0 0.0
        %605 = vmatpush.msra.mxu0 0.0
        %606 = vmatpush.msra.mxu0 0.0
        %607 = vmatpush.msra.mxu0 0.0
        %608 = vmatpush.msra.mxu0 0.0
        %609 = vmatpush.msra.mxu0 0.0
        %610 = vmatpush.msra.mxu0 0.0
        %611 = vmatpush.msra.mxu0 0.0
        %v612 = vand.u32 %v392, 4294901760
        %v613 = vsub.f32 %v392, %v612
        %614 = vmatpush.msra.mxu0 %v613
        %v615 = vand.u32 %v397, 4294901760
        %v616 = vsub.f32 %v397, %v615
        %617 = vmatmul.f32.gmra.mxu0 %v616
        %v618 = vpop.f32.mrf.mxu0
        %v619 = vadd.f32 %v595, %v618
        %620 = vdwg.mxu0
        %621 = vmatpush.msra.mxu0 0.0
        %622 = vmatpush.msra.mxu0 0.0
        %623 = vmatpush.msra.mxu0 0.0
        %624 = vmatpush.msra.mxu0 0.0
        %625 = vmatpush.msra.mxu0 0.0
        %626 = vmatpush.msra.mxu0 0.0
        %627 = vmatpush.msra.mxu0 0.0
        %628 = vmatpush.msra.mxu0 0.0
        %629 = vmatpush.msra.mxu0 0.0
        %630 = vmatpush.msra.mxu0 0.0
        %631 = vmatpush.msra.mxu0 0.0
        %632 = vmatpush.msra.mxu0 0.0
        %633 = vmatpush.msra.mxu0 0.0
        %634 = vmatpush.msra.mxu0 0.0
        %635 = vmatpush.msra.mxu0 0.0
        %v636 = vand.u32 %v392, 4294901760
        %637 = vmatpush.msra.mxu0 %v636
        %v638 = vand.u32 %v397, 4294901760
        %v639 = vsub.f32 %v397, %v638
        %v640 = vand.u32 %v639, 4294901760
        %641 = vmatmul.f32.gmra.mxu0 %v640
        %v642 = vpop.f32.mrf.mxu0
        %v643 = vadd.f32 %v619, %v642
        %644 = vdwg.mxu0
        %645 = vmatpush.msra.mxu0 0.0
        %646 = vmatpush.msra.mxu0 0.0
        %647 = vmatpush.msra.mxu0 0.0
        %648 = vmatpush.msra.mxu0 0.0
        %649 = vmatpush.msra.mxu0 0.0
        %650 = vmatpush.msra.mxu0 0.0
        %651 = vmatpush.msra.mxu0 0.0
        %652 = vmatpush.msra.mxu0 0.0
        %653 = vmatpush.msra.mxu0 0.0
        %654 = vmatpush.msra.mxu0 0.0
        %655 = vmatpush.msra.mxu0 0.0
        %656 = vmatpush.msra.mxu0 0.0
        %657 = vmatpush.msra.mxu0 0.0
        %658 = vmatpush.msra.mxu0 0.0
        %659 = vmatpush.msra.mxu0 0.0
        %v660 = vand.u32 %v392, 4294901760
        %v661 = vsub.f32 %v392, %v660
        %v662 = vand.u32 %v661, 4294901760
        %663 = vmatpush.msra.mxu0 %v662
        %v664 = vand.u32 %v397, 4294901760
        %665 = vmatmul.f32.gmra.mxu0 %v664
        %v666 = vpop.f32.mrf.mxu0
        %v667 = vadd.f32 %v643, %v666
        %668 = vdwg.mxu0
        %669 = vmatpush.msra.mxu0 0.0
        %670 = vmatpush.msra.mxu0 0.0
        %671 = vmatpush.msra.mxu0 0.0
        %672 = vmatpush.msra.mxu0 0.0
        %673 = vmatpush.msra.mxu0 0.0
        %674 = vmatpush.msra.mxu0 0.0
        %675 = vmatpush.msra.mxu0 0.0
        %676 = vmatpush.msra.mxu0 0.0
        %677 = vmatpush.msra.mxu0 0.0
        %678 = vmatpush.msra.mxu0 0.0
        %679 = vmatpush.msra.mxu0 0.0
        %680 = vmatpush.msra.mxu0 0.0
        %681 = vmatpush.msra.mxu0 0.0
        %682 = vmatpush.msra.mxu0 0.0
        %683 = vmatpush.msra.mxu0 0.0
        %v684 = vand.u32 %v392, 4294901760
        %685 = vmatpush.msra.mxu0 %v684
        %v686 = vand.u32 %v397, 4294901760
        %687 = vmatmul.f32.gmra.mxu0 %v686
        %v688 = vpop.f32.mrf.mxu0
        %v689 = vadd.f32 %v667, %v688
        %690 = vdwg.mxu0
        %v692 = vsel %vm395, %v383, 0
        %694 = vmatpush.msra.mxu0 0.0
        %695 = vmatpush.msra.mxu0 0.0
        %696 = vmatpush.msra.mxu0 0.0
        %697 = vmatpush.msra.mxu0 0.0
        %698 = vmatpush.msra.mxu0 0.0
        %699 = vmatpush.msra.mxu0 0.0
        %700 = vmatpush.msra.mxu0 0.0
        %701 = vmatpush.msra.mxu0 0.0
        %702 = vmatpush.msra.mxu0 0.0
        %703 = vmatpush.msra.mxu0 0.0
        %704 = vmatpush.msra.mxu0 0.0
        %705 = vmatpush.msra.mxu0 0.0
        %706 = vmatpush.msra.mxu0 0.0
        %707 = vmatpush.msra.mxu0 0.0
        %708 = vmatpush.msra.mxu0 0.0
        %v709 = vand.u32 %v381, 4294901760
        %710 = vmatpush.msra.mxu0 %v709
        %v711 = vand.u32 %v692, 4294901760
        %v712 = vsub.f32 %v692, %v711
        %v713 = vand.u32 %v712, 4294901760
        %v714 = vsub.f32 %v712, %v713
        %v715 = vand.u32 %v714, 4294901760
        %716 = vmatmul.f32.gmra.mxu0 %v715
        %v717 = vpop.f32.mrf.mxu0
        %v718 = vadd.f32 %v543, %v717
        %719 = vdwg.mxu0
        %720 = vmatpush.msra.mxu0 0.0
        %721 = vmatpush.msra.mxu0 0.0
        %722 = vmatpush.msra.mxu0 0.0
        %723 = vmatpush.msra.mxu0 0.0
        %724 = vmatpush.msra.mxu0 0.0
        %725 = vmatpush.msra.mxu0 0.0
        %726 = vmatpush.msra.mxu0 0.0
        %727 = vmatpush.msra.mxu0 0.0
        %728 = vmatpush.msra.mxu0 0.0
        %729 = vmatpush.msra.mxu0 0.0
        %730 = vmatpush.msra.mxu0 0.0
        %731 = vmatpush.msra.mxu0 0.0
        %732 = vmatpush.msra.mxu0 0.0
        %733 = vmatpush.msra.mxu0 0.0
        %734 = vmatpush.msra.mxu0 0.0
        %v735 = vand.u32 %v381, 4294901760
        %v736 = vsub.f32 %v381, %v735
        %v737 = vand.u32 %v736, 4294901760
        %v738 = vsub.f32 %v736, %v737
        %v739 = vand.u32 %v738, 4294901760
        %740 = vmatpush.msra.mxu0 %v739
        %v741 = vand.u32 %v692, 4294901760
        %742 = vmatmul.f32.gmra.mxu0 %v741
        %v743 = vpop.f32.mrf.mxu0
        %v744 = vadd.f32 %v718, %v743
        %745 = vdwg.mxu0
        %746 = vmatpush.msra.mxu0 0.0
        %747 = vmatpush.msra.mxu0 0.0
        %748 = vmatpush.msra.mxu0 0.0
        %749 = vmatpush.msra.mxu0 0.0
        %750 = vmatpush.msra.mxu0 0.0
        %751 = vmatpush.msra.mxu0 0.0
        %752 = vmatpush.msra.mxu0 0.0
        %753 = vmatpush.msra.mxu0 0.0
        %754 = vmatpush.msra.mxu0 0.0
        %755 = vmatpush.msra.mxu0 0.0
        %756 = vmatpush.msra.mxu0 0.0
        %757 = vmatpush.msra.mxu0 0.0
        %758 = vmatpush.msra.mxu0 0.0
        %759 = vmatpush.msra.mxu0 0.0
        %760 = vmatpush.msra.mxu0 0.0
        %v761 = vand.u32 %v381, 4294901760
        %v762 = vsub.f32 %v381, %v761
        %763 = vmatpush.msra.mxu0 %v762
        %v764 = vand.u32 %v692, 4294901760
        %v765 = vsub.f32 %v692, %v764
        %766 = vmatmul.f32.gmra.mxu0 %v765
        %v767 = vpop.f32.mrf.mxu0
        %v768 = vadd.f32 %v744, %v767
        %769 = vdwg.mxu0
        %770 = vmatpush.msra.mxu0 0.0
        %771 = vmatpush.msra.mxu0 0.0
        %772 = vmatpush.msra.mxu0 0.0
        %773 = vmatpush.msra.mxu0 0.0
        %774 = vmatpush.msra.mxu0 0.0
        %775 = vmatpush.msra.mxu0 0.0
        %776 = vmatpush.msra.mxu0 0.0
        %777 = vmatpush.msra.mxu0 0.0
        %778 = vmatpush.msra.mxu0 0.0
        %779 = vmatpush.msra.mxu0 0.0
        %780 = vmatpush.msra.mxu0 0.0
        %781 = vmatpush.msra.mxu0 0.0
        %782 = vmatpush.msra.mxu0 0.0
        %783 = vmatpush.msra.mxu0 0.0
        %784 = vmatpush.msra.mxu0 0.0
        %v785 = vand.u32 %v381, 4294901760
        %786 = vmatpush.msra.mxu0 %v785
        %v787 = vand.u32 %v692, 4294901760
        %v788 = vsub.f32 %v692, %v787
        %v789 = vand.u32 %v788, 4294901760
        %790 = vmatmul.f32.gmra.mxu0 %v789
        %v791 = vpop.f32.mrf.mxu0
        %v792 = vadd.f32 %v768, %v791
        %793 = vdwg.mxu0
        %794 = vmatpush.msra.mxu0 0.0
        %795 = vmatpush.msra.mxu0 0.0
        %796 = vmatpush.msra.mxu0 0.0
        %797 = vmatpush.msra.mxu0 0.0
        %798 = vmatpush.msra.mxu0 0.0
        %799 = vmatpush.msra.mxu0 0.0
        %800 = vmatpush.msra.mxu0 0.0
        %801 = vmatpush.msra.mxu0 0.0
        %802 = vmatpush.msra.mxu0 0.0
        %803 = vmatpush.msra.mxu0 0.0
        %804 = vmatpush.msra.mxu0 0.0
        %805 = vmatpush.msra.mxu0 0.0
        %806 = vmatpush.msra.mxu0 0.0
        %807 = vmatpush.msra.mxu0 0.0
        %808 = vmatpush.msra.mxu0 0.0
        %v809 = vand.u32 %v381, 4294901760
        %v810 = vsub.f32 %v381, %v809
        %v811 = vand.u32 %v810, 4294901760
        %812 = vmatpush.msra.mxu0 %v811
        %v813 = vand.u32 %v692, 4294901760
        %814 = vmatmul.f32.gmra.mxu0 %v813
        %v815 = vpop.f32.mrf.mxu0
        %v816 = vadd.f32 %v792, %v815
        %817 = vdwg.mxu0
        %818 = vmatpush.msra.mxu0 0.0
        %819 = vmatpush.msra.mxu0 0.0
        %820 = vmatpush.msra.mxu0 0.0
        %821 = vmatpush.msra.mxu0 0.0
        %822 = vmatpush.msra.mxu0 0.0
        %823 = vmatpush.msra.mxu0 0.0
        %824 = vmatpush.msra.mxu0 0.0
        %825 = vmatpush.msra.mxu0 0.0
        %826 = vmatpush.msra.mxu0 0.0
        %827 = vmatpush.msra.mxu0 0.0
        %828 = vmatpush.msra.mxu0 0.0
        %829 = vmatpush.msra.mxu0 0.0
        %830 = vmatpush.msra.mxu0 0.0
        %831 = vmatpush.msra.mxu0 0.0
        %832 = vmatpush.msra.mxu0 0.0
        %v833 = vand.u32 %v381, 4294901760
        %834 = vmatpush.msra.mxu0 %v833
        %v835 = vand.u32 %v692, 4294901760
        %836 = vmatmul.f32.gmra.mxu0 %v835
        %v837 = vpop.f32.mrf.mxu0
        %v838 = vadd.f32 %v816, %v837
        %839 = vdwg.mxu0
        %840 = vmatpush.msra.mxu0 0.0
        %841 = vmatpush.msra.mxu0 0.0
        %842 = vmatpush.msra.mxu0 0.0
        %843 = vmatpush.msra.mxu0 0.0
        %844 = vmatpush.msra.mxu0 0.0
        %845 = vmatpush.msra.mxu0 0.0
        %846 = vmatpush.msra.mxu0 0.0
        %847 = vmatpush.msra.mxu0 0.0
        %848 = vmatpush.msra.mxu0 0.0
        %849 = vmatpush.msra.mxu0 0.0
        %850 = vmatpush.msra.mxu0 0.0
        %851 = vmatpush.msra.mxu0 0.0
        %852 = vmatpush.msra.mxu0 0.0
        %853 = vmatpush.msra.mxu0 0.0
        %854 = vmatpush.msra.mxu0 0.0
        %v855 = vand.u32 %v382, 4294901760
        %856 = vmatpush.msra.mxu0 %v855
        %v857 = vand.u32 %v692, 4294901760
        %v858 = vsub.f32 %v692, %v857
        %v859 = vand.u32 %v858, 4294901760
        %v860 = vsub.f32 %v858, %v859
        %v861 = vand.u32 %v860, 4294901760
        %862 = vmatmul.f32.gmra.mxu0 %v861
        %v863 = vpop.f32.mrf.mxu0
        %v864 = vadd.f32 %v689, %v863
        %865 = vdwg.mxu0
        %866 = vmatpush.msra.mxu0 0.0
        %867 = vmatpush.msra.mxu0 0.0
        %868 = vmatpush.msra.mxu0 0.0
        %869 = vmatpush.msra.mxu0 0.0
        %870 = vmatpush.msra.mxu0 0.0
        %871 = vmatpush.msra.mxu0 0.0
        %872 = vmatpush.msra.mxu0 0.0
        %873 = vmatpush.msra.mxu0 0.0
        %874 = vmatpush.msra.mxu0 0.0
        %875 = vmatpush.msra.mxu0 0.0
        %876 = vmatpush.msra.mxu0 0.0
        %877 = vmatpush.msra.mxu0 0.0
        %878 = vmatpush.msra.mxu0 0.0
        %879 = vmatpush.msra.mxu0 0.0
        %880 = vmatpush.msra.mxu0 0.0
        %v881 = vand.u32 %v382, 4294901760
        %v882 = vsub.f32 %v382, %v881
        %v883 = vand.u32 %v882, 4294901760
        %v884 = vsub.f32 %v882, %v883
        %v885 = vand.u32 %v884, 4294901760
        %886 = vmatpush.msra.mxu0 %v885
        %v887 = vand.u32 %v692, 4294901760
        %888 = vmatmul.f32.gmra.mxu0 %v887
        %v889 = vpop.f32.mrf.mxu0
        %v890 = vadd.f32 %v864, %v889
        %891 = vdwg.mxu0
        %892 = vmatpush.msra.mxu0 0.0
        %893 = vmatpush.msra.mxu0 0.0
        %894 = vmatpush.msra.mxu0 0.0
        %895 = vmatpush.msra.mxu0 0.0
        %896 = vmatpush.msra.mxu0 0.0
        %897 = vmatpush.msra.mxu0 0.0
        %898 = vmatpush.msra.mxu0 0.0
        %899 = vmatpush.msra.mxu0 0.0
        %900 = vmatpush.msra.mxu0 0.0
        %901 = vmatpush.msra.mxu0 0.0
        %902 = vmatpush.msra.mxu0 0.0
        %903 = vmatpush.msra.mxu0 0.0
        %904 = vmatpush.msra.mxu0 0.0
        %905 = vmatpush.msra.mxu0 0.0
        %906 = vmatpush.msra.mxu0 0.0
        %v907 = vand.u32 %v382, 4294901760
        %v908 = vsub.f32 %v382, %v907
        %909 = vmatpush.msra.mxu0 %v908
        %v910 = vand.u32 %v692, 4294901760
        %v911 = vsub.f32 %v692, %v910
        %912 = vmatmul.f32.gmra.mxu0 %v911
        %v913 = vpop.f32.mrf.mxu0
        %v914 = vadd.f32 %v890, %v913
        %915 = vdwg.mxu0
        %916 = vmatpush.msra.mxu0 0.0
        %917 = vmatpush.msra.mxu0 0.0
        %918 = vmatpush.msra.mxu0 0.0
        %919 = vmatpush.msra.mxu0 0.0
        %920 = vmatpush.msra.mxu0 0.0
        %921 = vmatpush.msra.mxu0 0.0
        %922 = vmatpush.msra.mxu0 0.0
        %923 = vmatpush.msra.mxu0 0.0
        %924 = vmatpush.msra.mxu0 0.0
        %925 = vmatpush.msra.mxu0 0.0
        %926 = vmatpush.msra.mxu0 0.0
        %927 = vmatpush.msra.mxu0 0.0
        %928 = vmatpush.msra.mxu0 0.0
        %929 = vmatpush.msra.mxu0 0.0
        %930 = vmatpush.msra.mxu0 0.0
        %v931 = vand.u32 %v382, 4294901760
        %932 = vmatpush.msra.mxu0 %v931
        %v933 = vand.u32 %v692, 4294901760
        %v934 = vsub.f32 %v692, %v933
        %v935 = vand.u32 %v934, 4294901760
        %936 = vmatmul.f32.gmra.mxu0 %v935
        %v937 = vpop.f32.mrf.mxu0
        %v938 = vadd.f32 %v914, %v937
        %939 = vdwg.mxu0
        %940 = vmatpush.msra.mxu0 0.0
        %941 = vmatpush.msra.mxu0 0.0
        %942 = vmatpush.msra.mxu0 0.0
        %943 = vmatpush.msra.mxu0 0.0
        %944 = vmatpush.msra.mxu0 0.0
        %945 = vmatpush.msra.mxu0 0.0
        %946 = vmatpush.msra.mxu0 0.0
        %947 = vmatpush.msra.mxu0 0.0
        %948 = vmatpush.msra.mxu0 0.0
        %949 = vmatpush.msra.mxu0 0.0
        %950 = vmatpush.msra.mxu0 0.0
        %951 = vmatpush.msra.mxu0 0.0
        %952 = vmatpush.msra.mxu0 0.0
        %953 = vmatpush.msra.mxu0 0.0
        %954 = vmatpush.msra.mxu0 0.0
        %v955 = vand.u32 %v382, 4294901760
        %v956 = vsub.f32 %v382, %v955
        %v957 = vand.u32 %v956, 4294901760
        %958 = vmatpush.msra.mxu0 %v957
        %v959 = vand.u32 %v692, 4294901760
        %960 = vmatmul.f32.gmra.mxu0 %v959
        %v961 = vpop.f32.mrf.mxu0
        %v962 = vadd.f32 %v938, %v961
        %963 = vdwg.mxu0
        %964 = vmatpush.msra.mxu0 0.0
        %965 = vmatpush.msra.mxu0 0.0
        %966 = vmatpush.msra.mxu0 0.0
        %967 = vmatpush.msra.mxu0 0.0
        %968 = vmatpush.msra.mxu0 0.0
        %969 = vmatpush.msra.mxu0 0.0
        %970 = vmatpush.msra.mxu0 0.0
        %971 = vmatpush.msra.mxu0 0.0
        %972 = vmatpush.msra.mxu0 0.0
        %973 = vmatpush.msra.mxu0 0.0
        %974 = vmatpush.msra.mxu0 0.0
        %975 = vmatpush.msra.mxu0 0.0
        %976 = vmatpush.msra.mxu0 0.0
        %977 = vmatpush.msra.mxu0 0.0
        %978 = vmatpush.msra.mxu0 0.0
        %v979 = vand.u32 %v382, 4294901760
        %980 = vmatpush.msra.mxu0 %v979
        %v981 = vand.u32 %v692, 4294901760
        %982 = vmatmul.f32.gmra.mxu0 %v981
        %v983 = vpop.f32.mrf.mxu0
        %v984 = vadd.f32 %v962, %v983
        %985 = vdwg.mxu0
        %986 = vrot.lane.b32.xlu0 %v279, 15
        %v987 = vpop.permute.xlu0 %986
        %988 = vrot.lane.b32.xlu0 %v280, 15
        %v989 = vpop.permute.xlu0 %988
        %vm990 = vcmp.lt.s32.totalorder %v282, 15
        %v991 = vsel %vm990, %v987, %v989
        %v992 = vsel %vm990, %v989, %v987
        %v993 = vmul.f32 %v992, %v328
        %v994 = vmul.f32 %v991, %v329
        %s995 = scalar_lea.vmem %s255, 16
        %v996 = vld [vmem:[%s995] sm:$0xff]
        %v998 = vsel %vm395, %v996, 0
        %1000 = vmatpush.msra.mxu0 0.0
        %1001 = vmatpush.msra.mxu0 0.0
        %1002 = vmatpush.msra.mxu0 0.0
        %1003 = vmatpush.msra.mxu0 0.0
        %1004 = vmatpush.msra.mxu0 0.0
        %1005 = vmatpush.msra.mxu0 0.0
        %1006 = vmatpush.msra.mxu0 0.0
        %1007 = vmatpush.msra.mxu0 0.0
        %1008 = vmatpush.msra.mxu0 0.0
        %1009 = vmatpush.msra.mxu0 0.0
        %1010 = vmatpush.msra.mxu0 0.0
        %1011 = vmatpush.msra.mxu0 0.0
        %1012 = vmatpush.msra.mxu0 0.0
        %1013 = vmatpush.msra.mxu0 0.0
        %1014 = vmatpush.msra.mxu0 0.0
        %v1015 = vand.u32 %v993, 4294901760
        %1016 = vmatpush.msra.mxu0 %v1015
        %v1017 = vand.u32 %v998, 4294901760
        %v1018 = vsub.f32 %v998, %v1017
        %v1019 = vand.u32 %v1018, 4294901760
        %v1020 = vsub.f32 %v1018, %v1019
        %v1021 = vand.u32 %v1020, 4294901760
        %1022 = vmatmul.f32.gmra.mxu0 %v1021
        %v1023 = vpop.f32.mrf.mxu0
        %v1024 = vadd.f32 0.0, %v1023
        %1025 = vdwg.mxu0
        %1026 = vmatpush.msra.mxu0 0.0
        %1027 = vmatpush.msra.mxu0 0.0
        %1028 = vmatpush.msra.mxu0 0.0
        %1029 = vmatpush.msra.mxu0 0.0
        %1030 = vmatpush.msra.mxu0 0.0
        %1031 = vmatpush.msra.mxu0 0.0
        %1032 = vmatpush.msra.mxu0 0.0
        %1033 = vmatpush.msra.mxu0 0.0
        %1034 = vmatpush.msra.mxu0 0.0
        %1035 = vmatpush.msra.mxu0 0.0
        %1036 = vmatpush.msra.mxu0 0.0
        %1037 = vmatpush.msra.mxu0 0.0
        %1038 = vmatpush.msra.mxu0 0.0
        %1039 = vmatpush.msra.mxu0 0.0
        %1040 = vmatpush.msra.mxu0 0.0
        %v1041 = vand.u32 %v993, 4294901760
        %v1042 = vsub.f32 %v993, %v1041
        %v1043 = vand.u32 %v1042, 4294901760
        %v1044 = vsub.f32 %v1042, %v1043
        %v1045 = vand.u32 %v1044, 4294901760
        %1046 = vmatpush.msra.mxu0 %v1045
        %v1047 = vand.u32 %v998, 4294901760
        %1048 = vmatmul.f32.gmra.mxu0 %v1047
        %v1049 = vpop.f32.mrf.mxu0
        %v1050 = vadd.f32 %v1024, %v1049
        %1051 = vdwg.mxu0
        %1052 = vmatpush.msra.mxu0 0.0
        %1053 = vmatpush.msra.mxu0 0.0
        %1054 = vmatpush.msra.mxu0 0.0
        %1055 = vmatpush.msra.mxu0 0.0
        %1056 = vmatpush.msra.mxu0 0.0
        %1057 = vmatpush.msra.mxu0 0.0
        %1058 = vmatpush.msra.mxu0 0.0
        %1059 = vmatpush.msra.mxu0 0.0
        %1060 = vmatpush.msra.mxu0 0.0
        %1061 = vmatpush.msra.mxu0 0.0
        %1062 = vmatpush.msra.mxu0 0.0
        %1063 = vmatpush.msra.mxu0 0.0
        %1064 = vmatpush.msra.mxu0 0.0
        %1065 = vmatpush.msra.mxu0 0.0
        %1066 = vmatpush.msra.mxu0 0.0
        %v1067 = vand.u32 %v993, 4294901760
        %v1068 = vsub.f32 %v993, %v1067
        %1069 = vmatpush.msra.mxu0 %v1068
        %v1070 = vand.u32 %v998, 4294901760
        %v1071 = vsub.f32 %v998, %v1070
        %1072 = vmatmul.f32.gmra.mxu0 %v1071
        %v1073 = vpop.f32.mrf.mxu0
        %v1074 = vadd.f32 %v1050, %v1073
        %1075 = vdwg.mxu0
        %1076 = vmatpush.msra.mxu0 0.0
        %1077 = vmatpush.msra.mxu0 0.0
        %1078 = vmatpush.msra.mxu0 0.0
        %1079 = vmatpush.msra.mxu0 0.0
        %1080 = vmatpush.msra.mxu0 0.0
        %1081 = vmatpush.msra.mxu0 0.0
        %1082 = vmatpush.msra.mxu0 0.0
        %1083 = vmatpush.msra.mxu0 0.0
        %1084 = vmatpush.msra.mxu0 0.0
        %1085 = vmatpush.msra.mxu0 0.0
        %1086 = vmatpush.msra.mxu0 0.0
        %1087 = vmatpush.msra.mxu0 0.0
        %1088 = vmatpush.msra.mxu0 0.0
        %1089 = vmatpush.msra.mxu0 0.0
        %1090 = vmatpush.msra.mxu0 0.0
        %v1091 = vand.u32 %v993, 4294901760
        %1092 = vmatpush.msra.mxu0 %v1091
        %v1093 = vand.u32 %v998, 4294901760
        %v1094 = vsub.f32 %v998, %v1093
        %v1095 = vand.u32 %v1094, 4294901760
        %1096 = vmatmul.f32.gmra.mxu0 %v1095
        %v1097 = vpop.f32.mrf.mxu0
        %v1098 = vadd.f32 %v1074, %v1097
        %1099 = vdwg.mxu0
        %1100 = vmatpush.msra.mxu0 0.0
        %1101 = vmatpush.msra.mxu0 0.0
        %1102 = vmatpush.msra.mxu0 0.0
        %1103 = vmatpush.msra.mxu0 0.0
        %1104 = vmatpush.msra.mxu0 0.0
        %1105 = vmatpush.msra.mxu0 0.0
        %1106 = vmatpush.msra.mxu0 0.0
        %1107 = vmatpush.msra.mxu0 0.0
        %1108 = vmatpush.msra.mxu0 0.0
        %1109 = vmatpush.msra.mxu0 0.0
        %1110 = vmatpush.msra.mxu0 0.0
        %1111 = vmatpush.msra.mxu0 0.0
        %1112 = vmatpush.msra.mxu0 0.0
        %1113 = vmatpush.msra.mxu0 0.0
        %1114 = vmatpush.msra.mxu0 0.0
        %v1115 = vand.u32 %v993, 4294901760
        %v1116 = vsub.f32 %v993, %v1115
        %v1117 = vand.u32 %v1116, 4294901760
        %1118 = vmatpush.msra.mxu0 %v1117
        %v1119 = vand.u32 %v998, 4294901760
        %1120 = vmatmul.f32.gmra.mxu0 %v1119
        %v1121 = vpop.f32.mrf.mxu0
        %v1122 = vadd.f32 %v1098, %v1121
        %1123 = vdwg.mxu0
        %1124 = vmatpush.msra.mxu0 0.0
        %1125 = vmatpush.msra.mxu0 0.0
        %1126 = vmatpush.msra.mxu0 0.0
        %1127 = vmatpush.msra.mxu0 0.0
        %1128 = vmatpush.msra.mxu0 0.0
        %1129 = vmatpush.msra.mxu0 0.0
        %1130 = vmatpush.msra.mxu0 0.0
        %1131 = vmatpush.msra.mxu0 0.0
        %1132 = vmatpush.msra.mxu0 0.0
        %1133 = vmatpush.msra.mxu0 0.0
        %1134 = vmatpush.msra.mxu0 0.0
        %1135 = vmatpush.msra.mxu0 0.0
        %1136 = vmatpush.msra.mxu0 0.0
        %1137 = vmatpush.msra.mxu0 0.0
        %1138 = vmatpush.msra.mxu0 0.0
        %v1139 = vand.u32 %v993, 4294901760
        %1140 = vmatpush.msra.mxu0 %v1139
        %v1141 = vand.u32 %v998, 4294901760
        %1142 = vmatmul.f32.gmra.mxu0 %v1141
        %v1143 = vpop.f32.mrf.mxu0
        %v1144 = vadd.f32 %v1122, %v1143
        %1145 = vdwg.mxu0
        %1146 = vmatpush.msra.mxu0 0.0
        %1147 = vmatpush.msra.mxu0 0.0
        %1148 = vmatpush.msra.mxu0 0.0
        %1149 = vmatpush.msra.mxu0 0.0
        %1150 = vmatpush.msra.mxu0 0.0
        %1151 = vmatpush.msra.mxu0 0.0
        %1152 = vmatpush.msra.mxu0 0.0
        %1153 = vmatpush.msra.mxu0 0.0
        %1154 = vmatpush.msra.mxu0 0.0
        %1155 = vmatpush.msra.mxu0 0.0
        %1156 = vmatpush.msra.mxu0 0.0
        %1157 = vmatpush.msra.mxu0 0.0
        %1158 = vmatpush.msra.mxu0 0.0
        %1159 = vmatpush.msra.mxu0 0.0
        %1160 = vmatpush.msra.mxu0 0.0
        %v1161 = vand.u32 %v994, 4294901760
        %1162 = vmatpush.msra.mxu0 %v1161
        %v1163 = vand.u32 %v998, 4294901760
        %v1164 = vsub.f32 %v998, %v1163
        %v1165 = vand.u32 %v1164, 4294901760
        %v1166 = vsub.f32 %v1164, %v1165
        %v1167 = vand.u32 %v1166, 4294901760
        %1168 = vmatmul.f32.gmra.mxu0 %v1167
        %v1169 = vpop.f32.mrf.mxu0
        %v1170 = vadd.f32 0.0, %v1169
        %1171 = vdwg.mxu0
        %1172 = vmatpush.msra.mxu0 0.0
        %1173 = vmatpush.msra.mxu0 0.0
        %1174 = vmatpush.msra.mxu0 0.0
        %1175 = vmatpush.msra.mxu0 0.0
        %1176 = vmatpush.msra.mxu0 0.0
        %1177 = vmatpush.msra.mxu0 0.0
        %1178 = vmatpush.msra.mxu0 0.0
        %1179 = vmatpush.msra.mxu0 0.0
        %1180 = vmatpush.msra.mxu0 0.0
        %1181 = vmatpush.msra.mxu0 0.0
        %1182 = vmatpush.msra.mxu0 0.0
        %1183 = vmatpush.msra.mxu0 0.0
        %1184 = vmatpush.msra.mxu0 0.0
        %1185 = vmatpush.msra.mxu0 0.0
        %1186 = vmatpush.msra.mxu0 0.0
        %v1187 = vand.u32 %v994, 4294901760
        %v1188 = vsub.f32 %v994, %v1187
        %v1189 = vand.u32 %v1188, 4294901760
        %v1190 = vsub.f32 %v1188, %v1189
        %v1191 = vand.u32 %v1190, 4294901760
        %1192 = vmatpush.msra.mxu0 %v1191
        %v1193 = vand.u32 %v998, 4294901760
        %1194 = vmatmul.f32.gmra.mxu0 %v1193
        %v1195 = vpop.f32.mrf.mxu0
        %v1196 = vadd.f32 %v1170, %v1195
        %1197 = vdwg.mxu0
        %1198 = vmatpush.msra.mxu0 0.0
        %1199 = vmatpush.msra.mxu0 0.0
        %1200 = vmatpush.msra.mxu0 0.0
        %1201 = vmatpush.msra.mxu0 0.0
        %1202 = vmatpush.msra.mxu0 0.0
        %1203 = vmatpush.msra.mxu0 0.0
        %1204 = vmatpush.msra.mxu0 0.0
        %1205 = vmatpush.msra.mxu0 0.0
        %1206 = vmatpush.msra.mxu0 0.0
        %1207 = vmatpush.msra.mxu0 0.0
        %1208 = vmatpush.msra.mxu0 0.0
        %1209 = vmatpush.msra.mxu0 0.0
        %1210 = vmatpush.msra.mxu0 0.0
        %1211 = vmatpush.msra.mxu0 0.0
        %1212 = vmatpush.msra.mxu0 0.0
        %v1213 = vand.u32 %v994, 4294901760
        %v1214 = vsub.f32 %v994, %v1213
        %1215 = vmatpush.msra.mxu0 %v1214
        %v1216 = vand.u32 %v998, 4294901760
        %v1217 = vsub.f32 %v998, %v1216
        %1218 = vmatmul.f32.gmra.mxu0 %v1217
        %v1219 = vpop.f32.mrf.mxu0
        %v1220 = vadd.f32 %v1196, %v1219
        %1221 = vdwg.mxu0
        %1222 = vmatpush.msra.mxu0 0.0
        %1223 = vmatpush.msra.mxu0 0.0
        %1224 = vmatpush.msra.mxu0 0.0
        %1225 = vmatpush.msra.mxu0 0.0
        %1226 = vmatpush.msra.mxu0 0.0
        %1227 = vmatpush.msra.mxu0 0.0
        %1228 = vmatpush.msra.mxu0 0.0
        %1229 = vmatpush.msra.mxu0 0.0
        %1230 = vmatpush.msra.mxu0 0.0
        %1231 = vmatpush.msra.mxu0 0.0
        %1232 = vmatpush.msra.mxu0 0.0
        %1233 = vmatpush.msra.mxu0 0.0
        %1234 = vmatpush.msra.mxu0 0.0
        %1235 = vmatpush.msra.mxu0 0.0
        %1236 = vmatpush.msra.mxu0 0.0
        %v1237 = vand.u32 %v994, 4294901760
        %1238 = vmatpush.msra.mxu0 %v1237
        %v1239 = vand.u32 %v998, 4294901760
        %v1240 = vsub.f32 %v998, %v1239
        %v1241 = vand.u32 %v1240, 4294901760
        %1242 = vmatmul.f32.gmra.mxu0 %v1241
        %v1243 = vpop.f32.mrf.mxu0
        %v1244 = vadd.f32 %v1220, %v1243
        %1245 = vdwg.mxu0
        %1246 = vmatpush.msra.mxu0 0.0
        %1247 = vmatpush.msra.mxu0 0.0
        %1248 = vmatpush.msra.mxu0 0.0
        %1249 = vmatpush.msra.mxu0 0.0
        %1250 = vmatpush.msra.mxu0 0.0
        %1251 = vmatpush.msra.mxu0 0.0
        %1252 = vmatpush.msra.mxu0 0.0
        %1253 = vmatpush.msra.mxu0 0.0
        %1254 = vmatpush.msra.mxu0 0.0
        %1255 = vmatpush.msra.mxu0 0.0
        %1256 = vmatpush.msra.mxu0 0.0
        %1257 = vmatpush.msra.mxu0 0.0
        %1258 = vmatpush.msra.mxu0 0.0
        %1259 = vmatpush.msra.mxu0 0.0
        %1260 = vmatpush.msra.mxu0 0.0
        %v1261 = vand.u32 %v994, 4294901760
        %v1262 = vsub.f32 %v994, %v1261
        %v1263 = vand.u32 %v1262, 4294901760
        %1264 = vmatpush.msra.mxu0 %v1263
        %v1265 = vand.u32 %v998, 4294901760
        %1266 = vmatmul.f32.gmra.mxu0 %v1265
        %v1267 = vpop.f32.mrf.mxu0
        %v1268 = vadd.f32 %v1244, %v1267
        %1269 = vdwg.mxu0
        %1270 = vmatpush.msra.mxu0 0.0
        %1271 = vmatpush.msra.mxu0 0.0
        %1272 = vmatpush.msra.mxu0 0.0
        %1273 = vmatpush.msra.mxu0 0.0
        %1274 = vmatpush.msra.mxu0 0.0
        %1275 = vmatpush.msra.mxu0 0.0
        %1276 = vmatpush.msra.mxu0 0.0
        %1277 = vmatpush.msra.mxu0 0.0
        %1278 = vmatpush.msra.mxu0 0.0
        %1279 = vmatpush.msra.mxu0 0.0
        %1280 = vmatpush.msra.mxu0 0.0
        %1281 = vmatpush.msra.mxu0 0.0
        %1282 = vmatpush.msra.mxu0 0.0
        %1283 = vmatpush.msra.mxu0 0.0
        %1284 = vmatpush.msra.mxu0 0.0
        %v1285 = vand.u32 %v994, 4294901760
        %1286 = vmatpush.msra.mxu0 %v1285
        %v1287 = vand.u32 %v998, 4294901760
        %1288 = vmatmul.f32.gmra.mxu0 %v1287
        %v1289 = vpop.f32.mrf.mxu0
        %v1290 = vadd.f32 %v1268, %v1289
        %1291 = vdwg.mxu0
        %v1292 = vadd.f32 %v838, %v1144
        %v1293 = vadd.f32 %v984, %v1290
        %1294 = vrot.lane.b32.xlu0 %v279, 1
        %v1295 = vpop.permute.xlu0 %1294
        %1296 = vrot.lane.b32.xlu0 %v280, 1
        %v1297 = vpop.permute.xlu0 %1296
        %vm1298 = vcmp.lt.s32.totalorder %v282, 1
        %v1299 = vsel %vm1298, %v1295, %v1297
        %v1300 = vsel %vm1298, %v1297, %v1295
        %v1301 = vmul.f32 %v1300, %v340
        %v1302 = vmul.f32 %v1299, %v341
        %s1303 = scalar_lea.vmem %s255, 24
        %v1304 = vld [vmem:[%s1303] sm:$0xff]
        %v1306 = vsel %vm395, %v1304, 0
        %1308 = vmatpush.msra.mxu0 0.0
        %1309 = vmatpush.msra.mxu0 0.0
        %1310 = vmatpush.msra.mxu0 0.0
        %1311 = vmatpush.msra.mxu0 0.0
        %1312 = vmatpush.msra.mxu0 0.0
        %1313 = vmatpush.msra.mxu0 0.0
        %1314 = vmatpush.msra.mxu0 0.0
        %1315 = vmatpush.msra.mxu0 0.0
        %1316 = vmatpush.msra.mxu0 0.0
        %1317 = vmatpush.msra.mxu0 0.0
        %1318 = vmatpush.msra.mxu0 0.0
        %1319 = vmatpush.msra.mxu0 0.0
        %1320 = vmatpush.msra.mxu0 0.0
        %1321 = vmatpush.msra.mxu0 0.0
        %1322 = vmatpush.msra.mxu0 0.0
        %v1323 = vand.u32 %v1301, 4294901760
        %1324 = vmatpush.msra.mxu0 %v1323
        %v1325 = vand.u32 %v1306, 4294901760
        %v1326 = vsub.f32 %v1306, %v1325
        %v1327 = vand.u32 %v1326, 4294901760
        %v1328 = vsub.f32 %v1326, %v1327
        %v1329 = vand.u32 %v1328, 4294901760
        %1330 = vmatmul.f32.gmra.mxu0 %v1329
        %v1331 = vpop.f32.mrf.mxu0
        %v1332 = vadd.f32 0.0, %v1331
        %1333 = vdwg.mxu0
        %1334 = vmatpush.msra.mxu0 0.0
        %1335 = vmatpush.msra.mxu0 0.0
        %1336 = vmatpush.msra.mxu0 0.0
        %1337 = vmatpush.msra.mxu0 0.0
        %1338 = vmatpush.msra.mxu0 0.0
        %1339 = vmatpush.msra.mxu0 0.0
        %1340 = vmatpush.msra.mxu0 0.0
        %1341 = vmatpush.msra.mxu0 0.0
        %1342 = vmatpush.msra.mxu0 0.0
        %1343 = vmatpush.msra.mxu0 0.0
        %1344 = vmatpush.msra.mxu0 0.0
        %1345 = vmatpush.msra.mxu0 0.0
        %1346 = vmatpush.msra.mxu0 0.0
        %1347 = vmatpush.msra.mxu0 0.0
        %1348 = vmatpush.msra.mxu0 0.0
        %v1349 = vand.u32 %v1301, 4294901760
        %v1350 = vsub.f32 %v1301, %v1349
        %v1351 = vand.u32 %v1350, 4294901760
        %v1352 = vsub.f32 %v1350, %v1351
        %v1353 = vand.u32 %v1352, 4294901760
        %1354 = vmatpush.msra.mxu0 %v1353
        %v1355 = vand.u32 %v1306, 4294901760
        %1356 = vmatmul.f32.gmra.mxu0 %v1355
        %v1357 = vpop.f32.mrf.mxu0
        %v1358 = vadd.f32 %v1332, %v1357
        %1359 = vdwg.mxu0
        %1360 = vmatpush.msra.mxu0 0.0
        %1361 = vmatpush.msra.mxu0 0.0
        %1362 = vmatpush.msra.mxu0 0.0
        %1363 = vmatpush.msra.mxu0 0.0
        %1364 = vmatpush.msra.mxu0 0.0
        %1365 = vmatpush.msra.mxu0 0.0
        %1366 = vmatpush.msra.mxu0 0.0
        %1367 = vmatpush.msra.mxu0 0.0
        %1368 = vmatpush.msra.mxu0 0.0
        %1369 = vmatpush.msra.mxu0 0.0
        %1370 = vmatpush.msra.mxu0 0.0
        %1371 = vmatpush.msra.mxu0 0.0
        %1372 = vmatpush.msra.mxu0 0.0
        %1373 = vmatpush.msra.mxu0 0.0
        %1374 = vmatpush.msra.mxu0 0.0
        %v1375 = vand.u32 %v1301, 4294901760
        %v1376 = vsub.f32 %v1301, %v1375
        %1377 = vmatpush.msra.mxu0 %v1376
        %v1378 = vand.u32 %v1306, 4294901760
        %v1379 = vsub.f32 %v1306, %v1378
        %1380 = vmatmul.f32.gmra.mxu0 %v1379
        %v1381 = vpop.f32.mrf.mxu0
        %v1382 = vadd.f32 %v1358, %v1381
        %1383 = vdwg.mxu0
        %1384 = vmatpush.msra.mxu0 0.0
        %1385 = vmatpush.msra.mxu0 0.0
        %1386 = vmatpush.msra.mxu0 0.0
        %1387 = vmatpush.msra.mxu0 0.0
        %1388 = vmatpush.msra.mxu0 0.0
        %1389 = vmatpush.msra.mxu0 0.0
        %1390 = vmatpush.msra.mxu0 0.0
        %1391 = vmatpush.msra.mxu0 0.0
        %1392 = vmatpush.msra.mxu0 0.0
        %1393 = vmatpush.msra.mxu0 0.0
        %1394 = vmatpush.msra.mxu0 0.0
        %1395 = vmatpush.msra.mxu0 0.0
        %1396 = vmatpush.msra.mxu0 0.0
        %1397 = vmatpush.msra.mxu0 0.0
        %1398 = vmatpush.msra.mxu0 0.0
        %v1399 = vand.u32 %v1301, 4294901760
        %1400 = vmatpush.msra.mxu0 %v1399
        %v1401 = vand.u32 %v1306, 4294901760
        %v1402 = vsub.f32 %v1306, %v1401
        %v1403 = vand.u32 %v1402, 4294901760
        %1404 = vmatmul.f32.gmra.mxu0 %v1403
        %v1405 = vpop.f32.mrf.mxu0
        %v1406 = vadd.f32 %v1382, %v1405
        %1407 = vdwg.mxu0
        %1408 = vmatpush.msra.mxu0 0.0
        %1409 = vmatpush.msra.mxu0 0.0
        %1410 = vmatpush.msra.mxu0 0.0
        %1411 = vmatpush.msra.mxu0 0.0
        %1412 = vmatpush.msra.mxu0 0.0
        %1413 = vmatpush.msra.mxu0 0.0
        %1414 = vmatpush.msra.mxu0 0.0
        %1415 = vmatpush.msra.mxu0 0.0
        %1416 = vmatpush.msra.mxu0 0.0
        %1417 = vmatpush.msra.mxu0 0.0
        %1418 = vmatpush.msra.mxu0 0.0
        %1419 = vmatpush.msra.mxu0 0.0
        %1420 = vmatpush.msra.mxu0 0.0
        %1421 = vmatpush.msra.mxu0 0.0
        %1422 = vmatpush.msra.mxu0 0.0
        %v1423 = vand.u32 %v1301, 4294901760
        %v1424 = vsub.f32 %v1301, %v1423
        %v1425 = vand.u32 %v1424, 4294901760
        %1426 = vmatpush.msra.mxu0 %v1425
        %v1427 = vand.u32 %v1306, 4294901760
        %1428 = vmatmul.f32.gmra.mxu0 %v1427
        %v1429 = vpop.f32.mrf.mxu0
        %v1430 = vadd.f32 %v1406, %v1429
        %1431 = vdwg.mxu0
        %1432 = vmatpush.msra.mxu0 0.0
        %1433 = vmatpush.msra.mxu0 0.0
        %1434 = vmatpush.msra.mxu0 0.0
        %1435 = vmatpush.msra.mxu0 0.0
        %1436 = vmatpush.msra.mxu0 0.0
        %1437 = vmatpush.msra.mxu0 0.0
        %1438 = vmatpush.msra.mxu0 0.0
        %1439 = vmatpush.msra.mxu0 0.0
        %1440 = vmatpush.msra.mxu0 0.0
        %1441 = vmatpush.msra.mxu0 0.0
        %1442 = vmatpush.msra.mxu0 0.0
        %1443 = vmatpush.msra.mxu0 0.0
        %1444 = vmatpush.msra.mxu0 0.0
        %1445 = vmatpush.msra.mxu0 0.0
        %1446 = vmatpush.msra.mxu0 0.0
        %v1447 = vand.u32 %v1301, 4294901760
        %1448 = vmatpush.msra.mxu0 %v1447
        %v1449 = vand.u32 %v1306, 4294901760
        %1450 = vmatmul.f32.gmra.mxu0 %v1449
        %v1451 = vpop.f32.mrf.mxu0
        %v1452 = vadd.f32 %v1430, %v1451
        %1453 = vdwg.mxu0
        %1454 = vmatpush.msra.mxu0 0.0
        %1455 = vmatpush.msra.mxu0 0.0
        %1456 = vmatpush.msra.mxu0 0.0
        %1457 = vmatpush.msra.mxu0 0.0
        %1458 = vmatpush.msra.mxu0 0.0
        %1459 = vmatpush.msra.mxu0 0.0
        %1460 = vmatpush.msra.mxu0 0.0
        %1461 = vmatpush.msra.mxu0 0.0
        %1462 = vmatpush.msra.mxu0 0.0
        %1463 = vmatpush.msra.mxu0 0.0
        %1464 = vmatpush.msra.mxu0 0.0
        %1465 = vmatpush.msra.mxu0 0.0
        %1466 = vmatpush.msra.mxu0 0.0
        %1467 = vmatpush.msra.mxu0 0.0
        %1468 = vmatpush.msra.mxu0 0.0
        %v1469 = vand.u32 %v1302, 4294901760
        %1470 = vmatpush.msra.mxu0 %v1469
        %v1471 = vand.u32 %v1306, 4294901760
        %v1472 = vsub.f32 %v1306, %v1471
        %v1473 = vand.u32 %v1472, 4294901760
        %v1474 = vsub.f32 %v1472, %v1473
        %v1475 = vand.u32 %v1474, 4294901760
        %1476 = vmatmul.f32.gmra.mxu0 %v1475
        %v1477 = vpop.f32.mrf.mxu0
        %v1478 = vadd.f32 0.0, %v1477
        %1479 = vdwg.mxu0
        %1480 = vmatpush.msra.mxu0 0.0
        %1481 = vmatpush.msra.mxu0 0.0
        %1482 = vmatpush.msra.mxu0 0.0
        %1483 = vmatpush.msra.mxu0 0.0
        %1484 = vmatpush.msra.mxu0 0.0
        %1485 = vmatpush.msra.mxu0 0.0
        %1486 = vmatpush.msra.mxu0 0.0
        %1487 = vmatpush.msra.mxu0 0.0
        %1488 = vmatpush.msra.mxu0 0.0
        %1489 = vmatpush.msra.mxu0 0.0
        %1490 = vmatpush.msra.mxu0 0.0
        %1491 = vmatpush.msra.mxu0 0.0
        %1492 = vmatpush.msra.mxu0 0.0
        %1493 = vmatpush.msra.mxu0 0.0
        %1494 = vmatpush.msra.mxu0 0.0
        %v1495 = vand.u32 %v1302, 4294901760
        %v1496 = vsub.f32 %v1302, %v1495
        %v1497 = vand.u32 %v1496, 4294901760
        %v1498 = vsub.f32 %v1496, %v1497
        %v1499 = vand.u32 %v1498, 4294901760
        %1500 = vmatpush.msra.mxu0 %v1499
        %v1501 = vand.u32 %v1306, 4294901760
        %1502 = vmatmul.f32.gmra.mxu0 %v1501
        %v1503 = vpop.f32.mrf.mxu0
        %v1504 = vadd.f32 %v1478, %v1503
        %1505 = vdwg.mxu0
        %1506 = vmatpush.msra.mxu0 0.0
        %1507 = vmatpush.msra.mxu0 0.0
        %1508 = vmatpush.msra.mxu0 0.0
        %1509 = vmatpush.msra.mxu0 0.0
        %1510 = vmatpush.msra.mxu0 0.0
        %1511 = vmatpush.msra.mxu0 0.0
        %1512 = vmatpush.msra.mxu0 0.0
        %1513 = vmatpush.msra.mxu0 0.0
        %1514 = vmatpush.msra.mxu0 0.0
        %1515 = vmatpush.msra.mxu0 0.0
        %1516 = vmatpush.msra.mxu0 0.0
        %1517 = vmatpush.msra.mxu0 0.0
        %1518 = vmatpush.msra.mxu0 0.0
        %1519 = vmatpush.msra.mxu0 0.0
        %1520 = vmatpush.msra.mxu0 0.0
        %v1521 = vand.u32 %v1302, 4294901760
        %v1522 = vsub.f32 %v1302, %v1521
        %1523 = vmatpush.msra.mxu0 %v1522
        %v1524 = vand.u32 %v1306, 4294901760
        %v1525 = vsub.f32 %v1306, %v1524
        %1526 = vmatmul.f32.gmra.mxu0 %v1525
        %v1527 = vpop.f32.mrf.mxu0
        %v1528 = vadd.f32 %v1504, %v1527
        %1529 = vdwg.mxu0
        %1530 = vmatpush.msra.mxu0 0.0
        %1531 = vmatpush.msra.mxu0 0.0
        %1532 = vmatpush.msra.mxu0 0.0
        %1533 = vmatpush.msra.mxu0 0.0
        %1534 = vmatpush.msra.mxu0 0.0
        %1535 = vmatpush.msra.mxu0 0.0
        %1536 = vmatpush.msra.mxu0 0.0
        %1537 = vmatpush.msra.mxu0 0.0
        %1538 = vmatpush.msra.mxu0 0.0
        %1539 = vmatpush.msra.mxu0 0.0
        %1540 = vmatpush.msra.mxu0 0.0
        %1541 = vmatpush.msra.mxu0 0.0
        %1542 = vmatpush.msra.mxu0 0.0
        %1543 = vmatpush.msra.mxu0 0.0
        %1544 = vmatpush.msra.mxu0 0.0
        %v1545 = vand.u32 %v1302, 4294901760
        %1546 = vmatpush.msra.mxu0 %v1545
        %v1547 = vand.u32 %v1306, 4294901760
        %v1548 = vsub.f32 %v1306, %v1547
        %v1549 = vand.u32 %v1548, 4294901760
        %1550 = vmatmul.f32.gmra.mxu0 %v1549
        %v1551 = vpop.f32.mrf.mxu0
        %v1552 = vadd.f32 %v1528, %v1551
        %1553 = vdwg.mxu0
        %1554 = vmatpush.msra.mxu0 0.0
        %1555 = vmatpush.msra.mxu0 0.0
        %1556 = vmatpush.msra.mxu0 0.0
        %1557 = vmatpush.msra.mxu0 0.0
        %1558 = vmatpush.msra.mxu0 0.0
        %1559 = vmatpush.msra.mxu0 0.0
        %1560 = vmatpush.msra.mxu0 0.0
        %1561 = vmatpush.msra.mxu0 0.0
        %1562 = vmatpush.msra.mxu0 0.0
        %1563 = vmatpush.msra.mxu0 0.0
        %1564 = vmatpush.msra.mxu0 0.0
        %1565 = vmatpush.msra.mxu0 0.0
        %1566 = vmatpush.msra.mxu0 0.0
        %1567 = vmatpush.msra.mxu0 0.0
        %1568 = vmatpush.msra.mxu0 0.0
        %v1569 = vand.u32 %v1302, 4294901760
        %v1570 = vsub.f32 %v1302, %v1569
        %v1571 = vand.u32 %v1570, 4294901760
        %1572 = vmatpush.msra.mxu0 %v1571
        %v1573 = vand.u32 %v1306, 4294901760
        %1574 = vmatmul.f32.gmra.mxu0 %v1573
        %v1575 = vpop.f32.mrf.mxu0
        %v1576 = vadd.f32 %v1552, %v1575
        %1577 = vdwg.mxu0
        %1578 = vmatpush.msra.mxu0 0.0
        %1579 = vmatpush.msra.mxu0 0.0
        %1580 = vmatpush.msra.mxu0 0.0
        %1581 = vmatpush.msra.mxu0 0.0
        %1582 = vmatpush.msra.mxu0 0.0
        %1583 = vmatpush.msra.mxu0 0.0
        %1584 = vmatpush.msra.mxu0 0.0
        %1585 = vmatpush.msra.mxu0 0.0
        %1586 = vmatpush.msra.mxu0 0.0
        %1587 = vmatpush.msra.mxu0 0.0
        %1588 = vmatpush.msra.mxu0 0.0
        %1589 = vmatpush.msra.mxu0 0.0
        %1590 = vmatpush.msra.mxu0 0.0
        %1591 = vmatpush.msra.mxu0 0.0
        %1592 = vmatpush.msra.mxu0 0.0
        %v1593 = vand.u32 %v1302, 4294901760
        %1594 = vmatpush.msra.mxu0 %v1593
        %v1595 = vand.u32 %v1306, 4294901760
        %1596 = vmatmul.f32.gmra.mxu0 %v1595
        %v1597 = vpop.f32.mrf.mxu0
        %v1598 = vadd.f32 %v1576, %v1597
        %1599 = vdwg.mxu0
        %v1600 = vadd.f32 %v1292, %v1452
        %v1601 = vadd.f32 %v1293, %v1598
        %s1602 = scalar_lea.vmem %s255, 32
        %v1603 = vld [vmem:[%s1602] sm:$0xff]
        %v1605 = vsel %vm395, %v1603, 0
        %1607 = vmatpush.msra.mxu0 0.0
        %1608 = vmatpush.msra.mxu0 0.0
        %1609 = vmatpush.msra.mxu0 0.0
        %1610 = vmatpush.msra.mxu0 0.0
        %1611 = vmatpush.msra.mxu0 0.0
        %1612 = vmatpush.msra.mxu0 0.0
        %1613 = vmatpush.msra.mxu0 0.0
        %1614 = vmatpush.msra.mxu0 0.0
        %1615 = vmatpush.msra.mxu0 0.0
        %1616 = vmatpush.msra.mxu0 0.0
        %1617 = vmatpush.msra.mxu0 0.0
        %1618 = vmatpush.msra.mxu0 0.0
        %1619 = vmatpush.msra.mxu0 0.0
        %1620 = vmatpush.msra.mxu0 0.0
        %1621 = vmatpush.msra.mxu0 0.0
        %v1622 = vand.u32 %v279, 4294901760
        %1623 = vmatpush.msra.mxu0 %v1622
        %v1624 = vand.u32 %v1605, 4294901760
        %v1625 = vsub.f32 %v1605, %v1624
        %v1626 = vand.u32 %v1625, 4294901760
        %v1627 = vsub.f32 %v1625, %v1626
        %v1628 = vand.u32 %v1627, 4294901760
        %1629 = vmatmul.f32.gmra.mxu0 %v1628
        %v1630 = vpop.f32.mrf.mxu0
        %v1631 = vadd.f32 0.0, %v1630
        %1632 = vdwg.mxu0
        %1633 = vmatpush.msra.mxu0 0.0
        %1634 = vmatpush.msra.mxu0 0.0
        %1635 = vmatpush.msra.mxu0 0.0
        %1636 = vmatpush.msra.mxu0 0.0
        %1637 = vmatpush.msra.mxu0 0.0
        %1638 = vmatpush.msra.mxu0 0.0
        %1639 = vmatpush.msra.mxu0 0.0
        %1640 = vmatpush.msra.mxu0 0.0
        %1641 = vmatpush.msra.mxu0 0.0
        %1642 = vmatpush.msra.mxu0 0.0
        %1643 = vmatpush.msra.mxu0 0.0
        %1644 = vmatpush.msra.mxu0 0.0
        %1645 = vmatpush.msra.mxu0 0.0
        %1646 = vmatpush.msra.mxu0 0.0
        %1647 = vmatpush.msra.mxu0 0.0
        %v1648 = vand.u32 %v279, 4294901760
        %v1649 = vsub.f32 %v279, %v1648
        %v1650 = vand.u32 %v1649, 4294901760
        %v1651 = vsub.f32 %v1649, %v1650
        %v1652 = vand.u32 %v1651, 4294901760
        %1653 = vmatpush.msra.mxu0 %v1652
        %v1654 = vand.u32 %v1605, 4294901760
        %1655 = vmatmul.f32.gmra.mxu0 %v1654
        %v1656 = vpop.f32.mrf.mxu0
        %v1657 = vadd.f32 %v1631, %v1656
        %1658 = vdwg.mxu0
        %1659 = vmatpush.msra.mxu0 0.0
        %1660 = vmatpush.msra.mxu0 0.0
        %1661 = vmatpush.msra.mxu0 0.0
        %1662 = vmatpush.msra.mxu0 0.0
        %1663 = vmatpush.msra.mxu0 0.0
        %1664 = vmatpush.msra.mxu0 0.0
        %1665 = vmatpush.msra.mxu0 0.0
        %1666 = vmatpush.msra.mxu0 0.0
        %1667 = vmatpush.msra.mxu0 0.0
        %1668 = vmatpush.msra.mxu0 0.0
        %1669 = vmatpush.msra.mxu0 0.0
        %1670 = vmatpush.msra.mxu0 0.0
        %1671 = vmatpush.msra.mxu0 0.0
        %1672 = vmatpush.msra.mxu0 0.0
        %1673 = vmatpush.msra.mxu0 0.0
        %v1674 = vand.u32 %v279, 4294901760
        %v1675 = vsub.f32 %v279, %v1674
        %1676 = vmatpush.msra.mxu0 %v1675
        %v1677 = vand.u32 %v1605, 4294901760
        %v1678 = vsub.f32 %v1605, %v1677
        %1679 = vmatmul.f32.gmra.mxu0 %v1678
        %v1680 = vpop.f32.mrf.mxu0
        %v1681 = vadd.f32 %v1657, %v1680
        %1682 = vdwg.mxu0
        %1683 = vmatpush.msra.mxu0 0.0
        %1684 = vmatpush.msra.mxu0 0.0
        %1685 = vmatpush.msra.mxu0 0.0
        %1686 = vmatpush.msra.mxu0 0.0
        %1687 = vmatpush.msra.mxu0 0.0
        %1688 = vmatpush.msra.mxu0 0.0
        %1689 = vmatpush.msra.mxu0 0.0
        %1690 = vmatpush.msra.mxu0 0.0
        %1691 = vmatpush.msra.mxu0 0.0
        %1692 = vmatpush.msra.mxu0 0.0
        %1693 = vmatpush.msra.mxu0 0.0
        %1694 = vmatpush.msra.mxu0 0.0
        %1695 = vmatpush.msra.mxu0 0.0
        %1696 = vmatpush.msra.mxu0 0.0
        %1697 = vmatpush.msra.mxu0 0.0
        %v1698 = vand.u32 %v279, 4294901760
        %1699 = vmatpush.msra.mxu0 %v1698
        %v1700 = vand.u32 %v1605, 4294901760
        %v1701 = vsub.f32 %v1605, %v1700
        %v1702 = vand.u32 %v1701, 4294901760
        %1703 = vmatmul.f32.gmra.mxu0 %v1702
        %v1704 = vpop.f32.mrf.mxu0
        %v1705 = vadd.f32 %v1681, %v1704
        %1706 = vdwg.mxu0
        %1707 = vmatpush.msra.mxu0 0.0
        %1708 = vmatpush.msra.mxu0 0.0
        %1709 = vmatpush.msra.mxu0 0.0
        %1710 = vmatpush.msra.mxu0 0.0
        %1711 = vmatpush.msra.mxu0 0.0
        %1712 = vmatpush.msra.mxu0 0.0
        %1713 = vmatpush.msra.mxu0 0.0
        %1714 = vmatpush.msra.mxu0 0.0
        %1715 = vmatpush.msra.mxu0 0.0
        %1716 = vmatpush.msra.mxu0 0.0
        %1717 = vmatpush.msra.mxu0 0.0
        %1718 = vmatpush.msra.mxu0 0.0
        %1719 = vmatpush.msra.mxu0 0.0
        %1720 = vmatpush.msra.mxu0 0.0
        %1721 = vmatpush.msra.mxu0 0.0
        %v1722 = vand.u32 %v279, 4294901760
        %v1723 = vsub.f32 %v279, %v1722
        %v1724 = vand.u32 %v1723, 4294901760
        %1725 = vmatpush.msra.mxu0 %v1724
        %v1726 = vand.u32 %v1605, 4294901760
        %1727 = vmatmul.f32.gmra.mxu0 %v1726
        %v1728 = vpop.f32.mrf.mxu0
        %v1729 = vadd.f32 %v1705, %v1728
        %1730 = vdwg.mxu0
        %1731 = vmatpush.msra.mxu0 0.0
        %1732 = vmatpush.msra.mxu0 0.0
        %1733 = vmatpush.msra.mxu0 0.0
        %1734 = vmatpush.msra.mxu0 0.0
        %1735 = vmatpush.msra.mxu0 0.0
        %1736 = vmatpush.msra.mxu0 0.0
        %1737 = vmatpush.msra.mxu0 0.0
        %1738 = vmatpush.msra.mxu0 0.0
        %1739 = vmatpush.msra.mxu0 0.0
        %1740 = vmatpush.msra.mxu0 0.0
        %1741 = vmatpush.msra.mxu0 0.0
        %1742 = vmatpush.msra.mxu0 0.0
        %1743 = vmatpush.msra.mxu0 0.0
        %1744 = vmatpush.msra.mxu0 0.0
        %1745 = vmatpush.msra.mxu0 0.0
        %v1746 = vand.u32 %v279, 4294901760
        %1747 = vmatpush.msra.mxu0 %v1746
        %v1748 = vand.u32 %v1605, 4294901760
        %1749 = vmatmul.f32.gmra.mxu0 %v1748
        %v1750 = vpop.f32.mrf.mxu0
        %v1751 = vadd.f32 %v1729, %v1750
        %1752 = vdwg.mxu0
        %1753 = vmatpush.msra.mxu0 0.0
        %1754 = vmatpush.msra.mxu0 0.0
        %1755 = vmatpush.msra.mxu0 0.0
        %1756 = vmatpush.msra.mxu0 0.0
        %1757 = vmatpush.msra.mxu0 0.0
        %1758 = vmatpush.msra.mxu0 0.0
        %1759 = vmatpush.msra.mxu0 0.0
        %1760 = vmatpush.msra.mxu0 0.0
        %1761 = vmatpush.msra.mxu0 0.0
        %1762 = vmatpush.msra.mxu0 0.0
        %1763 = vmatpush.msra.mxu0 0.0
        %1764 = vmatpush.msra.mxu0 0.0
        %1765 = vmatpush.msra.mxu0 0.0
        %1766 = vmatpush.msra.mxu0 0.0
        %1767 = vmatpush.msra.mxu0 0.0
        %v1768 = vand.u32 %v280, 4294901760
        %1769 = vmatpush.msra.mxu0 %v1768
        %v1770 = vand.u32 %v1605, 4294901760
        %v1771 = vsub.f32 %v1605, %v1770
        %v1772 = vand.u32 %v1771, 4294901760
        %v1773 = vsub.f32 %v1771, %v1772
        %v1774 = vand.u32 %v1773, 4294901760
        %1775 = vmatmul.f32.gmra.mxu0 %v1774
        %v1776 = vpop.f32.mrf.mxu0
        %v1777 = vadd.f32 0.0, %v1776
        %1778 = vdwg.mxu0
        %1779 = vmatpush.msra.mxu0 0.0
        %1780 = vmatpush.msra.mxu0 0.0
        %1781 = vmatpush.msra.mxu0 0.0
        %1782 = vmatpush.msra.mxu0 0.0
        %1783 = vmatpush.msra.mxu0 0.0
        %1784 = vmatpush.msra.mxu0 0.0
        %1785 = vmatpush.msra.mxu0 0.0
        %1786 = vmatpush.msra.mxu0 0.0
        %1787 = vmatpush.msra.mxu0 0.0
        %1788 = vmatpush.msra.mxu0 0.0
        %1789 = vmatpush.msra.mxu0 0.0
        %1790 = vmatpush.msra.mxu0 0.0
        %1791 = vmatpush.msra.mxu0 0.0
        %1792 = vmatpush.msra.mxu0 0.0
        %1793 = vmatpush.msra.mxu0 0.0
        %v1794 = vand.u32 %v280, 4294901760
        %v1795 = vsub.f32 %v280, %v1794
        %v1796 = vand.u32 %v1795, 4294901760
        %v1797 = vsub.f32 %v1795, %v1796
        %v1798 = vand.u32 %v1797, 4294901760
        %1799 = vmatpush.msra.mxu0 %v1798
        %v1800 = vand.u32 %v1605, 4294901760
        %1801 = vmatmul.f32.gmra.mxu0 %v1800
        %v1802 = vpop.f32.mrf.mxu0
        %v1803 = vadd.f32 %v1777, %v1802
        %1804 = vdwg.mxu0
        %1805 = vmatpush.msra.mxu0 0.0
        %1806 = vmatpush.msra.mxu0 0.0
        %1807 = vmatpush.msra.mxu0 0.0
        %1808 = vmatpush.msra.mxu0 0.0
        %1809 = vmatpush.msra.mxu0 0.0
        %1810 = vmatpush.msra.mxu0 0.0
        %1811 = vmatpush.msra.mxu0 0.0
        %1812 = vmatpush.msra.mxu0 0.0
        %1813 = vmatpush.msra.mxu0 0.0
        %1814 = vmatpush.msra.mxu0 0.0
        %1815 = vmatpush.msra.mxu0 0.0
        %1816 = vmatpush.msra.mxu0 0.0
        %1817 = vmatpush.msra.mxu0 0.0
        %1818 = vmatpush.msra.mxu0 0.0
        %1819 = vmatpush.msra.mxu0 0.0
        %v1820 = vand.u32 %v280, 4294901760
        %v1821 = vsub.f32 %v280, %v1820
        %1822 = vmatpush.msra.mxu0 %v1821
        %v1823 = vand.u32 %v1605, 4294901760
        %v1824 = vsub.f32 %v1605, %v1823
        %1825 = vmatmul.f32.gmra.mxu0 %v1824
        %v1826 = vpop.f32.mrf.mxu0
        %v1827 = vadd.f32 %v1803, %v1826
        %1828 = vdwg.mxu0
        %1829 = vmatpush.msra.mxu0 0.0
        %1830 = vmatpush.msra.mxu0 0.0
        %1831 = vmatpush.msra.mxu0 0.0
        %1832 = vmatpush.msra.mxu0 0.0
        %1833 = vmatpush.msra.mxu0 0.0
        %1834 = vmatpush.msra.mxu0 0.0
        %1835 = vmatpush.msra.mxu0 0.0
        %1836 = vmatpush.msra.mxu0 0.0
        %1837 = vmatpush.msra.mxu0 0.0
        %1838 = vmatpush.msra.mxu0 0.0
        %1839 = vmatpush.msra.mxu0 0.0
        %1840 = vmatpush.msra.mxu0 0.0
        %1841 = vmatpush.msra.mxu0 0.0
        %1842 = vmatpush.msra.mxu0 0.0
        %1843 = vmatpush.msra.mxu0 0.0
        %v1844 = vand.u32 %v280, 4294901760
        %1845 = vmatpush.msra.mxu0 %v1844
        %v1846 = vand.u32 %v1605, 4294901760
        %v1847 = vsub.f32 %v1605, %v1846
        %v1848 = vand.u32 %v1847, 4294901760
        %1849 = vmatmul.f32.gmra.mxu0 %v1848
        %v1850 = vpop.f32.mrf.mxu0
        %v1851 = vadd.f32 %v1827, %v1850
        %1852 = vdwg.mxu0
        %1853 = vmatpush.msra.mxu0 0.0
        %1854 = vmatpush.msra.mxu0 0.0
        %1855 = vmatpush.msra.mxu0 0.0
        %1856 = vmatpush.msra.mxu0 0.0
        %1857 = vmatpush.msra.mxu0 0.0
        %1858 = vmatpush.msra.mxu0 0.0
        %1859 = vmatpush.msra.mxu0 0.0
        %1860 = vmatpush.msra.mxu0 0.0
        %1861 = vmatpush.msra.mxu0 0.0
        %1862 = vmatpush.msra.mxu0 0.0
        %1863 = vmatpush.msra.mxu0 0.0
        %1864 = vmatpush.msra.mxu0 0.0
        %1865 = vmatpush.msra.mxu0 0.0
        %1866 = vmatpush.msra.mxu0 0.0
        %1867 = vmatpush.msra.mxu0 0.0
        %v1868 = vand.u32 %v280, 4294901760
        %v1869 = vsub.f32 %v280, %v1868
        %v1870 = vand.u32 %v1869, 4294901760
        %1871 = vmatpush.msra.mxu0 %v1870
        %v1872 = vand.u32 %v1605, 4294901760
        %1873 = vmatmul.f32.gmra.mxu0 %v1872
        %v1874 = vpop.f32.mrf.mxu0
        %v1875 = vadd.f32 %v1851, %v1874
        %1876 = vdwg.mxu0
        %1877 = vmatpush.msra.mxu0 0.0
        %1878 = vmatpush.msra.mxu0 0.0
        %1879 = vmatpush.msra.mxu0 0.0
        %1880 = vmatpush.msra.mxu0 0.0
        %1881 = vmatpush.msra.mxu0 0.0
        %1882 = vmatpush.msra.mxu0 0.0
        %1883 = vmatpush.msra.mxu0 0.0
        %1884 = vmatpush.msra.mxu0 0.0
        %1885 = vmatpush.msra.mxu0 0.0
        %1886 = vmatpush.msra.mxu0 0.0
        %1887 = vmatpush.msra.mxu0 0.0
        %1888 = vmatpush.msra.mxu0 0.0
        %1889 = vmatpush.msra.mxu0 0.0
        %1890 = vmatpush.msra.mxu0 0.0
        %1891 = vmatpush.msra.mxu0 0.0
        %v1892 = vand.u32 %v280, 4294901760
        %1893 = vmatpush.msra.mxu0 %v1892
        %v1894 = vand.u32 %v1605, 4294901760
        %1895 = vmatmul.f32.gmra.mxu0 %v1894
        %v1896 = vpop.f32.mrf.mxu0
        %v1897 = vadd.f32 %v1875, %v1896
        %1898 = vdwg.mxu0
        %v1899 = vadd.f32 %v1600, %v1751
        %v1900 = vadd.f32 %v1601, %v1897
        %1901 = vrot.lane.b32.xlu0 %v279, 127
        %v1902 = vpop.permute.xlu0 %1901
        %1903 = vrot.lane.b32.xlu0 %v280, 127
        %v1904 = vpop.permute.xlu0 %1903
        %vm1905 = vcmp.lt.s32.totalorder %v282, 127
        %v1906 = vsel %vm1905, %v1902, %v1904
        %v1907 = vsel %vm1905, %v1904, %v1902
        %v1908 = vmul.f32 %v1906, %v346
        %v1909 = vmul.f32 %v1907, %v347
        %s1910 = scalar_lea.vmem %s255, 40
        %v1911 = vld [vmem:[%s1910] sm:$0xff]
        %v1913 = vsel %vm395, %v1911, 0
        %1915 = vmatpush.msra.mxu0 0.0
        %1916 = vmatpush.msra.mxu0 0.0
        %1917 = vmatpush.msra.mxu0 0.0
        %1918 = vmatpush.msra.mxu0 0.0
        %1919 = vmatpush.msra.mxu0 0.0
        %1920 = vmatpush.msra.mxu0 0.0
        %1921 = vmatpush.msra.mxu0 0.0
        %1922 = vmatpush.msra.mxu0 0.0
        %1923 = vmatpush.msra.mxu0 0.0
        %1924 = vmatpush.msra.mxu0 0.0
        %1925 = vmatpush.msra.mxu0 0.0
        %1926 = vmatpush.msra.mxu0 0.0
        %1927 = vmatpush.msra.mxu0 0.0
        %1928 = vmatpush.msra.mxu0 0.0
        %1929 = vmatpush.msra.mxu0 0.0
        %v1930 = vand.u32 %v1908, 4294901760
        %1931 = vmatpush.msra.mxu0 %v1930
        %v1932 = vand.u32 %v1913, 4294901760
        %v1933 = vsub.f32 %v1913, %v1932
        %v1934 = vand.u32 %v1933, 4294901760
        %v1935 = vsub.f32 %v1933, %v1934
        %v1936 = vand.u32 %v1935, 4294901760
        %1937 = vmatmul.f32.gmra.mxu0 %v1936
        %v1938 = vpop.f32.mrf.mxu0
        %v1939 = vadd.f32 0.0, %v1938
        %1940 = vdwg.mxu0
        %1941 = vmatpush.msra.mxu0 0.0
        %1942 = vmatpush.msra.mxu0 0.0
        %1943 = vmatpush.msra.mxu0 0.0
        %1944 = vmatpush.msra.mxu0 0.0
        %1945 = vmatpush.msra.mxu0 0.0
        %1946 = vmatpush.msra.mxu0 0.0
        %1947 = vmatpush.msra.mxu0 0.0
        %1948 = vmatpush.msra.mxu0 0.0
        %1949 = vmatpush.msra.mxu0 0.0
        %1950 = vmatpush.msra.mxu0 0.0
        %1951 = vmatpush.msra.mxu0 0.0
        %1952 = vmatpush.msra.mxu0 0.0
        %1953 = vmatpush.msra.mxu0 0.0
        %1954 = vmatpush.msra.mxu0 0.0
        %1955 = vmatpush.msra.mxu0 0.0
        %v1956 = vand.u32 %v1908, 4294901760
        %v1957 = vsub.f32 %v1908, %v1956
        %v1958 = vand.u32 %v1957, 4294901760
        %v1959 = vsub.f32 %v1957, %v1958
        %v1960 = vand.u32 %v1959, 4294901760
        %1961 = vmatpush.msra.mxu0 %v1960
        %v1962 = vand.u32 %v1913, 4294901760
        %1963 = vmatmul.f32.gmra.mxu0 %v1962
        %v1964 = vpop.f32.mrf.mxu0
        %v1965 = vadd.f32 %v1939, %v1964
        %1966 = vdwg.mxu0
        %1967 = vmatpush.msra.mxu0 0.0
        %1968 = vmatpush.msra.mxu0 0.0
        %1969 = vmatpush.msra.mxu0 0.0
        %1970 = vmatpush.msra.mxu0 0.0
        %1971 = vmatpush.msra.mxu0 0.0
        %1972 = vmatpush.msra.mxu0 0.0
        %1973 = vmatpush.msra.mxu0 0.0
        %1974 = vmatpush.msra.mxu0 0.0
        %1975 = vmatpush.msra.mxu0 0.0
        %1976 = vmatpush.msra.mxu0 0.0
        %1977 = vmatpush.msra.mxu0 0.0
        %1978 = vmatpush.msra.mxu0 0.0
        %1979 = vmatpush.msra.mxu0 0.0
        %1980 = vmatpush.msra.mxu0 0.0
        %1981 = vmatpush.msra.mxu0 0.0
        %v1982 = vand.u32 %v1908, 4294901760
        %v1983 = vsub.f32 %v1908, %v1982
        %1984 = vmatpush.msra.mxu0 %v1983
        %v1985 = vand.u32 %v1913, 4294901760
        %v1986 = vsub.f32 %v1913, %v1985
        %1987 = vmatmul.f32.gmra.mxu0 %v1986
        %v1988 = vpop.f32.mrf.mxu0
        %v1989 = vadd.f32 %v1965, %v1988
        %1990 = vdwg.mxu0
        %1991 = vmatpush.msra.mxu0 0.0
        %1992 = vmatpush.msra.mxu0 0.0
        %1993 = vmatpush.msra.mxu0 0.0
        %1994 = vmatpush.msra.mxu0 0.0
        %1995 = vmatpush.msra.mxu0 0.0
        %1996 = vmatpush.msra.mxu0 0.0
        %1997 = vmatpush.msra.mxu0 0.0
        %1998 = vmatpush.msra.mxu0 0.0
        %1999 = vmatpush.msra.mxu0 0.0
        %2000 = vmatpush.msra.mxu0 0.0
        %2001 = vmatpush.msra.mxu0 0.0
        %2002 = vmatpush.msra.mxu0 0.0
        %2003 = vmatpush.msra.mxu0 0.0
        %2004 = vmatpush.msra.mxu0 0.0
        %2005 = vmatpush.msra.mxu0 0.0
        %v2006 = vand.u32 %v1908, 4294901760
        %2007 = vmatpush.msra.mxu0 %v2006
        %v2008 = vand.u32 %v1913, 4294901760
        %v2009 = vsub.f32 %v1913, %v2008
        %v2010 = vand.u32 %v2009, 4294901760
        %2011 = vmatmul.f32.gmra.mxu0 %v2010
        %v2012 = vpop.f32.mrf.mxu0
        %v2013 = vadd.f32 %v1989, %v2012
        %2014 = vdwg.mxu0
        %2015 = vmatpush.msra.mxu0 0.0
        %2016 = vmatpush.msra.mxu0 0.0
        %2017 = vmatpush.msra.mxu0 0.0
        %2018 = vmatpush.msra.mxu0 0.0
        %2019 = vmatpush.msra.mxu0 0.0
        %2020 = vmatpush.msra.mxu0 0.0
        %2021 = vmatpush.msra.mxu0 0.0
        %2022 = vmatpush.msra.mxu0 0.0
        %2023 = vmatpush.msra.mxu0 0.0
        %2024 = vmatpush.msra.mxu0 0.0
        %2025 = vmatpush.msra.mxu0 0.0
        %2026 = vmatpush.msra.mxu0 0.0
        %2027 = vmatpush.msra.mxu0 0.0
        %2028 = vmatpush.msra.mxu0 0.0
        %2029 = vmatpush.msra.mxu0 0.0
        %v2030 = vand.u32 %v1908, 4294901760
        %v2031 = vsub.f32 %v1908, %v2030
        %v2032 = vand.u32 %v2031, 4294901760
        %2033 = vmatpush.msra.mxu0 %v2032
        %v2034 = vand.u32 %v1913, 4294901760
        %2035 = vmatmul.f32.gmra.mxu0 %v2034
        %v2036 = vpop.f32.mrf.mxu0
        %v2037 = vadd.f32 %v2013, %v2036
        %2038 = vdwg.mxu0
        %2039 = vmatpush.msra.mxu0 0.0
        %2040 = vmatpush.msra.mxu0 0.0
        %2041 = vmatpush.msra.mxu0 0.0
        %2042 = vmatpush.msra.mxu0 0.0
        %2043 = vmatpush.msra.mxu0 0.0
        %2044 = vmatpush.msra.mxu0 0.0
        %2045 = vmatpush.msra.mxu0 0.0
        %2046 = vmatpush.msra.mxu0 0.0
        %2047 = vmatpush.msra.mxu0 0.0
        %2048 = vmatpush.msra.mxu0 0.0
        %2049 = vmatpush.msra.mxu0 0.0
        %2050 = vmatpush.msra.mxu0 0.0
        %2051 = vmatpush.msra.mxu0 0.0
        %2052 = vmatpush.msra.mxu0 0.0
        %2053 = vmatpush.msra.mxu0 0.0
        %v2054 = vand.u32 %v1908, 4294901760
        %2055 = vmatpush.msra.mxu0 %v2054
        %v2056 = vand.u32 %v1913, 4294901760
        %2057 = vmatmul.f32.gmra.mxu0 %v2056
        %v2058 = vpop.f32.mrf.mxu0
        %v2059 = vadd.f32 %v2037, %v2058
        %2060 = vdwg.mxu0
        %2061 = vmatpush.msra.mxu0 0.0
        %2062 = vmatpush.msra.mxu0 0.0
        %2063 = vmatpush.msra.mxu0 0.0
        %2064 = vmatpush.msra.mxu0 0.0
        %2065 = vmatpush.msra.mxu0 0.0
        %2066 = vmatpush.msra.mxu0 0.0
        %2067 = vmatpush.msra.mxu0 0.0
        %2068 = vmatpush.msra.mxu0 0.0
        %2069 = vmatpush.msra.mxu0 0.0
        %2070 = vmatpush.msra.mxu0 0.0
        %2071 = vmatpush.msra.mxu0 0.0
        %2072 = vmatpush.msra.mxu0 0.0
        %2073 = vmatpush.msra.mxu0 0.0
        %2074 = vmatpush.msra.mxu0 0.0
        %2075 = vmatpush.msra.mxu0 0.0
        %v2076 = vand.u32 %v1909, 4294901760
        %2077 = vmatpush.msra.mxu0 %v2076
        %v2078 = vand.u32 %v1913, 4294901760
        %v2079 = vsub.f32 %v1913, %v2078
        %v2080 = vand.u32 %v2079, 4294901760
        %v2081 = vsub.f32 %v2079, %v2080
        %v2082 = vand.u32 %v2081, 4294901760
        %2083 = vmatmul.f32.gmra.mxu0 %v2082
        %v2084 = vpop.f32.mrf.mxu0
        %v2085 = vadd.f32 0.0, %v2084
        %2086 = vdwg.mxu0
        %2087 = vmatpush.msra.mxu0 0.0
        %2088 = vmatpush.msra.mxu0 0.0
        %2089 = vmatpush.msra.mxu0 0.0
        %2090 = vmatpush.msra.mxu0 0.0
        %2091 = vmatpush.msra.mxu0 0.0
        %2092 = vmatpush.msra.mxu0 0.0
        %2093 = vmatpush.msra.mxu0 0.0
        %2094 = vmatpush.msra.mxu0 0.0
        %2095 = vmatpush.msra.mxu0 0.0
        %2096 = vmatpush.msra.mxu0 0.0
        %2097 = vmatpush.msra.mxu0 0.0
        %2098 = vmatpush.msra.mxu0 0.0
        %2099 = vmatpush.msra.mxu0 0.0
        %2100 = vmatpush.msra.mxu0 0.0
        %2101 = vmatpush.msra.mxu0 0.0
        %v2102 = vand.u32 %v1909, 4294901760
        %v2103 = vsub.f32 %v1909, %v2102
        %v2104 = vand.u32 %v2103, 4294901760
        %v2105 = vsub.f32 %v2103, %v2104
        %v2106 = vand.u32 %v2105, 4294901760
        %2107 = vmatpush.msra.mxu0 %v2106
        %v2108 = vand.u32 %v1913, 4294901760
        %2109 = vmatmul.f32.gmra.mxu0 %v2108
        %v2110 = vpop.f32.mrf.mxu0
        %v2111 = vadd.f32 %v2085, %v2110
        %2112 = vdwg.mxu0
        %2113 = vmatpush.msra.mxu0 0.0
        %2114 = vmatpush.msra.mxu0 0.0
        %2115 = vmatpush.msra.mxu0 0.0
        %2116 = vmatpush.msra.mxu0 0.0
        %2117 = vmatpush.msra.mxu0 0.0
        %2118 = vmatpush.msra.mxu0 0.0
        %2119 = vmatpush.msra.mxu0 0.0
        %2120 = vmatpush.msra.mxu0 0.0
        %2121 = vmatpush.msra.mxu0 0.0
        %2122 = vmatpush.msra.mxu0 0.0
        %2123 = vmatpush.msra.mxu0 0.0
        %2124 = vmatpush.msra.mxu0 0.0
        %2125 = vmatpush.msra.mxu0 0.0
        %2126 = vmatpush.msra.mxu0 0.0
        %2127 = vmatpush.msra.mxu0 0.0
        %v2128 = vand.u32 %v1909, 4294901760
        %v2129 = vsub.f32 %v1909, %v2128
        %2130 = vmatpush.msra.mxu0 %v2129
        %v2131 = vand.u32 %v1913, 4294901760
        %v2132 = vsub.f32 %v1913, %v2131
        %2133 = vmatmul.f32.gmra.mxu0 %v2132
        %v2134 = vpop.f32.mrf.mxu0
        %v2135 = vadd.f32 %v2111, %v2134
        %2136 = vdwg.mxu0
        %2137 = vmatpush.msra.mxu0 0.0
        %2138 = vmatpush.msra.mxu0 0.0
        %2139 = vmatpush.msra.mxu0 0.0
        %2140 = vmatpush.msra.mxu0 0.0
        %2141 = vmatpush.msra.mxu0 0.0
        %2142 = vmatpush.msra.mxu0 0.0
        %2143 = vmatpush.msra.mxu0 0.0
        %2144 = vmatpush.msra.mxu0 0.0
        %2145 = vmatpush.msra.mxu0 0.0
        %2146 = vmatpush.msra.mxu0 0.0
        %2147 = vmatpush.msra.mxu0 0.0
        %2148 = vmatpush.msra.mxu0 0.0
        %2149 = vmatpush.msra.mxu0 0.0
        %2150 = vmatpush.msra.mxu0 0.0
        %2151 = vmatpush.msra.mxu0 0.0
        %v2152 = vand.u32 %v1909, 4294901760
        %2153 = vmatpush.msra.mxu0 %v2152
        %v2154 = vand.u32 %v1913, 4294901760
        %v2155 = vsub.f32 %v1913, %v2154
        %v2156 = vand.u32 %v2155, 4294901760
        %2157 = vmatmul.f32.gmra.mxu0 %v2156
        %v2158 = vpop.f32.mrf.mxu0
        %v2159 = vadd.f32 %v2135, %v2158
        %2160 = vdwg.mxu0
        %2161 = vmatpush.msra.mxu0 0.0
        %2162 = vmatpush.msra.mxu0 0.0
        %2163 = vmatpush.msra.mxu0 0.0
        %2164 = vmatpush.msra.mxu0 0.0
        %2165 = vmatpush.msra.mxu0 0.0
        %2166 = vmatpush.msra.mxu0 0.0
        %2167 = vmatpush.msra.mxu0 0.0
        %2168 = vmatpush.msra.mxu0 0.0
        %2169 = vmatpush.msra.mxu0 0.0
        %2170 = vmatpush.msra.mxu0 0.0
        %2171 = vmatpush.msra.mxu0 0.0
        %2172 = vmatpush.msra.mxu0 0.0
        %2173 = vmatpush.msra.mxu0 0.0
        %2174 = vmatpush.msra.mxu0 0.0
        %2175 = vmatpush.msra.mxu0 0.0
        %v2176 = vand.u32 %v1909, 4294901760
        %v2177 = vsub.f32 %v1909, %v2176
        %v2178 = vand.u32 %v2177, 4294901760
        %2179 = vmatpush.msra.mxu0 %v2178
        %v2180 = vand.u32 %v1913, 4294901760
        %2181 = vmatmul.f32.gmra.mxu0 %v2180
        %v2182 = vpop.f32.mrf.mxu0
        %v2183 = vadd.f32 %v2159, %v2182
        %2184 = vdwg.mxu0
        %2185 = vmatpush.msra.mxu0 0.0
        %2186 = vmatpush.msra.mxu0 0.0
        %2187 = vmatpush.msra.mxu0 0.0
        %2188 = vmatpush.msra.mxu0 0.0
        %2189 = vmatpush.msra.mxu0 0.0
        %2190 = vmatpush.msra.mxu0 0.0
        %2191 = vmatpush.msra.mxu0 0.0
        %2192 = vmatpush.msra.mxu0 0.0
        %2193 = vmatpush.msra.mxu0 0.0
        %2194 = vmatpush.msra.mxu0 0.0
        %2195 = vmatpush.msra.mxu0 0.0
        %2196 = vmatpush.msra.mxu0 0.0
        %2197 = vmatpush.msra.mxu0 0.0
        %2198 = vmatpush.msra.mxu0 0.0
        %2199 = vmatpush.msra.mxu0 0.0
        %v2200 = vand.u32 %v1909, 4294901760
        %2201 = vmatpush.msra.mxu0 %v2200
        %v2202 = vand.u32 %v1913, 4294901760
        %2203 = vmatmul.f32.gmra.mxu0 %v2202
        %v2204 = vpop.f32.mrf.mxu0
        %v2205 = vadd.f32 %v2183, %v2204
        %2206 = vdwg.mxu0
        %v2207 = vadd.f32 %v1899, %v2059
        %v2208 = vadd.f32 %v1900, %v2205
        %2209 = vrot.lane.b32.xlu0 %v279, 113
        %v2210 = vpop.permute.xlu0 %2209
        %2211 = vrot.lane.b32.xlu0 %v280, 113
        %v2212 = vpop.permute.xlu0 %2211
        %vm2213 = vcmp.lt.s32.totalorder %v282, 113
        %v2214 = vsel %vm2213, %v2210, %v2212
        %v2215 = vsel %vm2213, %v2212, %v2210
        %v2216 = vmul.f32 %v2214, %v360
        %v2217 = vmul.f32 %v2215, %v361
        %s2218 = scalar_lea.vmem %s255, 48
        %v2219 = vld [vmem:[%s2218] sm:$0xff]
        %v2221 = vsel %vm395, %v2219, 0
        %2223 = vmatpush.msra.mxu0 0.0
        %2224 = vmatpush.msra.mxu0 0.0
        %2225 = vmatpush.msra.mxu0 0.0
        %2226 = vmatpush.msra.mxu0 0.0
        %2227 = vmatpush.msra.mxu0 0.0
        %2228 = vmatpush.msra.mxu0 0.0
        %2229 = vmatpush.msra.mxu0 0.0
        %2230 = vmatpush.msra.mxu0 0.0
        %2231 = vmatpush.msra.mxu0 0.0
        %2232 = vmatpush.msra.mxu0 0.0
        %2233 = vmatpush.msra.mxu0 0.0
        %2234 = vmatpush.msra.mxu0 0.0
        %2235 = vmatpush.msra.mxu0 0.0
        %2236 = vmatpush.msra.mxu0 0.0
        %2237 = vmatpush.msra.mxu0 0.0
        %v2238 = vand.u32 %v2216, 4294901760
        %2239 = vmatpush.msra.mxu0 %v2238
        %v2240 = vand.u32 %v2221, 4294901760
        %v2241 = vsub.f32 %v2221, %v2240
        %v2242 = vand.u32 %v2241, 4294901760
        %v2243 = vsub.f32 %v2241, %v2242
        %v2244 = vand.u32 %v2243, 4294901760
        %2245 = vmatmul.f32.gmra.mxu0 %v2244
        %v2246 = vpop.f32.mrf.mxu0
        %v2247 = vadd.f32 0.0, %v2246
        %2248 = vdwg.mxu0
        %2249 = vmatpush.msra.mxu0 0.0
        %2250 = vmatpush.msra.mxu0 0.0
        %2251 = vmatpush.msra.mxu0 0.0
        %2252 = vmatpush.msra.mxu0 0.0
        %2253 = vmatpush.msra.mxu0 0.0
        %2254 = vmatpush.msra.mxu0 0.0
        %2255 = vmatpush.msra.mxu0 0.0
        %2256 = vmatpush.msra.mxu0 0.0
        %2257 = vmatpush.msra.mxu0 0.0
        %2258 = vmatpush.msra.mxu0 0.0
        %2259 = vmatpush.msra.mxu0 0.0
        %2260 = vmatpush.msra.mxu0 0.0
        %2261 = vmatpush.msra.mxu0 0.0
        %2262 = vmatpush.msra.mxu0 0.0
        %2263 = vmatpush.msra.mxu0 0.0
        %v2264 = vand.u32 %v2216, 4294901760
        %v2265 = vsub.f32 %v2216, %v2264
        %v2266 = vand.u32 %v2265, 4294901760
        %v2267 = vsub.f32 %v2265, %v2266
        %v2268 = vand.u32 %v2267, 4294901760
        %2269 = vmatpush.msra.mxu0 %v2268
        %v2270 = vand.u32 %v2221, 4294901760
        %2271 = vmatmul.f32.gmra.mxu0 %v2270
        %v2272 = vpop.f32.mrf.mxu0
        %v2273 = vadd.f32 %v2247, %v2272
        %2274 = vdwg.mxu0
        %2275 = vmatpush.msra.mxu0 0.0
        %2276 = vmatpush.msra.mxu0 0.0
        %2277 = vmatpush.msra.mxu0 0.0
        %2278 = vmatpush.msra.mxu0 0.0
        %2279 = vmatpush.msra.mxu0 0.0
        %2280 = vmatpush.msra.mxu0 0.0
        %2281 = vmatpush.msra.mxu0 0.0
        %2282 = vmatpush.msra.mxu0 0.0
        %2283 = vmatpush.msra.mxu0 0.0
        %2284 = vmatpush.msra.mxu0 0.0
        %2285 = vmatpush.msra.mxu0 0.0
        %2286 = vmatpush.msra.mxu0 0.0
        %2287 = vmatpush.msra.mxu0 0.0
        %2288 = vmatpush.msra.mxu0 0.0
        %2289 = vmatpush.msra.mxu0 0.0
        %v2290 = vand.u32 %v2216, 4294901760
        %v2291 = vsub.f32 %v2216, %v2290
        %2292 = vmatpush.msra.mxu0 %v2291
        %v2293 = vand.u32 %v2221, 4294901760
        %v2294 = vsub.f32 %v2221, %v2293
        %2295 = vmatmul.f32.gmra.mxu0 %v2294
        %v2296 = vpop.f32.mrf.mxu0
        %v2297 = vadd.f32 %v2273, %v2296
        %2298 = vdwg.mxu0
        %2299 = vmatpush.msra.mxu0 0.0
        %2300 = vmatpush.msra.mxu0 0.0
        %2301 = vmatpush.msra.mxu0 0.0
        %2302 = vmatpush.msra.mxu0 0.0
        %2303 = vmatpush.msra.mxu0 0.0
        %2304 = vmatpush.msra.mxu0 0.0
        %2305 = vmatpush.msra.mxu0 0.0
        %2306 = vmatpush.msra.mxu0 0.0
        %2307 = vmatpush.msra.mxu0 0.0
        %2308 = vmatpush.msra.mxu0 0.0
        %2309 = vmatpush.msra.mxu0 0.0
        %2310 = vmatpush.msra.mxu0 0.0
        %2311 = vmatpush.msra.mxu0 0.0
        %2312 = vmatpush.msra.mxu0 0.0
        %2313 = vmatpush.msra.mxu0 0.0
        %v2314 = vand.u32 %v2216, 4294901760
        %2315 = vmatpush.msra.mxu0 %v2314
        %v2316 = vand.u32 %v2221, 4294901760
        %v2317 = vsub.f32 %v2221, %v2316
        %v2318 = vand.u32 %v2317, 4294901760
        %2319 = vmatmul.f32.gmra.mxu0 %v2318
        %v2320 = vpop.f32.mrf.mxu0
        %v2321 = vadd.f32 %v2297, %v2320
        %2322 = vdwg.mxu0
        %2323 = vmatpush.msra.mxu0 0.0
        %2324 = vmatpush.msra.mxu0 0.0
        %2325 = vmatpush.msra.mxu0 0.0
        %2326 = vmatpush.msra.mxu0 0.0
        %2327 = vmatpush.msra.mxu0 0.0
        %2328 = vmatpush.msra.mxu0 0.0
        %2329 = vmatpush.msra.mxu0 0.0
        %2330 = vmatpush.msra.mxu0 0.0
        %2331 = vmatpush.msra.mxu0 0.0
        %2332 = vmatpush.msra.mxu0 0.0
        %2333 = vmatpush.msra.mxu0 0.0
        %2334 = vmatpush.msra.mxu0 0.0
        %2335 = vmatpush.msra.mxu0 0.0
        %2336 = vmatpush.msra.mxu0 0.0
        %2337 = vmatpush.msra.mxu0 0.0
        %v2338 = vand.u32 %v2216, 4294901760
        %v2339 = vsub.f32 %v2216, %v2338
        %v2340 = vand.u32 %v2339, 4294901760
        %2341 = vmatpush.msra.mxu0 %v2340
        %v2342 = vand.u32 %v2221, 4294901760
        %2343 = vmatmul.f32.gmra.mxu0 %v2342
        %v2344 = vpop.f32.mrf.mxu0
        %v2345 = vadd.f32 %v2321, %v2344
        %2346 = vdwg.mxu0
        %2347 = vmatpush.msra.mxu0 0.0
        %2348 = vmatpush.msra.mxu0 0.0
        %2349 = vmatpush.msra.mxu0 0.0
        %2350 = vmatpush.msra.mxu0 0.0
        %2351 = vmatpush.msra.mxu0 0.0
        %2352 = vmatpush.msra.mxu0 0.0
        %2353 = vmatpush.msra.mxu0 0.0
        %2354 = vmatpush.msra.mxu0 0.0
        %2355 = vmatpush.msra.mxu0 0.0
        %2356 = vmatpush.msra.mxu0 0.0
        %2357 = vmatpush.msra.mxu0 0.0
        %2358 = vmatpush.msra.mxu0 0.0
        %2359 = vmatpush.msra.mxu0 0.0
        %2360 = vmatpush.msra.mxu0 0.0
        %2361 = vmatpush.msra.mxu0 0.0
        %v2362 = vand.u32 %v2216, 4294901760
        %2363 = vmatpush.msra.mxu0 %v2362
        %v2364 = vand.u32 %v2221, 4294901760
        %2365 = vmatmul.f32.gmra.mxu0 %v2364
        %v2366 = vpop.f32.mrf.mxu0
        %v2367 = vadd.f32 %v2345, %v2366
        %2368 = vdwg.mxu0
        %2369 = vmatpush.msra.mxu0 0.0
        %2370 = vmatpush.msra.mxu0 0.0
        %2371 = vmatpush.msra.mxu0 0.0
        %2372 = vmatpush.msra.mxu0 0.0
        %2373 = vmatpush.msra.mxu0 0.0
        %2374 = vmatpush.msra.mxu0 0.0
        %2375 = vmatpush.msra.mxu0 0.0
        %2376 = vmatpush.msra.mxu0 0.0
        %2377 = vmatpush.msra.mxu0 0.0
        %2378 = vmatpush.msra.mxu0 0.0
        %2379 = vmatpush.msra.mxu0 0.0
        %2380 = vmatpush.msra.mxu0 0.0
        %2381 = vmatpush.msra.mxu0 0.0
        %2382 = vmatpush.msra.mxu0 0.0
        %2383 = vmatpush.msra.mxu0 0.0
        %v2384 = vand.u32 %v2217, 4294901760
        %2385 = vmatpush.msra.mxu0 %v2384
        %v2386 = vand.u32 %v2221, 4294901760
        %v2387 = vsub.f32 %v2221, %v2386
        %v2388 = vand.u32 %v2387, 4294901760
        %v2389 = vsub.f32 %v2387, %v2388
        %v2390 = vand.u32 %v2389, 4294901760
        %2391 = vmatmul.f32.gmra.mxu0 %v2390
        %v2392 = vpop.f32.mrf.mxu0
        %v2393 = vadd.f32 0.0, %v2392
        %2394 = vdwg.mxu0
        %2395 = vmatpush.msra.mxu0 0.0
        %2396 = vmatpush.msra.mxu0 0.0
        %2397 = vmatpush.msra.mxu0 0.0
        %2398 = vmatpush.msra.mxu0 0.0
        %2399 = vmatpush.msra.mxu0 0.0
        %2400 = vmatpush.msra.mxu0 0.0
        %2401 = vmatpush.msra.mxu0 0.0
        %2402 = vmatpush.msra.mxu0 0.0
        %2403 = vmatpush.msra.mxu0 0.0
        %2404 = vmatpush.msra.mxu0 0.0
        %2405 = vmatpush.msra.mxu0 0.0
        %2406 = vmatpush.msra.mxu0 0.0
        %2407 = vmatpush.msra.mxu0 0.0
        %2408 = vmatpush.msra.mxu0 0.0
        %2409 = vmatpush.msra.mxu0 0.0
        %v2410 = vand.u32 %v2217, 4294901760
        %v2411 = vsub.f32 %v2217, %v2410
        %v2412 = vand.u32 %v2411, 4294901760
        %v2413 = vsub.f32 %v2411, %v2412
        %v2414 = vand.u32 %v2413, 4294901760
        %2415 = vmatpush.msra.mxu0 %v2414
        %v2416 = vand.u32 %v2221, 4294901760
        %2417 = vmatmul.f32.gmra.mxu0 %v2416
        %v2418 = vpop.f32.mrf.mxu0
        %v2419 = vadd.f32 %v2393, %v2418
        %2420 = vdwg.mxu0
        %2421 = vmatpush.msra.mxu0 0.0
        %2422 = vmatpush.msra.mxu0 0.0
        %2423 = vmatpush.msra.mxu0 0.0
        %2424 = vmatpush.msra.mxu0 0.0
        %2425 = vmatpush.msra.mxu0 0.0
        %2426 = vmatpush.msra.mxu0 0.0
        %2427 = vmatpush.msra.mxu0 0.0
        %2428 = vmatpush.msra.mxu0 0.0
        %2429 = vmatpush.msra.mxu0 0.0
        %2430 = vmatpush.msra.mxu0 0.0
        %2431 = vmatpush.msra.mxu0 0.0
        %2432 = vmatpush.msra.mxu0 0.0
        %2433 = vmatpush.msra.mxu0 0.0
        %2434 = vmatpush.msra.mxu0 0.0
        %2435 = vmatpush.msra.mxu0 0.0
        %v2436 = vand.u32 %v2217, 4294901760
        %v2437 = vsub.f32 %v2217, %v2436
        %2438 = vmatpush.msra.mxu0 %v2437
        %v2439 = vand.u32 %v2221, 4294901760
        %v2440 = vsub.f32 %v2221, %v2439
        %2441 = vmatmul.f32.gmra.mxu0 %v2440
        %v2442 = vpop.f32.mrf.mxu0
        %v2443 = vadd.f32 %v2419, %v2442
        %2444 = vdwg.mxu0
        %2445 = vmatpush.msra.mxu0 0.0
        %2446 = vmatpush.msra.mxu0 0.0
        %2447 = vmatpush.msra.mxu0 0.0
        %2448 = vmatpush.msra.mxu0 0.0
        %2449 = vmatpush.msra.mxu0 0.0
        %2450 = vmatpush.msra.mxu0 0.0
        %2451 = vmatpush.msra.mxu0 0.0
        %2452 = vmatpush.msra.mxu0 0.0
        %2453 = vmatpush.msra.mxu0 0.0
        %2454 = vmatpush.msra.mxu0 0.0
        %2455 = vmatpush.msra.mxu0 0.0
        %2456 = vmatpush.msra.mxu0 0.0
        %2457 = vmatpush.msra.mxu0 0.0
        %2458 = vmatpush.msra.mxu0 0.0
        %2459 = vmatpush.msra.mxu0 0.0
        %v2460 = vand.u32 %v2217, 4294901760
        %2461 = vmatpush.msra.mxu0 %v2460
        %v2462 = vand.u32 %v2221, 4294901760
        %v2463 = vsub.f32 %v2221, %v2462
        %v2464 = vand.u32 %v2463, 4294901760
        %2465 = vmatmul.f32.gmra.mxu0 %v2464
        %v2466 = vpop.f32.mrf.mxu0
        %v2467 = vadd.f32 %v2443, %v2466
        %2468 = vdwg.mxu0
        %2469 = vmatpush.msra.mxu0 0.0
        %2470 = vmatpush.msra.mxu0 0.0
        %2471 = vmatpush.msra.mxu0 0.0
        %2472 = vmatpush.msra.mxu0 0.0
        %2473 = vmatpush.msra.mxu0 0.0
        %2474 = vmatpush.msra.mxu0 0.0
        %2475 = vmatpush.msra.mxu0 0.0
        %2476 = vmatpush.msra.mxu0 0.0
        %2477 = vmatpush.msra.mxu0 0.0
        %2478 = vmatpush.msra.mxu0 0.0
        %2479 = vmatpush.msra.mxu0 0.0
        %2480 = vmatpush.msra.mxu0 0.0
        %2481 = vmatpush.msra.mxu0 0.0
        %2482 = vmatpush.msra.mxu0 0.0
        %2483 = vmatpush.msra.mxu0 0.0
        %v2484 = vand.u32 %v2217, 4294901760
        %v2485 = vsub.f32 %v2217, %v2484
        %v2486 = vand.u32 %v2485, 4294901760
        %2487 = vmatpush.msra.mxu0 %v2486
        %v2488 = vand.u32 %v2221, 4294901760
        %2489 = vmatmul.f32.gmra.mxu0 %v2488
        %v2490 = vpop.f32.mrf.mxu0
        %v2491 = vadd.f32 %v2467, %v2490
        %2492 = vdwg.mxu0
        %2493 = vmatpush.msra.mxu0 0.0
        %2494 = vmatpush.msra.mxu0 0.0
        %2495 = vmatpush.msra.mxu0 0.0
        %2496 = vmatpush.msra.mxu0 0.0
        %2497 = vmatpush.msra.mxu0 0.0
        %2498 = vmatpush.msra.mxu0 0.0
        %2499 = vmatpush.msra.mxu0 0.0
        %2500 = vmatpush.msra.mxu0 0.0
        %2501 = vmatpush.msra.mxu0 0.0
        %2502 = vmatpush.msra.mxu0 0.0
        %2503 = vmatpush.msra.mxu0 0.0
        %2504 = vmatpush.msra.mxu0 0.0
        %2505 = vmatpush.msra.mxu0 0.0
        %2506 = vmatpush.msra.mxu0 0.0
        %2507 = vmatpush.msra.mxu0 0.0
        %v2508 = vand.u32 %v2217, 4294901760
        %2509 = vmatpush.msra.mxu0 %v2508
        %v2510 = vand.u32 %v2221, 4294901760
        %2511 = vmatmul.f32.gmra.mxu0 %v2510
        %v2512 = vpop.f32.mrf.mxu0
        %v2513 = vadd.f32 %v2491, %v2512
        %2514 = vdwg.mxu0
        %v2515 = vadd.f32 %v2207, %v2367
        %v2516 = vadd.f32 %v2208, %v2513
        %2517 = vrot.lane.b32.xlu0 %v279, 112
        %v2518 = vpop.permute.xlu0 %2517
        %2519 = vrot.lane.b32.xlu0 %v280, 112
        %v2520 = vpop.permute.xlu0 %2519
        %vm2521 = vcmp.lt.s32.totalorder %v282, 112
        %v2522 = vsel %vm2521, %v2518, %v2520
        %v2523 = vsel %vm2521, %v2520, %v2518
        %v2524 = vmul.f32 %v2522, %v366
        %v2525 = vmul.f32 %v2523, %v367
        %s2526 = scalar_lea.vmem %s255, 56
        %v2527 = vld [vmem:[%s2526] sm:$0xff]
        %v2529 = vsel %vm395, %v2527, 0
        %2531 = vmatpush.msra.mxu0 0.0
        %2532 = vmatpush.msra.mxu0 0.0
        %2533 = vmatpush.msra.mxu0 0.0
        %2534 = vmatpush.msra.mxu0 0.0
        %2535 = vmatpush.msra.mxu0 0.0
        %2536 = vmatpush.msra.mxu0 0.0
        %2537 = vmatpush.msra.mxu0 0.0
        %2538 = vmatpush.msra.mxu0 0.0
        %2539 = vmatpush.msra.mxu0 0.0
        %2540 = vmatpush.msra.mxu0 0.0
        %2541 = vmatpush.msra.mxu0 0.0
        %2542 = vmatpush.msra.mxu0 0.0
        %2543 = vmatpush.msra.mxu0 0.0
        %2544 = vmatpush.msra.mxu0 0.0
        %2545 = vmatpush.msra.mxu0 0.0
        %v2546 = vand.u32 %v2524, 4294901760
        %2547 = vmatpush.msra.mxu0 %v2546
        %v2548 = vand.u32 %v2529, 4294901760
        %v2549 = vsub.f32 %v2529, %v2548
        %v2550 = vand.u32 %v2549, 4294901760
        %v2551 = vsub.f32 %v2549, %v2550
        %v2552 = vand.u32 %v2551, 4294901760
        %2553 = vmatmul.f32.gmra.mxu0 %v2552
        %v2554 = vpop.f32.mrf.mxu0
        %v2555 = vadd.f32 0.0, %v2554
        %2556 = vdwg.mxu0
        %2557 = vmatpush.msra.mxu0 0.0
        %2558 = vmatpush.msra.mxu0 0.0
        %2559 = vmatpush.msra.mxu0 0.0
        %2560 = vmatpush.msra.mxu0 0.0
        %2561 = vmatpush.msra.mxu0 0.0
        %2562 = vmatpush.msra.mxu0 0.0
        %2563 = vmatpush.msra.mxu0 0.0
        %2564 = vmatpush.msra.mxu0 0.0
        %2565 = vmatpush.msra.mxu0 0.0
        %2566 = vmatpush.msra.mxu0 0.0
        %2567 = vmatpush.msra.mxu0 0.0
        %2568 = vmatpush.msra.mxu0 0.0
        %2569 = vmatpush.msra.mxu0 0.0
        %2570 = vmatpush.msra.mxu0 0.0
        %2571 = vmatpush.msra.mxu0 0.0
        %v2572 = vand.u32 %v2524, 4294901760
        %v2573 = vsub.f32 %v2524, %v2572
        %v2574 = vand.u32 %v2573, 4294901760
        %v2575 = vsub.f32 %v2573, %v2574
        %v2576 = vand.u32 %v2575, 4294901760
        %2577 = vmatpush.msra.mxu0 %v2576
        %v2578 = vand.u32 %v2529, 4294901760
        %2579 = vmatmul.f32.gmra.mxu0 %v2578
        %v2580 = vpop.f32.mrf.mxu0
        %v2581 = vadd.f32 %v2555, %v2580
        %2582 = vdwg.mxu0
        %2583 = vmatpush.msra.mxu0 0.0
        %2584 = vmatpush.msra.mxu0 0.0
        %2585 = vmatpush.msra.mxu0 0.0
        %2586 = vmatpush.msra.mxu0 0.0
        %2587 = vmatpush.msra.mxu0 0.0
        %2588 = vmatpush.msra.mxu0 0.0
        %2589 = vmatpush.msra.mxu0 0.0
        %2590 = vmatpush.msra.mxu0 0.0
        %2591 = vmatpush.msra.mxu0 0.0
        %2592 = vmatpush.msra.mxu0 0.0
        %2593 = vmatpush.msra.mxu0 0.0
        %2594 = vmatpush.msra.mxu0 0.0
        %2595 = vmatpush.msra.mxu0 0.0
        %2596 = vmatpush.msra.mxu0 0.0
        %2597 = vmatpush.msra.mxu0 0.0
        %v2598 = vand.u32 %v2524, 4294901760
        %v2599 = vsub.f32 %v2524, %v2598
        %2600 = vmatpush.msra.mxu0 %v2599
        %v2601 = vand.u32 %v2529, 4294901760
        %v2602 = vsub.f32 %v2529, %v2601
        %2603 = vmatmul.f32.gmra.mxu0 %v2602
        %v2604 = vpop.f32.mrf.mxu0
        %v2605 = vadd.f32 %v2581, %v2604
        %2606 = vdwg.mxu0
        %2607 = vmatpush.msra.mxu0 0.0
        %2608 = vmatpush.msra.mxu0 0.0
        %2609 = vmatpush.msra.mxu0 0.0
        %2610 = vmatpush.msra.mxu0 0.0
        %2611 = vmatpush.msra.mxu0 0.0
        %2612 = vmatpush.msra.mxu0 0.0
        %2613 = vmatpush.msra.mxu0 0.0
        %2614 = vmatpush.msra.mxu0 0.0
        %2615 = vmatpush.msra.mxu0 0.0
        %2616 = vmatpush.msra.mxu0 0.0
        %2617 = vmatpush.msra.mxu0 0.0
        %2618 = vmatpush.msra.mxu0 0.0
        %2619 = vmatpush.msra.mxu0 0.0
        %2620 = vmatpush.msra.mxu0 0.0
        %2621 = vmatpush.msra.mxu0 0.0
        %v2622 = vand.u32 %v2524, 4294901760
        %2623 = vmatpush.msra.mxu0 %v2622
        %v2624 = vand.u32 %v2529, 4294901760
        %v2625 = vsub.f32 %v2529, %v2624
        %v2626 = vand.u32 %v2625, 4294901760
        %2627 = vmatmul.f32.gmra.mxu0 %v2626
        %v2628 = vpop.f32.mrf.mxu0
        %v2629 = vadd.f32 %v2605, %v2628
        %2630 = vdwg.mxu0
        %2631 = vmatpush.msra.mxu0 0.0
        %2632 = vmatpush.msra.mxu0 0.0
        %2633 = vmatpush.msra.mxu0 0.0
        %2634 = vmatpush.msra.mxu0 0.0
        %2635 = vmatpush.msra.mxu0 0.0
        %2636 = vmatpush.msra.mxu0 0.0
        %2637 = vmatpush.msra.mxu0 0.0
        %2638 = vmatpush.msra.mxu0 0.0
        %2639 = vmatpush.msra.mxu0 0.0
        %2640 = vmatpush.msra.mxu0 0.0
        %2641 = vmatpush.msra.mxu0 0.0
        %2642 = vmatpush.msra.mxu0 0.0
        %2643 = vmatpush.msra.mxu0 0.0
        %2644 = vmatpush.msra.mxu0 0.0
        %2645 = vmatpush.msra.mxu0 0.0
        %v2646 = vand.u32 %v2524, 4294901760
        %v2647 = vsub.f32 %v2524, %v2646
        %v2648 = vand.u32 %v2647, 4294901760
        %2649 = vmatpush.msra.mxu0 %v2648
        %v2650 = vand.u32 %v2529, 4294901760
        %2651 = vmatmul.f32.gmra.mxu0 %v2650
        %v2652 = vpop.f32.mrf.mxu0
        %v2653 = vadd.f32 %v2629, %v2652
        %2654 = vdwg.mxu0
        %2655 = vmatpush.msra.mxu0 0.0
        %2656 = vmatpush.msra.mxu0 0.0
        %2657 = vmatpush.msra.mxu0 0.0
        %2658 = vmatpush.msra.mxu0 0.0
        %2659 = vmatpush.msra.mxu0 0.0
        %2660 = vmatpush.msra.mxu0 0.0
        %2661 = vmatpush.msra.mxu0 0.0
        %2662 = vmatpush.msra.mxu0 0.0
        %2663 = vmatpush.msra.mxu0 0.0
        %2664 = vmatpush.msra.mxu0 0.0
        %2665 = vmatpush.msra.mxu0 0.0
        %2666 = vmatpush.msra.mxu0 0.0
        %2667 = vmatpush.msra.mxu0 0.0
        %2668 = vmatpush.msra.mxu0 0.0
        %2669 = vmatpush.msra.mxu0 0.0
        %v2670 = vand.u32 %v2524, 4294901760
        %2671 = vmatpush.msra.mxu0 %v2670
        %v2672 = vand.u32 %v2529, 4294901760
        %2673 = vmatmul.f32.gmra.mxu0 %v2672
        %v2674 = vpop.f32.mrf.mxu0
        %v2675 = vadd.f32 %v2653, %v2674
        %2676 = vdwg.mxu0
        %2677 = vmatpush.msra.mxu0 0.0
        %2678 = vmatpush.msra.mxu0 0.0
        %2679 = vmatpush.msra.mxu0 0.0
        %2680 = vmatpush.msra.mxu0 0.0
        %2681 = vmatpush.msra.mxu0 0.0
        %2682 = vmatpush.msra.mxu0 0.0
        %2683 = vmatpush.msra.mxu0 0.0
        %2684 = vmatpush.msra.mxu0 0.0
        %2685 = vmatpush.msra.mxu0 0.0
        %2686 = vmatpush.msra.mxu0 0.0
        %2687 = vmatpush.msra.mxu0 0.0
        %2688 = vmatpush.msra.mxu0 0.0
        %2689 = vmatpush.msra.mxu0 0.0
        %2690 = vmatpush.msra.mxu0 0.0
        %2691 = vmatpush.msra.mxu0 0.0
        %v2692 = vand.u32 %v2525, 4294901760
        %2693 = vmatpush.msra.mxu0 %v2692
        %v2694 = vand.u32 %v2529, 4294901760
        %v2695 = vsub.f32 %v2529, %v2694
        %v2696 = vand.u32 %v2695, 4294901760
        %v2697 = vsub.f32 %v2695, %v2696
        %v2698 = vand.u32 %v2697, 4294901760
        %2699 = vmatmul.f32.gmra.mxu0 %v2698
        %v2700 = vpop.f32.mrf.mxu0
        %v2701 = vadd.f32 0.0, %v2700
        %2702 = vdwg.mxu0
        %2703 = vmatpush.msra.mxu0 0.0
        %2704 = vmatpush.msra.mxu0 0.0
        %2705 = vmatpush.msra.mxu0 0.0
        %2706 = vmatpush.msra.mxu0 0.0
        %2707 = vmatpush.msra.mxu0 0.0
        %2708 = vmatpush.msra.mxu0 0.0
        %2709 = vmatpush.msra.mxu0 0.0
        %2710 = vmatpush.msra.mxu0 0.0
        %2711 = vmatpush.msra.mxu0 0.0
        %2712 = vmatpush.msra.mxu0 0.0
        %2713 = vmatpush.msra.mxu0 0.0
        %2714 = vmatpush.msra.mxu0 0.0
        %2715 = vmatpush.msra.mxu0 0.0
        %2716 = vmatpush.msra.mxu0 0.0
        %2717 = vmatpush.msra.mxu0 0.0
        %v2718 = vand.u32 %v2525, 4294901760
        %v2719 = vsub.f32 %v2525, %v2718
        %v2720 = vand.u32 %v2719, 4294901760
        %v2721 = vsub.f32 %v2719, %v2720
        %v2722 = vand.u32 %v2721, 4294901760
        %2723 = vmatpush.msra.mxu0 %v2722
        %v2724 = vand.u32 %v2529, 4294901760
        %2725 = vmatmul.f32.gmra.mxu0 %v2724
        %v2726 = vpop.f32.mrf.mxu0
        %v2727 = vadd.f32 %v2701, %v2726
        %2728 = vdwg.mxu0
        %2729 = vmatpush.msra.mxu0 0.0
        %2730 = vmatpush.msra.mxu0 0.0
        %2731 = vmatpush.msra.mxu0 0.0
        %2732 = vmatpush.msra.mxu0 0.0
        %2733 = vmatpush.msra.mxu0 0.0
        %2734 = vmatpush.msra.mxu0 0.0
        %2735 = vmatpush.msra.mxu0 0.0
        %2736 = vmatpush.msra.mxu0 0.0
        %2737 = vmatpush.msra.mxu0 0.0
        %2738 = vmatpush.msra.mxu0 0.0
        %2739 = vmatpush.msra.mxu0 0.0
        %2740 = vmatpush.msra.mxu0 0.0
        %2741 = vmatpush.msra.mxu0 0.0
        %2742 = vmatpush.msra.mxu0 0.0
        %2743 = vmatpush.msra.mxu0 0.0
        %v2744 = vand.u32 %v2525, 4294901760
        %v2745 = vsub.f32 %v2525, %v2744
        %2746 = vmatpush.msra.mxu0 %v2745
        %v2747 = vand.u32 %v2529, 4294901760
        %v2748 = vsub.f32 %v2529, %v2747
        %2749 = vmatmul.f32.gmra.mxu0 %v2748
        %v2750 = vpop.f32.mrf.mxu0
        %v2751 = vadd.f32 %v2727, %v2750
        %2752 = vdwg.mxu0
        %2753 = vmatpush.msra.mxu0 0.0
        %2754 = vmatpush.msra.mxu0 0.0
        %2755 = vmatpush.msra.mxu0 0.0
        %2756 = vmatpush.msra.mxu0 0.0
        %2757 = vmatpush.msra.mxu0 0.0
        %2758 = vmatpush.msra.mxu0 0.0
        %2759 = vmatpush.msra.mxu0 0.0
        %2760 = vmatpush.msra.mxu0 0.0
        %2761 = vmatpush.msra.mxu0 0.0
        %2762 = vmatpush.msra.mxu0 0.0
        %2763 = vmatpush.msra.mxu0 0.0
        %2764 = vmatpush.msra.mxu0 0.0
        %2765 = vmatpush.msra.mxu0 0.0
        %2766 = vmatpush.msra.mxu0 0.0
        %2767 = vmatpush.msra.mxu0 0.0
        %v2768 = vand.u32 %v2525, 4294901760
        %2769 = vmatpush.msra.mxu0 %v2768
        %v2770 = vand.u32 %v2529, 4294901760
        %v2771 = vsub.f32 %v2529, %v2770
        %v2772 = vand.u32 %v2771, 4294901760
        %2773 = vmatmul.f32.gmra.mxu0 %v2772
        %v2774 = vpop.f32.mrf.mxu0
        %v2775 = vadd.f32 %v2751, %v2774
        %2776 = vdwg.mxu0
        %2777 = vmatpush.msra.mxu0 0.0
        %2778 = vmatpush.msra.mxu0 0.0
        %2779 = vmatpush.msra.mxu0 0.0
        %2780 = vmatpush.msra.mxu0 0.0
        %2781 = vmatpush.msra.mxu0 0.0
        %2782 = vmatpush.msra.mxu0 0.0
        %2783 = vmatpush.msra.mxu0 0.0
        %2784 = vmatpush.msra.mxu0 0.0
        %2785 = vmatpush.msra.mxu0 0.0
        %2786 = vmatpush.msra.mxu0 0.0
        %2787 = vmatpush.msra.mxu0 0.0
        %2788 = vmatpush.msra.mxu0 0.0
        %2789 = vmatpush.msra.mxu0 0.0
        %2790 = vmatpush.msra.mxu0 0.0
        %2791 = vmatpush.msra.mxu0 0.0
        %v2792 = vand.u32 %v2525, 4294901760
        %v2793 = vsub.f32 %v2525, %v2792
        %v2794 = vand.u32 %v2793, 4294901760
        %2795 = vmatpush.msra.mxu0 %v2794
        %v2796 = vand.u32 %v2529, 4294901760
        %2797 = vmatmul.f32.gmra.mxu0 %v2796
        %v2798 = vpop.f32.mrf.mxu0
        %v2799 = vadd.f32 %v2775, %v2798
        %2800 = vdwg.mxu0
        %2801 = vmatpush.msra.mxu0 0.0
        %2802 = vmatpush.msra.mxu0 0.0
        %2803 = vmatpush.msra.mxu0 0.0
        %2804 = vmatpush.msra.mxu0 0.0
        %2805 = vmatpush.msra.mxu0 0.0
        %2806 = vmatpush.msra.mxu0 0.0
        %2807 = vmatpush.msra.mxu0 0.0
        %2808 = vmatpush.msra.mxu0 0.0
        %2809 = vmatpush.msra.mxu0 0.0
        %2810 = vmatpush.msra.mxu0 0.0
        %2811 = vmatpush.msra.mxu0 0.0
        %2812 = vmatpush.msra.mxu0 0.0
        %2813 = vmatpush.msra.mxu0 0.0
        %2814 = vmatpush.msra.mxu0 0.0
        %2815 = vmatpush.msra.mxu0 0.0
        %v2816 = vand.u32 %v2525, 4294901760
        %2817 = vmatpush.msra.mxu0 %v2816
        %v2818 = vand.u32 %v2529, 4294901760
        %2819 = vmatmul.f32.gmra.mxu0 %v2818
        %v2820 = vpop.f32.mrf.mxu0
        %v2821 = vadd.f32 %v2799, %v2820
        %2822 = vdwg.mxu0
        %v2823 = vadd.f32 %v2515, %v2675
        %v2824 = vadd.f32 %v2516, %v2821
        %2825 = vrot.lane.b32.xlu0 %v279, 111
        %v2826 = vpop.permute.xlu0 %2825
        %2827 = vrot.lane.b32.xlu0 %v280, 111
        %v2828 = vpop.permute.xlu0 %2827
        %vm2829 = vcmp.lt.s32.totalorder %v282, 111
        %v2830 = vsel %vm2829, %v2826, %v2828
        %v2831 = vsel %vm2829, %v2828, %v2826
        %v2832 = vmul.f32 %v2830, %v372
        %v2833 = vmul.f32 %v2831, %v373
        %s2834 = scalar_lea.vmem %s255, 64
        %v2835 = vld [vmem:[%s2834] sm:$0xff]
        %v2837 = vsel %vm395, %v2835, 0
        %2839 = vmatpush.msra.mxu0 0.0
        %2840 = vmatpush.msra.mxu0 0.0
        %2841 = vmatpush.msra.mxu0 0.0
        %2842 = vmatpush.msra.mxu0 0.0
        %2843 = vmatpush.msra.mxu0 0.0
        %2844 = vmatpush.msra.mxu0 0.0
        %2845 = vmatpush.msra.mxu0 0.0
        %2846 = vmatpush.msra.mxu0 0.0
        %2847 = vmatpush.msra.mxu0 0.0
        %2848 = vmatpush.msra.mxu0 0.0
        %2849 = vmatpush.msra.mxu0 0.0
        %2850 = vmatpush.msra.mxu0 0.0
        %2851 = vmatpush.msra.mxu0 0.0
        %2852 = vmatpush.msra.mxu0 0.0
        %2853 = vmatpush.msra.mxu0 0.0
        %v2854 = vand.u32 %v2832, 4294901760
        %2855 = vmatpush.msra.mxu0 %v2854
        %v2856 = vand.u32 %v2837, 4294901760
        %v2857 = vsub.f32 %v2837, %v2856
        %v2858 = vand.u32 %v2857, 4294901760
        %v2859 = vsub.f32 %v2857, %v2858
        %v2860 = vand.u32 %v2859, 4294901760
        %2861 = vmatmul.f32.gmra.mxu0 %v2860
        %v2862 = vpop.f32.mrf.mxu0
        %v2863 = vadd.f32 0.0, %v2862
        %2864 = vdwg.mxu0
        %2865 = vmatpush.msra.mxu0 0.0
        %2866 = vmatpush.msra.mxu0 0.0
        %2867 = vmatpush.msra.mxu0 0.0
        %2868 = vmatpush.msra.mxu0 0.0
        %2869 = vmatpush.msra.mxu0 0.0
        %2870 = vmatpush.msra.mxu0 0.0
        %2871 = vmatpush.msra.mxu0 0.0
        %2872 = vmatpush.msra.mxu0 0.0
        %2873 = vmatpush.msra.mxu0 0.0
        %2874 = vmatpush.msra.mxu0 0.0
        %2875 = vmatpush.msra.mxu0 0.0
        %2876 = vmatpush.msra.mxu0 0.0
        %2877 = vmatpush.msra.mxu0 0.0
        %2878 = vmatpush.msra.mxu0 0.0
        %2879 = vmatpush.msra.mxu0 0.0
        %v2880 = vand.u32 %v2832, 4294901760
        %v2881 = vsub.f32 %v2832, %v2880
        %v2882 = vand.u32 %v2881, 4294901760
        %v2883 = vsub.f32 %v2881, %v2882
        %v2884 = vand.u32 %v2883, 4294901760
        %2885 = vmatpush.msra.mxu0 %v2884
        %v2886 = vand.u32 %v2837, 4294901760
        %2887 = vmatmul.f32.gmra.mxu0 %v2886
        %v2888 = vpop.f32.mrf.mxu0
        %v2889 = vadd.f32 %v2863, %v2888
        %2890 = vdwg.mxu0
        %2891 = vmatpush.msra.mxu0 0.0
        %2892 = vmatpush.msra.mxu0 0.0
        %2893 = vmatpush.msra.mxu0 0.0
        %2894 = vmatpush.msra.mxu0 0.0
        %2895 = vmatpush.msra.mxu0 0.0
        %2896 = vmatpush.msra.mxu0 0.0
        %2897 = vmatpush.msra.mxu0 0.0
        %2898 = vmatpush.msra.mxu0 0.0
        %2899 = vmatpush.msra.mxu0 0.0
        %2900 = vmatpush.msra.mxu0 0.0
        %2901 = vmatpush.msra.mxu0 0.0
        %2902 = vmatpush.msra.mxu0 0.0
        %2903 = vmatpush.msra.mxu0 0.0
        %2904 = vmatpush.msra.mxu0 0.0
        %2905 = vmatpush.msra.mxu0 0.0
        %v2906 = vand.u32 %v2832, 4294901760
        %v2907 = vsub.f32 %v2832, %v2906
        %2908 = vmatpush.msra.mxu0 %v2907
        %v2909 = vand.u32 %v2837, 4294901760
        %v2910 = vsub.f32 %v2837, %v2909
        %2911 = vmatmul.f32.gmra.mxu0 %v2910
        %v2912 = vpop.f32.mrf.mxu0
        %v2913 = vadd.f32 %v2889, %v2912
        %2914 = vdwg.mxu0
        %2915 = vmatpush.msra.mxu0 0.0
        %2916 = vmatpush.msra.mxu0 0.0
        %2917 = vmatpush.msra.mxu0 0.0
        %2918 = vmatpush.msra.mxu0 0.0
        %2919 = vmatpush.msra.mxu0 0.0
        %2920 = vmatpush.msra.mxu0 0.0
        %2921 = vmatpush.msra.mxu0 0.0
        %2922 = vmatpush.msra.mxu0 0.0
        %2923 = vmatpush.msra.mxu0 0.0
        %2924 = vmatpush.msra.mxu0 0.0
        %2925 = vmatpush.msra.mxu0 0.0
        %2926 = vmatpush.msra.mxu0 0.0
        %2927 = vmatpush.msra.mxu0 0.0
        %2928 = vmatpush.msra.mxu0 0.0
        %2929 = vmatpush.msra.mxu0 0.0
        %v2930 = vand.u32 %v2832, 4294901760
        %2931 = vmatpush.msra.mxu0 %v2930
        %v2932 = vand.u32 %v2837, 4294901760
        %v2933 = vsub.f32 %v2837, %v2932
        %v2934 = vand.u32 %v2933, 4294901760
        %2935 = vmatmul.f32.gmra.mxu0 %v2934
        %v2936 = vpop.f32.mrf.mxu0
        %v2937 = vadd.f32 %v2913, %v2936
        %2938 = vdwg.mxu0
        %2939 = vmatpush.msra.mxu0 0.0
        %2940 = vmatpush.msra.mxu0 0.0
        %2941 = vmatpush.msra.mxu0 0.0
        %2942 = vmatpush.msra.mxu0 0.0
        %2943 = vmatpush.msra.mxu0 0.0
        %2944 = vmatpush.msra.mxu0 0.0
        %2945 = vmatpush.msra.mxu0 0.0
        %2946 = vmatpush.msra.mxu0 0.0
        %2947 = vmatpush.msra.mxu0 0.0
        %2948 = vmatpush.msra.mxu0 0.0
        %2949 = vmatpush.msra.mxu0 0.0
        %2950 = vmatpush.msra.mxu0 0.0
        %2951 = vmatpush.msra.mxu0 0.0
        %2952 = vmatpush.msra.mxu0 0.0
        %2953 = vmatpush.msra.mxu0 0.0
        %v2954 = vand.u32 %v2832, 4294901760
        %v2955 = vsub.f32 %v2832, %v2954
        %v2956 = vand.u32 %v2955, 4294901760
        %2957 = vmatpush.msra.mxu0 %v2956
        %v2958 = vand.u32 %v2837, 4294901760
        %2959 = vmatmul.f32.gmra.mxu0 %v2958
        %v2960 = vpop.f32.mrf.mxu0
        %v2961 = vadd.f32 %v2937, %v2960
        %2962 = vdwg.mxu0
        %2963 = vmatpush.msra.mxu0 0.0
        %2964 = vmatpush.msra.mxu0 0.0
        %2965 = vmatpush.msra.mxu0 0.0
        %2966 = vmatpush.msra.mxu0 0.0
        %2967 = vmatpush.msra.mxu0 0.0
        %2968 = vmatpush.msra.mxu0 0.0
        %2969 = vmatpush.msra.mxu0 0.0
        %2970 = vmatpush.msra.mxu0 0.0
        %2971 = vmatpush.msra.mxu0 0.0
        %2972 = vmatpush.msra.mxu0 0.0
        %2973 = vmatpush.msra.mxu0 0.0
        %2974 = vmatpush.msra.mxu0 0.0
        %2975 = vmatpush.msra.mxu0 0.0
        %2976 = vmatpush.msra.mxu0 0.0
        %2977 = vmatpush.msra.mxu0 0.0
        %v2978 = vand.u32 %v2832, 4294901760
        %2979 = vmatpush.msra.mxu0 %v2978
        %v2980 = vand.u32 %v2837, 4294901760
        %2981 = vmatmul.f32.gmra.mxu0 %v2980
        %v2982 = vpop.f32.mrf.mxu0
        %v2983 = vadd.f32 %v2961, %v2982
        %2984 = vdwg.mxu0
        %2985 = vmatpush.msra.mxu0 0.0
        %2986 = vmatpush.msra.mxu0 0.0
        %2987 = vmatpush.msra.mxu0 0.0
        %2988 = vmatpush.msra.mxu0 0.0
        %2989 = vmatpush.msra.mxu0 0.0
        %2990 = vmatpush.msra.mxu0 0.0
        %2991 = vmatpush.msra.mxu0 0.0
        %2992 = vmatpush.msra.mxu0 0.0
        %2993 = vmatpush.msra.mxu0 0.0
        %2994 = vmatpush.msra.mxu0 0.0
        %2995 = vmatpush.msra.mxu0 0.0
        %2996 = vmatpush.msra.mxu0 0.0
        %2997 = vmatpush.msra.mxu0 0.0
        %2998 = vmatpush.msra.mxu0 0.0
        %2999 = vmatpush.msra.mxu0 0.0
        %v3000 = vand.u32 %v2833, 4294901760
        %3001 = vmatpush.msra.mxu0 %v3000
        %v3002 = vand.u32 %v2837, 4294901760
        %v3003 = vsub.f32 %v2837, %v3002
        %v3004 = vand.u32 %v3003, 4294901760
        %v3005 = vsub.f32 %v3003, %v3004
        %v3006 = vand.u32 %v3005, 4294901760
        %3007 = vmatmul.f32.gmra.mxu0 %v3006
        %v3008 = vpop.f32.mrf.mxu0
        %v3009 = vadd.f32 0.0, %v3008
        %3010 = vdwg.mxu0
        %3011 = vmatpush.msra.mxu0 0.0
        %3012 = vmatpush.msra.mxu0 0.0
        %3013 = vmatpush.msra.mxu0 0.0
        %3014 = vmatpush.msra.mxu0 0.0
        %3015 = vmatpush.msra.mxu0 0.0
        %3016 = vmatpush.msra.mxu0 0.0
        %3017 = vmatpush.msra.mxu0 0.0
        %3018 = vmatpush.msra.mxu0 0.0
        %3019 = vmatpush.msra.mxu0 0.0
        %3020 = vmatpush.msra.mxu0 0.0
        %3021 = vmatpush.msra.mxu0 0.0
        %3022 = vmatpush.msra.mxu0 0.0
        %3023 = vmatpush.msra.mxu0 0.0
        %3024 = vmatpush.msra.mxu0 0.0
        %3025 = vmatpush.msra.mxu0 0.0
        %v3026 = vand.u32 %v2833, 4294901760
        %v3027 = vsub.f32 %v2833, %v3026
        %v3028 = vand.u32 %v3027, 4294901760
        %v3029 = vsub.f32 %v3027, %v3028
        %v3030 = vand.u32 %v3029, 4294901760
        %3031 = vmatpush.msra.mxu0 %v3030
        %v3032 = vand.u32 %v2837, 4294901760
        %3033 = vmatmul.f32.gmra.mxu0 %v3032
        %v3034 = vpop.f32.mrf.mxu0
        %v3035 = vadd.f32 %v3009, %v3034
        %3036 = vdwg.mxu0
        %3037 = vmatpush.msra.mxu0 0.0
        %3038 = vmatpush.msra.mxu0 0.0
        %3039 = vmatpush.msra.mxu0 0.0
        %3040 = vmatpush.msra.mxu0 0.0
        %3041 = vmatpush.msra.mxu0 0.0
        %3042 = vmatpush.msra.mxu0 0.0
        %3043 = vmatpush.msra.mxu0 0.0
        %3044 = vmatpush.msra.mxu0 0.0
        %3045 = vmatpush.msra.mxu0 0.0
        %3046 = vmatpush.msra.mxu0 0.0
        %3047 = vmatpush.msra.mxu0 0.0
        %3048 = vmatpush.msra.mxu0 0.0
        %3049 = vmatpush.msra.mxu0 0.0
        %3050 = vmatpush.msra.mxu0 0.0
        %3051 = vmatpush.msra.mxu0 0.0
        %v3052 = vand.u32 %v2833, 4294901760
        %v3053 = vsub.f32 %v2833, %v3052
        %3054 = vmatpush.msra.mxu0 %v3053
        %v3055 = vand.u32 %v2837, 4294901760
        %v3056 = vsub.f32 %v2837, %v3055
        %3057 = vmatmul.f32.gmra.mxu0 %v3056
        %v3058 = vpop.f32.mrf.mxu0
        %v3059 = vadd.f32 %v3035, %v3058
        %3060 = vdwg.mxu0
        %3061 = vmatpush.msra.mxu0 0.0
        %3062 = vmatpush.msra.mxu0 0.0
        %3063 = vmatpush.msra.mxu0 0.0
        %3064 = vmatpush.msra.mxu0 0.0
        %3065 = vmatpush.msra.mxu0 0.0
        %3066 = vmatpush.msra.mxu0 0.0
        %3067 = vmatpush.msra.mxu0 0.0
        %3068 = vmatpush.msra.mxu0 0.0
        %3069 = vmatpush.msra.mxu0 0.0
        %3070 = vmatpush.msra.mxu0 0.0
        %3071 = vmatpush.msra.mxu0 0.0
        %3072 = vmatpush.msra.mxu0 0.0
        %3073 = vmatpush.msra.mxu0 0.0
        %3074 = vmatpush.msra.mxu0 0.0
        %3075 = vmatpush.msra.mxu0 0.0
        %v3076 = vand.u32 %v2833, 4294901760
        %3077 = vmatpush.msra.mxu0 %v3076
        %v3078 = vand.u32 %v2837, 4294901760
        %v3079 = vsub.f32 %v2837, %v3078
        %v3080 = vand.u32 %v3079, 4294901760
        %3081 = vmatmul.f32.gmra.mxu0 %v3080
        %v3082 = vpop.f32.mrf.mxu0
        %v3083 = vadd.f32 %v3059, %v3082
        %3084 = vdwg.mxu0
        %3085 = vmatpush.msra.mxu0 0.0
        %3086 = vmatpush.msra.mxu0 0.0
        %3087 = vmatpush.msra.mxu0 0.0
        %3088 = vmatpush.msra.mxu0 0.0
        %3089 = vmatpush.msra.mxu0 0.0
        %3090 = vmatpush.msra.mxu0 0.0
        %3091 = vmatpush.msra.mxu0 0.0
        %3092 = vmatpush.msra.mxu0 0.0
        %3093 = vmatpush.msra.mxu0 0.0
        %3094 = vmatpush.msra.mxu0 0.0
        %3095 = vmatpush.msra.mxu0 0.0
        %3096 = vmatpush.msra.mxu0 0.0
        %3097 = vmatpush.msra.mxu0 0.0
        %3098 = vmatpush.msra.mxu0 0.0
        %3099 = vmatpush.msra.mxu0 0.0
        %v3100 = vand.u32 %v2833, 4294901760
        %v3101 = vsub.f32 %v2833, %v3100
        %v3102 = vand.u32 %v3101, 4294901760
        %3103 = vmatpush.msra.mxu0 %v3102
        %v3104 = vand.u32 %v2837, 4294901760
        %3105 = vmatmul.f32.gmra.mxu0 %v3104
        %v3106 = vpop.f32.mrf.mxu0
        %v3107 = vadd.f32 %v3083, %v3106
        %3108 = vdwg.mxu0
        %3109 = vmatpush.msra.mxu0 0.0
        %3110 = vmatpush.msra.mxu0 0.0
        %3111 = vmatpush.msra.mxu0 0.0
        %3112 = vmatpush.msra.mxu0 0.0
        %3113 = vmatpush.msra.mxu0 0.0
        %3114 = vmatpush.msra.mxu0 0.0
        %3115 = vmatpush.msra.mxu0 0.0
        %3116 = vmatpush.msra.mxu0 0.0
        %3117 = vmatpush.msra.mxu0 0.0
        %3118 = vmatpush.msra.mxu0 0.0
        %3119 = vmatpush.msra.mxu0 0.0
        %3120 = vmatpush.msra.mxu0 0.0
        %3121 = vmatpush.msra.mxu0 0.0
        %3122 = vmatpush.msra.mxu0 0.0
        %3123 = vmatpush.msra.mxu0 0.0
        %v3124 = vand.u32 %v2833, 4294901760
        %3125 = vmatpush.msra.mxu0 %v3124
        %v3126 = vand.u32 %v2837, 4294901760
        %3127 = vmatmul.f32.gmra.mxu0 %v3126
        %v3128 = vpop.f32.mrf.mxu0
        %v3129 = vadd.f32 %v3107, %v3128
        %3130 = vdwg.mxu0
        %v3131 = vadd.f32 %v2823, %v2983
        %v3132 = vadd.f32 %v2824, %v3129
        %v3133 = vld [vmem:[%s260] sm:$0xff]
        %s3134 = scalar_lea.vmem %s260, 8
        %v3135 = vld [vmem:[%s3134] sm:$0xff]
        %v3136 = vadd.f32 %v3131, %v3132
        %3137 = vadd.xlane.f32.xlu0 %v3136
        %v3138 = vpop.xlane.xlu0 %3137
        %v3139 = vmul.f32 %v3131, %v3131
        %v3140 = vmul.f32 %v3132, %v3132
        %v3141 = vadd.f32 %v3139, %v3140
        %3142 = vadd.xlane.f32.xlu0 %v3141
        %v3143 = vpop.xlane.xlu0 %3142
        %v3145 = vrot.slane %v3138, 4
        %v3147 = vadd.f32 %v3138, %v3145
        %v3149 = vrot.slane %v3143, 4
        %v3151 = vadd.f32 %v3143, %v3149
        %v3152 = vmul.f32 %v3147, 0.001953125
        %v3153 = vmul.f32 %v3151, 0.001953125
        %v3154 = vmul.f32 %v3152, %v3152
        %v3155 = vsub.f32 %v3153, %v3154
        %v3156 = vmax.f32 %v3155, 0.0
        %v3158 = vrot.slane %v3152, 4
        %vm3160 = vcmask 1043456
        %v3161 = vsel %vm3160, %v3152, %v3158
        %v3163 = vrot.slane %v3156, 4
        %v3165 = vsel %vm3160, %v3156, %v3163
        %v3166 = vadd.f32 %v3165, 1e-05
        %v3167 = vrsqrt.pop %v3166
        %v3168 = vmul.f32 %v3167, %v3166
        %v3169 = vmul.f32 %v3168, %v3167
        %v3170 = vmul.f32 0.5, %v3169
        %v3171 = vsub.f32 1.5, %v3170
        %v3172 = vmul.f32 %v3167, %v3171
        %vm3173 = vweird.f32 %v3166
        %vm3174 = vweird.f32 %v3167
        %vm3175 = vmor %vm3173, %vm3174
        %v3176 = vsel %vm3175, %v3167, %v3172
        %v3177 = vmul.f32 %v3133, %v3176
        %v3178 = vmul.f32 %v3161, %v3177
        %v3179 = vsub.f32 %v3135, %v3178
        %3181 = vset.pattern.permute.xlu0 0
        %3182 = vperm.xlu0 %3181, %v3177
        %v3183 = vpop.permute.xlu0 %3182
        %v3185 = vmul.f32 %v3131, %v3183
        %v3186 = vmul.f32 %v3132, %v3183
        %3188 = vset.pattern.permute.xlu0 0
        %3189 = vperm.xlu0 %3188, %v3179
        %v3190 = vpop.permute.xlu0 %3189
        %v3192 = vadd.f32 %v3185, %v3190
        %v3193 = vadd.f32 %v3186, %v3190
        %v3194 = vmax.f32 %v3192, 0.0
        %v3195 = vmax.f32 %v3193, 0.0
        %3196 = vrot.lane.b32.xlu0 %v3194, 17
        %v3197 = vpop.permute.xlu0 %3196
        %3198 = vrot.lane.b32.xlu0 %v3195, 17
        %v3199 = vpop.permute.xlu0 %3198
        %v3200 = vsel %vm378, %v3197, %v3199
        %v3201 = vsel %vm378, %v3199, %v3197
        %v3202 = vmul.f32 %v3201, %v306
        %v3203 = vmul.f32 %v3200, %v307
        %v3204 = vld [vmem:[%s265] sm:$0xff]
        %3205 = vrot.lane.b32.xlu0 %v3194, 16
        %v3206 = vpop.permute.xlu0 %3205
        %3207 = vrot.lane.b32.xlu0 %v3195, 16
        %v3208 = vpop.permute.xlu0 %3207
        %v3209 = vsel %vm388, %v3206, %v3208
        %v3210 = vsel %vm388, %v3208, %v3206
        %v3211 = vmul.f32 %v3210, %v316
        %v3212 = vmul.f32 %v3209, %v317
        %s3213 = scalar_lea.vmem %s265, 8
        %v3214 = vld [vmem:[%s3213] sm:$0xff]
        %v3216 = vsel %vm395, %v3214, 0
        %3218 = vmatpush.msra.mxu0 0.0
        %3219 = vmatpush.msra.mxu0 0.0
        %3220 = vmatpush.msra.mxu0 0.0
        %3221 = vmatpush.msra.mxu0 0.0
        %3222 = vmatpush.msra.mxu0 0.0
        %3223 = vmatpush.msra.mxu0 0.0
        %3224 = vmatpush.msra.mxu0 0.0
        %3225 = vmatpush.msra.mxu0 0.0
        %3226 = vmatpush.msra.mxu0 0.0
        %3227 = vmatpush.msra.mxu0 0.0
        %3228 = vmatpush.msra.mxu0 0.0
        %3229 = vmatpush.msra.mxu0 0.0
        %3230 = vmatpush.msra.mxu0 0.0
        %3231 = vmatpush.msra.mxu0 0.0
        %3232 = vmatpush.msra.mxu0 0.0
        %v3233 = vand.u32 %v3211, 4294901760
        %3234 = vmatpush.msra.mxu0 %v3233
        %v3235 = vand.u32 %v3216, 4294901760
        %v3236 = vsub.f32 %v3216, %v3235
        %v3237 = vand.u32 %v3236, 4294901760
        %v3238 = vsub.f32 %v3236, %v3237
        %v3239 = vand.u32 %v3238, 4294901760
        %3240 = vmatmul.f32.gmra.mxu0 %v3239
        %v3241 = vpop.f32.mrf.mxu0
        %v3242 = vadd.f32 0.0, %v3241
        %3243 = vdwg.mxu0
        %3244 = vmatpush.msra.mxu0 0.0
        %3245 = vmatpush.msra.mxu0 0.0
        %3246 = vmatpush.msra.mxu0 0.0
        %3247 = vmatpush.msra.mxu0 0.0
        %3248 = vmatpush.msra.mxu0 0.0
        %3249 = vmatpush.msra.mxu0 0.0
        %3250 = vmatpush.msra.mxu0 0.0
        %3251 = vmatpush.msra.mxu0 0.0
        %3252 = vmatpush.msra.mxu0 0.0
        %3253 = vmatpush.msra.mxu0 0.0
        %3254 = vmatpush.msra.mxu0 0.0
        %3255 = vmatpush.msra.mxu0 0.0
        %3256 = vmatpush.msra.mxu0 0.0
        %3257 = vmatpush.msra.mxu0 0.0
        %3258 = vmatpush.msra.mxu0 0.0
        %v3259 = vand.u32 %v3211, 4294901760
        %v3260 = vsub.f32 %v3211, %v3259
        %v3261 = vand.u32 %v3260, 4294901760
        %v3262 = vsub.f32 %v3260, %v3261
        %v3263 = vand.u32 %v3262, 4294901760
        %3264 = vmatpush.msra.mxu0 %v3263
        %v3265 = vand.u32 %v3216, 4294901760
        %3266 = vmatmul.f32.gmra.mxu0 %v3265
        %v3267 = vpop.f32.mrf.mxu0
        %v3268 = vadd.f32 %v3242, %v3267
        %3269 = vdwg.mxu0
        %3270 = vmatpush.msra.mxu0 0.0
        %3271 = vmatpush.msra.mxu0 0.0
        %3272 = vmatpush.msra.mxu0 0.0
        %3273 = vmatpush.msra.mxu0 0.0
        %3274 = vmatpush.msra.mxu0 0.0
        %3275 = vmatpush.msra.mxu0 0.0
        %3276 = vmatpush.msra.mxu0 0.0
        %3277 = vmatpush.msra.mxu0 0.0
        %3278 = vmatpush.msra.mxu0 0.0
        %3279 = vmatpush.msra.mxu0 0.0
        %3280 = vmatpush.msra.mxu0 0.0
        %3281 = vmatpush.msra.mxu0 0.0
        %3282 = vmatpush.msra.mxu0 0.0
        %3283 = vmatpush.msra.mxu0 0.0
        %3284 = vmatpush.msra.mxu0 0.0
        %v3285 = vand.u32 %v3211, 4294901760
        %v3286 = vsub.f32 %v3211, %v3285
        %3287 = vmatpush.msra.mxu0 %v3286
        %v3288 = vand.u32 %v3216, 4294901760
        %v3289 = vsub.f32 %v3216, %v3288
        %3290 = vmatmul.f32.gmra.mxu0 %v3289
        %v3291 = vpop.f32.mrf.mxu0
        %v3292 = vadd.f32 %v3268, %v3291
        %3293 = vdwg.mxu0
        %3294 = vmatpush.msra.mxu0 0.0
        %3295 = vmatpush.msra.mxu0 0.0
        %3296 = vmatpush.msra.mxu0 0.0
        %3297 = vmatpush.msra.mxu0 0.0
        %3298 = vmatpush.msra.mxu0 0.0
        %3299 = vmatpush.msra.mxu0 0.0
        %3300 = vmatpush.msra.mxu0 0.0
        %3301 = vmatpush.msra.mxu0 0.0
        %3302 = vmatpush.msra.mxu0 0.0
        %3303 = vmatpush.msra.mxu0 0.0
        %3304 = vmatpush.msra.mxu0 0.0
        %3305 = vmatpush.msra.mxu0 0.0
        %3306 = vmatpush.msra.mxu0 0.0
        %3307 = vmatpush.msra.mxu0 0.0
        %3308 = vmatpush.msra.mxu0 0.0
        %v3309 = vand.u32 %v3211, 4294901760
        %3310 = vmatpush.msra.mxu0 %v3309
        %v3311 = vand.u32 %v3216, 4294901760
        %v3312 = vsub.f32 %v3216, %v3311
        %v3313 = vand.u32 %v3312, 4294901760
        %3314 = vmatmul.f32.gmra.mxu0 %v3313
        %v3315 = vpop.f32.mrf.mxu0
        %v3316 = vadd.f32 %v3292, %v3315
        %3317 = vdwg.mxu0
        %3318 = vmatpush.msra.mxu0 0.0
        %3319 = vmatpush.msra.mxu0 0.0
        %3320 = vmatpush.msra.mxu0 0.0
        %3321 = vmatpush.msra.mxu0 0.0
        %3322 = vmatpush.msra.mxu0 0.0
        %3323 = vmatpush.msra.mxu0 0.0
        %3324 = vmatpush.msra.mxu0 0.0
        %3325 = vmatpush.msra.mxu0 0.0
        %3326 = vmatpush.msra.mxu0 0.0
        %3327 = vmatpush.msra.mxu0 0.0
        %3328 = vmatpush.msra.mxu0 0.0
        %3329 = vmatpush.msra.mxu0 0.0
        %3330 = vmatpush.msra.mxu0 0.0
        %3331 = vmatpush.msra.mxu0 0.0
        %3332 = vmatpush.msra.mxu0 0.0
        %v3333 = vand.u32 %v3211, 4294901760
        %v3334 = vsub.f32 %v3211, %v3333
        %v3335 = vand.u32 %v3334, 4294901760
        %3336 = vmatpush.msra.mxu0 %v3335
        %v3337 = vand.u32 %v3216, 4294901760
        %3338 = vmatmul.f32.gmra.mxu0 %v3337
        %v3339 = vpop.f32.mrf.mxu0
        %v3340 = vadd.f32 %v3316, %v3339
        %3341 = vdwg.mxu0
        %3342 = vmatpush.msra.mxu0 0.0
        %3343 = vmatpush.msra.mxu0 0.0
        %3344 = vmatpush.msra.mxu0 0.0
        %3345 = vmatpush.msra.mxu0 0.0
        %3346 = vmatpush.msra.mxu0 0.0
        %3347 = vmatpush.msra.mxu0 0.0
        %3348 = vmatpush.msra.mxu0 0.0
        %3349 = vmatpush.msra.mxu0 0.0
        %3350 = vmatpush.msra.mxu0 0.0
        %3351 = vmatpush.msra.mxu0 0.0
        %3352 = vmatpush.msra.mxu0 0.0
        %3353 = vmatpush.msra.mxu0 0.0
        %3354 = vmatpush.msra.mxu0 0.0
        %3355 = vmatpush.msra.mxu0 0.0
        %3356 = vmatpush.msra.mxu0 0.0
        %v3357 = vand.u32 %v3211, 4294901760
        %3358 = vmatpush.msra.mxu0 %v3357
        %v3359 = vand.u32 %v3216, 4294901760
        %3360 = vmatmul.f32.gmra.mxu0 %v3359
        %v3361 = vpop.f32.mrf.mxu0
        %v3362 = vadd.f32 %v3340, %v3361
        %3363 = vdwg.mxu0
        %3364 = vmatpush.msra.mxu0 0.0
        %3365 = vmatpush.msra.mxu0 0.0
        %3366 = vmatpush.msra.mxu0 0.0
        %3367 = vmatpush.msra.mxu0 0.0
        %3368 = vmatpush.msra.mxu0 0.0
        %3369 = vmatpush.msra.mxu0 0.0
        %3370 = vmatpush.msra.mxu0 0.0
        %3371 = vmatpush.msra.mxu0 0.0
        %3372 = vmatpush.msra.mxu0 0.0
        %3373 = vmatpush.msra.mxu0 0.0
        %3374 = vmatpush.msra.mxu0 0.0
        %3375 = vmatpush.msra.mxu0 0.0
        %3376 = vmatpush.msra.mxu0 0.0
        %3377 = vmatpush.msra.mxu0 0.0
        %3378 = vmatpush.msra.mxu0 0.0
        %v3379 = vand.u32 %v3212, 4294901760
        %3380 = vmatpush.msra.mxu0 %v3379
        %v3381 = vand.u32 %v3216, 4294901760
        %v3382 = vsub.f32 %v3216, %v3381
        %v3383 = vand.u32 %v3382, 4294901760
        %v3384 = vsub.f32 %v3382, %v3383
        %v3385 = vand.u32 %v3384, 4294901760
        %3386 = vmatmul.f32.gmra.mxu0 %v3385
        %v3387 = vpop.f32.mrf.mxu0
        %v3388 = vadd.f32 0.0, %v3387
        %3389 = vdwg.mxu0
        %3390 = vmatpush.msra.mxu0 0.0
        %3391 = vmatpush.msra.mxu0 0.0
        %3392 = vmatpush.msra.mxu0 0.0
        %3393 = vmatpush.msra.mxu0 0.0
        %3394 = vmatpush.msra.mxu0 0.0
        %3395 = vmatpush.msra.mxu0 0.0
        %3396 = vmatpush.msra.mxu0 0.0
        %3397 = vmatpush.msra.mxu0 0.0
        %3398 = vmatpush.msra.mxu0 0.0
        %3399 = vmatpush.msra.mxu0 0.0
        %3400 = vmatpush.msra.mxu0 0.0
        %3401 = vmatpush.msra.mxu0 0.0
        %3402 = vmatpush.msra.mxu0 0.0
        %3403 = vmatpush.msra.mxu0 0.0
        %3404 = vmatpush.msra.mxu0 0.0
        %v3405 = vand.u32 %v3212, 4294901760
        %v3406 = vsub.f32 %v3212, %v3405
        %v3407 = vand.u32 %v3406, 4294901760
        %v3408 = vsub.f32 %v3406, %v3407
        %v3409 = vand.u32 %v3408, 4294901760
        %3410 = vmatpush.msra.mxu0 %v3409
        %v3411 = vand.u32 %v3216, 4294901760
        %3412 = vmatmul.f32.gmra.mxu0 %v3411
        %v3413 = vpop.f32.mrf.mxu0
        %v3414 = vadd.f32 %v3388, %v3413
        %3415 = vdwg.mxu0
        %3416 = vmatpush.msra.mxu0 0.0
        %3417 = vmatpush.msra.mxu0 0.0
        %3418 = vmatpush.msra.mxu0 0.0
        %3419 = vmatpush.msra.mxu0 0.0
        %3420 = vmatpush.msra.mxu0 0.0
        %3421 = vmatpush.msra.mxu0 0.0
        %3422 = vmatpush.msra.mxu0 0.0
        %3423 = vmatpush.msra.mxu0 0.0
        %3424 = vmatpush.msra.mxu0 0.0
        %3425 = vmatpush.msra.mxu0 0.0
        %3426 = vmatpush.msra.mxu0 0.0
        %3427 = vmatpush.msra.mxu0 0.0
        %3428 = vmatpush.msra.mxu0 0.0
        %3429 = vmatpush.msra.mxu0 0.0
        %3430 = vmatpush.msra.mxu0 0.0
        %v3431 = vand.u32 %v3212, 4294901760
        %v3432 = vsub.f32 %v3212, %v3431
        %3433 = vmatpush.msra.mxu0 %v3432
        %v3434 = vand.u32 %v3216, 4294901760
        %v3435 = vsub.f32 %v3216, %v3434
        %3436 = vmatmul.f32.gmra.mxu0 %v3435
        %v3437 = vpop.f32.mrf.mxu0
        %v3438 = vadd.f32 %v3414, %v3437
        %3439 = vdwg.mxu0
        %3440 = vmatpush.msra.mxu0 0.0
        %3441 = vmatpush.msra.mxu0 0.0
        %3442 = vmatpush.msra.mxu0 0.0
        %3443 = vmatpush.msra.mxu0 0.0
        %3444 = vmatpush.msra.mxu0 0.0
        %3445 = vmatpush.msra.mxu0 0.0
        %3446 = vmatpush.msra.mxu0 0.0
        %3447 = vmatpush.msra.mxu0 0.0
        %3448 = vmatpush.msra.mxu0 0.0
        %3449 = vmatpush.msra.mxu0 0.0
        %3450 = vmatpush.msra.mxu0 0.0
        %3451 = vmatpush.msra.mxu0 0.0
        %3452 = vmatpush.msra.mxu0 0.0
        %3453 = vmatpush.msra.mxu0 0.0
        %3454 = vmatpush.msra.mxu0 0.0
        %v3455 = vand.u32 %v3212, 4294901760
        %3456 = vmatpush.msra.mxu0 %v3455
        %v3457 = vand.u32 %v3216, 4294901760
        %v3458 = vsub.f32 %v3216, %v3457
        %v3459 = vand.u32 %v3458, 4294901760
        %3460 = vmatmul.f32.gmra.mxu0 %v3459
        %v3461 = vpop.f32.mrf.mxu0
        %v3462 = vadd.f32 %v3438, %v3461
        %3463 = vdwg.mxu0
        %3464 = vmatpush.msra.mxu0 0.0
        %3465 = vmatpush.msra.mxu0 0.0
        %3466 = vmatpush.msra.mxu0 0.0
        %3467 = vmatpush.msra.mxu0 0.0
        %3468 = vmatpush.msra.mxu0 0.0
        %3469 = vmatpush.msra.mxu0 0.0
        %3470 = vmatpush.msra.mxu0 0.0
        %3471 = vmatpush.msra.mxu0 0.0
        %3472 = vmatpush.msra.mxu0 0.0
        %3473 = vmatpush.msra.mxu0 0.0
        %3474 = vmatpush.msra.mxu0 0.0
        %3475 = vmatpush.msra.mxu0 0.0
        %3476 = vmatpush.msra.mxu0 0.0
        %3477 = vmatpush.msra.mxu0 0.0
        %3478 = vmatpush.msra.mxu0 0.0
        %v3479 = vand.u32 %v3212, 4294901760
        %v3480 = vsub.f32 %v3212, %v3479
        %v3481 = vand.u32 %v3480, 4294901760
        %3482 = vmatpush.msra.mxu0 %v3481
        %v3483 = vand.u32 %v3216, 4294901760
        %3484 = vmatmul.f32.gmra.mxu0 %v3483
        %v3485 = vpop.f32.mrf.mxu0
        %v3486 = vadd.f32 %v3462, %v3485
        %3487 = vdwg.mxu0
        %3488 = vmatpush.msra.mxu0 0.0
        %3489 = vmatpush.msra.mxu0 0.0
        %3490 = vmatpush.msra.mxu0 0.0
        %3491 = vmatpush.msra.mxu0 0.0
        %3492 = vmatpush.msra.mxu0 0.0
        %3493 = vmatpush.msra.mxu0 0.0
        %3494 = vmatpush.msra.mxu0 0.0
        %3495 = vmatpush.msra.mxu0 0.0
        %3496 = vmatpush.msra.mxu0 0.0
        %3497 = vmatpush.msra.mxu0 0.0
        %3498 = vmatpush.msra.mxu0 0.0
        %3499 = vmatpush.msra.mxu0 0.0
        %3500 = vmatpush.msra.mxu0 0.0
        %3501 = vmatpush.msra.mxu0 0.0
        %3502 = vmatpush.msra.mxu0 0.0
        %v3503 = vand.u32 %v3212, 4294901760
        %3504 = vmatpush.msra.mxu0 %v3503
        %v3505 = vand.u32 %v3216, 4294901760
        %3506 = vmatmul.f32.gmra.mxu0 %v3505
        %v3507 = vpop.f32.mrf.mxu0
        %v3508 = vadd.f32 %v3486, %v3507
        %3509 = vdwg.mxu0
        %v3511 = vsel %vm395, %v3204, 0
        %3513 = vmatpush.msra.mxu0 0.0
        %3514 = vmatpush.msra.mxu0 0.0
        %3515 = vmatpush.msra.mxu0 0.0
        %3516 = vmatpush.msra.mxu0 0.0
        %3517 = vmatpush.msra.mxu0 0.0
        %3518 = vmatpush.msra.mxu0 0.0
        %3519 = vmatpush.msra.mxu0 0.0
        %3520 = vmatpush.msra.mxu0 0.0
        %3521 = vmatpush.msra.mxu0 0.0
        %3522 = vmatpush.msra.mxu0 0.0
        %3523 = vmatpush.msra.mxu0 0.0
        %3524 = vmatpush.msra.mxu0 0.0
        %3525 = vmatpush.msra.mxu0 0.0
        %3526 = vmatpush.msra.mxu0 0.0
        %3527 = vmatpush.msra.mxu0 0.0
        %v3528 = vand.u32 %v3202, 4294901760
        %3529 = vmatpush.msra.mxu0 %v3528
        %v3530 = vand.u32 %v3511, 4294901760
        %v3531 = vsub.f32 %v3511, %v3530
        %v3532 = vand.u32 %v3531, 4294901760
        %v3533 = vsub.f32 %v3531, %v3532
        %v3534 = vand.u32 %v3533, 4294901760
        %3535 = vmatmul.f32.gmra.mxu0 %v3534
        %v3536 = vpop.f32.mrf.mxu0
        %v3537 = vadd.f32 %v3362, %v3536
        %3538 = vdwg.mxu0
        %3539 = vmatpush.msra.mxu0 0.0
        %3540 = vmatpush.msra.mxu0 0.0
        %3541 = vmatpush.msra.mxu0 0.0
        %3542 = vmatpush.msra.mxu0 0.0
        %3543 = vmatpush.msra.mxu0 0.0
        %3544 = vmatpush.msra.mxu0 0.0
        %3545 = vmatpush.msra.mxu0 0.0
        %3546 = vmatpush.msra.mxu0 0.0
        %3547 = vmatpush.msra.mxu0 0.0
        %3548 = vmatpush.msra.mxu0 0.0
        %3549 = vmatpush.msra.mxu0 0.0
        %3550 = vmatpush.msra.mxu0 0.0
        %3551 = vmatpush.msra.mxu0 0.0
        %3552 = vmatpush.msra.mxu0 0.0
        %3553 = vmatpush.msra.mxu0 0.0
        %v3554 = vand.u32 %v3202, 4294901760
        %v3555 = vsub.f32 %v3202, %v3554
        %v3556 = vand.u32 %v3555, 4294901760
        %v3557 = vsub.f32 %v3555, %v3556
        %v3558 = vand.u32 %v3557, 4294901760
        %3559 = vmatpush.msra.mxu0 %v3558
        %v3560 = vand.u32 %v3511, 4294901760
        %3561 = vmatmul.f32.gmra.mxu0 %v3560
        %v3562 = vpop.f32.mrf.mxu0
        %v3563 = vadd.f32 %v3537, %v3562
        %3564 = vdwg.mxu0
        %3565 = vmatpush.msra.mxu0 0.0
        %3566 = vmatpush.msra.mxu0 0.0
        %3567 = vmatpush.msra.mxu0 0.0
        %3568 = vmatpush.msra.mxu0 0.0
        %3569 = vmatpush.msra.mxu0 0.0
        %3570 = vmatpush.msra.mxu0 0.0
        %3571 = vmatpush.msra.mxu0 0.0
        %3572 = vmatpush.msra.mxu0 0.0
        %3573 = vmatpush.msra.mxu0 0.0
        %3574 = vmatpush.msra.mxu0 0.0
        %3575 = vmatpush.msra.mxu0 0.0
        %3576 = vmatpush.msra.mxu0 0.0
        %3577 = vmatpush.msra.mxu0 0.0
        %3578 = vmatpush.msra.mxu0 0.0
        %3579 = vmatpush.msra.mxu0 0.0
        %v3580 = vand.u32 %v3202, 4294901760
        %v3581 = vsub.f32 %v3202, %v3580
        %3582 = vmatpush.msra.mxu0 %v3581
        %v3583 = vand.u32 %v3511, 4294901760
        %v3584 = vsub.f32 %v3511, %v3583
        %3585 = vmatmul.f32.gmra.mxu0 %v3584
        %v3586 = vpop.f32.mrf.mxu0
        %v3587 = vadd.f32 %v3563, %v3586
        %3588 = vdwg.mxu0
        %3589 = vmatpush.msra.mxu0 0.0
        %3590 = vmatpush.msra.mxu0 0.0
        %3591 = vmatpush.msra.mxu0 0.0
        %3592 = vmatpush.msra.mxu0 0.0
        %3593 = vmatpush.msra.mxu0 0.0
        %3594 = vmatpush.msra.mxu0 0.0
        %3595 = vmatpush.msra.mxu0 0.0
        %3596 = vmatpush.msra.mxu0 0.0
        %3597 = vmatpush.msra.mxu0 0.0
        %3598 = vmatpush.msra.mxu0 0.0
        %3599 = vmatpush.msra.mxu0 0.0
        %3600 = vmatpush.msra.mxu0 0.0
        %3601 = vmatpush.msra.mxu0 0.0
        %3602 = vmatpush.msra.mxu0 0.0
        %3603 = vmatpush.msra.mxu0 0.0
        %v3604 = vand.u32 %v3202, 4294901760
        %3605 = vmatpush.msra.mxu0 %v3604
        %v3606 = vand.u32 %v3511, 4294901760
        %v3607 = vsub.f32 %v3511, %v3606
        %v3608 = vand.u32 %v3607, 4294901760
        %3609 = vmatmul.f32.gmra.mxu0 %v3608
        %v3610 = vpop.f32.mrf.mxu0
        %v3611 = vadd.f32 %v3587, %v3610
        %3612 = vdwg.mxu0
        %3613 = vmatpush.msra.mxu0 0.0
        %3614 = vmatpush.msra.mxu0 0.0
        %3615 = vmatpush.msra.mxu0 0.0
        %3616 = vmatpush.msra.mxu0 0.0
        %3617 = vmatpush.msra.mxu0 0.0
        %3618 = vmatpush.msra.mxu0 0.0
        %3619 = vmatpush.msra.mxu0 0.0
        %3620 = vmatpush.msra.mxu0 0.0
        %3621 = vmatpush.msra.mxu0 0.0
        %3622 = vmatpush.msra.mxu0 0.0
        %3623 = vmatpush.msra.mxu0 0.0
        %3624 = vmatpush.msra.mxu0 0.0
        %3625 = vmatpush.msra.mxu0 0.0
        %3626 = vmatpush.msra.mxu0 0.0
        %3627 = vmatpush.msra.mxu0 0.0
        %v3628 = vand.u32 %v3202, 4294901760
        %v3629 = vsub.f32 %v3202, %v3628
        %v3630 = vand.u32 %v3629, 4294901760
        %3631 = vmatpush.msra.mxu0 %v3630
        %v3632 = vand.u32 %v3511, 4294901760
        %3633 = vmatmul.f32.gmra.mxu0 %v3632
        %v3634 = vpop.f32.mrf.mxu0
        %v3635 = vadd.f32 %v3611, %v3634
        %3636 = vdwg.mxu0
        %3637 = vmatpush.msra.mxu0 0.0
        %3638 = vmatpush.msra.mxu0 0.0
        %3639 = vmatpush.msra.mxu0 0.0
        %3640 = vmatpush.msra.mxu0 0.0
        %3641 = vmatpush.msra.mxu0 0.0
        %3642 = vmatpush.msra.mxu0 0.0
        %3643 = vmatpush.msra.mxu0 0.0
        %3644 = vmatpush.msra.mxu0 0.0
        %3645 = vmatpush.msra.mxu0 0.0
        %3646 = vmatpush.msra.mxu0 0.0
        %3647 = vmatpush.msra.mxu0 0.0
        %3648 = vmatpush.msra.mxu0 0.0
        %3649 = vmatpush.msra.mxu0 0.0
        %3650 = vmatpush.msra.mxu0 0.0
        %3651 = vmatpush.msra.mxu0 0.0
        %v3652 = vand.u32 %v3202, 4294901760
        %3653 = vmatpush.msra.mxu0 %v3652
        %v3654 = vand.u32 %v3511, 4294901760
        %3655 = vmatmul.f32.gmra.mxu0 %v3654
        %v3656 = vpop.f32.mrf.mxu0
        %v3657 = vadd.f32 %v3635, %v3656
        %3658 = vdwg.mxu0
        %3659 = vmatpush.msra.mxu0 0.0
        %3660 = vmatpush.msra.mxu0 0.0
        %3661 = vmatpush.msra.mxu0 0.0
        %3662 = vmatpush.msra.mxu0 0.0
        %3663 = vmatpush.msra.mxu0 0.0
        %3664 = vmatpush.msra.mxu0 0.0
        %3665 = vmatpush.msra.mxu0 0.0
        %3666 = vmatpush.msra.mxu0 0.0
        %3667 = vmatpush.msra.mxu0 0.0
        %3668 = vmatpush.msra.mxu0 0.0
        %3669 = vmatpush.msra.mxu0 0.0
        %3670 = vmatpush.msra.mxu0 0.0
        %3671 = vmatpush.msra.mxu0 0.0
        %3672 = vmatpush.msra.mxu0 0.0
        %3673 = vmatpush.msra.mxu0 0.0
        %v3674 = vand.u32 %v3203, 4294901760
        %3675 = vmatpush.msra.mxu0 %v3674
        %v3676 = vand.u32 %v3511, 4294901760
        %v3677 = vsub.f32 %v3511, %v3676
        %v3678 = vand.u32 %v3677, 4294901760
        %v3679 = vsub.f32 %v3677, %v3678
        %v3680 = vand.u32 %v3679, 4294901760
        %3681 = vmatmul.f32.gmra.mxu0 %v3680
        %v3682 = vpop.f32.mrf.mxu0
        %v3683 = vadd.f32 %v3508, %v3682
        %3684 = vdwg.mxu0
        %3685 = vmatpush.msra.mxu0 0.0
        %3686 = vmatpush.msra.mxu0 0.0
        %3687 = vmatpush.msra.mxu0 0.0
        %3688 = vmatpush.msra.mxu0 0.0
        %3689 = vmatpush.msra.mxu0 0.0
        %3690 = vmatpush.msra.mxu0 0.0
        %3691 = vmatpush.msra.mxu0 0.0
        %3692 = vmatpush.msra.mxu0 0.0
        %3693 = vmatpush.msra.mxu0 0.0
        %3694 = vmatpush.msra.mxu0 0.0
        %3695 = vmatpush.msra.mxu0 0.0
        %3696 = vmatpush.msra.mxu0 0.0
        %3697 = vmatpush.msra.mxu0 0.0
        %3698 = vmatpush.msra.mxu0 0.0
        %3699 = vmatpush.msra.mxu0 0.0
        %v3700 = vand.u32 %v3203, 4294901760
        %v3701 = vsub.f32 %v3203, %v3700
        %v3702 = vand.u32 %v3701, 4294901760
        %v3703 = vsub.f32 %v3701, %v3702
        %v3704 = vand.u32 %v3703, 4294901760
        %3705 = vmatpush.msra.mxu0 %v3704
        %v3706 = vand.u32 %v3511, 4294901760
        %3707 = vmatmul.f32.gmra.mxu0 %v3706
        %v3708 = vpop.f32.mrf.mxu0
        %v3709 = vadd.f32 %v3683, %v3708
        %3710 = vdwg.mxu0
        %3711 = vmatpush.msra.mxu0 0.0
        %3712 = vmatpush.msra.mxu0 0.0
        %3713 = vmatpush.msra.mxu0 0.0
        %3714 = vmatpush.msra.mxu0 0.0
        %3715 = vmatpush.msra.mxu0 0.0
        %3716 = vmatpush.msra.mxu0 0.0
        %3717 = vmatpush.msra.mxu0 0.0
        %3718 = vmatpush.msra.mxu0 0.0
        %3719 = vmatpush.msra.mxu0 0.0
        %3720 = vmatpush.msra.mxu0 0.0
        %3721 = vmatpush.msra.mxu0 0.0
        %3722 = vmatpush.msra.mxu0 0.0
        %3723 = vmatpush.msra.mxu0 0.0
        %3724 = vmatpush.msra.mxu0 0.0
        %3725 = vmatpush.msra.mxu0 0.0
        %v3726 = vand.u32 %v3203, 4294901760
        %v3727 = vsub.f32 %v3203, %v3726
        %3728 = vmatpush.msra.mxu0 %v3727
        %v3729 = vand.u32 %v3511, 4294901760
        %v3730 = vsub.f32 %v3511, %v3729
        %3731 = vmatmul.f32.gmra.mxu0 %v3730
        %v3732 = vpop.f32.mrf.mxu0
        %v3733 = vadd.f32 %v3709, %v3732
        %3734 = vdwg.mxu0
        %3735 = vmatpush.msra.mxu0 0.0
        %3736 = vmatpush.msra.mxu0 0.0
        %3737 = vmatpush.msra.mxu0 0.0
        %3738 = vmatpush.msra.mxu0 0.0
        %3739 = vmatpush.msra.mxu0 0.0
        %3740 = vmatpush.msra.mxu0 0.0
        %3741 = vmatpush.msra.mxu0 0.0
        %3742 = vmatpush.msra.mxu0 0.0
        %3743 = vmatpush.msra.mxu0 0.0
        %3744 = vmatpush.msra.mxu0 0.0
        %3745 = vmatpush.msra.mxu0 0.0
        %3746 = vmatpush.msra.mxu0 0.0
        %3747 = vmatpush.msra.mxu0 0.0
        %3748 = vmatpush.msra.mxu0 0.0
        %3749 = vmatpush.msra.mxu0 0.0
        %v3750 = vand.u32 %v3203, 4294901760
        %3751 = vmatpush.msra.mxu0 %v3750
        %v3752 = vand.u32 %v3511, 4294901760
        %v3753 = vsub.f32 %v3511, %v3752
        %v3754 = vand.u32 %v3753, 4294901760
        %3755 = vmatmul.f32.gmra.mxu0 %v3754
        %v3756 = vpop.f32.mrf.mxu0
        %v3757 = vadd.f32 %v3733, %v3756
        %3758 = vdwg.mxu0
        %3759 = vmatpush.msra.mxu0 0.0
        %3760 = vmatpush.msra.mxu0 0.0
        %3761 = vmatpush.msra.mxu0 0.0
        %3762 = vmatpush.msra.mxu0 0.0
        %3763 = vmatpush.msra.mxu0 0.0
        %3764 = vmatpush.msra.mxu0 0.0
        %3765 = vmatpush.msra.mxu0 0.0
        %3766 = vmatpush.msra.mxu0 0.0
        %3767 = vmatpush.msra.mxu0 0.0
        %3768 = vmatpush.msra.mxu0 0.0
        %3769 = vmatpush.msra.mxu0 0.0
        %3770 = vmatpush.msra.mxu0 0.0
        %3771 = vmatpush.msra.mxu0 0.0
        %3772 = vmatpush.msra.mxu0 0.0
        %3773 = vmatpush.msra.mxu0 0.0
        %v3774 = vand.u32 %v3203, 4294901760
        %v3775 = vsub.f32 %v3203, %v3774
        %v3776 = vand.u32 %v3775, 4294901760
        %3777 = vmatpush.msra.mxu0 %v3776
        %v3778 = vand.u32 %v3511, 4294901760
        %3779 = vmatmul.f32.gmra.mxu0 %v3778
        %v3780 = vpop.f32.mrf.mxu0
        %v3781 = vadd.f32 %v3757, %v3780
        %3782 = vdwg.mxu0
        %3783 = vmatpush.msra.mxu0 0.0
        %3784 = vmatpush.msra.mxu0 0.0
        %3785 = vmatpush.msra.mxu0 0.0
        %3786 = vmatpush.msra.mxu0 0.0
        %3787 = vmatpush.msra.mxu0 0.0
        %3788 = vmatpush.msra.mxu0 0.0
        %3789 = vmatpush.msra.mxu0 0.0
        %3790 = vmatpush.msra.mxu0 0.0
        %3791 = vmatpush.msra.mxu0 0.0
        %3792 = vmatpush.msra.mxu0 0.0
        %3793 = vmatpush.msra.mxu0 0.0
        %3794 = vmatpush.msra.mxu0 0.0
        %3795 = vmatpush.msra.mxu0 0.0
        %3796 = vmatpush.msra.mxu0 0.0
        %3797 = vmatpush.msra.mxu0 0.0
        %v3798 = vand.u32 %v3203, 4294901760
        %3799 = vmatpush.msra.mxu0 %v3798
        %v3800 = vand.u32 %v3511, 4294901760
        %3801 = vmatmul.f32.gmra.mxu0 %v3800
        %v3802 = vpop.f32.mrf.mxu0
        %v3803 = vadd.f32 %v3781, %v3802
        %3804 = vdwg.mxu0
        %3805 = vrot.lane.b32.xlu0 %v3194, 15
        %v3806 = vpop.permute.xlu0 %3805
        %3807 = vrot.lane.b32.xlu0 %v3195, 15
        %v3808 = vpop.permute.xlu0 %3807
        %v3809 = vsel %vm990, %v3806, %v3808
        %v3810 = vsel %vm990, %v3808, %v3806
        %v3811 = vmul.f32 %v3810, %v328
        %v3812 = vmul.f32 %v3809, %v329
        %s3813 = scalar_lea.vmem %s265, 16
        %v3814 = vld [vmem:[%s3813] sm:$0xff]
        %v3816 = vsel %vm395, %v3814, 0
        %3818 = vmatpush.msra.mxu0 0.0
        %3819 = vmatpush.msra.mxu0 0.0
        %3820 = vmatpush.msra.mxu0 0.0
        %3821 = vmatpush.msra.mxu0 0.0
        %3822 = vmatpush.msra.mxu0 0.0
        %3823 = vmatpush.msra.mxu0 0.0
        %3824 = vmatpush.msra.mxu0 0.0
        %3825 = vmatpush.msra.mxu0 0.0
        %3826 = vmatpush.msra.mxu0 0.0
        %3827 = vmatpush.msra.mxu0 0.0
        %3828 = vmatpush.msra.mxu0 0.0
        %3829 = vmatpush.msra.mxu0 0.0
        %3830 = vmatpush.msra.mxu0 0.0
        %3831 = vmatpush.msra.mxu0 0.0
        %3832 = vmatpush.msra.mxu0 0.0
        %v3833 = vand.u32 %v3811, 4294901760
        %3834 = vmatpush.msra.mxu0 %v3833
        %v3835 = vand.u32 %v3816, 4294901760
        %v3836 = vsub.f32 %v3816, %v3835
        %v3837 = vand.u32 %v3836, 4294901760
        %v3838 = vsub.f32 %v3836, %v3837
        %v3839 = vand.u32 %v3838, 4294901760
        %3840 = vmatmul.f32.gmra.mxu0 %v3839
        %v3841 = vpop.f32.mrf.mxu0
        %v3842 = vadd.f32 0.0, %v3841
        %3843 = vdwg.mxu0
        %3844 = vmatpush.msra.mxu0 0.0
        %3845 = vmatpush.msra.mxu0 0.0
        %3846 = vmatpush.msra.mxu0 0.0
        %3847 = vmatpush.msra.mxu0 0.0
        %3848 = vmatpush.msra.mxu0 0.0
        %3849 = vmatpush.msra.mxu0 0.0
        %3850 = vmatpush.msra.mxu0 0.0
        %3851 = vmatpush.msra.mxu0 0.0
        %3852 = vmatpush.msra.mxu0 0.0
        %3853 = vmatpush.msra.mxu0 0.0
        %3854 = vmatpush.msra.mxu0 0.0
        %3855 = vmatpush.msra.mxu0 0.0
        %3856 = vmatpush.msra.mxu0 0.0
        %3857 = vmatpush.msra.mxu0 0.0
        %3858 = vmatpush.msra.mxu0 0.0
        %v3859 = vand.u32 %v3811, 4294901760
        %v3860 = vsub.f32 %v3811, %v3859
        %v3861 = vand.u32 %v3860, 4294901760
        %v3862 = vsub.f32 %v3860, %v3861
        %v3863 = vand.u32 %v3862, 4294901760
        %3864 = vmatpush.msra.mxu0 %v3863
        %v3865 = vand.u32 %v3816, 4294901760
        %3866 = vmatmul.f32.gmra.mxu0 %v3865
        %v3867 = vpop.f32.mrf.mxu0
        %v3868 = vadd.f32 %v3842, %v3867
        %3869 = vdwg.mxu0
        %3870 = vmatpush.msra.mxu0 0.0
        %3871 = vmatpush.msra.mxu0 0.0
        %3872 = vmatpush.msra.mxu0 0.0
        %3873 = vmatpush.msra.mxu0 0.0
        %3874 = vmatpush.msra.mxu0 0.0
        %3875 = vmatpush.msra.mxu0 0.0
        %3876 = vmatpush.msra.mxu0 0.0
        %3877 = vmatpush.msra.mxu0 0.0
        %3878 = vmatpush.msra.mxu0 0.0
        %3879 = vmatpush.msra.mxu0 0.0
        %3880 = vmatpush.msra.mxu0 0.0
        %3881 = vmatpush.msra.mxu0 0.0
        %3882 = vmatpush.msra.mxu0 0.0
        %3883 = vmatpush.msra.mxu0 0.0
        %3884 = vmatpush.msra.mxu0 0.0
        %v3885 = vand.u32 %v3811, 4294901760
        %v3886 = vsub.f32 %v3811, %v3885
        %3887 = vmatpush.msra.mxu0 %v3886
        %v3888 = vand.u32 %v3816, 4294901760
        %v3889 = vsub.f32 %v3816, %v3888
        %3890 = vmatmul.f32.gmra.mxu0 %v3889
        %v3891 = vpop.f32.mrf.mxu0
        %v3892 = vadd.f32 %v3868, %v3891
        %3893 = vdwg.mxu0
        %3894 = vmatpush.msra.mxu0 0.0
        %3895 = vmatpush.msra.mxu0 0.0
        %3896 = vmatpush.msra.mxu0 0.0
        %3897 = vmatpush.msra.mxu0 0.0
        %3898 = vmatpush.msra.mxu0 0.0
        %3899 = vmatpush.msra.mxu0 0.0
        %3900 = vmatpush.msra.mxu0 0.0
        %3901 = vmatpush.msra.mxu0 0.0
        %3902 = vmatpush.msra.mxu0 0.0
        %3903 = vmatpush.msra.mxu0 0.0
        %3904 = vmatpush.msra.mxu0 0.0
        %3905 = vmatpush.msra.mxu0 0.0
        %3906 = vmatpush.msra.mxu0 0.0
        %3907 = vmatpush.msra.mxu0 0.0
        %3908 = vmatpush.msra.mxu0 0.0
        %v3909 = vand.u32 %v3811, 4294901760
        %3910 = vmatpush.msra.mxu0 %v3909
        %v3911 = vand.u32 %v3816, 4294901760
        %v3912 = vsub.f32 %v3816, %v3911
        %v3913 = vand.u32 %v3912, 4294901760
        %3914 = vmatmul.f32.gmra.mxu0 %v3913
        %v3915 = vpop.f32.mrf.mxu0
        %v3916 = vadd.f32 %v3892, %v3915
        %3917 = vdwg.mxu0
        %3918 = vmatpush.msra.mxu0 0.0
        %3919 = vmatpush.msra.mxu0 0.0
        %3920 = vmatpush.msra.mxu0 0.0
        %3921 = vmatpush.msra.mxu0 0.0
        %3922 = vmatpush.msra.mxu0 0.0
        %3923 = vmatpush.msra.mxu0 0.0
        %3924 = vmatpush.msra.mxu0 0.0
        %3925 = vmatpush.msra.mxu0 0.0
        %3926 = vmatpush.msra.mxu0 0.0
        %3927 = vmatpush.msra.mxu0 0.0
        %3928 = vmatpush.msra.mxu0 0.0
        %3929 = vmatpush.msra.mxu0 0.0
        %3930 = vmatpush.msra.mxu0 0.0
        %3931 = vmatpush.msra.mxu0 0.0
        %3932 = vmatpush.msra.mxu0 0.0
        %v3933 = vand.u32 %v3811, 4294901760
        %v3934 = vsub.f32 %v3811, %v3933
        %v3935 = vand.u32 %v3934, 4294901760
        %3936 = vmatpush.msra.mxu0 %v3935
        %v3937 = vand.u32 %v3816, 4294901760
        %3938 = vmatmul.f32.gmra.mxu0 %v3937
        %v3939 = vpop.f32.mrf.mxu0
        %v3940 = vadd.f32 %v3916, %v3939
        %3941 = vdwg.mxu0
        %3942 = vmatpush.msra.mxu0 0.0
        %3943 = vmatpush.msra.mxu0 0.0
        %3944 = vmatpush.msra.mxu0 0.0
        %3945 = vmatpush.msra.mxu0 0.0
        %3946 = vmatpush.msra.mxu0 0.0
        %3947 = vmatpush.msra.mxu0 0.0
        %3948 = vmatpush.msra.mxu0 0.0
        %3949 = vmatpush.msra.mxu0 0.0
        %3950 = vmatpush.msra.mxu0 0.0
        %3951 = vmatpush.msra.mxu0 0.0
        %3952 = vmatpush.msra.mxu0 0.0
        %3953 = vmatpush.msra.mxu0 0.0
        %3954 = vmatpush.msra.mxu0 0.0
        %3955 = vmatpush.msra.mxu0 0.0
        %3956 = vmatpush.msra.mxu0 0.0
        %v3957 = vand.u32 %v3811, 4294901760
        %3958 = vmatpush.msra.mxu0 %v3957
        %v3959 = vand.u32 %v3816, 4294901760
        %3960 = vmatmul.f32.gmra.mxu0 %v3959
        %v3961 = vpop.f32.mrf.mxu0
        %v3962 = vadd.f32 %v3940, %v3961
        %3963 = vdwg.mxu0
        %3964 = vmatpush.msra.mxu0 0.0
        %3965 = vmatpush.msra.mxu0 0.0
        %3966 = vmatpush.msra.mxu0 0.0
        %3967 = vmatpush.msra.mxu0 0.0
        %3968 = vmatpush.msra.mxu0 0.0
        %3969 = vmatpush.msra.mxu0 0.0
        %3970 = vmatpush.msra.mxu0 0.0
        %3971 = vmatpush.msra.mxu0 0.0
        %3972 = vmatpush.msra.mxu0 0.0
        %3973 = vmatpush.msra.mxu0 0.0
        %3974 = vmatpush.msra.mxu0 0.0
        %3975 = vmatpush.msra.mxu0 0.0
        %3976 = vmatpush.msra.mxu0 0.0
        %3977 = vmatpush.msra.mxu0 0.0
        %3978 = vmatpush.msra.mxu0 0.0
        %v3979 = vand.u32 %v3812, 4294901760
        %3980 = vmatpush.msra.mxu0 %v3979
        %v3981 = vand.u32 %v3816, 4294901760
        %v3982 = vsub.f32 %v3816, %v3981
        %v3983 = vand.u32 %v3982, 4294901760
        %v3984 = vsub.f32 %v3982, %v3983
        %v3985 = vand.u32 %v3984, 4294901760
        %3986 = vmatmul.f32.gmra.mxu0 %v3985
        %v3987 = vpop.f32.mrf.mxu0
        %v3988 = vadd.f32 0.0, %v3987
        %3989 = vdwg.mxu0
        %3990 = vmatpush.msra.mxu0 0.0
        %3991 = vmatpush.msra.mxu0 0.0
        %3992 = vmatpush.msra.mxu0 0.0
        %3993 = vmatpush.msra.mxu0 0.0
        %3994 = vmatpush.msra.mxu0 0.0
        %3995 = vmatpush.msra.mxu0 0.0
        %3996 = vmatpush.msra.mxu0 0.0
        %3997 = vmatpush.msra.mxu0 0.0
        %3998 = vmatpush.msra.mxu0 0.0
        %3999 = vmatpush.msra.mxu0 0.0
        %4000 = vmatpush.msra.mxu0 0.0
        %4001 = vmatpush.msra.mxu0 0.0
        %4002 = vmatpush.msra.mxu0 0.0
        %4003 = vmatpush.msra.mxu0 0.0
        %4004 = vmatpush.msra.mxu0 0.0
        %v4005 = vand.u32 %v3812, 4294901760
        %v4006 = vsub.f32 %v3812, %v4005
        %v4007 = vand.u32 %v4006, 4294901760
        %v4008 = vsub.f32 %v4006, %v4007
        %v4009 = vand.u32 %v4008, 4294901760
        %4010 = vmatpush.msra.mxu0 %v4009
        %v4011 = vand.u32 %v3816, 4294901760
        %4012 = vmatmul.f32.gmra.mxu0 %v4011
        %v4013 = vpop.f32.mrf.mxu0
        %v4014 = vadd.f32 %v3988, %v4013
        %4015 = vdwg.mxu0
        %4016 = vmatpush.msra.mxu0 0.0
        %4017 = vmatpush.msra.mxu0 0.0
        %4018 = vmatpush.msra.mxu0 0.0
        %4019 = vmatpush.msra.mxu0 0.0
        %4020 = vmatpush.msra.mxu0 0.0
        %4021 = vmatpush.msra.mxu0 0.0
        %4022 = vmatpush.msra.mxu0 0.0
        %4023 = vmatpush.msra.mxu0 0.0
        %4024 = vmatpush.msra.mxu0 0.0
        %4025 = vmatpush.msra.mxu0 0.0
        %4026 = vmatpush.msra.mxu0 0.0
        %4027 = vmatpush.msra.mxu0 0.0
        %4028 = vmatpush.msra.mxu0 0.0
        %4029 = vmatpush.msra.mxu0 0.0
        %4030 = vmatpush.msra.mxu0 0.0
        %v4031 = vand.u32 %v3812, 4294901760
        %v4032 = vsub.f32 %v3812, %v4031
        %4033 = vmatpush.msra.mxu0 %v4032
        %v4034 = vand.u32 %v3816, 4294901760
        %v4035 = vsub.f32 %v3816, %v4034
        %4036 = vmatmul.f32.gmra.mxu0 %v4035
        %v4037 = vpop.f32.mrf.mxu0
        %v4038 = vadd.f32 %v4014, %v4037
        %4039 = vdwg.mxu0
        %4040 = vmatpush.msra.mxu0 0.0
        %4041 = vmatpush.msra.mxu0 0.0
        %4042 = vmatpush.msra.mxu0 0.0
        %4043 = vmatpush.msra.mxu0 0.0
        %4044 = vmatpush.msra.mxu0 0.0
        %4045 = vmatpush.msra.mxu0 0.0
        %4046 = vmatpush.msra.mxu0 0.0
        %4047 = vmatpush.msra.mxu0 0.0
        %4048 = vmatpush.msra.mxu0 0.0
        %4049 = vmatpush.msra.mxu0 0.0
        %4050 = vmatpush.msra.mxu0 0.0
        %4051 = vmatpush.msra.mxu0 0.0
        %4052 = vmatpush.msra.mxu0 0.0
        %4053 = vmatpush.msra.mxu0 0.0
        %4054 = vmatpush.msra.mxu0 0.0
        %v4055 = vand.u32 %v3812, 4294901760
        %4056 = vmatpush.msra.mxu0 %v4055
        %v4057 = vand.u32 %v3816, 4294901760
        %v4058 = vsub.f32 %v3816, %v4057
        %v4059 = vand.u32 %v4058, 4294901760
        %4060 = vmatmul.f32.gmra.mxu0 %v4059
        %v4061 = vpop.f32.mrf.mxu0
        %v4062 = vadd.f32 %v4038, %v4061
        %4063 = vdwg.mxu0
        %4064 = vmatpush.msra.mxu0 0.0
        %4065 = vmatpush.msra.mxu0 0.0
        %4066 = vmatpush.msra.mxu0 0.0
        %4067 = vmatpush.msra.mxu0 0.0
        %4068 = vmatpush.msra.mxu0 0.0
        %4069 = vmatpush.msra.mxu0 0.0
        %4070 = vmatpush.msra.mxu0 0.0
        %4071 = vmatpush.msra.mxu0 0.0
        %4072 = vmatpush.msra.mxu0 0.0
        %4073 = vmatpush.msra.mxu0 0.0
        %4074 = vmatpush.msra.mxu0 0.0
        %4075 = vmatpush.msra.mxu0 0.0
        %4076 = vmatpush.msra.mxu0 0.0
        %4077 = vmatpush.msra.mxu0 0.0
        %4078 = vmatpush.msra.mxu0 0.0
        %v4079 = vand.u32 %v3812, 4294901760
        %v4080 = vsub.f32 %v3812, %v4079
        %v4081 = vand.u32 %v4080, 4294901760
        %4082 = vmatpush.msra.mxu0 %v4081
        %v4083 = vand.u32 %v3816, 4294901760
        %4084 = vmatmul.f32.gmra.mxu0 %v4083
        %v4085 = vpop.f32.mrf.mxu0
        %v4086 = vadd.f32 %v4062, %v4085
        %4087 = vdwg.mxu0
        %4088 = vmatpush.msra.mxu0 0.0
        %4089 = vmatpush.msra.mxu0 0.0
        %4090 = vmatpush.msra.mxu0 0.0
        %4091 = vmatpush.msra.mxu0 0.0
        %4092 = vmatpush.msra.mxu0 0.0
        %4093 = vmatpush.msra.mxu0 0.0
        %4094 = vmatpush.msra.mxu0 0.0
        %4095 = vmatpush.msra.mxu0 0.0
        %4096 = vmatpush.msra.mxu0 0.0
        %4097 = vmatpush.msra.mxu0 0.0
        %4098 = vmatpush.msra.mxu0 0.0
        %4099 = vmatpush.msra.mxu0 0.0
        %4100 = vmatpush.msra.mxu0 0.0
        %4101 = vmatpush.msra.mxu0 0.0
        %4102 = vmatpush.msra.mxu0 0.0
        %v4103 = vand.u32 %v3812, 4294901760
        %4104 = vmatpush.msra.mxu0 %v4103
        %v4105 = vand.u32 %v3816, 4294901760
        %4106 = vmatmul.f32.gmra.mxu0 %v4105
        %v4107 = vpop.f32.mrf.mxu0
        %v4108 = vadd.f32 %v4086, %v4107
        %4109 = vdwg.mxu0
        %v4110 = vadd.f32 %v3657, %v3962
        %v4111 = vadd.f32 %v3803, %v4108
        %4112 = vrot.lane.b32.xlu0 %v3194, 1
        %v4113 = vpop.permute.xlu0 %4112
        %4114 = vrot.lane.b32.xlu0 %v3195, 1
        %v4115 = vpop.permute.xlu0 %4114
        %v4116 = vsel %vm1298, %v4113, %v4115
        %v4117 = vsel %vm1298, %v4115, %v4113
        %v4118 = vmul.f32 %v4117, %v340
        %v4119 = vmul.f32 %v4116, %v341
        %s4120 = scalar_lea.vmem %s265, 24
        %v4121 = vld [vmem:[%s4120] sm:$0xff]
        %v4123 = vsel %vm395, %v4121, 0
        %4125 = vmatpush.msra.mxu0 0.0
        %4126 = vmatpush.msra.mxu0 0.0
        %4127 = vmatpush.msra.mxu0 0.0
        %4128 = vmatpush.msra.mxu0 0.0
        %4129 = vmatpush.msra.mxu0 0.0
        %4130 = vmatpush.msra.mxu0 0.0
        %4131 = vmatpush.msra.mxu0 0.0
        %4132 = vmatpush.msra.mxu0 0.0
        %4133 = vmatpush.msra.mxu0 0.0
        %4134 = vmatpush.msra.mxu0 0.0
        %4135 = vmatpush.msra.mxu0 0.0
        %4136 = vmatpush.msra.mxu0 0.0
        %4137 = vmatpush.msra.mxu0 0.0
        %4138 = vmatpush.msra.mxu0 0.0
        %4139 = vmatpush.msra.mxu0 0.0
        %v4140 = vand.u32 %v4118, 4294901760
        %4141 = vmatpush.msra.mxu0 %v4140
        %v4142 = vand.u32 %v4123, 4294901760
        %v4143 = vsub.f32 %v4123, %v4142
        %v4144 = vand.u32 %v4143, 4294901760
        %v4145 = vsub.f32 %v4143, %v4144
        %v4146 = vand.u32 %v4145, 4294901760
        %4147 = vmatmul.f32.gmra.mxu0 %v4146
        %v4148 = vpop.f32.mrf.mxu0
        %v4149 = vadd.f32 0.0, %v4148
        %4150 = vdwg.mxu0
        %4151 = vmatpush.msra.mxu0 0.0
        %4152 = vmatpush.msra.mxu0 0.0
        %4153 = vmatpush.msra.mxu0 0.0
        %4154 = vmatpush.msra.mxu0 0.0
        %4155 = vmatpush.msra.mxu0 0.0
        %4156 = vmatpush.msra.mxu0 0.0
        %4157 = vmatpush.msra.mxu0 0.0
        %4158 = vmatpush.msra.mxu0 0.0
        %4159 = vmatpush.msra.mxu0 0.0
        %4160 = vmatpush.msra.mxu0 0.0
        %4161 = vmatpush.msra.mxu0 0.0
        %4162 = vmatpush.msra.mxu0 0.0
        %4163 = vmatpush.msra.mxu0 0.0
        %4164 = vmatpush.msra.mxu0 0.0
        %4165 = vmatpush.msra.mxu0 0.0
        %v4166 = vand.u32 %v4118, 4294901760
        %v4167 = vsub.f32 %v4118, %v4166
        %v4168 = vand.u32 %v4167, 4294901760
        %v4169 = vsub.f32 %v4167, %v4168
        %v4170 = vand.u32 %v4169, 4294901760
        %4171 = vmatpush.msra.mxu0 %v4170
        %v4172 = vand.u32 %v4123, 4294901760
        %4173 = vmatmul.f32.gmra.mxu0 %v4172
        %v4174 = vpop.f32.mrf.mxu0
        %v4175 = vadd.f32 %v4149, %v4174
        %4176 = vdwg.mxu0
        %4177 = vmatpush.msra.mxu0 0.0
        %4178 = vmatpush.msra.mxu0 0.0
        %4179 = vmatpush.msra.mxu0 0.0
        %4180 = vmatpush.msra.mxu0 0.0
        %4181 = vmatpush.msra.mxu0 0.0
        %4182 = vmatpush.msra.mxu0 0.0
        %4183 = vmatpush.msra.mxu0 0.0
        %4184 = vmatpush.msra.mxu0 0.0
        %4185 = vmatpush.msra.mxu0 0.0
        %4186 = vmatpush.msra.mxu0 0.0
        %4187 = vmatpush.msra.mxu0 0.0
        %4188 = vmatpush.msra.mxu0 0.0
        %4189 = vmatpush.msra.mxu0 0.0
        %4190 = vmatpush.msra.mxu0 0.0
        %4191 = vmatpush.msra.mxu0 0.0
        %v4192 = vand.u32 %v4118, 4294901760
        %v4193 = vsub.f32 %v4118, %v4192
        %4194 = vmatpush.msra.mxu0 %v4193
        %v4195 = vand.u32 %v4123, 4294901760
        %v4196 = vsub.f32 %v4123, %v4195
        %4197 = vmatmul.f32.gmra.mxu0 %v4196
        %v4198 = vpop.f32.mrf.mxu0
        %v4199 = vadd.f32 %v4175, %v4198
        %4200 = vdwg.mxu0
        %4201 = vmatpush.msra.mxu0 0.0
        %4202 = vmatpush.msra.mxu0 0.0
        %4203 = vmatpush.msra.mxu0 0.0
        %4204 = vmatpush.msra.mxu0 0.0
        %4205 = vmatpush.msra.mxu0 0.0
        %4206 = vmatpush.msra.mxu0 0.0
        %4207 = vmatpush.msra.mxu0 0.0
        %4208 = vmatpush.msra.mxu0 0.0
        %4209 = vmatpush.msra.mxu0 0.0
        %4210 = vmatpush.msra.mxu0 0.0
        %4211 = vmatpush.msra.mxu0 0.0
        %4212 = vmatpush.msra.mxu0 0.0
        %4213 = vmatpush.msra.mxu0 0.0
        %4214 = vmatpush.msra.mxu0 0.0
        %4215 = vmatpush.msra.mxu0 0.0
        %v4216 = vand.u32 %v4118, 4294901760
        %4217 = vmatpush.msra.mxu0 %v4216
        %v4218 = vand.u32 %v4123, 4294901760
        %v4219 = vsub.f32 %v4123, %v4218
        %v4220 = vand.u32 %v4219, 4294901760
        %4221 = vmatmul.f32.gmra.mxu0 %v4220
        %v4222 = vpop.f32.mrf.mxu0
        %v4223 = vadd.f32 %v4199, %v4222
        %4224 = vdwg.mxu0
        %4225 = vmatpush.msra.mxu0 0.0
        %4226 = vmatpush.msra.mxu0 0.0
        %4227 = vmatpush.msra.mxu0 0.0
        %4228 = vmatpush.msra.mxu0 0.0
        %4229 = vmatpush.msra.mxu0 0.0
        %4230 = vmatpush.msra.mxu0 0.0
        %4231 = vmatpush.msra.mxu0 0.0
        %4232 = vmatpush.msra.mxu0 0.0
        %4233 = vmatpush.msra.mxu0 0.0
        %4234 = vmatpush.msra.mxu0 0.0
        %4235 = vmatpush.msra.mxu0 0.0
        %4236 = vmatpush.msra.mxu0 0.0
        %4237 = vmatpush.msra.mxu0 0.0
        %4238 = vmatpush.msra.mxu0 0.0
        %4239 = vmatpush.msra.mxu0 0.0
        %v4240 = vand.u32 %v4118, 4294901760
        %v4241 = vsub.f32 %v4118, %v4240
        %v4242 = vand.u32 %v4241, 4294901760
        %4243 = vmatpush.msra.mxu0 %v4242
        %v4244 = vand.u32 %v4123, 4294901760
        %4245 = vmatmul.f32.gmra.mxu0 %v4244
        %v4246 = vpop.f32.mrf.mxu0
        %v4247 = vadd.f32 %v4223, %v4246
        %4248 = vdwg.mxu0
        %4249 = vmatpush.msra.mxu0 0.0
        %4250 = vmatpush.msra.mxu0 0.0
        %4251 = vmatpush.msra.mxu0 0.0
        %4252 = vmatpush.msra.mxu0 0.0
        %4253 = vmatpush.msra.mxu0 0.0
        %4254 = vmatpush.msra.mxu0 0.0
        %4255 = vmatpush.msra.mxu0 0.0
        %4256 = vmatpush.msra.mxu0 0.0
        %4257 = vmatpush.msra.mxu0 0.0
        %4258 = vmatpush.msra.mxu0 0.0
        %4259 = vmatpush.msra.mxu0 0.0
        %4260 = vmatpush.msra.mxu0 0.0
        %4261 = vmatpush.msra.mxu0 0.0
        %4262 = vmatpush.msra.mxu0 0.0
        %4263 = vmatpush.msra.mxu0 0.0
        %v4264 = vand.u32 %v4118, 4294901760
        %4265 = vmatpush.msra.mxu0 %v4264
        %v4266 = vand.u32 %v4123, 4294901760
        %4267 = vmatmul.f32.gmra.mxu0 %v4266
        %v4268 = vpop.f32.mrf.mxu0
        %v4269 = vadd.f32 %v4247, %v4268
        %4270 = vdwg.mxu0
        %4271 = vmatpush.msra.mxu0 0.0
        %4272 = vmatpush.msra.mxu0 0.0
        %4273 = vmatpush.msra.mxu0 0.0
        %4274 = vmatpush.msra.mxu0 0.0
        %4275 = vmatpush.msra.mxu0 0.0
        %4276 = vmatpush.msra.mxu0 0.0
        %4277 = vmatpush.msra.mxu0 0.0
        %4278 = vmatpush.msra.mxu0 0.0
        %4279 = vmatpush.msra.mxu0 0.0
        %4280 = vmatpush.msra.mxu0 0.0
        %4281 = vmatpush.msra.mxu0 0.0
        %4282 = vmatpush.msra.mxu0 0.0
        %4283 = vmatpush.msra.mxu0 0.0
        %4284 = vmatpush.msra.mxu0 0.0
        %4285 = vmatpush.msra.mxu0 0.0
        %v4286 = vand.u32 %v4119, 4294901760
        %4287 = vmatpush.msra.mxu0 %v4286
        %v4288 = vand.u32 %v4123, 4294901760
        %v4289 = vsub.f32 %v4123, %v4288
        %v4290 = vand.u32 %v4289, 4294901760
        %v4291 = vsub.f32 %v4289, %v4290
        %v4292 = vand.u32 %v4291, 4294901760
        %4293 = vmatmul.f32.gmra.mxu0 %v4292
        %v4294 = vpop.f32.mrf.mxu0
        %v4295 = vadd.f32 0.0, %v4294
        %4296 = vdwg.mxu0
        %4297 = vmatpush.msra.mxu0 0.0
        %4298 = vmatpush.msra.mxu0 0.0
        %4299 = vmatpush.msra.mxu0 0.0
        %4300 = vmatpush.msra.mxu0 0.0
        %4301 = vmatpush.msra.mxu0 0.0
        %4302 = vmatpush.msra.mxu0 0.0
        %4303 = vmatpush.msra.mxu0 0.0
        %4304 = vmatpush.msra.mxu0 0.0
        %4305 = vmatpush.msra.mxu0 0.0
        %4306 = vmatpush.msra.mxu0 0.0
        %4307 = vmatpush.msra.mxu0 0.0
        %4308 = vmatpush.msra.mxu0 0.0
        %4309 = vmatpush.msra.mxu0 0.0
        %4310 = vmatpush.msra.mxu0 0.0
        %4311 = vmatpush.msra.mxu0 0.0
        %v4312 = vand.u32 %v4119, 4294901760
        %v4313 = vsub.f32 %v4119, %v4312
        %v4314 = vand.u32 %v4313, 4294901760
        %v4315 = vsub.f32 %v4313, %v4314
        %v4316 = vand.u32 %v4315, 4294901760
        %4317 = vmatpush.msra.mxu0 %v4316
        %v4318 = vand.u32 %v4123, 4294901760
        %4319 = vmatmul.f32.gmra.mxu0 %v4318
        %v4320 = vpop.f32.mrf.mxu0
        %v4321 = vadd.f32 %v4295, %v4320
        %4322 = vdwg.mxu0
        %4323 = vmatpush.msra.mxu0 0.0
        %4324 = vmatpush.msra.mxu0 0.0
        %4325 = vmatpush.msra.mxu0 0.0
        %4326 = vmatpush.msra.mxu0 0.0
        %4327 = vmatpush.msra.mxu0 0.0
        %4328 = vmatpush.msra.mxu0 0.0
        %4329 = vmatpush.msra.mxu0 0.0
        %4330 = vmatpush.msra.mxu0 0.0
        %4331 = vmatpush.msra.mxu0 0.0
        %4332 = vmatpush.msra.mxu0 0.0
        %4333 = vmatpush.msra.mxu0 0.0
        %4334 = vmatpush.msra.mxu0 0.0
        %4335 = vmatpush.msra.mxu0 0.0
        %4336 = vmatpush.msra.mxu0 0.0
        %4337 = vmatpush.msra.mxu0 0.0
        %v4338 = vand.u32 %v4119, 4294901760
        %v4339 = vsub.f32 %v4119, %v4338
        %4340 = vmatpush.msra.mxu0 %v4339
        %v4341 = vand.u32 %v4123, 4294901760
        %v4342 = vsub.f32 %v4123, %v4341
        %4343 = vmatmul.f32.gmra.mxu0 %v4342
        %v4344 = vpop.f32.mrf.mxu0
        %v4345 = vadd.f32 %v4321, %v4344
        %4346 = vdwg.mxu0
        %4347 = vmatpush.msra.mxu0 0.0
        %4348 = vmatpush.msra.mxu0 0.0
        %4349 = vmatpush.msra.mxu0 0.0
        %4350 = vmatpush.msra.mxu0 0.0
        %4351 = vmatpush.msra.mxu0 0.0
        %4352 = vmatpush.msra.mxu0 0.0
        %4353 = vmatpush.msra.mxu0 0.0
        %4354 = vmatpush.msra.mxu0 0.0
        %4355 = vmatpush.msra.mxu0 0.0
        %4356 = vmatpush.msra.mxu0 0.0
        %4357 = vmatpush.msra.mxu0 0.0
        %4358 = vmatpush.msra.mxu0 0.0
        %4359 = vmatpush.msra.mxu0 0.0
        %4360 = vmatpush.msra.mxu0 0.0
        %4361 = vmatpush.msra.mxu0 0.0
        %v4362 = vand.u32 %v4119, 4294901760
        %4363 = vmatpush.msra.mxu0 %v4362
        %v4364 = vand.u32 %v4123, 4294901760
        %v4365 = vsub.f32 %v4123, %v4364
        %v4366 = vand.u32 %v4365, 4294901760
        %4367 = vmatmul.f32.gmra.mxu0 %v4366
        %v4368 = vpop.f32.mrf.mxu0
        %v4369 = vadd.f32 %v4345, %v4368
        %4370 = vdwg.mxu0
        %4371 = vmatpush.msra.mxu0 0.0
        %4372 = vmatpush.msra.mxu0 0.0
        %4373 = vmatpush.msra.mxu0 0.0
        %4374 = vmatpush.msra.mxu0 0.0
        %4375 = vmatpush.msra.mxu0 0.0
        %4376 = vmatpush.msra.mxu0 0.0
        %4377 = vmatpush.msra.mxu0 0.0
        %4378 = vmatpush.msra.mxu0 0.0
        %4379 = vmatpush.msra.mxu0 0.0
        %4380 = vmatpush.msra.mxu0 0.0
        %4381 = vmatpush.msra.mxu0 0.0
        %4382 = vmatpush.msra.mxu0 0.0
        %4383 = vmatpush.msra.mxu0 0.0
        %4384 = vmatpush.msra.mxu0 0.0
        %4385 = vmatpush.msra.mxu0 0.0
        %v4386 = vand.u32 %v4119, 4294901760
        %v4387 = vsub.f32 %v4119, %v4386
        %v4388 = vand.u32 %v4387, 4294901760
        %4389 = vmatpush.msra.mxu0 %v4388
        %v4390 = vand.u32 %v4123, 4294901760
        %4391 = vmatmul.f32.gmra.mxu0 %v4390
        %v4392 = vpop.f32.mrf.mxu0
        %v4393 = vadd.f32 %v4369, %v4392
        %4394 = vdwg.mxu0
        %4395 = vmatpush.msra.mxu0 0.0
        %4396 = vmatpush.msra.mxu0 0.0
        %4397 = vmatpush.msra.mxu0 0.0
        %4398 = vmatpush.msra.mxu0 0.0
        %4399 = vmatpush.msra.mxu0 0.0
        %4400 = vmatpush.msra.mxu0 0.0
        %4401 = vmatpush.msra.mxu0 0.0
        %4402 = vmatpush.msra.mxu0 0.0
        %4403 = vmatpush.msra.mxu0 0.0
        %4404 = vmatpush.msra.mxu0 0.0
        %4405 = vmatpush.msra.mxu0 0.0
        %4406 = vmatpush.msra.mxu0 0.0
        %4407 = vmatpush.msra.mxu0 0.0
        %4408 = vmatpush.msra.mxu0 0.0
        %4409 = vmatpush.msra.mxu0 0.0
        %v4410 = vand.u32 %v4119, 4294901760
        %4411 = vmatpush.msra.mxu0 %v4410
        %v4412 = vand.u32 %v4123, 4294901760
        %4413 = vmatmul.f32.gmra.mxu0 %v4412
        %v4414 = vpop.f32.mrf.mxu0
        %v4415 = vadd.f32 %v4393, %v4414
        %4416 = vdwg.mxu0
        %v4417 = vadd.f32 %v4110, %v4269
        %v4418 = vadd.f32 %v4111, %v4415
        %s4419 = scalar_lea.vmem %s265, 32
        %v4420 = vld [vmem:[%s4419] sm:$0xff]
        %v4422 = vsel %vm395, %v4420, 0
        %4424 = vmatpush.msra.mxu0 0.0
        %4425 = vmatpush.msra.mxu0 0.0
        %4426 = vmatpush.msra.mxu0 0.0
        %4427 = vmatpush.msra.mxu0 0.0
        %4428 = vmatpush.msra.mxu0 0.0
        %4429 = vmatpush.msra.mxu0 0.0
        %4430 = vmatpush.msra.mxu0 0.0
        %4431 = vmatpush.msra.mxu0 0.0
        %4432 = vmatpush.msra.mxu0 0.0
        %4433 = vmatpush.msra.mxu0 0.0
        %4434 = vmatpush.msra.mxu0 0.0
        %4435 = vmatpush.msra.mxu0 0.0
        %4436 = vmatpush.msra.mxu0 0.0
        %4437 = vmatpush.msra.mxu0 0.0
        %4438 = vmatpush.msra.mxu0 0.0
        %v4439 = vand.u32 %v3194, 4294901760
        %4440 = vmatpush.msra.mxu0 %v4439
        %v4441 = vand.u32 %v4422, 4294901760
        %v4442 = vsub.f32 %v4422, %v4441
        %v4443 = vand.u32 %v4442, 4294901760
        %v4444 = vsub.f32 %v4442, %v4443
        %v4445 = vand.u32 %v4444, 4294901760
        %4446 = vmatmul.f32.gmra.mxu0 %v4445
        %v4447 = vpop.f32.mrf.mxu0
        %v4448 = vadd.f32 0.0, %v4447
        %4449 = vdwg.mxu0
        %4450 = vmatpush.msra.mxu0 0.0
        %4451 = vmatpush.msra.mxu0 0.0
        %4452 = vmatpush.msra.mxu0 0.0
        %4453 = vmatpush.msra.mxu0 0.0
        %4454 = vmatpush.msra.mxu0 0.0
        %4455 = vmatpush.msra.mxu0 0.0
        %4456 = vmatpush.msra.mxu0 0.0
        %4457 = vmatpush.msra.mxu0 0.0
        %4458 = vmatpush.msra.mxu0 0.0
        %4459 = vmatpush.msra.mxu0 0.0
        %4460 = vmatpush.msra.mxu0 0.0
        %4461 = vmatpush.msra.mxu0 0.0
        %4462 = vmatpush.msra.mxu0 0.0
        %4463 = vmatpush.msra.mxu0 0.0
        %4464 = vmatpush.msra.mxu0 0.0
        %v4465 = vand.u32 %v3194, 4294901760
        %v4466 = vsub.f32 %v3194, %v4465
        %v4467 = vand.u32 %v4466, 4294901760
        %v4468 = vsub.f32 %v4466, %v4467
        %v4469 = vand.u32 %v4468, 4294901760
        %4470 = vmatpush.msra.mxu0 %v4469
        %v4471 = vand.u32 %v4422, 4294901760
        %4472 = vmatmul.f32.gmra.mxu0 %v4471
        %v4473 = vpop.f32.mrf.mxu0
        %v4474 = vadd.f32 %v4448, %v4473
        %4475 = vdwg.mxu0
        %4476 = vmatpush.msra.mxu0 0.0
        %4477 = vmatpush.msra.mxu0 0.0
        %4478 = vmatpush.msra.mxu0 0.0
        %4479 = vmatpush.msra.mxu0 0.0
        %4480 = vmatpush.msra.mxu0 0.0
        %4481 = vmatpush.msra.mxu0 0.0
        %4482 = vmatpush.msra.mxu0 0.0
        %4483 = vmatpush.msra.mxu0 0.0
        %4484 = vmatpush.msra.mxu0 0.0
        %4485 = vmatpush.msra.mxu0 0.0
        %4486 = vmatpush.msra.mxu0 0.0
        %4487 = vmatpush.msra.mxu0 0.0
        %4488 = vmatpush.msra.mxu0 0.0
        %4489 = vmatpush.msra.mxu0 0.0
        %4490 = vmatpush.msra.mxu0 0.0
        %v4491 = vand.u32 %v3194, 4294901760
        %v4492 = vsub.f32 %v3194, %v4491
        %4493 = vmatpush.msra.mxu0 %v4492
        %v4494 = vand.u32 %v4422, 4294901760
        %v4495 = vsub.f32 %v4422, %v4494
        %4496 = vmatmul.f32.gmra.mxu0 %v4495
        %v4497 = vpop.f32.mrf.mxu0
        %v4498 = vadd.f32 %v4474, %v4497
        %4499 = vdwg.mxu0
        %4500 = vmatpush.msra.mxu0 0.0
        %4501 = vmatpush.msra.mxu0 0.0
        %4502 = vmatpush.msra.mxu0 0.0
        %4503 = vmatpush.msra.mxu0 0.0
        %4504 = vmatpush.msra.mxu0 0.0
        %4505 = vmatpush.msra.mxu0 0.0
        %4506 = vmatpush.msra.mxu0 0.0
        %4507 = vmatpush.msra.mxu0 0.0
        %4508 = vmatpush.msra.mxu0 0.0
        %4509 = vmatpush.msra.mxu0 0.0
        %4510 = vmatpush.msra.mxu0 0.0
        %4511 = vmatpush.msra.mxu0 0.0
        %4512 = vmatpush.msra.mxu0 0.0
        %4513 = vmatpush.msra.mxu0 0.0
        %4514 = vmatpush.msra.mxu0 0.0
        %v4515 = vand.u32 %v3194, 4294901760
        %4516 = vmatpush.msra.mxu0 %v4515
        %v4517 = vand.u32 %v4422, 4294901760
        %v4518 = vsub.f32 %v4422, %v4517
        %v4519 = vand.u32 %v4518, 4294901760
        %4520 = vmatmul.f32.gmra.mxu0 %v4519
        %v4521 = vpop.f32.mrf.mxu0
        %v4522 = vadd.f32 %v4498, %v4521
        %4523 = vdwg.mxu0
        %4524 = vmatpush.msra.mxu0 0.0
        %4525 = vmatpush.msra.mxu0 0.0
        %4526 = vmatpush.msra.mxu0 0.0
        %4527 = vmatpush.msra.mxu0 0.0
        %4528 = vmatpush.msra.mxu0 0.0
        %4529 = vmatpush.msra.mxu0 0.0
        %4530 = vmatpush.msra.mxu0 0.0
        %4531 = vmatpush.msra.mxu0 0.0
        %4532 = vmatpush.msra.mxu0 0.0
        %4533 = vmatpush.msra.mxu0 0.0
        %4534 = vmatpush.msra.mxu0 0.0
        %4535 = vmatpush.msra.mxu0 0.0
        %4536 = vmatpush.msra.mxu0 0.0
        %4537 = vmatpush.msra.mxu0 0.0
        %4538 = vmatpush.msra.mxu0 0.0
        %v4539 = vand.u32 %v3194, 4294901760
        %v4540 = vsub.f32 %v3194, %v4539
        %v4541 = vand.u32 %v4540, 4294901760
        %4542 = vmatpush.msra.mxu0 %v4541
        %v4543 = vand.u32 %v4422, 4294901760
        %4544 = vmatmul.f32.gmra.mxu0 %v4543
        %v4545 = vpop.f32.mrf.mxu0
        %v4546 = vadd.f32 %v4522, %v4545
        %4547 = vdwg.mxu0
        %4548 = vmatpush.msra.mxu0 0.0
        %4549 = vmatpush.msra.mxu0 0.0
        %4550 = vmatpush.msra.mxu0 0.0
        %4551 = vmatpush.msra.mxu0 0.0
        %4552 = vmatpush.msra.mxu0 0.0
        %4553 = vmatpush.msra.mxu0 0.0
        %4554 = vmatpush.msra.mxu0 0.0
        %4555 = vmatpush.msra.mxu0 0.0
        %4556 = vmatpush.msra.mxu0 0.0
        %4557 = vmatpush.msra.mxu0 0.0
        %4558 = vmatpush.msra.mxu0 0.0
        %4559 = vmatpush.msra.mxu0 0.0
        %4560 = vmatpush.msra.mxu0 0.0
        %4561 = vmatpush.msra.mxu0 0.0
        %4562 = vmatpush.msra.mxu0 0.0
        %v4563 = vand.u32 %v3194, 4294901760
        %4564 = vmatpush.msra.mxu0 %v4563
        %v4565 = vand.u32 %v4422, 4294901760
        %4566 = vmatmul.f32.gmra.mxu0 %v4565
        %v4567 = vpop.f32.mrf.mxu0
        %v4568 = vadd.f32 %v4546, %v4567
        %4569 = vdwg.mxu0
        %4570 = vmatpush.msra.mxu0 0.0
        %4571 = vmatpush.msra.mxu0 0.0
        %4572 = vmatpush.msra.mxu0 0.0
        %4573 = vmatpush.msra.mxu0 0.0
        %4574 = vmatpush.msra.mxu0 0.0
        %4575 = vmatpush.msra.mxu0 0.0
        %4576 = vmatpush.msra.mxu0 0.0
        %4577 = vmatpush.msra.mxu0 0.0
        %4578 = vmatpush.msra.mxu0 0.0
        %4579 = vmatpush.msra.mxu0 0.0
        %4580 = vmatpush.msra.mxu0 0.0
        %4581 = vmatpush.msra.mxu0 0.0
        %4582 = vmatpush.msra.mxu0 0.0
        %4583 = vmatpush.msra.mxu0 0.0
        %4584 = vmatpush.msra.mxu0 0.0
        %v4585 = vand.u32 %v3195, 4294901760
        %4586 = vmatpush.msra.mxu0 %v4585
        %v4587 = vand.u32 %v4422, 4294901760
        %v4588 = vsub.f32 %v4422, %v4587
        %v4589 = vand.u32 %v4588, 4294901760
        %v4590 = vsub.f32 %v4588, %v4589
        %v4591 = vand.u32 %v4590, 4294901760
        %4592 = vmatmul.f32.gmra.mxu0 %v4591
        %v4593 = vpop.f32.mrf.mxu0
        %v4594 = vadd.f32 0.0, %v4593
        %4595 = vdwg.mxu0
        %4596 = vmatpush.msra.mxu0 0.0
        %4597 = vmatpush.msra.mxu0 0.0
        %4598 = vmatpush.msra.mxu0 0.0
        %4599 = vmatpush.msra.mxu0 0.0
        %4600 = vmatpush.msra.mxu0 0.0
        %4601 = vmatpush.msra.mxu0 0.0
        %4602 = vmatpush.msra.mxu0 0.0
        %4603 = vmatpush.msra.mxu0 0.0
        %4604 = vmatpush.msra.mxu0 0.0
        %4605 = vmatpush.msra.mxu0 0.0
        %4606 = vmatpush.msra.mxu0 0.0
        %4607 = vmatpush.msra.mxu0 0.0
        %4608 = vmatpush.msra.mxu0 0.0
        %4609 = vmatpush.msra.mxu0 0.0
        %4610 = vmatpush.msra.mxu0 0.0
        %v4611 = vand.u32 %v3195, 4294901760
        %v4612 = vsub.f32 %v3195, %v4611
        %v4613 = vand.u32 %v4612, 4294901760
        %v4614 = vsub.f32 %v4612, %v4613
        %v4615 = vand.u32 %v4614, 4294901760
        %4616 = vmatpush.msra.mxu0 %v4615
        %v4617 = vand.u32 %v4422, 4294901760
        %4618 = vmatmul.f32.gmra.mxu0 %v4617
        %v4619 = vpop.f32.mrf.mxu0
        %v4620 = vadd.f32 %v4594, %v4619
        %4621 = vdwg.mxu0
        %4622 = vmatpush.msra.mxu0 0.0
        %4623 = vmatpush.msra.mxu0 0.0
        %4624 = vmatpush.msra.mxu0 0.0
        %4625 = vmatpush.msra.mxu0 0.0
        %4626 = vmatpush.msra.mxu0 0.0
        %4627 = vmatpush.msra.mxu0 0.0
        %4628 = vmatpush.msra.mxu0 0.0
        %4629 = vmatpush.msra.mxu0 0.0
        %4630 = vmatpush.msra.mxu0 0.0
        %4631 = vmatpush.msra.mxu0 0.0
        %4632 = vmatpush.msra.mxu0 0.0
        %4633 = vmatpush.msra.mxu0 0.0
        %4634 = vmatpush.msra.mxu0 0.0
        %4635 = vmatpush.msra.mxu0 0.0
        %4636 = vmatpush.msra.mxu0 0.0
        %v4637 = vand.u32 %v3195, 4294901760
        %v4638 = vsub.f32 %v3195, %v4637
        %4639 = vmatpush.msra.mxu0 %v4638
        %v4640 = vand.u32 %v4422, 4294901760
        %v4641 = vsub.f32 %v4422, %v4640
        %4642 = vmatmul.f32.gmra.mxu0 %v4641
        %v4643 = vpop.f32.mrf.mxu0
        %v4644 = vadd.f32 %v4620, %v4643
        %4645 = vdwg.mxu0
        %4646 = vmatpush.msra.mxu0 0.0
        %4647 = vmatpush.msra.mxu0 0.0
        %4648 = vmatpush.msra.mxu0 0.0
        %4649 = vmatpush.msra.mxu0 0.0
        %4650 = vmatpush.msra.mxu0 0.0
        %4651 = vmatpush.msra.mxu0 0.0
        %4652 = vmatpush.msra.mxu0 0.0
        %4653 = vmatpush.msra.mxu0 0.0
        %4654 = vmatpush.msra.mxu0 0.0
        %4655 = vmatpush.msra.mxu0 0.0
        %4656 = vmatpush.msra.mxu0 0.0
        %4657 = vmatpush.msra.mxu0 0.0
        %4658 = vmatpush.msra.mxu0 0.0
        %4659 = vmatpush.msra.mxu0 0.0
        %4660 = vmatpush.msra.mxu0 0.0
        %v4661 = vand.u32 %v3195, 4294901760
        %4662 = vmatpush.msra.mxu0 %v4661
        %v4663 = vand.u32 %v4422, 4294901760
        %v4664 = vsub.f32 %v4422, %v4663
        %v4665 = vand.u32 %v4664, 4294901760
        %4666 = vmatmul.f32.gmra.mxu0 %v4665
        %v4667 = vpop.f32.mrf.mxu0
        %v4668 = vadd.f32 %v4644, %v4667
        %4669 = vdwg.mxu0
        %4670 = vmatpush.msra.mxu0 0.0
        %4671 = vmatpush.msra.mxu0 0.0
        %4672 = vmatpush.msra.mxu0 0.0
        %4673 = vmatpush.msra.mxu0 0.0
        %4674 = vmatpush.msra.mxu0 0.0
        %4675 = vmatpush.msra.mxu0 0.0
        %4676 = vmatpush.msra.mxu0 0.0
        %4677 = vmatpush.msra.mxu0 0.0
        %4678 = vmatpush.msra.mxu0 0.0
        %4679 = vmatpush.msra.mxu0 0.0
        %4680 = vmatpush.msra.mxu0 0.0
        %4681 = vmatpush.msra.mxu0 0.0
        %4682 = vmatpush.msra.mxu0 0.0
        %4683 = vmatpush.msra.mxu0 0.0
        %4684 = vmatpush.msra.mxu0 0.0
        %v4685 = vand.u32 %v3195, 4294901760
        %v4686 = vsub.f32 %v3195, %v4685
        %v4687 = vand.u32 %v4686, 4294901760
        %4688 = vmatpush.msra.mxu0 %v4687
        %v4689 = vand.u32 %v4422, 4294901760
        %4690 = vmatmul.f32.gmra.mxu0 %v4689
        %v4691 = vpop.f32.mrf.mxu0
        %v4692 = vadd.f32 %v4668, %v4691
        %4693 = vdwg.mxu0
        %4694 = vmatpush.msra.mxu0 0.0
        %4695 = vmatpush.msra.mxu0 0.0
        %4696 = vmatpush.msra.mxu0 0.0
        %4697 = vmatpush.msra.mxu0 0.0
        %4698 = vmatpush.msra.mxu0 0.0
        %4699 = vmatpush.msra.mxu0 0.0
        %4700 = vmatpush.msra.mxu0 0.0
        %4701 = vmatpush.msra.mxu0 0.0
        %4702 = vmatpush.msra.mxu0 0.0
        %4703 = vmatpush.msra.mxu0 0.0
        %4704 = vmatpush.msra.mxu0 0.0
        %4705 = vmatpush.msra.mxu0 0.0
        %4706 = vmatpush.msra.mxu0 0.0
        %4707 = vmatpush.msra.mxu0 0.0
        %4708 = vmatpush.msra.mxu0 0.0
        %v4709 = vand.u32 %v3195, 4294901760
        %4710 = vmatpush.msra.mxu0 %v4709
        %v4711 = vand.u32 %v4422, 4294901760
        %4712 = vmatmul.f32.gmra.mxu0 %v4711
        %v4713 = vpop.f32.mrf.mxu0
        %v4714 = vadd.f32 %v4692, %v4713
        %4715 = vdwg.mxu0
        %v4716 = vadd.f32 %v4417, %v4568
        %v4717 = vadd.f32 %v4418, %v4714
        %4718 = vrot.lane.b32.xlu0 %v3194, 127
        %v4719 = vpop.permute.xlu0 %4718
        %4720 = vrot.lane.b32.xlu0 %v3195, 127
        %v4721 = vpop.permute.xlu0 %4720
        %v4722 = vsel %vm1905, %v4719, %v4721
        %v4723 = vsel %vm1905, %v4721, %v4719
        %v4724 = vmul.f32 %v4722, %v346
        %v4725 = vmul.f32 %v4723, %v347
        %s4726 = scalar_lea.vmem %s265, 40
        %v4727 = vld [vmem:[%s4726] sm:$0xff]
        %v4729 = vsel %vm395, %v4727, 0
        %4731 = vmatpush.msra.mxu0 0.0
        %4732 = vmatpush.msra.mxu0 0.0
        %4733 = vmatpush.msra.mxu0 0.0
        %4734 = vmatpush.msra.mxu0 0.0
        %4735 = vmatpush.msra.mxu0 0.0
        %4736 = vmatpush.msra.mxu0 0.0
        %4737 = vmatpush.msra.mxu0 0.0
        %4738 = vmatpush.msra.mxu0 0.0
        %4739 = vmatpush.msra.mxu0 0.0
        %4740 = vmatpush.msra.mxu0 0.0
        %4741 = vmatpush.msra.mxu0 0.0
        %4742 = vmatpush.msra.mxu0 0.0
        %4743 = vmatpush.msra.mxu0 0.0
        %4744 = vmatpush.msra.mxu0 0.0
        %4745 = vmatpush.msra.mxu0 0.0
        %v4746 = vand.u32 %v4724, 4294901760
        %4747 = vmatpush.msra.mxu0 %v4746
        %v4748 = vand.u32 %v4729, 4294901760
        %v4749 = vsub.f32 %v4729, %v4748
        %v4750 = vand.u32 %v4749, 4294901760
        %v4751 = vsub.f32 %v4749, %v4750
        %v4752 = vand.u32 %v4751, 4294901760
        %4753 = vmatmul.f32.gmra.mxu0 %v4752
        %v4754 = vpop.f32.mrf.mxu0
        %v4755 = vadd.f32 0.0, %v4754
        %4756 = vdwg.mxu0
        %4757 = vmatpush.msra.mxu0 0.0
        %4758 = vmatpush.msra.mxu0 0.0
        %4759 = vmatpush.msra.mxu0 0.0
        %4760 = vmatpush.msra.mxu0 0.0
        %4761 = vmatpush.msra.mxu0 0.0
        %4762 = vmatpush.msra.mxu0 0.0
        %4763 = vmatpush.msra.mxu0 0.0
        %4764 = vmatpush.msra.mxu0 0.0
        %4765 = vmatpush.msra.mxu0 0.0
        %4766 = vmatpush.msra.mxu0 0.0
        %4767 = vmatpush.msra.mxu0 0.0
        %4768 = vmatpush.msra.mxu0 0.0
        %4769 = vmatpush.msra.mxu0 0.0
        %4770 = vmatpush.msra.mxu0 0.0
        %4771 = vmatpush.msra.mxu0 0.0
        %v4772 = vand.u32 %v4724, 4294901760
        %v4773 = vsub.f32 %v4724, %v4772
        %v4774 = vand.u32 %v4773, 4294901760
        %v4775 = vsub.f32 %v4773, %v4774
        %v4776 = vand.u32 %v4775, 4294901760
        %4777 = vmatpush.msra.mxu0 %v4776
        %v4778 = vand.u32 %v4729, 4294901760
        %4779 = vmatmul.f32.gmra.mxu0 %v4778
        %v4780 = vpop.f32.mrf.mxu0
        %v4781 = vadd.f32 %v4755, %v4780
        %4782 = vdwg.mxu0
        %4783 = vmatpush.msra.mxu0 0.0
        %4784 = vmatpush.msra.mxu0 0.0
        %4785 = vmatpush.msra.mxu0 0.0
        %4786 = vmatpush.msra.mxu0 0.0
        %4787 = vmatpush.msra.mxu0 0.0
        %4788 = vmatpush.msra.mxu0 0.0
        %4789 = vmatpush.msra.mxu0 0.0
        %4790 = vmatpush.msra.mxu0 0.0
        %4791 = vmatpush.msra.mxu0 0.0
        %4792 = vmatpush.msra.mxu0 0.0
        %4793 = vmatpush.msra.mxu0 0.0
        %4794 = vmatpush.msra.mxu0 0.0
        %4795 = vmatpush.msra.mxu0 0.0
        %4796 = vmatpush.msra.mxu0 0.0
        %4797 = vmatpush.msra.mxu0 0.0
        %v4798 = vand.u32 %v4724, 4294901760
        %v4799 = vsub.f32 %v4724, %v4798
        %4800 = vmatpush.msra.mxu0 %v4799
        %v4801 = vand.u32 %v4729, 4294901760
        %v4802 = vsub.f32 %v4729, %v4801
        %4803 = vmatmul.f32.gmra.mxu0 %v4802
        %v4804 = vpop.f32.mrf.mxu0
        %v4805 = vadd.f32 %v4781, %v4804
        %4806 = vdwg.mxu0
        %4807 = vmatpush.msra.mxu0 0.0
        %4808 = vmatpush.msra.mxu0 0.0
        %4809 = vmatpush.msra.mxu0 0.0
        %4810 = vmatpush.msra.mxu0 0.0
        %4811 = vmatpush.msra.mxu0 0.0
        %4812 = vmatpush.msra.mxu0 0.0
        %4813 = vmatpush.msra.mxu0 0.0
        %4814 = vmatpush.msra.mxu0 0.0
        %4815 = vmatpush.msra.mxu0 0.0
        %4816 = vmatpush.msra.mxu0 0.0
        %4817 = vmatpush.msra.mxu0 0.0
        %4818 = vmatpush.msra.mxu0 0.0
        %4819 = vmatpush.msra.mxu0 0.0
        %4820 = vmatpush.msra.mxu0 0.0
        %4821 = vmatpush.msra.mxu0 0.0
        %v4822 = vand.u32 %v4724, 4294901760
        %4823 = vmatpush.msra.mxu0 %v4822
        %v4824 = vand.u32 %v4729, 4294901760
        %v4825 = vsub.f32 %v4729, %v4824
        %v4826 = vand.u32 %v4825, 4294901760
        %4827 = vmatmul.f32.gmra.mxu0 %v4826
        %v4828 = vpop.f32.mrf.mxu0
        %v4829 = vadd.f32 %v4805, %v4828
        %4830 = vdwg.mxu0
        %4831 = vmatpush.msra.mxu0 0.0
        %4832 = vmatpush.msra.mxu0 0.0
        %4833 = vmatpush.msra.mxu0 0.0
        %4834 = vmatpush.msra.mxu0 0.0
        %4835 = vmatpush.msra.mxu0 0.0
        %4836 = vmatpush.msra.mxu0 0.0
        %4837 = vmatpush.msra.mxu0 0.0
        %4838 = vmatpush.msra.mxu0 0.0
        %4839 = vmatpush.msra.mxu0 0.0
        %4840 = vmatpush.msra.mxu0 0.0
        %4841 = vmatpush.msra.mxu0 0.0
        %4842 = vmatpush.msra.mxu0 0.0
        %4843 = vmatpush.msra.mxu0 0.0
        %4844 = vmatpush.msra.mxu0 0.0
        %4845 = vmatpush.msra.mxu0 0.0
        %v4846 = vand.u32 %v4724, 4294901760
        %v4847 = vsub.f32 %v4724, %v4846
        %v4848 = vand.u32 %v4847, 4294901760
        %4849 = vmatpush.msra.mxu0 %v4848
        %v4850 = vand.u32 %v4729, 4294901760
        %4851 = vmatmul.f32.gmra.mxu0 %v4850
        %v4852 = vpop.f32.mrf.mxu0
        %v4853 = vadd.f32 %v4829, %v4852
        %4854 = vdwg.mxu0
        %4855 = vmatpush.msra.mxu0 0.0
        %4856 = vmatpush.msra.mxu0 0.0
        %4857 = vmatpush.msra.mxu0 0.0
        %4858 = vmatpush.msra.mxu0 0.0
        %4859 = vmatpush.msra.mxu0 0.0
        %4860 = vmatpush.msra.mxu0 0.0
        %4861 = vmatpush.msra.mxu0 0.0
        %4862 = vmatpush.msra.mxu0 0.0
        %4863 = vmatpush.msra.mxu0 0.0
        %4864 = vmatpush.msra.mxu0 0.0
        %4865 = vmatpush.msra.mxu0 0.0
        %4866 = vmatpush.msra.mxu0 0.0
        %4867 = vmatpush.msra.mxu0 0.0
        %4868 = vmatpush.msra.mxu0 0.0
        %4869 = vmatpush.msra.mxu0 0.0
        %v4870 = vand.u32 %v4724, 4294901760
        %4871 = vmatpush.msra.mxu0 %v4870
        %v4872 = vand.u32 %v4729, 4294901760
        %4873 = vmatmul.f32.gmra.mxu0 %v4872
        %v4874 = vpop.f32.mrf.mxu0
        %v4875 = vadd.f32 %v4853, %v4874
        %4876 = vdwg.mxu0
        %4877 = vmatpush.msra.mxu0 0.0
        %4878 = vmatpush.msra.mxu0 0.0
        %4879 = vmatpush.msra.mxu0 0.0
        %4880 = vmatpush.msra.mxu0 0.0
        %4881 = vmatpush.msra.mxu0 0.0
        %4882 = vmatpush.msra.mxu0 0.0
        %4883 = vmatpush.msra.mxu0 0.0
        %4884 = vmatpush.msra.mxu0 0.0
        %4885 = vmatpush.msra.mxu0 0.0
        %4886 = vmatpush.msra.mxu0 0.0
        %4887 = vmatpush.msra.mxu0 0.0
        %4888 = vmatpush.msra.mxu0 0.0
        %4889 = vmatpush.msra.mxu0 0.0
        %4890 = vmatpush.msra.mxu0 0.0
        %4891 = vmatpush.msra.mxu0 0.0
        %v4892 = vand.u32 %v4725, 4294901760
        %4893 = vmatpush.msra.mxu0 %v4892
        %v4894 = vand.u32 %v4729, 4294901760
        %v4895 = vsub.f32 %v4729, %v4894
        %v4896 = vand.u32 %v4895, 4294901760
        %v4897 = vsub.f32 %v4895, %v4896
        %v4898 = vand.u32 %v4897, 4294901760
        %4899 = vmatmul.f32.gmra.mxu0 %v4898
        %v4900 = vpop.f32.mrf.mxu0
        %v4901 = vadd.f32 0.0, %v4900
        %4902 = vdwg.mxu0
        %4903 = vmatpush.msra.mxu0 0.0
        %4904 = vmatpush.msra.mxu0 0.0
        %4905 = vmatpush.msra.mxu0 0.0
        %4906 = vmatpush.msra.mxu0 0.0
        %4907 = vmatpush.msra.mxu0 0.0
        %4908 = vmatpush.msra.mxu0 0.0
        %4909 = vmatpush.msra.mxu0 0.0
        %4910 = vmatpush.msra.mxu0 0.0
        %4911 = vmatpush.msra.mxu0 0.0
        %4912 = vmatpush.msra.mxu0 0.0
        %4913 = vmatpush.msra.mxu0 0.0
        %4914 = vmatpush.msra.mxu0 0.0
        %4915 = vmatpush.msra.mxu0 0.0
        %4916 = vmatpush.msra.mxu0 0.0
        %4917 = vmatpush.msra.mxu0 0.0
        %v4918 = vand.u32 %v4725, 4294901760
        %v4919 = vsub.f32 %v4725, %v4918
        %v4920 = vand.u32 %v4919, 4294901760
        %v4921 = vsub.f32 %v4919, %v4920
        %v4922 = vand.u32 %v4921, 4294901760
        %4923 = vmatpush.msra.mxu0 %v4922
        %v4924 = vand.u32 %v4729, 4294901760
        %4925 = vmatmul.f32.gmra.mxu0 %v4924
        %v4926 = vpop.f32.mrf.mxu0
        %v4927 = vadd.f32 %v4901, %v4926
        %4928 = vdwg.mxu0
        %4929 = vmatpush.msra.mxu0 0.0
        %4930 = vmatpush.msra.mxu0 0.0
        %4931 = vmatpush.msra.mxu0 0.0
        %4932 = vmatpush.msra.mxu0 0.0
        %4933 = vmatpush.msra.mxu0 0.0
        %4934 = vmatpush.msra.mxu0 0.0
        %4935 = vmatpush.msra.mxu0 0.0
        %4936 = vmatpush.msra.mxu0 0.0
        %4937 = vmatpush.msra.mxu0 0.0
        %4938 = vmatpush.msra.mxu0 0.0
        %4939 = vmatpush.msra.mxu0 0.0
        %4940 = vmatpush.msra.mxu0 0.0
        %4941 = vmatpush.msra.mxu0 0.0
        %4942 = vmatpush.msra.mxu0 0.0
        %4943 = vmatpush.msra.mxu0 0.0
        %v4944 = vand.u32 %v4725, 4294901760
        %v4945 = vsub.f32 %v4725, %v4944
        %4946 = vmatpush.msra.mxu0 %v4945
        %v4947 = vand.u32 %v4729, 4294901760
        %v4948 = vsub.f32 %v4729, %v4947
        %4949 = vmatmul.f32.gmra.mxu0 %v4948
        %v4950 = vpop.f32.mrf.mxu0
        %v4951 = vadd.f32 %v4927, %v4950
        %4952 = vdwg.mxu0
        %4953 = vmatpush.msra.mxu0 0.0
        %4954 = vmatpush.msra.mxu0 0.0
        %4955 = vmatpush.msra.mxu0 0.0
        %4956 = vmatpush.msra.mxu0 0.0
        %4957 = vmatpush.msra.mxu0 0.0
        %4958 = vmatpush.msra.mxu0 0.0
        %4959 = vmatpush.msra.mxu0 0.0
        %4960 = vmatpush.msra.mxu0 0.0
        %4961 = vmatpush.msra.mxu0 0.0
        %4962 = vmatpush.msra.mxu0 0.0
        %4963 = vmatpush.msra.mxu0 0.0
        %4964 = vmatpush.msra.mxu0 0.0
        %4965 = vmatpush.msra.mxu0 0.0
        %4966 = vmatpush.msra.mxu0 0.0
        %4967 = vmatpush.msra.mxu0 0.0
        %v4968 = vand.u32 %v4725, 4294901760
        %4969 = vmatpush.msra.mxu0 %v4968
        %v4970 = vand.u32 %v4729, 4294901760
        %v4971 = vsub.f32 %v4729, %v4970
        %v4972 = vand.u32 %v4971, 4294901760
        %4973 = vmatmul.f32.gmra.mxu0 %v4972
        %v4974 = vpop.f32.mrf.mxu0
        %v4975 = vadd.f32 %v4951, %v4974
        %4976 = vdwg.mxu0
        %4977 = vmatpush.msra.mxu0 0.0
        %4978 = vmatpush.msra.mxu0 0.0
        %4979 = vmatpush.msra.mxu0 0.0
        %4980 = vmatpush.msra.mxu0 0.0
        %4981 = vmatpush.msra.mxu0 0.0
        %4982 = vmatpush.msra.mxu0 0.0
        %4983 = vmatpush.msra.mxu0 0.0
        %4984 = vmatpush.msra.mxu0 0.0
        %4985 = vmatpush.msra.mxu0 0.0
        %4986 = vmatpush.msra.mxu0 0.0
        %4987 = vmatpush.msra.mxu0 0.0
        %4988 = vmatpush.msra.mxu0 0.0
        %4989 = vmatpush.msra.mxu0 0.0
        %4990 = vmatpush.msra.mxu0 0.0
        %4991 = vmatpush.msra.mxu0 0.0
        %v4992 = vand.u32 %v4725, 4294901760
        %v4993 = vsub.f32 %v4725, %v4992
        %v4994 = vand.u32 %v4993, 4294901760
        %4995 = vmatpush.msra.mxu0 %v4994
        %v4996 = vand.u32 %v4729, 4294901760
        %4997 = vmatmul.f32.gmra.mxu0 %v4996
        %v4998 = vpop.f32.mrf.mxu0
        %v4999 = vadd.f32 %v4975, %v4998
        %5000 = vdwg.mxu0
        %5001 = vmatpush.msra.mxu0 0.0
        %5002 = vmatpush.msra.mxu0 0.0
        %5003 = vmatpush.msra.mxu0 0.0
        %5004 = vmatpush.msra.mxu0 0.0
        %5005 = vmatpush.msra.mxu0 0.0
        %5006 = vmatpush.msra.mxu0 0.0
        %5007 = vmatpush.msra.mxu0 0.0
        %5008 = vmatpush.msra.mxu0 0.0
        %5009 = vmatpush.msra.mxu0 0.0
        %5010 = vmatpush.msra.mxu0 0.0
        %5011 = vmatpush.msra.mxu0 0.0
        %5012 = vmatpush.msra.mxu0 0.0
        %5013 = vmatpush.msra.mxu0 0.0
        %5014 = vmatpush.msra.mxu0 0.0
        %5015 = vmatpush.msra.mxu0 0.0
        %v5016 = vand.u32 %v4725, 4294901760
        %5017 = vmatpush.msra.mxu0 %v5016
        %v5018 = vand.u32 %v4729, 4294901760
        %5019 = vmatmul.f32.gmra.mxu0 %v5018
        %v5020 = vpop.f32.mrf.mxu0
        %v5021 = vadd.f32 %v4999, %v5020
        %5022 = vdwg.mxu0
        %v5023 = vadd.f32 %v4716, %v4875
        %v5024 = vadd.f32 %v4717, %v5021
        %5025 = vrot.lane.b32.xlu0 %v3194, 113
        %v5026 = vpop.permute.xlu0 %5025
        %5027 = vrot.lane.b32.xlu0 %v3195, 113
        %v5028 = vpop.permute.xlu0 %5027
        %v5029 = vsel %vm2213, %v5026, %v5028
        %v5030 = vsel %vm2213, %v5028, %v5026
        %v5031 = vmul.f32 %v5029, %v360
        %v5032 = vmul.f32 %v5030, %v361
        %s5033 = scalar_lea.vmem %s265, 48
        %v5034 = vld [vmem:[%s5033] sm:$0xff]
        %v5036 = vsel %vm395, %v5034, 0
        %5038 = vmatpush.msra.mxu0 0.0
        %5039 = vmatpush.msra.mxu0 0.0
        %5040 = vmatpush.msra.mxu0 0.0
        %5041 = vmatpush.msra.mxu0 0.0
        %5042 = vmatpush.msra.mxu0 0.0
        %5043 = vmatpush.msra.mxu0 0.0
        %5044 = vmatpush.msra.mxu0 0.0
        %5045 = vmatpush.msra.mxu0 0.0
        %5046 = vmatpush.msra.mxu0 0.0
        %5047 = vmatpush.msra.mxu0 0.0
        %5048 = vmatpush.msra.mxu0 0.0
        %5049 = vmatpush.msra.mxu0 0.0
        %5050 = vmatpush.msra.mxu0 0.0
        %5051 = vmatpush.msra.mxu0 0.0
        %5052 = vmatpush.msra.mxu0 0.0
        %v5053 = vand.u32 %v5031, 4294901760
        %5054 = vmatpush.msra.mxu0 %v5053
        %v5055 = vand.u32 %v5036, 4294901760
        %v5056 = vsub.f32 %v5036, %v5055
        %v5057 = vand.u32 %v5056, 4294901760
        %v5058 = vsub.f32 %v5056, %v5057
        %v5059 = vand.u32 %v5058, 4294901760
        %5060 = vmatmul.f32.gmra.mxu0 %v5059
        %v5061 = vpop.f32.mrf.mxu0
        %v5062 = vadd.f32 0.0, %v5061
        %5063 = vdwg.mxu0
        %5064 = vmatpush.msra.mxu0 0.0
        %5065 = vmatpush.msra.mxu0 0.0
        %5066 = vmatpush.msra.mxu0 0.0
        %5067 = vmatpush.msra.mxu0 0.0
        %5068 = vmatpush.msra.mxu0 0.0
        %5069 = vmatpush.msra.mxu0 0.0
        %5070 = vmatpush.msra.mxu0 0.0
        %5071 = vmatpush.msra.mxu0 0.0
        %5072 = vmatpush.msra.mxu0 0.0
        %5073 = vmatpush.msra.mxu0 0.0
        %5074 = vmatpush.msra.mxu0 0.0
        %5075 = vmatpush.msra.mxu0 0.0
        %5076 = vmatpush.msra.mxu0 0.0
        %5077 = vmatpush.msra.mxu0 0.0
        %5078 = vmatpush.msra.mxu0 0.0
        %v5079 = vand.u32 %v5031, 4294901760
        %v5080 = vsub.f32 %v5031, %v5079
        %v5081 = vand.u32 %v5080, 4294901760
        %v5082 = vsub.f32 %v5080, %v5081
        %v5083 = vand.u32 %v5082, 4294901760
        %5084 = vmatpush.msra.mxu0 %v5083
        %v5085 = vand.u32 %v5036, 4294901760
        %5086 = vmatmul.f32.gmra.mxu0 %v5085
        %v5087 = vpop.f32.mrf.mxu0
        %v5088 = vadd.f32 %v5062, %v5087
        %5089 = vdwg.mxu0
        %5090 = vmatpush.msra.mxu0 0.0
        %5091 = vmatpush.msra.mxu0 0.0
        %5092 = vmatpush.msra.mxu0 0.0
        %5093 = vmatpush.msra.mxu0 0.0
        %5094 = vmatpush.msra.mxu0 0.0
        %5095 = vmatpush.msra.mxu0 0.0
        %5096 = vmatpush.msra.mxu0 0.0
        %5097 = vmatpush.msra.mxu0 0.0
        %5098 = vmatpush.msra.mxu0 0.0
        %5099 = vmatpush.msra.mxu0 0.0
        %5100 = vmatpush.msra.mxu0 0.0
        %5101 = vmatpush.msra.mxu0 0.0
        %5102 = vmatpush.msra.mxu0 0.0
        %5103 = vmatpush.msra.mxu0 0.0
        %5104 = vmatpush.msra.mxu0 0.0
        %v5105 = vand.u32 %v5031, 4294901760
        %v5106 = vsub.f32 %v5031, %v5105
        %5107 = vmatpush.msra.mxu0 %v5106
        %v5108 = vand.u32 %v5036, 4294901760
        %v5109 = vsub.f32 %v5036, %v5108
        %5110 = vmatmul.f32.gmra.mxu0 %v5109
        %v5111 = vpop.f32.mrf.mxu0
        %v5112 = vadd.f32 %v5088, %v5111
        %5113 = vdwg.mxu0
        %5114 = vmatpush.msra.mxu0 0.0
        %5115 = vmatpush.msra.mxu0 0.0
        %5116 = vmatpush.msra.mxu0 0.0
        %5117 = vmatpush.msra.mxu0 0.0
        %5118 = vmatpush.msra.mxu0 0.0
        %5119 = vmatpush.msra.mxu0 0.0
        %5120 = vmatpush.msra.mxu0 0.0
        %5121 = vmatpush.msra.mxu0 0.0
        %5122 = vmatpush.msra.mxu0 0.0
        %5123 = vmatpush.msra.mxu0 0.0
        %5124 = vmatpush.msra.mxu0 0.0
        %5125 = vmatpush.msra.mxu0 0.0
        %5126 = vmatpush.msra.mxu0 0.0
        %5127 = vmatpush.msra.mxu0 0.0
        %5128 = vmatpush.msra.mxu0 0.0
        %v5129 = vand.u32 %v5031, 4294901760
        %5130 = vmatpush.msra.mxu0 %v5129
        %v5131 = vand.u32 %v5036, 4294901760
        %v5132 = vsub.f32 %v5036, %v5131
        %v5133 = vand.u32 %v5132, 4294901760
        %5134 = vmatmul.f32.gmra.mxu0 %v5133
        %v5135 = vpop.f32.mrf.mxu0
        %v5136 = vadd.f32 %v5112, %v5135
        %5137 = vdwg.mxu0
        %5138 = vmatpush.msra.mxu0 0.0
        %5139 = vmatpush.msra.mxu0 0.0
        %5140 = vmatpush.msra.mxu0 0.0
        %5141 = vmatpush.msra.mxu0 0.0
        %5142 = vmatpush.msra.mxu0 0.0
        %5143 = vmatpush.msra.mxu0 0.0
        %5144 = vmatpush.msra.mxu0 0.0
        %5145 = vmatpush.msra.mxu0 0.0
        %5146 = vmatpush.msra.mxu0 0.0
        %5147 = vmatpush.msra.mxu0 0.0
        %5148 = vmatpush.msra.mxu0 0.0
        %5149 = vmatpush.msra.mxu0 0.0
        %5150 = vmatpush.msra.mxu0 0.0
        %5151 = vmatpush.msra.mxu0 0.0
        %5152 = vmatpush.msra.mxu0 0.0
        %v5153 = vand.u32 %v5031, 4294901760
        %v5154 = vsub.f32 %v5031, %v5153
        %v5155 = vand.u32 %v5154, 4294901760
        %5156 = vmatpush.msra.mxu0 %v5155
        %v5157 = vand.u32 %v5036, 4294901760
        %5158 = vmatmul.f32.gmra.mxu0 %v5157
        %v5159 = vpop.f32.mrf.mxu0
        %v5160 = vadd.f32 %v5136, %v5159
        %5161 = vdwg.mxu0
        %5162 = vmatpush.msra.mxu0 0.0
        %5163 = vmatpush.msra.mxu0 0.0
        %5164 = vmatpush.msra.mxu0 0.0
        %5165 = vmatpush.msra.mxu0 0.0
        %5166 = vmatpush.msra.mxu0 0.0
        %5167 = vmatpush.msra.mxu0 0.0
        %5168 = vmatpush.msra.mxu0 0.0
        %5169 = vmatpush.msra.mxu0 0.0
        %5170 = vmatpush.msra.mxu0 0.0
        %5171 = vmatpush.msra.mxu0 0.0
        %5172 = vmatpush.msra.mxu0 0.0
        %5173 = vmatpush.msra.mxu0 0.0
        %5174 = vmatpush.msra.mxu0 0.0
        %5175 = vmatpush.msra.mxu0 0.0
        %5176 = vmatpush.msra.mxu0 0.0
        %v5177 = vand.u32 %v5031, 4294901760
        %5178 = vmatpush.msra.mxu0 %v5177
        %v5179 = vand.u32 %v5036, 4294901760
        %5180 = vmatmul.f32.gmra.mxu0 %v5179
        %v5181 = vpop.f32.mrf.mxu0
        %v5182 = vadd.f32 %v5160, %v5181
        %5183 = vdwg.mxu0
        %5184 = vmatpush.msra.mxu0 0.0
        %5185 = vmatpush.msra.mxu0 0.0
        %5186 = vmatpush.msra.mxu0 0.0
        %5187 = vmatpush.msra.mxu0 0.0
        %5188 = vmatpush.msra.mxu0 0.0
        %5189 = vmatpush.msra.mxu0 0.0
        %5190 = vmatpush.msra.mxu0 0.0
        %5191 = vmatpush.msra.mxu0 0.0
        %5192 = vmatpush.msra.mxu0 0.0
        %5193 = vmatpush.msra.mxu0 0.0
        %5194 = vmatpush.msra.mxu0 0.0
        %5195 = vmatpush.msra.mxu0 0.0
        %5196 = vmatpush.msra.mxu0 0.0
        %5197 = vmatpush.msra.mxu0 0.0
        %5198 = vmatpush.msra.mxu0 0.0
        %v5199 = vand.u32 %v5032, 4294901760
        %5200 = vmatpush.msra.mxu0 %v5199
        %v5201 = vand.u32 %v5036, 4294901760
        %v5202 = vsub.f32 %v5036, %v5201
        %v5203 = vand.u32 %v5202, 4294901760
        %v5204 = vsub.f32 %v5202, %v5203
        %v5205 = vand.u32 %v5204, 4294901760
        %5206 = vmatmul.f32.gmra.mxu0 %v5205
        %v5207 = vpop.f32.mrf.mxu0
        %v5208 = vadd.f32 0.0, %v5207
        %5209 = vdwg.mxu0
        %5210 = vmatpush.msra.mxu0 0.0
        %5211 = vmatpush.msra.mxu0 0.0
        %5212 = vmatpush.msra.mxu0 0.0
        %5213 = vmatpush.msra.mxu0 0.0
        %5214 = vmatpush.msra.mxu0 0.0
        %5215 = vmatpush.msra.mxu0 0.0
        %5216 = vmatpush.msra.mxu0 0.0
        %5217 = vmatpush.msra.mxu0 0.0
        %5218 = vmatpush.msra.mxu0 0.0
        %5219 = vmatpush.msra.mxu0 0.0
        %5220 = vmatpush.msra.mxu0 0.0
        %5221 = vmatpush.msra.mxu0 0.0
        %5222 = vmatpush.msra.mxu0 0.0
        %5223 = vmatpush.msra.mxu0 0.0
        %5224 = vmatpush.msra.mxu0 0.0
        %v5225 = vand.u32 %v5032, 4294901760
        %v5226 = vsub.f32 %v5032, %v5225
        %v5227 = vand.u32 %v5226, 4294901760
        %v5228 = vsub.f32 %v5226, %v5227
        %v5229 = vand.u32 %v5228, 4294901760
        %5230 = vmatpush.msra.mxu0 %v5229
        %v5231 = vand.u32 %v5036, 4294901760
        %5232 = vmatmul.f32.gmra.mxu0 %v5231
        %v5233 = vpop.f32.mrf.mxu0
        %v5234 = vadd.f32 %v5208, %v5233
        %5235 = vdwg.mxu0
        %5236 = vmatpush.msra.mxu0 0.0
        %5237 = vmatpush.msra.mxu0 0.0
        %5238 = vmatpush.msra.mxu0 0.0
        %5239 = vmatpush.msra.mxu0 0.0
        %5240 = vmatpush.msra.mxu0 0.0
        %5241 = vmatpush.msra.mxu0 0.0
        %5242 = vmatpush.msra.mxu0 0.0
        %5243 = vmatpush.msra.mxu0 0.0
        %5244 = vmatpush.msra.mxu0 0.0
        %5245 = vmatpush.msra.mxu0 0.0
        %5246 = vmatpush.msra.mxu0 0.0
        %5247 = vmatpush.msra.mxu0 0.0
        %5248 = vmatpush.msra.mxu0 0.0
        %5249 = vmatpush.msra.mxu0 0.0
        %5250 = vmatpush.msra.mxu0 0.0
        %v5251 = vand.u32 %v5032, 4294901760
        %v5252 = vsub.f32 %v5032, %v5251
        %5253 = vmatpush.msra.mxu0 %v5252
        %v5254 = vand.u32 %v5036, 4294901760
        %v5255 = vsub.f32 %v5036, %v5254
        %5256 = vmatmul.f32.gmra.mxu0 %v5255
        %v5257 = vpop.f32.mrf.mxu0
        %v5258 = vadd.f32 %v5234, %v5257
        %5259 = vdwg.mxu0
        %5260 = vmatpush.msra.mxu0 0.0
        %5261 = vmatpush.msra.mxu0 0.0
        %5262 = vmatpush.msra.mxu0 0.0
        %5263 = vmatpush.msra.mxu0 0.0
        %5264 = vmatpush.msra.mxu0 0.0
        %5265 = vmatpush.msra.mxu0 0.0
        %5266 = vmatpush.msra.mxu0 0.0
        %5267 = vmatpush.msra.mxu0 0.0
        %5268 = vmatpush.msra.mxu0 0.0
        %5269 = vmatpush.msra.mxu0 0.0
        %5270 = vmatpush.msra.mxu0 0.0
        %5271 = vmatpush.msra.mxu0 0.0
        %5272 = vmatpush.msra.mxu0 0.0
        %5273 = vmatpush.msra.mxu0 0.0
        %5274 = vmatpush.msra.mxu0 0.0
        %v5275 = vand.u32 %v5032, 4294901760
        %5276 = vmatpush.msra.mxu0 %v5275
        %v5277 = vand.u32 %v5036, 4294901760
        %v5278 = vsub.f32 %v5036, %v5277
        %v5279 = vand.u32 %v5278, 4294901760
        %5280 = vmatmul.f32.gmra.mxu0 %v5279
        %v5281 = vpop.f32.mrf.mxu0
        %v5282 = vadd.f32 %v5258, %v5281
        %5283 = vdwg.mxu0
        %5284 = vmatpush.msra.mxu0 0.0
        %5285 = vmatpush.msra.mxu0 0.0
        %5286 = vmatpush.msra.mxu0 0.0
        %5287 = vmatpush.msra.mxu0 0.0
        %5288 = vmatpush.msra.mxu0 0.0
        %5289 = vmatpush.msra.mxu0 0.0
        %5290 = vmatpush.msra.mxu0 0.0
        %5291 = vmatpush.msra.mxu0 0.0
        %5292 = vmatpush.msra.mxu0 0.0
        %5293 = vmatpush.msra.mxu0 0.0
        %5294 = vmatpush.msra.mxu0 0.0
        %5295 = vmatpush.msra.mxu0 0.0
        %5296 = vmatpush.msra.mxu0 0.0
        %5297 = vmatpush.msra.mxu0 0.0
        %5298 = vmatpush.msra.mxu0 0.0
        %v5299 = vand.u32 %v5032, 4294901760
        %v5300 = vsub.f32 %v5032, %v5299
        %v5301 = vand.u32 %v5300, 4294901760
        %5302 = vmatpush.msra.mxu0 %v5301
        %v5303 = vand.u32 %v5036, 4294901760
        %5304 = vmatmul.f32.gmra.mxu0 %v5303
        %v5305 = vpop.f32.mrf.mxu0
        %v5306 = vadd.f32 %v5282, %v5305
        %5307 = vdwg.mxu0
        %5308 = vmatpush.msra.mxu0 0.0
        %5309 = vmatpush.msra.mxu0 0.0
        %5310 = vmatpush.msra.mxu0 0.0
        %5311 = vmatpush.msra.mxu0 0.0
        %5312 = vmatpush.msra.mxu0 0.0
        %5313 = vmatpush.msra.mxu0 0.0
        %5314 = vmatpush.msra.mxu0 0.0
        %5315 = vmatpush.msra.mxu0 0.0
        %5316 = vmatpush.msra.mxu0 0.0
        %5317 = vmatpush.msra.mxu0 0.0
        %5318 = vmatpush.msra.mxu0 0.0
        %5319 = vmatpush.msra.mxu0 0.0
        %5320 = vmatpush.msra.mxu0 0.0
        %5321 = vmatpush.msra.mxu0 0.0
        %5322 = vmatpush.msra.mxu0 0.0
        %v5323 = vand.u32 %v5032, 4294901760
        %5324 = vmatpush.msra.mxu0 %v5323
        %v5325 = vand.u32 %v5036, 4294901760
        %5326 = vmatmul.f32.gmra.mxu0 %v5325
        %v5327 = vpop.f32.mrf.mxu0
        %v5328 = vadd.f32 %v5306, %v5327
        %5329 = vdwg.mxu0
        %v5330 = vadd.f32 %v5023, %v5182
        %v5331 = vadd.f32 %v5024, %v5328
        %5332 = vrot.lane.b32.xlu0 %v3194, 112
        %v5333 = vpop.permute.xlu0 %5332
        %5334 = vrot.lane.b32.xlu0 %v3195, 112
        %v5335 = vpop.permute.xlu0 %5334
        %v5336 = vsel %vm2521, %v5333, %v5335
        %v5337 = vsel %vm2521, %v5335, %v5333
        %v5338 = vmul.f32 %v5336, %v366
        %v5339 = vmul.f32 %v5337, %v367
        %s5340 = scalar_lea.vmem %s265, 56
        %v5341 = vld [vmem:[%s5340] sm:$0xff]
        %v5343 = vsel %vm395, %v5341, 0
        %5345 = vmatpush.msra.mxu0 0.0
        %5346 = vmatpush.msra.mxu0 0.0
        %5347 = vmatpush.msra.mxu0 0.0
        %5348 = vmatpush.msra.mxu0 0.0
        %5349 = vmatpush.msra.mxu0 0.0
        %5350 = vmatpush.msra.mxu0 0.0
        %5351 = vmatpush.msra.mxu0 0.0
        %5352 = vmatpush.msra.mxu0 0.0
        %5353 = vmatpush.msra.mxu0 0.0
        %5354 = vmatpush.msra.mxu0 0.0
        %5355 = vmatpush.msra.mxu0 0.0
        %5356 = vmatpush.msra.mxu0 0.0
        %5357 = vmatpush.msra.mxu0 0.0
        %5358 = vmatpush.msra.mxu0 0.0
        %5359 = vmatpush.msra.mxu0 0.0
        %v5360 = vand.u32 %v5338, 4294901760
        %5361 = vmatpush.msra.mxu0 %v5360
        %v5362 = vand.u32 %v5343, 4294901760
        %v5363 = vsub.f32 %v5343, %v5362
        %v5364 = vand.u32 %v5363, 4294901760
        %v5365 = vsub.f32 %v5363, %v5364
        %v5366 = vand.u32 %v5365, 4294901760
        %5367 = vmatmul.f32.gmra.mxu0 %v5366
        %v5368 = vpop.f32.mrf.mxu0
        %v5369 = vadd.f32 0.0, %v5368
        %5370 = vdwg.mxu0
        %5371 = vmatpush.msra.mxu0 0.0
        %5372 = vmatpush.msra.mxu0 0.0
        %5373 = vmatpush.msra.mxu0 0.0
        %5374 = vmatpush.msra.mxu0 0.0
        %5375 = vmatpush.msra.mxu0 0.0
        %5376 = vmatpush.msra.mxu0 0.0
        %5377 = vmatpush.msra.mxu0 0.0
        %5378 = vmatpush.msra.mxu0 0.0
        %5379 = vmatpush.msra.mxu0 0.0
        %5380 = vmatpush.msra.mxu0 0.0
        %5381 = vmatpush.msra.mxu0 0.0
        %5382 = vmatpush.msra.mxu0 0.0
        %5383 = vmatpush.msra.mxu0 0.0
        %5384 = vmatpush.msra.mxu0 0.0
        %5385 = vmatpush.msra.mxu0 0.0
        %v5386 = vand.u32 %v5338, 4294901760
        %v5387 = vsub.f32 %v5338, %v5386
        %v5388 = vand.u32 %v5387, 4294901760
        %v5389 = vsub.f32 %v5387, %v5388
        %v5390 = vand.u32 %v5389, 4294901760
        %5391 = vmatpush.msra.mxu0 %v5390
        %v5392 = vand.u32 %v5343, 4294901760
        %5393 = vmatmul.f32.gmra.mxu0 %v5392
        %v5394 = vpop.f32.mrf.mxu0
        %v5395 = vadd.f32 %v5369, %v5394
        %5396 = vdwg.mxu0
        %5397 = vmatpush.msra.mxu0 0.0
        %5398 = vmatpush.msra.mxu0 0.0
        %5399 = vmatpush.msra.mxu0 0.0
        %5400 = vmatpush.msra.mxu0 0.0
        %5401 = vmatpush.msra.mxu0 0.0
        %5402 = vmatpush.msra.mxu0 0.0
        %5403 = vmatpush.msra.mxu0 0.0
        %5404 = vmatpush.msra.mxu0 0.0
        %5405 = vmatpush.msra.mxu0 0.0
        %5406 = vmatpush.msra.mxu0 0.0
        %5407 = vmatpush.msra.mxu0 0.0
        %5408 = vmatpush.msra.mxu0 0.0
        %5409 = vmatpush.msra.mxu0 0.0
        %5410 = vmatpush.msra.mxu0 0.0
        %5411 = vmatpush.msra.mxu0 0.0
        %v5412 = vand.u32 %v5338, 4294901760
        %v5413 = vsub.f32 %v5338, %v5412
        %5414 = vmatpush.msra.mxu0 %v5413
        %v5415 = vand.u32 %v5343, 4294901760
        %v5416 = vsub.f32 %v5343, %v5415
        %5417 = vmatmul.f32.gmra.mxu0 %v5416
        %v5418 = vpop.f32.mrf.mxu0
        %v5419 = vadd.f32 %v5395, %v5418
        %5420 = vdwg.mxu0
        %5421 = vmatpush.msra.mxu0 0.0
        %5422 = vmatpush.msra.mxu0 0.0
        %5423 = vmatpush.msra.mxu0 0.0
        %5424 = vmatpush.msra.mxu0 0.0
        %5425 = vmatpush.msra.mxu0 0.0
        %5426 = vmatpush.msra.mxu0 0.0
        %5427 = vmatpush.msra.mxu0 0.0
        %5428 = vmatpush.msra.mxu0 0.0
        %5429 = vmatpush.msra.mxu0 0.0
        %5430 = vmatpush.msra.mxu0 0.0
        %5431 = vmatpush.msra.mxu0 0.0
        %5432 = vmatpush.msra.mxu0 0.0
        %5433 = vmatpush.msra.mxu0 0.0
        %5434 = vmatpush.msra.mxu0 0.0
        %5435 = vmatpush.msra.mxu0 0.0
        %v5436 = vand.u32 %v5338, 4294901760
        %5437 = vmatpush.msra.mxu0 %v5436
        %v5438 = vand.u32 %v5343, 4294901760
        %v5439 = vsub.f32 %v5343, %v5438
        %v5440 = vand.u32 %v5439, 4294901760
        %5441 = vmatmul.f32.gmra.mxu0 %v5440
        %v5442 = vpop.f32.mrf.mxu0
        %v5443 = vadd.f32 %v5419, %v5442
        %5444 = vdwg.mxu0
        %5445 = vmatpush.msra.mxu0 0.0
        %5446 = vmatpush.msra.mxu0 0.0
        %5447 = vmatpush.msra.mxu0 0.0
        %5448 = vmatpush.msra.mxu0 0.0
        %5449 = vmatpush.msra.mxu0 0.0
        %5450 = vmatpush.msra.mxu0 0.0
        %5451 = vmatpush.msra.mxu0 0.0
        %5452 = vmatpush.msra.mxu0 0.0
        %5453 = vmatpush.msra.mxu0 0.0
        %5454 = vmatpush.msra.mxu0 0.0
        %5455 = vmatpush.msra.mxu0 0.0
        %5456 = vmatpush.msra.mxu0 0.0
        %5457 = vmatpush.msra.mxu0 0.0
        %5458 = vmatpush.msra.mxu0 0.0
        %5459 = vmatpush.msra.mxu0 0.0
        %v5460 = vand.u32 %v5338, 4294901760
        %v5461 = vsub.f32 %v5338, %v5460
        %v5462 = vand.u32 %v5461, 4294901760
        %5463 = vmatpush.msra.mxu0 %v5462
        %v5464 = vand.u32 %v5343, 4294901760
        %5465 = vmatmul.f32.gmra.mxu0 %v5464
        %v5466 = vpop.f32.mrf.mxu0
        %v5467 = vadd.f32 %v5443, %v5466
        %5468 = vdwg.mxu0
        %5469 = vmatpush.msra.mxu0 0.0
        %5470 = vmatpush.msra.mxu0 0.0
        %5471 = vmatpush.msra.mxu0 0.0
        %5472 = vmatpush.msra.mxu0 0.0
        %5473 = vmatpush.msra.mxu0 0.0
        %5474 = vmatpush.msra.mxu0 0.0
        %5475 = vmatpush.msra.mxu0 0.0
        %5476 = vmatpush.msra.mxu0 0.0
        %5477 = vmatpush.msra.mxu0 0.0
        %5478 = vmatpush.msra.mxu0 0.0
        %5479 = vmatpush.msra.mxu0 0.0
        %5480 = vmatpush.msra.mxu0 0.0
        %5481 = vmatpush.msra.mxu0 0.0
        %5482 = vmatpush.msra.mxu0 0.0
        %5483 = vmatpush.msra.mxu0 0.0
        %v5484 = vand.u32 %v5338, 4294901760
        %5485 = vmatpush.msra.mxu0 %v5484
        %v5486 = vand.u32 %v5343, 4294901760
        %5487 = vmatmul.f32.gmra.mxu0 %v5486
        %v5488 = vpop.f32.mrf.mxu0
        %v5489 = vadd.f32 %v5467, %v5488
        %5490 = vdwg.mxu0
        %5491 = vmatpush.msra.mxu0 0.0
        %5492 = vmatpush.msra.mxu0 0.0
        %5493 = vmatpush.msra.mxu0 0.0
        %5494 = vmatpush.msra.mxu0 0.0
        %5495 = vmatpush.msra.mxu0 0.0
        %5496 = vmatpush.msra.mxu0 0.0
        %5497 = vmatpush.msra.mxu0 0.0
        %5498 = vmatpush.msra.mxu0 0.0
        %5499 = vmatpush.msra.mxu0 0.0
        %5500 = vmatpush.msra.mxu0 0.0
        %5501 = vmatpush.msra.mxu0 0.0
        %5502 = vmatpush.msra.mxu0 0.0
        %5503 = vmatpush.msra.mxu0 0.0
        %5504 = vmatpush.msra.mxu0 0.0
        %5505 = vmatpush.msra.mxu0 0.0
        %v5506 = vand.u32 %v5339, 4294901760
        %5507 = vmatpush.msra.mxu0 %v5506
        %v5508 = vand.u32 %v5343, 4294901760
        %v5509 = vsub.f32 %v5343, %v5508
        %v5510 = vand.u32 %v5509, 4294901760
        %v5511 = vsub.f32 %v5509, %v5510
        %v5512 = vand.u32 %v5511, 4294901760
        %5513 = vmatmul.f32.gmra.mxu0 %v5512
        %v5514 = vpop.f32.mrf.mxu0
        %v5515 = vadd.f32 0.0, %v5514
        %5516 = vdwg.mxu0
        %5517 = vmatpush.msra.mxu0 0.0
        %5518 = vmatpush.msra.mxu0 0.0
        %5519 = vmatpush.msra.mxu0 0.0
        %5520 = vmatpush.msra.mxu0 0.0
        %5521 = vmatpush.msra.mxu0 0.0
        %5522 = vmatpush.msra.mxu0 0.0
        %5523 = vmatpush.msra.mxu0 0.0
        %5524 = vmatpush.msra.mxu0 0.0
        %5525 = vmatpush.msra.mxu0 0.0
        %5526 = vmatpush.msra.mxu0 0.0
        %5527 = vmatpush.msra.mxu0 0.0
        %5528 = vmatpush.msra.mxu0 0.0
        %5529 = vmatpush.msra.mxu0 0.0
        %5530 = vmatpush.msra.mxu0 0.0
        %5531 = vmatpush.msra.mxu0 0.0
        %v5532 = vand.u32 %v5339, 4294901760
        %v5533 = vsub.f32 %v5339, %v5532
        %v5534 = vand.u32 %v5533, 4294901760
        %v5535 = vsub.f32 %v5533, %v5534
        %v5536 = vand.u32 %v5535, 4294901760
        %5537 = vmatpush.msra.mxu0 %v5536
        %v5538 = vand.u32 %v5343, 4294901760
        %5539 = vmatmul.f32.gmra.mxu0 %v5538
        %v5540 = vpop.f32.mrf.mxu0
        %v5541 = vadd.f32 %v5515, %v5540
        %5542 = vdwg.mxu0
        %5543 = vmatpush.msra.mxu0 0.0
        %5544 = vmatpush.msra.mxu0 0.0
        %5545 = vmatpush.msra.mxu0 0.0
        %5546 = vmatpush.msra.mxu0 0.0
        %5547 = vmatpush.msra.mxu0 0.0
        %5548 = vmatpush.msra.mxu0 0.0
        %5549 = vmatpush.msra.mxu0 0.0
        %5550 = vmatpush.msra.mxu0 0.0
        %5551 = vmatpush.msra.mxu0 0.0
        %5552 = vmatpush.msra.mxu0 0.0
        %5553 = vmatpush.msra.mxu0 0.0
        %5554 = vmatpush.msra.mxu0 0.0
        %5555 = vmatpush.msra.mxu0 0.0
        %5556 = vmatpush.msra.mxu0 0.0
        %5557 = vmatpush.msra.mxu0 0.0
        %v5558 = vand.u32 %v5339, 4294901760
        %v5559 = vsub.f32 %v5339, %v5558
        %5560 = vmatpush.msra.mxu0 %v5559
        %v5561 = vand.u32 %v5343, 4294901760
        %v5562 = vsub.f32 %v5343, %v5561
        %5563 = vmatmul.f32.gmra.mxu0 %v5562
        %v5564 = vpop.f32.mrf.mxu0
        %v5565 = vadd.f32 %v5541, %v5564
        %5566 = vdwg.mxu0
        %5567 = vmatpush.msra.mxu0 0.0
        %5568 = vmatpush.msra.mxu0 0.0
        %5569 = vmatpush.msra.mxu0 0.0
        %5570 = vmatpush.msra.mxu0 0.0
        %5571 = vmatpush.msra.mxu0 0.0
        %5572 = vmatpush.msra.mxu0 0.0
        %5573 = vmatpush.msra.mxu0 0.0
        %5574 = vmatpush.msra.mxu0 0.0
        %5575 = vmatpush.msra.mxu0 0.0
        %5576 = vmatpush.msra.mxu0 0.0
        %5577 = vmatpush.msra.mxu0 0.0
        %5578 = vmatpush.msra.mxu0 0.0
        %5579 = vmatpush.msra.mxu0 0.0
        %5580 = vmatpush.msra.mxu0 0.0
        %5581 = vmatpush.msra.mxu0 0.0
        %v5582 = vand.u32 %v5339, 4294901760
        %5583 = vmatpush.msra.mxu0 %v5582
        %v5584 = vand.u32 %v5343, 4294901760
        %v5585 = vsub.f32 %v5343, %v5584
        %v5586 = vand.u32 %v5585, 4294901760
        %5587 = vmatmul.f32.gmra.mxu0 %v5586
        %v5588 = vpop.f32.mrf.mxu0
        %v5589 = vadd.f32 %v5565, %v5588
        %5590 = vdwg.mxu0
        %5591 = vmatpush.msra.mxu0 0.0
        %5592 = vmatpush.msra.mxu0 0.0
        %5593 = vmatpush.msra.mxu0 0.0
        %5594 = vmatpush.msra.mxu0 0.0
        %5595 = vmatpush.msra.mxu0 0.0
        %5596 = vmatpush.msra.mxu0 0.0
        %5597 = vmatpush.msra.mxu0 0.0
        %5598 = vmatpush.msra.mxu0 0.0
        %5599 = vmatpush.msra.mxu0 0.0
        %5600 = vmatpush.msra.mxu0 0.0
        %5601 = vmatpush.msra.mxu0 0.0
        %5602 = vmatpush.msra.mxu0 0.0
        %5603 = vmatpush.msra.mxu0 0.0
        %5604 = vmatpush.msra.mxu0 0.0
        %5605 = vmatpush.msra.mxu0 0.0
        %v5606 = vand.u32 %v5339, 4294901760
        %v5607 = vsub.f32 %v5339, %v5606
        %v5608 = vand.u32 %v5607, 4294901760
        %5609 = vmatpush.msra.mxu0 %v5608
        %v5610 = vand.u32 %v5343, 4294901760
        %5611 = vmatmul.f32.gmra.mxu0 %v5610
        %v5612 = vpop.f32.mrf.mxu0
        %v5613 = vadd.f32 %v5589, %v5612
        %5614 = vdwg.mxu0
        %5615 = vmatpush.msra.mxu0 0.0
        %5616 = vmatpush.msra.mxu0 0.0
        %5617 = vmatpush.msra.mxu0 0.0
        %5618 = vmatpush.msra.mxu0 0.0
        %5619 = vmatpush.msra.mxu0 0.0
        %5620 = vmatpush.msra.mxu0 0.0
        %5621 = vmatpush.msra.mxu0 0.0
        %5622 = vmatpush.msra.mxu0 0.0
        %5623 = vmatpush.msra.mxu0 0.0
        %5624 = vmatpush.msra.mxu0 0.0
        %5625 = vmatpush.msra.mxu0 0.0
        %5626 = vmatpush.msra.mxu0 0.0
        %5627 = vmatpush.msra.mxu0 0.0
        %5628 = vmatpush.msra.mxu0 0.0
        %5629 = vmatpush.msra.mxu0 0.0
        %v5630 = vand.u32 %v5339, 4294901760
        %5631 = vmatpush.msra.mxu0 %v5630
        %v5632 = vand.u32 %v5343, 4294901760
        %5633 = vmatmul.f32.gmra.mxu0 %v5632
        %v5634 = vpop.f32.mrf.mxu0
        %v5635 = vadd.f32 %v5613, %v5634
        %5636 = vdwg.mxu0
        %v5637 = vadd.f32 %v5330, %v5489
        %v5638 = vadd.f32 %v5331, %v5635
        %5639 = vrot.lane.b32.xlu0 %v3194, 111
        %v5640 = vpop.permute.xlu0 %5639
        %5641 = vrot.lane.b32.xlu0 %v3195, 111
        %v5642 = vpop.permute.xlu0 %5641
        %v5643 = vsel %vm2829, %v5640, %v5642
        %v5644 = vsel %vm2829, %v5642, %v5640
        %v5645 = vmul.f32 %v5643, %v372
        %v5646 = vmul.f32 %v5644, %v373
        %s5647 = scalar_lea.vmem %s265, 64
        %v5648 = vld [vmem:[%s5647] sm:$0xff]
        %v5650 = vsel %vm395, %v5648, 0
        %5652 = vmatpush.msra.mxu0 0.0
        %5653 = vmatpush.msra.mxu0 0.0
        %5654 = vmatpush.msra.mxu0 0.0
        %5655 = vmatpush.msra.mxu0 0.0
        %5656 = vmatpush.msra.mxu0 0.0
        %5657 = vmatpush.msra.mxu0 0.0
        %5658 = vmatpush.msra.mxu0 0.0
        %5659 = vmatpush.msra.mxu0 0.0
        %5660 = vmatpush.msra.mxu0 0.0
        %5661 = vmatpush.msra.mxu0 0.0
        %5662 = vmatpush.msra.mxu0 0.0
        %5663 = vmatpush.msra.mxu0 0.0
        %5664 = vmatpush.msra.mxu0 0.0
        %5665 = vmatpush.msra.mxu0 0.0
        %5666 = vmatpush.msra.mxu0 0.0
        %v5667 = vand.u32 %v5645, 4294901760
        %5668 = vmatpush.msra.mxu0 %v5667
        %v5669 = vand.u32 %v5650, 4294901760
        %v5670 = vsub.f32 %v5650, %v5669
        %v5671 = vand.u32 %v5670, 4294901760
        %v5672 = vsub.f32 %v5670, %v5671
        %v5673 = vand.u32 %v5672, 4294901760
        %5674 = vmatmul.f32.gmra.mxu0 %v5673
        %v5675 = vpop.f32.mrf.mxu0
        %v5676 = vadd.f32 0.0, %v5675
        %5677 = vdwg.mxu0
        %5678 = vmatpush.msra.mxu0 0.0
        %5679 = vmatpush.msra.mxu0 0.0
        %5680 = vmatpush.msra.mxu0 0.0
        %5681 = vmatpush.msra.mxu0 0.0
        %5682 = vmatpush.msra.mxu0 0.0
        %5683 = vmatpush.msra.mxu0 0.0
        %5684 = vmatpush.msra.mxu0 0.0
        %5685 = vmatpush.msra.mxu0 0.0
        %5686 = vmatpush.msra.mxu0 0.0
        %5687 = vmatpush.msra.mxu0 0.0
        %5688 = vmatpush.msra.mxu0 0.0
        %5689 = vmatpush.msra.mxu0 0.0
        %5690 = vmatpush.msra.mxu0 0.0
        %5691 = vmatpush.msra.mxu0 0.0
        %5692 = vmatpush.msra.mxu0 0.0
        %v5693 = vand.u32 %v5645, 4294901760
        %v5694 = vsub.f32 %v5645, %v5693
        %v5695 = vand.u32 %v5694, 4294901760
        %v5696 = vsub.f32 %v5694, %v5695
        %v5697 = vand.u32 %v5696, 4294901760
        %5698 = vmatpush.msra.mxu0 %v5697
        %v5699 = vand.u32 %v5650, 4294901760
        %5700 = vmatmul.f32.gmra.mxu0 %v5699
        %v5701 = vpop.f32.mrf.mxu0
        %v5702 = vadd.f32 %v5676, %v5701
        %5703 = vdwg.mxu0
        %5704 = vmatpush.msra.mxu0 0.0
        %5705 = vmatpush.msra.mxu0 0.0
        %5706 = vmatpush.msra.mxu0 0.0
        %5707 = vmatpush.msra.mxu0 0.0
        %5708 = vmatpush.msra.mxu0 0.0
        %5709 = vmatpush.msra.mxu0 0.0
        %5710 = vmatpush.msra.mxu0 0.0
        %5711 = vmatpush.msra.mxu0 0.0
        %5712 = vmatpush.msra.mxu0 0.0
        %5713 = vmatpush.msra.mxu0 0.0
        %5714 = vmatpush.msra.mxu0 0.0
        %5715 = vmatpush.msra.mxu0 0.0
        %5716 = vmatpush.msra.mxu0 0.0
        %5717 = vmatpush.msra.mxu0 0.0
        %5718 = vmatpush.msra.mxu0 0.0
        %v5719 = vand.u32 %v5645, 4294901760
        %v5720 = vsub.f32 %v5645, %v5719
        %5721 = vmatpush.msra.mxu0 %v5720
        %v5722 = vand.u32 %v5650, 4294901760
        %v5723 = vsub.f32 %v5650, %v5722
        %5724 = vmatmul.f32.gmra.mxu0 %v5723
        %v5725 = vpop.f32.mrf.mxu0
        %v5726 = vadd.f32 %v5702, %v5725
        %5727 = vdwg.mxu0
        %5728 = vmatpush.msra.mxu0 0.0
        %5729 = vmatpush.msra.mxu0 0.0
        %5730 = vmatpush.msra.mxu0 0.0
        %5731 = vmatpush.msra.mxu0 0.0
        %5732 = vmatpush.msra.mxu0 0.0
        %5733 = vmatpush.msra.mxu0 0.0
        %5734 = vmatpush.msra.mxu0 0.0
        %5735 = vmatpush.msra.mxu0 0.0
        %5736 = vmatpush.msra.mxu0 0.0
        %5737 = vmatpush.msra.mxu0 0.0
        %5738 = vmatpush.msra.mxu0 0.0
        %5739 = vmatpush.msra.mxu0 0.0
        %5740 = vmatpush.msra.mxu0 0.0
        %5741 = vmatpush.msra.mxu0 0.0
        %5742 = vmatpush.msra.mxu0 0.0
        %v5743 = vand.u32 %v5645, 4294901760
        %5744 = vmatpush.msra.mxu0 %v5743
        %v5745 = vand.u32 %v5650, 4294901760
        %v5746 = vsub.f32 %v5650, %v5745
        %v5747 = vand.u32 %v5746, 4294901760
        %5748 = vmatmul.f32.gmra.mxu0 %v5747
        %v5749 = vpop.f32.mrf.mxu0
        %v5750 = vadd.f32 %v5726, %v5749
        %5751 = vdwg.mxu0
        %5752 = vmatpush.msra.mxu0 0.0
        %5753 = vmatpush.msra.mxu0 0.0
        %5754 = vmatpush.msra.mxu0 0.0
        %5755 = vmatpush.msra.mxu0 0.0
        %5756 = vmatpush.msra.mxu0 0.0
        %5757 = vmatpush.msra.mxu0 0.0
        %5758 = vmatpush.msra.mxu0 0.0
        %5759 = vmatpush.msra.mxu0 0.0
        %5760 = vmatpush.msra.mxu0 0.0
        %5761 = vmatpush.msra.mxu0 0.0
        %5762 = vmatpush.msra.mxu0 0.0
        %5763 = vmatpush.msra.mxu0 0.0
        %5764 = vmatpush.msra.mxu0 0.0
        %5765 = vmatpush.msra.mxu0 0.0
        %5766 = vmatpush.msra.mxu0 0.0
        %v5767 = vand.u32 %v5645, 4294901760
        %v5768 = vsub.f32 %v5645, %v5767
        %v5769 = vand.u32 %v5768, 4294901760
        %5770 = vmatpush.msra.mxu0 %v5769
        %v5771 = vand.u32 %v5650, 4294901760
        %5772 = vmatmul.f32.gmra.mxu0 %v5771
        %v5773 = vpop.f32.mrf.mxu0
        %v5774 = vadd.f32 %v5750, %v5773
        %5775 = vdwg.mxu0
        %5776 = vmatpush.msra.mxu0 0.0
        %5777 = vmatpush.msra.mxu0 0.0
        %5778 = vmatpush.msra.mxu0 0.0
        %5779 = vmatpush.msra.mxu0 0.0
        %5780 = vmatpush.msra.mxu0 0.0
        %5781 = vmatpush.msra.mxu0 0.0
        %5782 = vmatpush.msra.mxu0 0.0
        %5783 = vmatpush.msra.mxu0 0.0
        %5784 = vmatpush.msra.mxu0 0.0
        %5785 = vmatpush.msra.mxu0 0.0
        %5786 = vmatpush.msra.mxu0 0.0
        %5787 = vmatpush.msra.mxu0 0.0
        %5788 = vmatpush.msra.mxu0 0.0
        %5789 = vmatpush.msra.mxu0 0.0
        %5790 = vmatpush.msra.mxu0 0.0
        %v5791 = vand.u32 %v5645, 4294901760
        %5792 = vmatpush.msra.mxu0 %v5791
        %v5793 = vand.u32 %v5650, 4294901760
        %5794 = vmatmul.f32.gmra.mxu0 %v5793
        %v5795 = vpop.f32.mrf.mxu0
        %v5796 = vadd.f32 %v5774, %v5795
        %5797 = vdwg.mxu0
        %5798 = vmatpush.msra.mxu0 0.0
        %5799 = vmatpush.msra.mxu0 0.0
        %5800 = vmatpush.msra.mxu0 0.0
        %5801 = vmatpush.msra.mxu0 0.0
        %5802 = vmatpush.msra.mxu0 0.0
        %5803 = vmatpush.msra.mxu0 0.0
        %5804 = vmatpush.msra.mxu0 0.0
        %5805 = vmatpush.msra.mxu0 0.0
        %5806 = vmatpush.msra.mxu0 0.0
        %5807 = vmatpush.msra.mxu0 0.0
        %5808 = vmatpush.msra.mxu0 0.0
        %5809 = vmatpush.msra.mxu0 0.0
        %5810 = vmatpush.msra.mxu0 0.0
        %5811 = vmatpush.msra.mxu0 0.0
        %5812 = vmatpush.msra.mxu0 0.0
        %v5813 = vand.u32 %v5646, 4294901760
        %5814 = vmatpush.msra.mxu0 %v5813
        %v5815 = vand.u32 %v5650, 4294901760
        %v5816 = vsub.f32 %v5650, %v5815
        %v5817 = vand.u32 %v5816, 4294901760
        %v5818 = vsub.f32 %v5816, %v5817
        %v5819 = vand.u32 %v5818, 4294901760
        %5820 = vmatmul.f32.gmra.mxu0 %v5819
        %v5821 = vpop.f32.mrf.mxu0
        %v5822 = vadd.f32 0.0, %v5821
        %5823 = vdwg.mxu0
        %5824 = vmatpush.msra.mxu0 0.0
        %5825 = vmatpush.msra.mxu0 0.0
        %5826 = vmatpush.msra.mxu0 0.0
        %5827 = vmatpush.msra.mxu0 0.0
        %5828 = vmatpush.msra.mxu0 0.0
        %5829 = vmatpush.msra.mxu0 0.0
        %5830 = vmatpush.msra.mxu0 0.0
        %5831 = vmatpush.msra.mxu0 0.0
        %5832 = vmatpush.msra.mxu0 0.0
        %5833 = vmatpush.msra.mxu0 0.0
        %5834 = vmatpush.msra.mxu0 0.0
        %5835 = vmatpush.msra.mxu0 0.0
        %5836 = vmatpush.msra.mxu0 0.0
        %5837 = vmatpush.msra.mxu0 0.0
        %5838 = vmatpush.msra.mxu0 0.0
        %v5839 = vand.u32 %v5646, 4294901760
        %v5840 = vsub.f32 %v5646, %v5839
        %v5841 = vand.u32 %v5840, 4294901760
        %v5842 = vsub.f32 %v5840, %v5841
        %v5843 = vand.u32 %v5842, 4294901760
        %5844 = vmatpush.msra.mxu0 %v5843
        %v5845 = vand.u32 %v5650, 4294901760
        %5846 = vmatmul.f32.gmra.mxu0 %v5845
        %v5847 = vpop.f32.mrf.mxu0
        %v5848 = vadd.f32 %v5822, %v5847
        %5849 = vdwg.mxu0
        %5850 = vmatpush.msra.mxu0 0.0
        %5851 = vmatpush.msra.mxu0 0.0
        %5852 = vmatpush.msra.mxu0 0.0
        %5853 = vmatpush.msra.mxu0 0.0
        %5854 = vmatpush.msra.mxu0 0.0
        %5855 = vmatpush.msra.mxu0 0.0
        %5856 = vmatpush.msra.mxu0 0.0
        %5857 = vmatpush.msra.mxu0 0.0
        %5858 = vmatpush.msra.mxu0 0.0
        %5859 = vmatpush.msra.mxu0 0.0
        %5860 = vmatpush.msra.mxu0 0.0
        %5861 = vmatpush.msra.mxu0 0.0
        %5862 = vmatpush.msra.mxu0 0.0
        %5863 = vmatpush.msra.mxu0 0.0
        %5864 = vmatpush.msra.mxu0 0.0
        %v5865 = vand.u32 %v5646, 4294901760
        %v5866 = vsub.f32 %v5646, %v5865
        %5867 = vmatpush.msra.mxu0 %v5866
        %v5868 = vand.u32 %v5650, 4294901760
        %v5869 = vsub.f32 %v5650, %v5868
        %5870 = vmatmul.f32.gmra.mxu0 %v5869
        %v5871 = vpop.f32.mrf.mxu0
        %v5872 = vadd.f32 %v5848, %v5871
        %5873 = vdwg.mxu0
        %5874 = vmatpush.msra.mxu0 0.0
        %5875 = vmatpush.msra.mxu0 0.0
        %5876 = vmatpush.msra.mxu0 0.0
        %5877 = vmatpush.msra.mxu0 0.0
        %5878 = vmatpush.msra.mxu0 0.0
        %5879 = vmatpush.msra.mxu0 0.0
        %5880 = vmatpush.msra.mxu0 0.0
        %5881 = vmatpush.msra.mxu0 0.0
        %5882 = vmatpush.msra.mxu0 0.0
        %5883 = vmatpush.msra.mxu0 0.0
        %5884 = vmatpush.msra.mxu0 0.0
        %5885 = vmatpush.msra.mxu0 0.0
        %5886 = vmatpush.msra.mxu0 0.0
        %5887 = vmatpush.msra.mxu0 0.0
        %5888 = vmatpush.msra.mxu0 0.0
        %v5889 = vand.u32 %v5646, 4294901760
        %5890 = vmatpush.msra.mxu0 %v5889
        %v5891 = vand.u32 %v5650, 4294901760
        %v5892 = vsub.f32 %v5650, %v5891
        %v5893 = vand.u32 %v5892, 4294901760
        %5894 = vmatmul.f32.gmra.mxu0 %v5893
        %v5895 = vpop.f32.mrf.mxu0
        %v5896 = vadd.f32 %v5872, %v5895
        %5897 = vdwg.mxu0
        %5898 = vmatpush.msra.mxu0 0.0
        %5899 = vmatpush.msra.mxu0 0.0
        %5900 = vmatpush.msra.mxu0 0.0
        %5901 = vmatpush.msra.mxu0 0.0
        %5902 = vmatpush.msra.mxu0 0.0
        %5903 = vmatpush.msra.mxu0 0.0
        %5904 = vmatpush.msra.mxu0 0.0
        %5905 = vmatpush.msra.mxu0 0.0
        %5906 = vmatpush.msra.mxu0 0.0
        %5907 = vmatpush.msra.mxu0 0.0
        %5908 = vmatpush.msra.mxu0 0.0
        %5909 = vmatpush.msra.mxu0 0.0
        %5910 = vmatpush.msra.mxu0 0.0
        %5911 = vmatpush.msra.mxu0 0.0
        %5912 = vmatpush.msra.mxu0 0.0
        %v5913 = vand.u32 %v5646, 4294901760
        %v5914 = vsub.f32 %v5646, %v5913
        %v5915 = vand.u32 %v5914, 4294901760
        %5916 = vmatpush.msra.mxu0 %v5915
        %v5917 = vand.u32 %v5650, 4294901760
        %5918 = vmatmul.f32.gmra.mxu0 %v5917
        %v5919 = vpop.f32.mrf.mxu0
        %v5920 = vadd.f32 %v5896, %v5919
        %5921 = vdwg.mxu0
        %5922 = vmatpush.msra.mxu0 0.0
        %5923 = vmatpush.msra.mxu0 0.0
        %5924 = vmatpush.msra.mxu0 0.0
        %5925 = vmatpush.msra.mxu0 0.0
        %5926 = vmatpush.msra.mxu0 0.0
        %5927 = vmatpush.msra.mxu0 0.0
        %5928 = vmatpush.msra.mxu0 0.0
        %5929 = vmatpush.msra.mxu0 0.0
        %5930 = vmatpush.msra.mxu0 0.0
        %5931 = vmatpush.msra.mxu0 0.0
        %5932 = vmatpush.msra.mxu0 0.0
        %5933 = vmatpush.msra.mxu0 0.0
        %5934 = vmatpush.msra.mxu0 0.0
        %5935 = vmatpush.msra.mxu0 0.0
        %5936 = vmatpush.msra.mxu0 0.0
        %v5937 = vand.u32 %v5646, 4294901760
        %5938 = vmatpush.msra.mxu0 %v5937
        %v5939 = vand.u32 %v5650, 4294901760
        %5940 = vmatmul.f32.gmra.mxu0 %v5939
        %v5941 = vpop.f32.mrf.mxu0
        %v5942 = vadd.f32 %v5920, %v5941
        %5943 = vdwg.mxu0
        %v5944 = vadd.f32 %v5637, %v5796
        %v5945 = vadd.f32 %v5638, %v5942
        %v5946 = vld [vmem:[%s270] sm:$0xff]
        %s5947 = scalar_lea.vmem %s270, 8
        %v5948 = vld [vmem:[%s5947] sm:$0xff]
        %v5949 = vadd.f32 %v5944, %v5945
        %5950 = vadd.xlane.f32.xlu0 %v5949
        %v5951 = vpop.xlane.xlu0 %5950
        %v5952 = vmul.f32 %v5944, %v5944
        %v5953 = vmul.f32 %v5945, %v5945
        %v5954 = vadd.f32 %v5952, %v5953
        %5955 = vadd.xlane.f32.xlu0 %v5954
        %v5956 = vpop.xlane.xlu0 %5955
        %v5958 = vrot.slane %v5951, 4
        %v5960 = vadd.f32 %v5951, %v5958
        %v5962 = vrot.slane %v5956, 4
        %v5964 = vadd.f32 %v5956, %v5962
        %v5965 = vmul.f32 %v5960, 0.001953125
        %v5966 = vmul.f32 %v5964, 0.001953125
        %v5967 = vmul.f32 %v5965, %v5965
        %v5968 = vsub.f32 %v5966, %v5967
        %v5969 = vmax.f32 %v5968, 0.0
        %v5971 = vrot.slane %v5965, 4
        %v5973 = vsel %vm3160, %v5965, %v5971
        %v5975 = vrot.slane %v5969, 4
        %v5977 = vsel %vm3160, %v5969, %v5975
        %v5978 = vadd.f32 %v5977, 1e-05
        %v5979 = vrsqrt.pop %v5978
        %v5980 = vmul.f32 %v5979, %v5978
        %v5981 = vmul.f32 %v5980, %v5979
        %v5982 = vmul.f32 0.5, %v5981
        %v5983 = vsub.f32 1.5, %v5982
        %v5984 = vmul.f32 %v5979, %v5983
        %vm5985 = vweird.f32 %v5978
        %vm5986 = vweird.f32 %v5979
        %vm5987 = vmor %vm5985, %vm5986
        %v5988 = vsel %vm5987, %v5979, %v5984
        %v5989 = vmul.f32 %v5946, %v5988
        %v5990 = vmul.f32 %v5973, %v5989
        %v5991 = vsub.f32 %v5948, %v5990
        %5993 = vset.pattern.permute.xlu0 0
        %5994 = vperm.xlu0 %5993, %v5989
        %v5995 = vpop.permute.xlu0 %5994
        %v5997 = vmul.f32 %v5944, %v5995
        %v5998 = vmul.f32 %v5945, %v5995
        %6000 = vset.pattern.permute.xlu0 0
        %6001 = vperm.xlu0 %6000, %v5991
        %v6002 = vpop.permute.xlu0 %6001
        %v6004 = vadd.f32 %v5997, %v6002
        %v6005 = vadd.f32 %v5998, %v6002
        %v6006 = vadd.f32 %v6004, %v279
        %v6007 = vadd.f32 %v6005, %v280
        %v6008 = vmax.f32 %v6006, 0.0
        %v6009 = vmax.f32 %v6007, 0.0
        %6010 = vst [vmem:[#allocation2] sm:$0xff] %v6008
        %6011 = vst [vmem:[#allocation2 + $0x8] sm:$0xff] %v6009
        %p6012 = scmp.eq.s32.totalorder %s17, 5
        // Predicated region
        $region45: #{tpu_custom_call.1} parent=39 // pred_check
          %p6013 = pneg %p6012
        $region46: #{tpu_custom_call.1} parent=39 // pred_check_branch
          %6015 = sbr.rel (%p6013) target = $region48
        $region47: #{tpu_custom_call.1} parent=39 // pred_region
          %6016 = vst [vmem:[#allocation3] sm:$0xff] %v6008
          %6017 = vst [vmem:[#allocation3 + $0x8] sm:$0xff] %v6009
        $region48: #{tpu_custom_call.1} parent=39 // pred_fallthru
          _
        // Predicated region
        $region49: #{tpu_custom_call.1} parent=39 // pred_check
          %p6018 = pneg %p155
        $region50: #{tpu_custom_call.1} parent=39 // pred_check_branch
          %6020 = sbr.rel (%p6018) target = $region52
        $region51: #{tpu_custom_call.1} parent=39 // pred_region
          %6022 = vsyncadd [#allocation4], 0
          %s6024 = sshll.u32 [#allocation3], 4
          %s6025 = int_to_ptr.vmem [resolvable:$true] %s6024
          %s6026 = sshll.u32 %s5, 4
          %s6027 = int_to_ptr.hbm [resolvable:$true] %s6026
          %6029 = dma.vmem_to_hbm [thread:$0]  %s6025, 256, %s6027, [#allocation4]
        $region52: #{tpu_custom_call.1} parent=39 // pred_fallthru
          _
        // Predicated region
        $region53: #{tpu_custom_call.1} parent=39 // pred_check
          %p6030 = pneg %p155
        $region54: #{tpu_custom_call.1} parent=39 // pred_check_branch
          %6032 = sbr.rel (%p6030) target = $region56
        $region55: #{tpu_custom_call.1} parent=39 // pred_region
          %6034 = dma.done [#allocation4], 256
        $region56: #{tpu_custom_call.1} parent=39 // pred_fallthru
          _
      $region40: #{tpu_custom_call.1} parent=5 // pred_fallthru
        _
      %p6035 = scmp.le.s32.totalorder 2, %s12
      // Predicated region
      $region57: #{tpu_custom_call.1} parent=5 // pred_check
        %p6036 = pneg %p6035
      $region58: #{tpu_custom_call.1} parent=5 // pred_check_branch
        %6038 = sbr.rel (%p6036) target = $region60
      $region59: #{tpu_custom_call.1} parent=5 // pred_region
        %s6039 = ssub.s32 %s12, 2
      $region60: #{tpu_custom_call.1} parent=5 // pred_fallthru
        _
    $region6: #{tpu_custom_call.1} parent=1 // loop_footer
      %s16 = sadd.s32 1, %s12
    $region7: #{tpu_custom_call.1} parent=1 // loop_footer_branch
      %11 = sbr.rel target = $region3
    $region8: #{tpu_custom_call.1} parent=1 // loop_exit
      _
    %6040 = vsyncpa [#allocation4], 1
    %s6041 = scalar_lea.sflag [#allocation4], 1
    %6042 = vsyncpa %s6041, 1

</llo_original>
